<compile_context>
chip_gen: v6e
topology: v6e:2x2x1
jax: 0.10.0
libtpu: 0.0.40
codegen_flags: <defaults>
</compile_context>

<pallas_src>
import math

import jax
import jax.numpy as jnp
from jax.experimental import pallas as pl
from jax.experimental.pallas import tpu as pltpu

FEAT = 70   # theta1 is a fixed 70x70 Parameter in the module


def _sync_fuzzy_kernel(s_ref, f_ref, h_ref, a_ref, theta_ref, o_ref):
    # Tile shapes: s/f/a (TB, R, R); h (TB, R, FEAT); theta (FEAT, FP);
    # o (TB, R, FP) with FP = 128 (lane-dense stores).
    tb, r, feat = h_ref.shape

    a = a_ref[...]                                          # (TB, R, R)
    d1 = jnp.sum(a, axis=-1, keepdims=True)                 # (TB, R, 1) row sums
    # NOTE: rows of A with non-positive sums give inf/NaN, matching PyTorch.
    d12 = jax.lax.rsqrt(d1)                                 # (TB, R, 1), EUP

    sf = s_ref[...] * f_ref[...]                            # S * F (elementwise)
    h_scaled = d12 * h_ref[...]                             # diag(d) @ H (row scale)

    # Batched (TB, R, R) @ (TB, R, FEAT) on the MXU.
    tmp = jnp.einsum("bij,bjk->bik", sf, h_scaled,
                     preferred_element_type=jnp.float32)
    tmp = d12 * tmp                                         # diag(d) @ (SF @ D H)

    # Fused theta matmul across the full batch tile: one (TB*R, FEAT) @ (FEAT, FP)
    # MXU pass (collapse of the two major dims is layout-preserving: R % 8 == 0
    # is not even required since the lane dim is untouched).
    hs = jnp.dot(tmp.reshape(tb * r, feat), theta_ref[...],
                 preferred_element_type=jnp.float32)
    hs = hs.reshape(tb, r, -1)

    o_ref[...] = jnp.maximum(hs, 0.0).astype(o_ref.dtype)


def _pick_batch_tile(num, target=128):
    """Largest divisor of `num` that is <= target while keeping grid >= 2."""
    best = 1
    for cand in range(1, min(num, target) + 1):
        if num % cand == 0 and num // cand >= 2:
            best = cand
    return best


def sync_fuzzy_conv(S, F, H, A, theta1, *, batch_tile=None):
    num, row, feat = H.shape
    assert theta1.shape == (feat, feat)
    assert S.shape == F.shape == A.shape == (num, row, row)

    # Pad only theta's columns to a lane-dense multiple of 128 so the final
    # matmul output (and thus every store) is unmasked.  The padded output
    # columns are exactly relu(0) = 0 and get sliced off below.  H itself is
    # NOT padded: its block covers the full (row, feat) extent, which BlockSpec
    # allows, and the MXU handles K = 70 / N = 70 contractions directly.
    fp = pl.cdiv(feat, 128) * 128
    theta_p = jnp.pad(theta1, ((0, 0), (0, fp - feat)))

    if batch_tile is None:
        tb = _pick_batch_tile(num)
    else:
        tb = batch_tile
        assert num % tb == 0, "batch_tile must divide the batch size"
    grid = (num // tb,)

    grid_spec = pltpu.PrefetchScalarGridSpec(
        num_scalar_prefetch=0,
        grid=grid,
        in_specs=[
            pl.BlockSpec((tb, row, row), lambda n: (n, 0, 0)),    # S
            pl.BlockSpec((tb, row, row), lambda n: (n, 0, 0)),    # F
            pl.BlockSpec((tb, row, feat), lambda n: (n, 0, 0)),   # H (unpadded)
            pl.BlockSpec((tb, row, row), lambda n: (n, 0, 0)),    # A
            pl.BlockSpec((feat, fp), lambda n: (0, 0)),           # theta (resident)
        ],
        out_specs=pl.BlockSpec((tb, row, fp), lambda n: (n, 0, 0)),
    )

    cost = pl.CostEstimate(
        flops=num * (2 * row * row * feat + 2 * row * feat * fp),
        transcendentals=num * row,
        bytes_accessed=num * (3 * row * row + row * feat + row * fp) * 4
        + feat * fp * 4,
    )

    out = pl.pallas_call(
        _sync_fuzzy_kernel,
        out_shape=jax.ShapeDtypeStruct((num, row, fp), jnp.float32),
        grid_spec=grid_spec,
        compiler_params=pltpu.CompilerParams(
            dimension_semantics=("parallel",)),
        cost_estimate=cost,
    )(S, F, H, A, theta_p)

    return out[..., :feat]


def _reference(S, F, H, A, theta1):
    d1 = jnp.sum(A, axis=-1)                 # (N, R)
    d12 = d1 ** -0.5
    norm = d12[:, :, None] * (S * F) * d12[:, None, :]
    hs = jnp.einsum("nij,njk,kl->nil", norm, H, theta1,
                    precision=jax.lax.Precision.HIGHEST)
    return jnp.maximum(hs, 0.0)


if __name__ == "__main__":
    key = jax.random.PRNGKey(0)
    k1, k2, k3, k4, k5 = jax.random.split(key, 5)

    num, row = 128, 16  # small per-sample shapes; batch big enough to tile

    S = jax.random.uniform(k1, (num, row, row), jnp.float32)
    F = jax.random.uniform(k2, (num, row, row), jnp.float32)
    H = jax.random.normal(k3, (num, row, FEAT), jnp.float32)
    # A must have positive row sums so D1 ** -0.5 is finite (same as PyTorch).
    A = jax.random.uniform(k4, (num, row, row), jnp.float32,
                           minval=0.1, maxval=1.0)

    # Deterministic theta1 init matching reset_parameters(): U(-stdv, stdv),
    # stdv = 1/sqrt(70).
    stdv = 1.0 / math.sqrt(FEAT)
    theta1 = jax.random.uniform(k5, (FEAT, FEAT), jnp.float32,
                                minval=-stdv, maxval=stdv)

    out = sync_fuzzy_conv(S, F, H, A, theta1)
    out = jax.block_until_ready(out)

    ref = _reference(S, F, H, A, theta1)
    assert out.shape == (num, row, FEAT)
    assert jnp.allclose(out, ref, atol=2e-3, rtol=2e-3), \
        float(jnp.max(jnp.abs(out - ref)))

    print("KERNEL_OK")
</pallas_src>

<mosaic_0001>
module attributes {stable_mosaic.version = 11 : i64} {
  func.func @_sync_fuzzy_kernel(%arg0: i32, %arg1: memref<64x16x16xf32, #tpu.memory_space<vmem>>, %arg2: memref<64x16x16xf32, #tpu.memory_space<vmem>>, %arg3: memref<64x16x70xf32, #tpu.memory_space<vmem>>, %arg4: memref<64x16x16xf32, #tpu.memory_space<vmem>>, %arg5: memref<70x128xf32, #tpu.memory_space<vmem>>, %arg6: memref<64x16x128xf32, #tpu.memory_space<vmem>>) attributes {dimension_semantics = [#tpu.dimension_semantics<parallel>], iteration_bounds = array<i64: 2>, scalar_prefetch = 0 : i64, scratch_operands = 0 : i64, tpu.core_type = #tpu.core_type<tc>, window_params = [{transform_indices = @transform_0, window_bounds = array<i64: 64, 16, 16>}, {transform_indices = @transform_1, window_bounds = array<i64: 64, 16, 16>}, {transform_indices = @transform_2, window_bounds = array<i64: 64, 16, 70>}, {transform_indices = @transform_3, window_bounds = array<i64: 64, 16, 16>}, {pipeline_mode = #tpu.pipeline_mode<synchronous>, transform_indices = @transform_4, window_bounds = array<i64: 70, 128>}, {transform_indices = @transform_5, window_bounds = array<i64: 64, 16, 128>}]} {
    %c0 = arith.constant 0 : index
    %c0_0 = arith.constant 0 : index
    %c0_1 = arith.constant 0 : index
    %0 = vector.load %arg4[%c0, %c0_0, %c0_1] : memref<64x16x16xf32, #tpu.memory_space<vmem>>, vector<64x16x16xf32>
    %cst = arith.constant dense<0.000000e+00> : vector<64x16xf32>
    %1 = vector.multi_reduction <add>, %0, %cst [2] : vector<64x16x16xf32> to vector<64x16xf32>
    %2 = vector.shape_cast %1 : vector<64x16xf32> to vector<64x16x1xf32>
    %3 = math.rsqrt %2 : vector<64x16x1xf32>
    %c0_2 = arith.constant 0 : index
    %c0_3 = arith.constant 0 : index
    %c0_4 = arith.constant 0 : index
    %4 = vector.load %arg1[%c0_2, %c0_3, %c0_4] : memref<64x16x16xf32, #tpu.memory_space<vmem>>, vector<64x16x16xf32>
    %c0_5 = arith.constant 0 : index
    %c0_6 = arith.constant 0 : index
    %c0_7 = arith.constant 0 : index
    %5 = vector.load %arg2[%c0_5, %c0_6, %c0_7] : memref<64x16x16xf32, #tpu.memory_space<vmem>>, vector<64x16x16xf32>
    %6 = arith.mulf %4, %5 : vector<64x16x16xf32>
    %c0_8 = arith.constant 0 : index
    %c0_9 = arith.constant 0 : index
    %c0_10 = arith.constant 0 : index
    %7 = vector.load %arg3[%c0_8, %c0_9, %c0_10] : memref<64x16x70xf32, #tpu.memory_space<vmem>>, vector<64x16x70xf32>
    %8 = vector.broadcast %3 : vector<64x16x1xf32> to vector<64x16x70xf32>
    %9 = arith.mulf %8, %7 : vector<64x16x70xf32>
    "tpu.trace_start"() <{level = 10 : i32, message = "bij,bjk->bik"}> : () -> ()
    %cst_11 = arith.constant dense<0.000000e+00> : vector<64x16x70xf32>
    %10 = tpu.matmul %6, %9, %cst_11 {dimension_numbers = #tpu.dot_dimension_numbers<[2], [1], [1], [2], [0, 0, 0, 1, 1, 2], [0], [0]>} : vector<64x16x16xf32>, vector<64x16x70xf32>, vector<64x16x70xf32> -> vector<64x16x70xf32>
    "tpu.trace_stop"() : () -> ()
    %11 = vector.broadcast %3 : vector<64x16x1xf32> to vector<64x16x70xf32>
    %12 = arith.mulf %11, %10 : vector<64x16x70xf32>
    %13 = vector.shape_cast %12 : vector<64x16x70xf32> to vector<1024x70xf32>
    %c0_12 = arith.constant 0 : index
    %c0_13 = arith.constant 0 : index
    %14 = vector.load %arg5[%c0_12, %c0_13] : memref<70x128xf32, #tpu.memory_space<vmem>>, vector<70x128xf32>
    %cst_14 = arith.constant dense<0.000000e+00> : vector<1024x128xf32>
    %15 = tpu.matmul %13, %14, %cst_14 {dimension_numbers = #tpu.dot_dimension_numbers<[1], [0], [0], [1], [0, 0, 1, 1], [], []>} : vector<1024x70xf32>, vector<70x128xf32>, vector<1024x128xf32> -> vector<1024x128xf32>
    %16 = vector.shape_cast %15 : vector<1024x128xf32> to vector<64x16x128xf32>
    %cst_15 = arith.constant 0.000000e+00 : f32
    %17 = vector.broadcast %cst_15 : f32 to vector<64x16x128xf32>
    %18 = arith.maximumf %16, %17 : vector<64x16x128xf32>
    %c0_16 = arith.constant 0 : index
    %c0_17 = arith.constant 0 : index
    %c0_18 = arith.constant 0 : index
    %19 = vector.load %arg6[%c0_16, %c0_17, %c0_18] : memref<64x16x128xf32, #tpu.memory_space<vmem>>, vector<64x16x128xf32>
    tpu.vector_store %arg6[%c0_16, %c0_17, %c0_18], %18 {strides = array<i32>} : memref<64x16x128xf32, #tpu.memory_space<vmem>>, vector<64x16x128xf32>,
    return
  }
  func.func @transform_0(%arg0: i32) -> (i32, i32, i32) {
    %c0_i32 = arith.constant 0 : i32
    %c0_i32_0 = arith.constant 0 : i32
    %c0_i32_1 = arith.constant 0 : i32
    return %arg0, %c0_i32, %c0_i32_0 : i32, i32, i32
  }
  func.func @transform_1(%arg0: i32) -> (i32, i32, i32) {
    %c0_i32 = arith.constant 0 : i32
    %c0_i32_0 = arith.constant 0 : i32
    %c0_i32_1 = arith.constant 0 : i32
    return %arg0, %c0_i32, %c0_i32_0 : i32, i32, i32
  }
  func.func @transform_2(%arg0: i32) -> (i32, i32, i32) {
    %c0_i32 = arith.constant 0 : i32
    %c0_i32_0 = arith.constant 0 : i32
    %c0_i32_1 = arith.constant 0 : i32
    return %arg0, %c0_i32, %c0_i32_0 : i32, i32, i32
  }
  func.func @transform_3(%arg0: i32) -> (i32, i32, i32) {
    %c0_i32 = arith.constant 0 : i32
    %c0_i32_0 = arith.constant 0 : i32
    %c0_i32_1 = arith.constant 0 : i32
    return %arg0, %c0_i32, %c0_i32_0 : i32, i32, i32
  }
  func.func @transform_4(%arg0: i32) -> (i32, i32) {
    %c0_i32 = arith.constant 0 : i32
    %c0_i32_0 = arith.constant 0 : i32
    %c0_i32_1 = arith.constant 0 : i32
    return %c0_i32, %c0_i32_0 : i32, i32
  }
  func.func @transform_5(%arg0: i32) -> (i32, i32, i32) {
    %c0_i32 = arith.constant 0 : i32
    %c0_i32_0 = arith.constant 0 : i32
    %c0_i32_1 = arith.constant 0 : i32
    return %arg0, %c0_i32, %c0_i32_0 : i32, i32, i32
  }
}

</mosaic_0001>

<llo_original>
// kernel: tpu_custom_call.1
$region0: #{tpu_custom_call.1}
  #allocation0 [shape = 'u32[]', space=smem, size = 0x4, offset = 0x4, fixed_abs, tag = 'smem constant byte address 0x4 - core index']
  #allocation1 [shape = 'u32[144,128]{1,0:T(1,128)}', space=vmem, size = 0x12000, scoped, tag = 'internal scratch']
  %s0 = inlined_call_operand.vmem [shape: f32[128,16,16], index: 0, kind: input, shape index: {}]
  %s1 = inlined_call_operand.vmem [shape: f32[128,16,16], index: 1, kind: input, shape index: {}]
  %s2 = inlined_call_operand.vmem [shape: f32[128,16,70], index: 2, kind: input, shape index: {}]
  %s3 = inlined_call_operand.vmem [shape: f32[128,16,16], index: 3, kind: input, shape index: {}]
  %s4 = inlined_call_operand.vmem [shape: f32[70,128], index: 4, kind: input, shape index: {}]
  %s5 = inlined_call_operand.hbm [shape: f32[128,16,128], index: 5, kind: output, shape index: {}]
  %s6 = sld [smem:[#allocation0]]
  $region53: #{tpu_custom_call.1} parent=0
    _
  %s8 = ssub.s32 1, %s6
  %s9 = scalar_select 0, %s8, %s6
  $region1: #{tpu_custom_call.1} parent=0
    #allocation2 [shape = 'u8[1048576]{0}', space=vmem, size = 0x100000, scoped, tag = 'output window, operand 0']
    #allocation3 [shape = 's32[2]{0}', space=sflag, size = 0x8, scoped, tag = 'scoped memory for tpu_custom_call.1']
    %10 = vsyncpa [#allocation3], 0
    %s11 = scalar_lea.sflag [#allocation3], 1
    %12 = vsyncpa %s11, 0
    loop: start=0, step=1, limit=4
    $region2: #{tpu_custom_call.1} parent=1 // loop_pre_header
      _
    $region3: #{tpu_custom_call.1} parent=1 // loop_header
      %s14 = sphi 0, %s18
      %p15 = scmp.ge.s32.totalorder %s14, 4
      %s24 = sphi 0, %s26
      %s27 = sphi 0, %s24
      %s28 = sphi 0, %s27
      %s44 = sphi 0, %s28
      %s50 = sphi 0, %s52
      %s53 = sphi 0, %s50
      %s54 = sphi 0, %s53
      %s70 = sphi 0, %s54
      %s76 = sphi 0, %s78
      %s79 = sphi 0, %s76
      %s80 = sphi 0, %s79
      %s96 = sphi 0, %s80
      %s102 = sphi 0, %s104
      %s105 = sphi 0, %s102
      %s106 = sphi 0, %s105
      %s122 = sphi 0, %s106
      %s126 = sphi 0, %s126
      %s128 = sphi 0, %s126
      %s129 = sphi 0, %s128
      %s143 = sphi 0, %s129
      %s149 = sphi 0, %s151
      %s152 = sphi 0, %s149
      %s153 = sphi 0, %s152
      %s169 = sphi 0, %s153
    $region4: #{tpu_custom_call.1} parent=1 // loop_header_branch
      %17 = sbr.rel (%p15) target = $region8
    $region5: #{tpu_custom_call.1} parent=1 // loop_body
      %s19 = ssub.s32 %s14, 1
      %s20 = ssub.s32 %s14, 2
      %s21 = sadd.s32 %s14, 1
      %s22 = ssub.s32 %s14, %s21
      %p23 = scmp.eq.s32.totalorder %s22, 0
      %s25 = sadd.s32 %s24, 1
      %s26 = scalar_select %p23, %s24, %s25
      %p29 = pneg %p23
      %p30 = scmp.eq.s32.totalorder %s14, 1
      %p31 = por %p29, %p30
      %p32 = scmp.ne.s32.totalorder %s24, %s27
      %p33 = scmp.eq.s32.totalorder %s14, 0
      %p34 = por %p32, %p33
      %p35 = scmp.ne.s32.totalorder %s24, %s27
      %p36 = scmp.eq.s32.totalorder %s19, 1
      %p37 = por %p35, %p36
      %p38 = scmp.ne.s32.totalorder %s27, %s28
      %p39 = scmp.eq.s32.totalorder %s19, 0
      %p40 = por %p38, %p39
      %p41 = scmp.ne.s32.totalorder %s27, %s28
      %p42 = scmp.eq.s32.totalorder %s20, 1
      %p43 = por %p41, %p42
      %p45 = scmp.ne.s32.totalorder %s28, %s44
      %p46 = scmp.eq.s32.totalorder %s20, 0
      %p47 = por %p45, %p46
      %s48 = ssub.s32 %s14, %s21
      %p49 = scmp.eq.s32.totalorder %s48, 0
      %s51 = sadd.s32 %s50, 1
      %s52 = scalar_select %p49, %s50, %s51
      %p55 = pneg %p49
      %p56 = scmp.eq.s32.totalorder %s14, 1
      %p57 = por %p55, %p56
      %p58 = scmp.ne.s32.totalorder %s50, %s53
      %p59 = scmp.eq.s32.totalorder %s14, 0
      %p60 = por %p58, %p59
      %p61 = scmp.ne.s32.totalorder %s50, %s53
      %p62 = scmp.eq.s32.totalorder %s19, 1
      %p63 = por %p61, %p62
      %p64 = scmp.ne.s32.totalorder %s53, %s54
      %p65 = scmp.eq.s32.totalorder %s19, 0
      %p66 = por %p64, %p65
      %p67 = scmp.ne.s32.totalorder %s53, %s54
      %p68 = scmp.eq.s32.totalorder %s20, 1
      %p69 = por %p67, %p68
      %p71 = scmp.ne.s32.totalorder %s54, %s70
      %p72 = scmp.eq.s32.totalorder %s20, 0
      %p73 = por %p71, %p72
      %s74 = ssub.s32 %s14, %s21
      %p75 = scmp.eq.s32.totalorder %s74, 0
      %s77 = sadd.s32 %s76, 1
      %s78 = scalar_select %p75, %s76, %s77
      %p81 = pneg %p75
      %p82 = scmp.eq.s32.totalorder %s14, 1
      %p83 = por %p81, %p82
      %p84 = scmp.ne.s32.totalorder %s76, %s79
      %p85 = scmp.eq.s32.totalorder %s14, 0
      %p86 = por %p84, %p85
      %p87 = scmp.ne.s32.totalorder %s76, %s79
      %p88 = scmp.eq.s32.totalorder %s19, 1
      %p89 = por %p87, %p88
      %p90 = scmp.ne.s32.totalorder %s79, %s80
      %p91 = scmp.eq.s32.totalorder %s19, 0
      %p92 = por %p90, %p91
      %p93 = scmp.ne.s32.totalorder %s79, %s80
      %p94 = scmp.eq.s32.totalorder %s20, 1
      %p95 = por %p93, %p94
      %p97 = scmp.ne.s32.totalorder %s80, %s96
      %p98 = scmp.eq.s32.totalorder %s20, 0
      %p99 = por %p97, %p98
      %s100 = ssub.s32 %s14, %s21
      %p101 = scmp.eq.s32.totalorder %s100, 0
      %s103 = sadd.s32 %s102, 1
      %s104 = scalar_select %p101, %s102, %s103
      %p107 = pneg %p101
      %p108 = scmp.eq.s32.totalorder %s14, 1
      %p109 = por %p107, %p108
      %p110 = scmp.ne.s32.totalorder %s102, %s105
      %p111 = scmp.eq.s32.totalorder %s14, 0
      %p112 = por %p110, %p111
      %p113 = scmp.ne.s32.totalorder %s102, %s105
      %p114 = scmp.eq.s32.totalorder %s19, 1
      %p115 = por %p113, %p114
      %p116 = scmp.ne.s32.totalorder %s105, %s106
      %p117 = scmp.eq.s32.totalorder %s19, 0
      %p118 = por %p116, %p117
      %p119 = scmp.ne.s32.totalorder %s105, %s106
      %p120 = scmp.eq.s32.totalorder %s20, 1
      %p121 = por %p119, %p120
      %p123 = scmp.ne.s32.totalorder %s106, %s122
      %p124 = scmp.eq.s32.totalorder %s20, 0
      %p125 = por %p123, %p124
      %s127 = sadd.s32 %s126, 1
      %p130 = scmp.eq.s32.totalorder %s14, 1
      %p131 = scmp.ne.s32.totalorder %s126, %s128
      %p132 = scmp.eq.s32.totalorder %s14, 0
      %p133 = por %p131, %p132
      %p134 = scmp.ne.s32.totalorder %s126, %s128
      %p135 = scmp.eq.s32.totalorder %s19, 1
      %p136 = por %p134, %p135
      %p137 = scmp.ne.s32.totalorder %s128, %s129
      %p138 = scmp.eq.s32.totalorder %s19, 0
      %p139 = por %p137, %p138
      %p140 = scmp.ne.s32.totalorder %s128, %s129
      %p141 = scmp.eq.s32.totalorder %s20, 1
      %p142 = por %p140, %p141
      %p144 = scmp.ne.s32.totalorder %s129, %s143
      %p145 = scmp.eq.s32.totalorder %s20, 0
      %p146 = por %p144, %p145
      %s147 = ssub.s32 %s14, %s21
      %p148 = scmp.eq.s32.totalorder %s147, 0
      %s150 = sadd.s32 %s149, 1
      %s151 = scalar_select %p148, %s149, %s150
      %p154 = pneg %p148
      %p155 = scmp.eq.s32.totalorder %s14, 1
      %p156 = por %p154, %p155
      %p157 = scmp.ne.s32.totalorder %s149, %s152
      %p158 = scmp.eq.s32.totalorder %s14, 0
      %p159 = por %p157, %p158
      %p160 = scmp.ne.s32.totalorder %s149, %s152
      %p161 = scmp.eq.s32.totalorder %s19, 1
      %p162 = por %p160, %p161
      %p163 = scmp.ne.s32.totalorder %s152, %s153
      %p164 = scmp.eq.s32.totalorder %s19, 0
      %p165 = por %p163, %p164
      %p166 = scmp.ne.s32.totalorder %s152, %s153
      %p167 = scmp.eq.s32.totalorder %s20, 1
      %p168 = por %p166, %p167
      %p170 = scmp.ne.s32.totalorder %s153, %s169
      %p171 = scmp.eq.s32.totalorder %s20, 0
      %p172 = por %p170, %p171
      %p173 = scmp.le.s32.totalorder 1, %s14
      %p174 = scmp.lt.s32.totalorder %s14, 3
      %p175 = pnand %p173, %p174
      %p176 = pneg %p175
      // Predicated region
      $region9: #{tpu_custom_call.1} parent=5 // pred_check
        _
      $region10: #{tpu_custom_call.1} parent=5 // pred_check_branch
        %178 = sbr.rel (%p175) target = $region12
      $region11: #{tpu_custom_call.1} parent=5 // pred_region
        %s179 = ssub.s32 %s14, 1
        // Predicated region
        $region13: #{tpu_custom_call.1} parent=11 // pred_check
          %p180 = pneg %p139
        $region14: #{tpu_custom_call.1} parent=11 // pred_check_branch
          %182 = sbr.rel (%p180) target = $region16
        $region15: #{tpu_custom_call.1} parent=11 // pred_region
          _
        $region16: #{tpu_custom_call.1} parent=11 // pred_fallthru
          _
      $region12: #{tpu_custom_call.1} parent=5 // pred_fallthru
        _
      %p183 = scmp.lt.s32.totalorder %s14, 2
      // Predicated region
      $region17: #{tpu_custom_call.1} parent=5 // pred_check
        %p184 = pneg %p183
      $region18: #{tpu_custom_call.1} parent=5 // pred_check_branch
        %186 = sbr.rel (%p184) target = $region20
      $region19: #{tpu_custom_call.1} parent=5 // pred_region
        // Predicated region
        $region21: #{tpu_custom_call.1} parent=19 // pred_check
          %p187 = pneg %p34
        $region22: #{tpu_custom_call.1} parent=19 // pred_check_branch
          %189 = sbr.rel (%p187) target = $region24
        $region23: #{tpu_custom_call.1} parent=19 // pred_region
          %s190 = smul.u32 64, %s14
          %p191 = scmp.lt.s32.totalorder %s190, 127
          %s192 = scalar_select %p191, %s190, 127
          %s193 = smul.addr %s192, 2
          %s194 = smul.addr %s193, 8
          %s195 = scalar_lea.vmem %s0, %s194
          %s196 = smul.u32 64, %s14
        $region24: #{tpu_custom_call.1} parent=19 // pred_fallthru
          _
        // Predicated region
        $region25: #{tpu_custom_call.1} parent=19 // pred_check
          %p197 = pneg %p60
        $region26: #{tpu_custom_call.1} parent=19 // pred_check_branch
          %199 = sbr.rel (%p197) target = $region28
        $region27: #{tpu_custom_call.1} parent=19 // pred_region
          %s200 = smul.u32 64, %s14
          %p201 = scmp.lt.s32.totalorder %s200, 127
          %s202 = scalar_select %p201, %s200, 127
          %s203 = smul.addr %s202, 2
          %s204 = smul.addr %s203, 8
          %s205 = scalar_lea.vmem %s1, %s204
          %s206 = smul.u32 64, %s14
        $region28: #{tpu_custom_call.1} parent=19 // pred_fallthru
          _
        // Predicated region
        $region29: #{tpu_custom_call.1} parent=19 // pred_check
          %p207 = pneg %p86
        $region30: #{tpu_custom_call.1} parent=19 // pred_check_branch
          %209 = sbr.rel (%p207) target = $region32
        $region31: #{tpu_custom_call.1} parent=19 // pred_region
          %s210 = smul.u32 64, %s14
          %p211 = scmp.lt.s32.totalorder %s210, 127
          %s212 = scalar_select %p211, %s210, 127
          %s213 = smul.addr %s212, 2
          %s214 = smul.addr %s213, 8
          %s215 = scalar_lea.vmem %s2, %s214
          %s216 = smul.u32 64, %s14
        $region32: #{tpu_custom_call.1} parent=19 // pred_fallthru
          _
        // Predicated region
        $region33: #{tpu_custom_call.1} parent=19 // pred_check
          %p217 = pneg %p112
        $region34: #{tpu_custom_call.1} parent=19 // pred_check_branch
          %219 = sbr.rel (%p217) target = $region36
        $region35: #{tpu_custom_call.1} parent=19 // pred_region
          %s220 = smul.u32 64, %s14
          %p221 = scmp.lt.s32.totalorder %s220, 127
          %s222 = scalar_select %p221, %s220, 127
          %s223 = smul.addr %s222, 2
          %s224 = smul.addr %s223, 8
          %s225 = scalar_lea.vmem %s3, %s224
          %s226 = smul.u32 64, %s14
        $region36: #{tpu_custom_call.1} parent=19 // pred_fallthru
          _
      $region20: #{tpu_custom_call.1} parent=5 // pred_fallthru
        _
      %p227 = scmp.le.s32.totalorder 1, %s14
      %p228 = scmp.lt.s32.totalorder %s14, 3
      %p229 = pnand %p227, %p228
      %p230 = pneg %p229
      // Predicated region
      $region37: #{tpu_custom_call.1} parent=5 // pred_check
        _
      $region38: #{tpu_custom_call.1} parent=5 // pred_check_branch
        %232 = sbr.rel (%p229) target = $region40
      $region39: #{tpu_custom_call.1} parent=5 // pred_region
        %s233 = ssub.s32 %s14, 1
        %s234 = smul.u32 64, %s19
        %p235 = scmp.lt.s32.totalorder %s234, 127
        %s236 = scalar_select %p235, %s234, 127
        %s237 = smul.addr %s236, 2
        %s238 = smul.addr %s237, 8
        %s239 = scalar_lea.vmem %s0, %s238
        %p240 = pneg %p40
        %p241 = pneg %p37
        %s242 = smul.u32 64, %s19
        %p243 = scmp.lt.s32.totalorder %s242, 127
        %s244 = scalar_select %p243, %s242, 127
        %s245 = smul.addr %s244, 2
        %s246 = smul.addr %s245, 8
        %s247 = scalar_lea.vmem %s1, %s246
        %p248 = pneg %p66
        %p249 = pneg %p63
        %s250 = smul.u32 64, %s19
        %p251 = scmp.lt.s32.totalorder %s250, 127
        %s252 = scalar_select %p251, %s250, 127
        %s253 = smul.addr %s252, 2
        %s254 = smul.addr %s253, 8
        %s255 = scalar_lea.vmem %s2, %s254
        %p256 = pneg %p92
        %p257 = pneg %p89
        %s258 = smul.u32 64, %s19
        %p259 = scmp.lt.s32.totalorder %s258, 127
        %s260 = scalar_select %p259, %s258, 127
        %s261 = smul.addr %s260, 2
        %s262 = smul.addr %s261, 8
        %s263 = scalar_lea.vmem %s3, %s262
        %p264 = pneg %p118
        %p265 = pneg %p115
        %p266 = pneg %p139
        %p267 = pneg %p136
        %p268 = pneg %p165
        %p269 = pneg %p162
        %s270 = sand.u32 %s152, 1
        %s271 = scalar_lea.sflag [#allocation3], %s270
        %s272 = sand.u32 %s152, 1
        %s273 = smul.addr %s272, 1024
        %s274 = scalar_lea.vmem [#allocation2], %s273
        %s275 = smul.u32 64, %s19
        %p276 = scmp.lt.s32.totalorder %s275, 127
        %s277 = scalar_select %p276, %s275, 127
        %s278 = smul.addr %s277, 2
        %s279 = smul.addr %s278, 8
        %s280 = scalar_lea.vmem %s0, %s279
        %s281 = smul.u32 64, %s19
        %s282 = smul.u32 64, %s19
        %p283 = scmp.lt.s32.totalorder %s282, 127
        %s284 = scalar_select %p283, %s282, 127
        %s285 = smul.addr %s284, 2
        %s286 = smul.addr %s285, 8
        %s287 = scalar_lea.vmem %s1, %s286
        %s288 = smul.u32 64, %s19
        %s289 = smul.u32 64, %s19
        %p290 = scmp.lt.s32.totalorder %s289, 127
        %s291 = scalar_select %p290, %s289, 127
        %s292 = smul.addr %s291, 2
        %s293 = smul.addr %s292, 8
        %s294 = scalar_lea.vmem %s2, %s293
        %s295 = smul.u32 64, %s19
        %s296 = smul.u32 64, %s19
        %p297 = scmp.lt.s32.totalorder %s296, 127
        %s298 = scalar_select %p297, %s296, 127
        %s299 = smul.addr %s298, 2
        %s300 = smul.addr %s299, 8
        %s301 = scalar_lea.vmem %s3, %s300
        %s302 = smul.u32 64, %s19
        %s303 = smul.u32 64, %s19
        %v304 = vld [vmem:[%s301] sm:$0xff]
        %v305 = vld [vmem:[%s301 + $0x8] sm:$0xff]
        %v306 = vld [vmem:[%s301 + $0x10] sm:$0xff]
        %v307 = vld [vmem:[%s301 + $0x18] sm:$0xff]
        %v308 = vld [vmem:[%s301 + $0x20] sm:$0xff]
        %v309 = vld [vmem:[%s301 + $0x28] sm:$0xff]
        %v310 = vld [vmem:[%s301 + $0x30] sm:$0xff]
        %v311 = vld [vmem:[%s301 + $0x38] sm:$0xff]
        %v312 = vld [vmem:[%s301 + $0x40] sm:$0xff]
        %v313 = vld [vmem:[%s301 + $0x48] sm:$0xff]
        %v314 = vld [vmem:[%s301 + $0x50] sm:$0xff]
        %v315 = vld [vmem:[%s301 + $0x58] sm:$0xff]
        %v316 = vld [vmem:[%s301 + $0x60] sm:$0xff]
        %v317 = vld [vmem:[%s301 + $0x68] sm:$0xff]
        %v318 = vld [vmem:[%s301 + $0x70] sm:$0xff]
        %v319 = vld [vmem:[%s301 + $0x78] sm:$0xff]
        %v320 = vld [vmem:[%s301 + $0x80] sm:$0xff]
        %v321 = vld [vmem:[%s301 + $0x88] sm:$0xff]
        %v322 = vld [vmem:[%s301 + $0x90] sm:$0xff]
        %v323 = vld [vmem:[%s301 + $0x98] sm:$0xff]
        %v324 = vld [vmem:[%s301 + $0xa0] sm:$0xff]
        %v325 = vld [vmem:[%s301 + $0xa8] sm:$0xff]
        %v326 = vld [vmem:[%s301 + $0xb0] sm:$0xff]
        %v327 = vld [vmem:[%s301 + $0xb8] sm:$0xff]
        %v328 = vld [vmem:[%s301 + $0xc0] sm:$0xff]
        %v329 = vld [vmem:[%s301 + $0xc8] sm:$0xff]
        %v330 = vld [vmem:[%s301 + $0xd0] sm:$0xff]
        %v331 = vld [vmem:[%s301 + $0xd8] sm:$0xff]
        %v332 = vld [vmem:[%s301 + $0xe0] sm:$0xff]
        %v333 = vld [vmem:[%s301 + $0xe8] sm:$0xff]
        %v334 = vld [vmem:[%s301 + $0xf0] sm:$0xff]
        %v335 = vld [vmem:[%s301 + $0xf8] sm:$0xff]
        %v336 = vld [vmem:[%s301 + $0x100] sm:$0xff]
        %v337 = vld [vmem:[%s301 + $0x108] sm:$0xff]
        %v338 = vld [vmem:[%s301 + $0x110] sm:$0xff]
        %v339 = vld [vmem:[%s301 + $0x118] sm:$0xff]
        %v340 = vld [vmem:[%s301 + $0x120] sm:$0xff]
        %v341 = vld [vmem:[%s301 + $0x128] sm:$0xff]
        %v342 = vld [vmem:[%s301 + $0x130] sm:$0xff]
        %v343 = vld [vmem:[%s301 + $0x138] sm:$0xff]
        %v344 = vld [vmem:[%s301 + $0x140] sm:$0xff]
        %v345 = vld [vmem:[%s301 + $0x148] sm:$0xff]
        %v346 = vld [vmem:[%s301 + $0x150] sm:$0xff]
        %v347 = vld [vmem:[%s301 + $0x158] sm:$0xff]
        %v348 = vld [vmem:[%s301 + $0x160] sm:$0xff]
        %v349 = vld [vmem:[%s301 + $0x168] sm:$0xff]
        %v350 = vld [vmem:[%s301 + $0x170] sm:$0xff]
        %v351 = vld [vmem:[%s301 + $0x178] sm:$0xff]
        %v352 = vld [vmem:[%s301 + $0x180] sm:$0xff]
        %v353 = vld [vmem:[%s301 + $0x188] sm:$0xff]
        %v354 = vld [vmem:[%s301 + $0x190] sm:$0xff]
        %v355 = vld [vmem:[%s301 + $0x198] sm:$0xff]
        %v356 = vld [vmem:[%s301 + $0x1a0] sm:$0xff]
        %v357 = vld [vmem:[%s301 + $0x1a8] sm:$0xff]
        %v358 = vld [vmem:[%s301 + $0x1b0] sm:$0xff]
        %v359 = vld [vmem:[%s301 + $0x1b8] sm:$0xff]
        %v360 = vld [vmem:[%s301 + $0x1c0] sm:$0xff]
        %v361 = vld [vmem:[%s301 + $0x1c8] sm:$0xff]
        %v362 = vld [vmem:[%s301 + $0x1d0] sm:$0xff]
        %v363 = vld [vmem:[%s301 + $0x1d8] sm:$0xff]
        %v364 = vld [vmem:[%s301 + $0x1e0] sm:$0xff]
        %v365 = vld [vmem:[%s301 + $0x1e8] sm:$0xff]
        %v366 = vld [vmem:[%s301 + $0x1f0] sm:$0xff]
        %v367 = vld [vmem:[%s301 + $0x1f8] sm:$0xff]
        %v368 = vld [vmem:[%s301 + $0x200] sm:$0xff]
        %v369 = vld [vmem:[%s301 + $0x208] sm:$0xff]
        %v370 = vld [vmem:[%s301 + $0x210] sm:$0xff]
        %v371 = vld [vmem:[%s301 + $0x218] sm:$0xff]
        %v372 = vld [vmem:[%s301 + $0x220] sm:$0xff]
        %v373 = vld [vmem:[%s301 + $0x228] sm:$0xff]
        %v374 = vld [vmem:[%s301 + $0x230] sm:$0xff]
        %v375 = vld [vmem:[%s301 + $0x238] sm:$0xff]
        %v376 = vld [vmem:[%s301 + $0x240] sm:$0xff]
        %v377 = vld [vmem:[%s301 + $0x248] sm:$0xff]
        %v378 = vld [vmem:[%s301 + $0x250] sm:$0xff]
        %v379 = vld [vmem:[%s301 + $0x258] sm:$0xff]
        %v380 = vld [vmem:[%s301 + $0x260] sm:$0xff]
        %v381 = vld [vmem:[%s301 + $0x268] sm:$0xff]
        %v382 = vld [vmem:[%s301 + $0x270] sm:$0xff]
        %v383 = vld [vmem:[%s301 + $0x278] sm:$0xff]
        %v384 = vld [vmem:[%s301 + $0x280] sm:$0xff]
        %v385 = vld [vmem:[%s301 + $0x288] sm:$0xff]
        %v386 = vld [vmem:[%s301 + $0x290] sm:$0xff]
        %v387 = vld [vmem:[%s301 + $0x298] sm:$0xff]
        %v388 = vld [vmem:[%s301 + $0x2a0] sm:$0xff]
        %v389 = vld [vmem:[%s301 + $0x2a8] sm:$0xff]
        %v390 = vld [vmem:[%s301 + $0x2b0] sm:$0xff]
        %v391 = vld [vmem:[%s301 + $0x2b8] sm:$0xff]
        %v392 = vld [vmem:[%s301 + $0x2c0] sm:$0xff]
        %v393 = vld [vmem:[%s301 + $0x2c8] sm:$0xff]
        %v394 = vld [vmem:[%s301 + $0x2d0] sm:$0xff]
        %v395 = vld [vmem:[%s301 + $0x2d8] sm:$0xff]
        %v396 = vld [vmem:[%s301 + $0x2e0] sm:$0xff]
        %v397 = vld [vmem:[%s301 + $0x2e8] sm:$0xff]
        %v398 = vld [vmem:[%s301 + $0x2f0] sm:$0xff]
        %v399 = vld [vmem:[%s301 + $0x2f8] sm:$0xff]
        %v400 = vld [vmem:[%s301 + $0x300] sm:$0xff]
        %v401 = vld [vmem:[%s301 + $0x308] sm:$0xff]
        %v402 = vld [vmem:[%s301 + $0x310] sm:$0xff]
        %v403 = vld [vmem:[%s301 + $0x318] sm:$0xff]
        %v404 = vld [vmem:[%s301 + $0x320] sm:$0xff]
        %v405 = vld [vmem:[%s301 + $0x328] sm:$0xff]
        %v406 = vld [vmem:[%s301 + $0x330] sm:$0xff]
        %v407 = vld [vmem:[%s301 + $0x338] sm:$0xff]
        %v408 = vld [vmem:[%s301 + $0x340] sm:$0xff]
        %v409 = vld [vmem:[%s301 + $0x348] sm:$0xff]
        %v410 = vld [vmem:[%s301 + $0x350] sm:$0xff]
        %v411 = vld [vmem:[%s301 + $0x358] sm:$0xff]
        %v412 = vld [vmem:[%s301 + $0x360] sm:$0xff]
        %v413 = vld [vmem:[%s301 + $0x368] sm:$0xff]
        %v414 = vld [vmem:[%s301 + $0x370] sm:$0xff]
        %v415 = vld [vmem:[%s301 + $0x378] sm:$0xff]
        %v416 = vld [vmem:[%s301 + $0x380] sm:$0xff]
        %v417 = vld [vmem:[%s301 + $0x388] sm:$0xff]
        %v418 = vld [vmem:[%s301 + $0x390] sm:$0xff]
        %v419 = vld [vmem:[%s301 + $0x398] sm:$0xff]
        %v420 = vld [vmem:[%s301 + $0x3a0] sm:$0xff]
        %v421 = vld [vmem:[%s301 + $0x3a8] sm:$0xff]
        %v422 = vld [vmem:[%s301 + $0x3b0] sm:$0xff]
        %v423 = vld [vmem:[%s301 + $0x3b8] sm:$0xff]
        %v424 = vld [vmem:[%s301 + $0x3c0] sm:$0xff]
        %v425 = vld [vmem:[%s301 + $0x3c8] sm:$0xff]
        %v426 = vld [vmem:[%s301 + $0x3d0] sm:$0xff]
        %v427 = vld [vmem:[%s301 + $0x3d8] sm:$0xff]
        %v428 = vld [vmem:[%s301 + $0x3e0] sm:$0xff]
        %v429 = vld [vmem:[%s301 + $0x3e8] sm:$0xff]
        %v430 = vld [vmem:[%s301 + $0x3f0] sm:$0xff]
        %v431 = vld [vmem:[%s301 + $0x3f8] sm:$0xff]
        %vm432 = vcmask 130048
        %v433 = vsel %vm432, %v304, 0.0
        %434 = vadd.xlane.f32.xlu0 %v433
        %v435 = vpop.xlane.xlu0 %434
        %v436 = vsel %vm432, %v305, 0.0
        %437 = vadd.xlane.f32.xlu0 %v436
        %v438 = vpop.xlane.xlu0 %437
        %v439 = vsel %vm432, %v306, 0.0
        %440 = vadd.xlane.f32.xlu0 %v439
        %v441 = vpop.xlane.xlu0 %440
        %v442 = vsel %vm432, %v307, 0.0
        %443 = vadd.xlane.f32.xlu0 %v442
        %v444 = vpop.xlane.xlu0 %443
        %v445 = vsel %vm432, %v308, 0.0
        %446 = vadd.xlane.f32.xlu0 %v445
        %v447 = vpop.xlane.xlu0 %446
        %v448 = vsel %vm432, %v309, 0.0
        %449 = vadd.xlane.f32.xlu0 %v448
        %v450 = vpop.xlane.xlu0 %449
        %v451 = vsel %vm432, %v310, 0.0
        %452 = vadd.xlane.f32.xlu0 %v451
        %v453 = vpop.xlane.xlu0 %452
        %v454 = vsel %vm432, %v311, 0.0
        %455 = vadd.xlane.f32.xlu0 %v454
        %v456 = vpop.xlane.xlu0 %455
        %v457 = vsel %vm432, %v312, 0.0
        %458 = vadd.xlane.f32.xlu0 %v457
        %v459 = vpop.xlane.xlu0 %458
        %v460 = vsel %vm432, %v313, 0.0
        %461 = vadd.xlane.f32.xlu0 %v460
        %v462 = vpop.xlane.xlu0 %461
        %v463 = vsel %vm432, %v314, 0.0
        %464 = vadd.xlane.f32.xlu0 %v463
        %v465 = vpop.xlane.xlu0 %464
        %v466 = vsel %vm432, %v315, 0.0
        %467 = vadd.xlane.f32.xlu0 %v466
        %v468 = vpop.xlane.xlu0 %467
        %v469 = vsel %vm432, %v316, 0.0
        %470 = vadd.xlane.f32.xlu0 %v469
        %v471 = vpop.xlane.xlu0 %470
        %v472 = vsel %vm432, %v317, 0.0
        %473 = vadd.xlane.f32.xlu0 %v472
        %v474 = vpop.xlane.xlu0 %473
        %v475 = vsel %vm432, %v318, 0.0
        %476 = vadd.xlane.f32.xlu0 %v475
        %v477 = vpop.xlane.xlu0 %476
        %v478 = vsel %vm432, %v319, 0.0
        %479 = vadd.xlane.f32.xlu0 %v478
        %v480 = vpop.xlane.xlu0 %479
        %v481 = vsel %vm432, %v320, 0.0
        %482 = vadd.xlane.f32.xlu0 %v481
        %v483 = vpop.xlane.xlu0 %482
        %v484 = vsel %vm432, %v321, 0.0
        %485 = vadd.xlane.f32.xlu0 %v484
        %v486 = vpop.xlane.xlu0 %485
        %v487 = vsel %vm432, %v322, 0.0
        %488 = vadd.xlane.f32.xlu0 %v487
        %v489 = vpop.xlane.xlu0 %488
        %v490 = vsel %vm432, %v323, 0.0
        %491 = vadd.xlane.f32.xlu0 %v490
        %v492 = vpop.xlane.xlu0 %491
        %v493 = vsel %vm432, %v324, 0.0
        %494 = vadd.xlane.f32.xlu0 %v493
        %v495 = vpop.xlane.xlu0 %494
        %v496 = vsel %vm432, %v325, 0.0
        %497 = vadd.xlane.f32.xlu0 %v496
        %v498 = vpop.xlane.xlu0 %497
        %v499 = vsel %vm432, %v326, 0.0
        %500 = vadd.xlane.f32.xlu0 %v499
        %v501 = vpop.xlane.xlu0 %500
        %v502 = vsel %vm432, %v327, 0.0
        %503 = vadd.xlane.f32.xlu0 %v502
        %v504 = vpop.xlane.xlu0 %503
        %v505 = vsel %vm432, %v328, 0.0
        %506 = vadd.xlane.f32.xlu0 %v505
        %v507 = vpop.xlane.xlu0 %506
        %v508 = vsel %vm432, %v329, 0.0
        %509 = vadd.xlane.f32.xlu0 %v508
        %v510 = vpop.xlane.xlu0 %509
        %v511 = vsel %vm432, %v330, 0.0
        %512 = vadd.xlane.f32.xlu0 %v511
        %v513 = vpop.xlane.xlu0 %512
        %v514 = vsel %vm432, %v331, 0.0
        %515 = vadd.xlane.f32.xlu0 %v514
        %v516 = vpop.xlane.xlu0 %515
        %v517 = vsel %vm432, %v332, 0.0
        %518 = vadd.xlane.f32.xlu0 %v517
        %v519 = vpop.xlane.xlu0 %518
        %v520 = vsel %vm432, %v333, 0.0
        %521 = vadd.xlane.f32.xlu0 %v520
        %v522 = vpop.xlane.xlu0 %521
        %v523 = vsel %vm432, %v334, 0.0
        %524 = vadd.xlane.f32.xlu0 %v523
        %v525 = vpop.xlane.xlu0 %524
        %v526 = vsel %vm432, %v335, 0.0
        %527 = vadd.xlane.f32.xlu0 %v526
        %v528 = vpop.xlane.xlu0 %527
        %v529 = vsel %vm432, %v336, 0.0
        %530 = vadd.xlane.f32.xlu0 %v529
        %v531 = vpop.xlane.xlu0 %530
        %v532 = vsel %vm432, %v337, 0.0
        %533 = vadd.xlane.f32.xlu0 %v532
        %v534 = vpop.xlane.xlu0 %533
        %v535 = vsel %vm432, %v338, 0.0
        %536 = vadd.xlane.f32.xlu0 %v535
        %v537 = vpop.xlane.xlu0 %536
        %v538 = vsel %vm432, %v339, 0.0
        %539 = vadd.xlane.f32.xlu0 %v538
        %v540 = vpop.xlane.xlu0 %539
        %v541 = vsel %vm432, %v340, 0.0
        %542 = vadd.xlane.f32.xlu0 %v541
        %v543 = vpop.xlane.xlu0 %542
        %v544 = vsel %vm432, %v341, 0.0
        %545 = vadd.xlane.f32.xlu0 %v544
        %v546 = vpop.xlane.xlu0 %545
        %v547 = vsel %vm432, %v342, 0.0
        %548 = vadd.xlane.f32.xlu0 %v547
        %v549 = vpop.xlane.xlu0 %548
        %v550 = vsel %vm432, %v343, 0.0
        %551 = vadd.xlane.f32.xlu0 %v550
        %v552 = vpop.xlane.xlu0 %551
        %v553 = vsel %vm432, %v344, 0.0
        %554 = vadd.xlane.f32.xlu0 %v553
        %v555 = vpop.xlane.xlu0 %554
        %v556 = vsel %vm432, %v345, 0.0
        %557 = vadd.xlane.f32.xlu0 %v556
        %v558 = vpop.xlane.xlu0 %557
        %v559 = vsel %vm432, %v346, 0.0
        %560 = vadd.xlane.f32.xlu0 %v559
        %v561 = vpop.xlane.xlu0 %560
        %v562 = vsel %vm432, %v347, 0.0
        %563 = vadd.xlane.f32.xlu0 %v562
        %v564 = vpop.xlane.xlu0 %563
        %v565 = vsel %vm432, %v348, 0.0
        %566 = vadd.xlane.f32.xlu0 %v565
        %v567 = vpop.xlane.xlu0 %566
        %v568 = vsel %vm432, %v349, 0.0
        %569 = vadd.xlane.f32.xlu0 %v568
        %v570 = vpop.xlane.xlu0 %569
        %v571 = vsel %vm432, %v350, 0.0
        %572 = vadd.xlane.f32.xlu0 %v571
        %v573 = vpop.xlane.xlu0 %572
        %v574 = vsel %vm432, %v351, 0.0
        %575 = vadd.xlane.f32.xlu0 %v574
        %v576 = vpop.xlane.xlu0 %575
        %v577 = vsel %vm432, %v352, 0.0
        %578 = vadd.xlane.f32.xlu0 %v577
        %v579 = vpop.xlane.xlu0 %578
        %v580 = vsel %vm432, %v353, 0.0
        %581 = vadd.xlane.f32.xlu0 %v580
        %v582 = vpop.xlane.xlu0 %581
        %v583 = vsel %vm432, %v354, 0.0
        %584 = vadd.xlane.f32.xlu0 %v583
        %v585 = vpop.xlane.xlu0 %584
        %v586 = vsel %vm432, %v355, 0.0
        %587 = vadd.xlane.f32.xlu0 %v586
        %v588 = vpop.xlane.xlu0 %587
        %v589 = vsel %vm432, %v356, 0.0
        %590 = vadd.xlane.f32.xlu0 %v589
        %v591 = vpop.xlane.xlu0 %590
        %v592 = vsel %vm432, %v357, 0.0
        %593 = vadd.xlane.f32.xlu0 %v592
        %v594 = vpop.xlane.xlu0 %593
        %v595 = vsel %vm432, %v358, 0.0
        %596 = vadd.xlane.f32.xlu0 %v595
        %v597 = vpop.xlane.xlu0 %596
        %v598 = vsel %vm432, %v359, 0.0
        %599 = vadd.xlane.f32.xlu0 %v598
        %v600 = vpop.xlane.xlu0 %599
        %v601 = vsel %vm432, %v360, 0.0
        %602 = vadd.xlane.f32.xlu0 %v601
        %v603 = vpop.xlane.xlu0 %602
        %v604 = vsel %vm432, %v361, 0.0
        %605 = vadd.xlane.f32.xlu0 %v604
        %v606 = vpop.xlane.xlu0 %605
        %v607 = vsel %vm432, %v362, 0.0
        %608 = vadd.xlane.f32.xlu0 %v607
        %v609 = vpop.xlane.xlu0 %608
        %v610 = vsel %vm432, %v363, 0.0
        %611 = vadd.xlane.f32.xlu0 %v610
        %v612 = vpop.xlane.xlu0 %611
        %v613 = vsel %vm432, %v364, 0.0
        %614 = vadd.xlane.f32.xlu0 %v613
        %v615 = vpop.xlane.xlu0 %614
        %v616 = vsel %vm432, %v365, 0.0
        %617 = vadd.xlane.f32.xlu0 %v616
        %v618 = vpop.xlane.xlu0 %617
        %v619 = vsel %vm432, %v366, 0.0
        %620 = vadd.xlane.f32.xlu0 %v619
        %v621 = vpop.xlane.xlu0 %620
        %v622 = vsel %vm432, %v367, 0.0
        %623 = vadd.xlane.f32.xlu0 %v622
        %v624 = vpop.xlane.xlu0 %623
        %v625 = vsel %vm432, %v368, 0.0
        %626 = vadd.xlane.f32.xlu0 %v625
        %v627 = vpop.xlane.xlu0 %626
        %v628 = vsel %vm432, %v369, 0.0
        %629 = vadd.xlane.f32.xlu0 %v628
        %v630 = vpop.xlane.xlu0 %629
        %v631 = vsel %vm432, %v370, 0.0
        %632 = vadd.xlane.f32.xlu0 %v631
        %v633 = vpop.xlane.xlu0 %632
        %v634 = vsel %vm432, %v371, 0.0
        %635 = vadd.xlane.f32.xlu0 %v634
        %v636 = vpop.xlane.xlu0 %635
        %v637 = vsel %vm432, %v372, 0.0
        %638 = vadd.xlane.f32.xlu0 %v637
        %v639 = vpop.xlane.xlu0 %638
        %v640 = vsel %vm432, %v373, 0.0
        %641 = vadd.xlane.f32.xlu0 %v640
        %v642 = vpop.xlane.xlu0 %641
        %v643 = vsel %vm432, %v374, 0.0
        %644 = vadd.xlane.f32.xlu0 %v643
        %v645 = vpop.xlane.xlu0 %644
        %v646 = vsel %vm432, %v375, 0.0
        %647 = vadd.xlane.f32.xlu0 %v646
        %v648 = vpop.xlane.xlu0 %647
        %v649 = vsel %vm432, %v376, 0.0
        %650 = vadd.xlane.f32.xlu0 %v649
        %v651 = vpop.xlane.xlu0 %650
        %v652 = vsel %vm432, %v377, 0.0
        %653 = vadd.xlane.f32.xlu0 %v652
        %v654 = vpop.xlane.xlu0 %653
        %v655 = vsel %vm432, %v378, 0.0
        %656 = vadd.xlane.f32.xlu0 %v655
        %v657 = vpop.xlane.xlu0 %656
        %v658 = vsel %vm432, %v379, 0.0
        %659 = vadd.xlane.f32.xlu0 %v658
        %v660 = vpop.xlane.xlu0 %659
        %v661 = vsel %vm432, %v380, 0.0
        %662 = vadd.xlane.f32.xlu0 %v661
        %v663 = vpop.xlane.xlu0 %662
        %v664 = vsel %vm432, %v381, 0.0
        %665 = vadd.xlane.f32.xlu0 %v664
        %v666 = vpop.xlane.xlu0 %665
        %v667 = vsel %vm432, %v382, 0.0
        %668 = vadd.xlane.f32.xlu0 %v667
        %v669 = vpop.xlane.xlu0 %668
        %v670 = vsel %vm432, %v383, 0.0
        %671 = vadd.xlane.f32.xlu0 %v670
        %v672 = vpop.xlane.xlu0 %671
        %v673 = vsel %vm432, %v384, 0.0
        %674 = vadd.xlane.f32.xlu0 %v673
        %v675 = vpop.xlane.xlu0 %674
        %v676 = vsel %vm432, %v385, 0.0
        %677 = vadd.xlane.f32.xlu0 %v676
        %v678 = vpop.xlane.xlu0 %677
        %v679 = vsel %vm432, %v386, 0.0
        %680 = vadd.xlane.f32.xlu0 %v679
        %v681 = vpop.xlane.xlu0 %680
        %v682 = vsel %vm432, %v387, 0.0
        %683 = vadd.xlane.f32.xlu0 %v682
        %v684 = vpop.xlane.xlu0 %683
        %v685 = vsel %vm432, %v388, 0.0
        %686 = vadd.xlane.f32.xlu0 %v685
        %v687 = vpop.xlane.xlu0 %686
        %v688 = vsel %vm432, %v389, 0.0
        %689 = vadd.xlane.f32.xlu0 %v688
        %v690 = vpop.xlane.xlu0 %689
        %v691 = vsel %vm432, %v390, 0.0
        %692 = vadd.xlane.f32.xlu0 %v691
        %v693 = vpop.xlane.xlu0 %692
        %v694 = vsel %vm432, %v391, 0.0
        %695 = vadd.xlane.f32.xlu0 %v694
        %v696 = vpop.xlane.xlu0 %695
        %v697 = vsel %vm432, %v392, 0.0
        %698 = vadd.xlane.f32.xlu0 %v697
        %v699 = vpop.xlane.xlu0 %698
        %v700 = vsel %vm432, %v393, 0.0
        %701 = vadd.xlane.f32.xlu0 %v700
        %v702 = vpop.xlane.xlu0 %701
        %v703 = vsel %vm432, %v394, 0.0
        %704 = vadd.xlane.f32.xlu0 %v703
        %v705 = vpop.xlane.xlu0 %704
        %v706 = vsel %vm432, %v395, 0.0
        %707 = vadd.xlane.f32.xlu0 %v706
        %v708 = vpop.xlane.xlu0 %707
        %v709 = vsel %vm432, %v396, 0.0
        %710 = vadd.xlane.f32.xlu0 %v709
        %v711 = vpop.xlane.xlu0 %710
        %v712 = vsel %vm432, %v397, 0.0
        %713 = vadd.xlane.f32.xlu0 %v712
        %v714 = vpop.xlane.xlu0 %713
        %v715 = vsel %vm432, %v398, 0.0
        %716 = vadd.xlane.f32.xlu0 %v715
        %v717 = vpop.xlane.xlu0 %716
        %v718 = vsel %vm432, %v399, 0.0
        %719 = vadd.xlane.f32.xlu0 %v718
        %v720 = vpop.xlane.xlu0 %719
        %v721 = vsel %vm432, %v400, 0.0
        %722 = vadd.xlane.f32.xlu0 %v721
        %v723 = vpop.xlane.xlu0 %722
        %v724 = vsel %vm432, %v401, 0.0
        %725 = vadd.xlane.f32.xlu0 %v724
        %v726 = vpop.xlane.xlu0 %725
        %v727 = vsel %vm432, %v402, 0.0
        %728 = vadd.xlane.f32.xlu0 %v727
        %v729 = vpop.xlane.xlu0 %728
        %v730 = vsel %vm432, %v403, 0.0
        %731 = vadd.xlane.f32.xlu0 %v730
        %v732 = vpop.xlane.xlu0 %731
        %v733 = vsel %vm432, %v404, 0.0
        %734 = vadd.xlane.f32.xlu0 %v733
        %v735 = vpop.xlane.xlu0 %734
        %v736 = vsel %vm432, %v405, 0.0
        %737 = vadd.xlane.f32.xlu0 %v736
        %v738 = vpop.xlane.xlu0 %737
        %v739 = vsel %vm432, %v406, 0.0
        %740 = vadd.xlane.f32.xlu0 %v739
        %v741 = vpop.xlane.xlu0 %740
        %v742 = vsel %vm432, %v407, 0.0
        %743 = vadd.xlane.f32.xlu0 %v742
        %v744 = vpop.xlane.xlu0 %743
        %v745 = vsel %vm432, %v408, 0.0
        %746 = vadd.xlane.f32.xlu0 %v745
        %v747 = vpop.xlane.xlu0 %746
        %v748 = vsel %vm432, %v409, 0.0
        %749 = vadd.xlane.f32.xlu0 %v748
        %v750 = vpop.xlane.xlu0 %749
        %v751 = vsel %vm432, %v410, 0.0
        %752 = vadd.xlane.f32.xlu0 %v751
        %v753 = vpop.xlane.xlu0 %752
        %v754 = vsel %vm432, %v411, 0.0
        %755 = vadd.xlane.f32.xlu0 %v754
        %v756 = vpop.xlane.xlu0 %755
        %v757 = vsel %vm432, %v412, 0.0
        %758 = vadd.xlane.f32.xlu0 %v757
        %v759 = vpop.xlane.xlu0 %758
        %v760 = vsel %vm432, %v413, 0.0
        %761 = vadd.xlane.f32.xlu0 %v760
        %v762 = vpop.xlane.xlu0 %761
        %v763 = vsel %vm432, %v414, 0.0
        %764 = vadd.xlane.f32.xlu0 %v763
        %v765 = vpop.xlane.xlu0 %764
        %v766 = vsel %vm432, %v415, 0.0
        %767 = vadd.xlane.f32.xlu0 %v766
        %v768 = vpop.xlane.xlu0 %767
        %v769 = vsel %vm432, %v416, 0.0
        %770 = vadd.xlane.f32.xlu0 %v769
        %v771 = vpop.xlane.xlu0 %770
        %v772 = vsel %vm432, %v417, 0.0
        %773 = vadd.xlane.f32.xlu0 %v772
        %v774 = vpop.xlane.xlu0 %773
        %v775 = vsel %vm432, %v418, 0.0
        %776 = vadd.xlane.f32.xlu0 %v775
        %v777 = vpop.xlane.xlu0 %776
        %v778 = vsel %vm432, %v419, 0.0
        %779 = vadd.xlane.f32.xlu0 %v778
        %v780 = vpop.xlane.xlu0 %779
        %v781 = vsel %vm432, %v420, 0.0
        %782 = vadd.xlane.f32.xlu0 %v781
        %v783 = vpop.xlane.xlu0 %782
        %v784 = vsel %vm432, %v421, 0.0
        %785 = vadd.xlane.f32.xlu0 %v784
        %v786 = vpop.xlane.xlu0 %785
        %v787 = vsel %vm432, %v422, 0.0
        %788 = vadd.xlane.f32.xlu0 %v787
        %v789 = vpop.xlane.xlu0 %788
        %v790 = vsel %vm432, %v423, 0.0
        %791 = vadd.xlane.f32.xlu0 %v790
        %v792 = vpop.xlane.xlu0 %791
        %v793 = vsel %vm432, %v424, 0.0
        %794 = vadd.xlane.f32.xlu0 %v793
        %v795 = vpop.xlane.xlu0 %794
        %v796 = vsel %vm432, %v425, 0.0
        %797 = vadd.xlane.f32.xlu0 %v796
        %v798 = vpop.xlane.xlu0 %797
        %v799 = vsel %vm432, %v426, 0.0
        %800 = vadd.xlane.f32.xlu0 %v799
        %v801 = vpop.xlane.xlu0 %800
        %v802 = vsel %vm432, %v427, 0.0
        %803 = vadd.xlane.f32.xlu0 %v802
        %v804 = vpop.xlane.xlu0 %803
        %v805 = vsel %vm432, %v428, 0.0
        %806 = vadd.xlane.f32.xlu0 %v805
        %v807 = vpop.xlane.xlu0 %806
        %v808 = vsel %vm432, %v429, 0.0
        %809 = vadd.xlane.f32.xlu0 %v808
        %v810 = vpop.xlane.xlu0 %809
        %v811 = vsel %vm432, %v430, 0.0
        %812 = vadd.xlane.f32.xlu0 %v811
        %v813 = vpop.xlane.xlu0 %812
        %v814 = vsel %vm432, %v431, 0.0
        %815 = vadd.xlane.f32.xlu0 %v814
        %v816 = vpop.xlane.xlu0 %815
        %v817 = vrsqrt.pop %v435
        %v818 = vrsqrt.pop %v438
        %v819 = vrsqrt.pop %v441
        %v820 = vrsqrt.pop %v444
        %v821 = vrsqrt.pop %v447
        %v822 = vrsqrt.pop %v450
        %v823 = vrsqrt.pop %v453
        %v824 = vrsqrt.pop %v456
        %v825 = vrsqrt.pop %v459
        %v826 = vrsqrt.pop %v462
        %v827 = vrsqrt.pop %v465
        %v828 = vrsqrt.pop %v468
        %v829 = vrsqrt.pop %v471
        %v830 = vrsqrt.pop %v474
        %v831 = vrsqrt.pop %v477
        %v832 = vrsqrt.pop %v480
        %v833 = vrsqrt.pop %v483
        %v834 = vrsqrt.pop %v486
        %v835 = vrsqrt.pop %v489
        %v836 = vrsqrt.pop %v492
        %v837 = vrsqrt.pop %v495
        %v838 = vrsqrt.pop %v498
        %v839 = vrsqrt.pop %v501
        %v840 = vrsqrt.pop %v504
        %v841 = vrsqrt.pop %v507
        %v842 = vrsqrt.pop %v510
        %v843 = vrsqrt.pop %v513
        %v844 = vrsqrt.pop %v516
        %v845 = vrsqrt.pop %v519
        %v846 = vrsqrt.pop %v522
        %v847 = vrsqrt.pop %v525
        %v848 = vrsqrt.pop %v528
        %v849 = vrsqrt.pop %v531
        %v850 = vrsqrt.pop %v534
        %v851 = vrsqrt.pop %v537
        %v852 = vrsqrt.pop %v540
        %v853 = vrsqrt.pop %v543
        %v854 = vrsqrt.pop %v546
        %v855 = vrsqrt.pop %v549
        %v856 = vrsqrt.pop %v552
        %v857 = vrsqrt.pop %v555
        %v858 = vrsqrt.pop %v558
        %v859 = vrsqrt.pop %v561
        %v860 = vrsqrt.pop %v564
        %v861 = vrsqrt.pop %v567
        %v862 = vrsqrt.pop %v570
        %v863 = vrsqrt.pop %v573
        %v864 = vrsqrt.pop %v576
        %v865 = vrsqrt.pop %v579
        %v866 = vrsqrt.pop %v582
        %v867 = vrsqrt.pop %v585
        %v868 = vrsqrt.pop %v588
        %v869 = vrsqrt.pop %v591
        %v870 = vrsqrt.pop %v594
        %v871 = vrsqrt.pop %v597
        %v872 = vrsqrt.pop %v600
        %v873 = vrsqrt.pop %v603
        %v874 = vrsqrt.pop %v606
        %v875 = vrsqrt.pop %v609
        %v876 = vrsqrt.pop %v612
        %v877 = vrsqrt.pop %v615
        %v878 = vrsqrt.pop %v618
        %v879 = vrsqrt.pop %v621
        %v880 = vrsqrt.pop %v624
        %v881 = vrsqrt.pop %v627
        %v882 = vrsqrt.pop %v630
        %v883 = vrsqrt.pop %v633
        %v884 = vrsqrt.pop %v636
        %v885 = vrsqrt.pop %v639
        %v886 = vrsqrt.pop %v642
        %v887 = vrsqrt.pop %v645
        %v888 = vrsqrt.pop %v648
        %v889 = vrsqrt.pop %v651
        %v890 = vrsqrt.pop %v654
        %v891 = vrsqrt.pop %v657
        %v892 = vrsqrt.pop %v660
        %v893 = vrsqrt.pop %v663
        %v894 = vrsqrt.pop %v666
        %v895 = vrsqrt.pop %v669
        %v896 = vrsqrt.pop %v672
        %v897 = vrsqrt.pop %v675
        %v898 = vrsqrt.pop %v678
        %v899 = vrsqrt.pop %v681
        %v900 = vrsqrt.pop %v684
        %v901 = vrsqrt.pop %v687
        %v902 = vrsqrt.pop %v690
        %v903 = vrsqrt.pop %v693
        %v904 = vrsqrt.pop %v696
        %v905 = vrsqrt.pop %v699
        %v906 = vrsqrt.pop %v702
        %v907 = vrsqrt.pop %v705
        %v908 = vrsqrt.pop %v708
        %v909 = vrsqrt.pop %v711
        %v910 = vrsqrt.pop %v714
        %v911 = vrsqrt.pop %v717
        %v912 = vrsqrt.pop %v720
        %v913 = vrsqrt.pop %v723
        %v914 = vrsqrt.pop %v726
        %v915 = vrsqrt.pop %v729
        %v916 = vrsqrt.pop %v732
        %v917 = vrsqrt.pop %v735
        %v918 = vrsqrt.pop %v738
        %v919 = vrsqrt.pop %v741
        %v920 = vrsqrt.pop %v744
        %v921 = vrsqrt.pop %v747
        %v922 = vrsqrt.pop %v750
        %v923 = vrsqrt.pop %v753
        %v924 = vrsqrt.pop %v756
        %v925 = vrsqrt.pop %v759
        %v926 = vrsqrt.pop %v762
        %v927 = vrsqrt.pop %v765
        %v928 = vrsqrt.pop %v768
        %v929 = vrsqrt.pop %v771
        %v930 = vrsqrt.pop %v774
        %v931 = vrsqrt.pop %v777
        %v932 = vrsqrt.pop %v780
        %v933 = vrsqrt.pop %v783
        %v934 = vrsqrt.pop %v786
        %v935 = vrsqrt.pop %v789
        %v936 = vrsqrt.pop %v792
        %v937 = vrsqrt.pop %v795
        %v938 = vrsqrt.pop %v798
        %v939 = vrsqrt.pop %v801
        %v940 = vrsqrt.pop %v804
        %v941 = vrsqrt.pop %v807
        %v942 = vrsqrt.pop %v810
        %v943 = vrsqrt.pop %v813
        %v944 = vrsqrt.pop %v816
        %v945 = vld [vmem:[%s280] sm:$0xff]
        %v946 = vld [vmem:[%s280 + $0x8] sm:$0xff]
        %v947 = vld [vmem:[%s280 + $0x10] sm:$0xff]
        %v948 = vld [vmem:[%s280 + $0x18] sm:$0xff]
        %v949 = vld [vmem:[%s280 + $0x20] sm:$0xff]
        %v950 = vld [vmem:[%s280 + $0x28] sm:$0xff]
        %v951 = vld [vmem:[%s280 + $0x30] sm:$0xff]
        %v952 = vld [vmem:[%s280 + $0x38] sm:$0xff]
        %v953 = vld [vmem:[%s280 + $0x40] sm:$0xff]
        %v954 = vld [vmem:[%s280 + $0x48] sm:$0xff]
        %v955 = vld [vmem:[%s280 + $0x50] sm:$0xff]
        %v956 = vld [vmem:[%s280 + $0x58] sm:$0xff]
        %v957 = vld [vmem:[%s280 + $0x60] sm:$0xff]
        %v958 = vld [vmem:[%s280 + $0x68] sm:$0xff]
        %v959 = vld [vmem:[%s280 + $0x70] sm:$0xff]
        %v960 = vld [vmem:[%s280 + $0x78] sm:$0xff]
        %v961 = vld [vmem:[%s280 + $0x80] sm:$0xff]
        %v962 = vld [vmem:[%s280 + $0x88] sm:$0xff]
        %v963 = vld [vmem:[%s280 + $0x90] sm:$0xff]
        %v964 = vld [vmem:[%s280 + $0x98] sm:$0xff]
        %v965 = vld [vmem:[%s280 + $0xa0] sm:$0xff]
        %v966 = vld [vmem:[%s280 + $0xa8] sm:$0xff]
        %v967 = vld [vmem:[%s280 + $0xb0] sm:$0xff]
        %v968 = vld [vmem:[%s280 + $0xb8] sm:$0xff]
        %v969 = vld [vmem:[%s280 + $0xc0] sm:$0xff]
        %v970 = vld [vmem:[%s280 + $0xc8] sm:$0xff]
        %v971 = vld [vmem:[%s280 + $0xd0] sm:$0xff]
        %v972 = vld [vmem:[%s280 + $0xd8] sm:$0xff]
        %v973 = vld [vmem:[%s280 + $0xe0] sm:$0xff]
        %v974 = vld [vmem:[%s280 + $0xe8] sm:$0xff]
        %v975 = vld [vmem:[%s280 + $0xf0] sm:$0xff]
        %v976 = vld [vmem:[%s280 + $0xf8] sm:$0xff]
        %v977 = vld [vmem:[%s280 + $0x100] sm:$0xff]
        %v978 = vld [vmem:[%s280 + $0x108] sm:$0xff]
        %v979 = vld [vmem:[%s280 + $0x110] sm:$0xff]
        %v980 = vld [vmem:[%s280 + $0x118] sm:$0xff]
        %v981 = vld [vmem:[%s280 + $0x120] sm:$0xff]
        %v982 = vld [vmem:[%s280 + $0x128] sm:$0xff]
        %v983 = vld [vmem:[%s280 + $0x130] sm:$0xff]
        %v984 = vld [vmem:[%s280 + $0x138] sm:$0xff]
        %v985 = vld [vmem:[%s280 + $0x140] sm:$0xff]
        %v986 = vld [vmem:[%s280 + $0x148] sm:$0xff]
        %v987 = vld [vmem:[%s280 + $0x150] sm:$0xff]
        %v988 = vld [vmem:[%s280 + $0x158] sm:$0xff]
        %v989 = vld [vmem:[%s280 + $0x160] sm:$0xff]
        %v990 = vld [vmem:[%s280 + $0x168] sm:$0xff]
        %v991 = vld [vmem:[%s280 + $0x170] sm:$0xff]
        %v992 = vld [vmem:[%s280 + $0x178] sm:$0xff]
        %v993 = vld [vmem:[%s280 + $0x180] sm:$0xff]
        %v994 = vld [vmem:[%s280 + $0x188] sm:$0xff]
        %v995 = vld [vmem:[%s280 + $0x190] sm:$0xff]
        %v996 = vld [vmem:[%s280 + $0x198] sm:$0xff]
        %v997 = vld [vmem:[%s280 + $0x1a0] sm:$0xff]
        %v998 = vld [vmem:[%s280 + $0x1a8] sm:$0xff]
        %v999 = vld [vmem:[%s280 + $0x1b0] sm:$0xff]
        %v1000 = vld [vmem:[%s280 + $0x1b8] sm:$0xff]
        %v1001 = vld [vmem:[%s280 + $0x1c0] sm:$0xff]
        %v1002 = vld [vmem:[%s280 + $0x1c8] sm:$0xff]
        %v1003 = vld [vmem:[%s280 + $0x1d0] sm:$0xff]
        %v1004 = vld [vmem:[%s280 + $0x1d8] sm:$0xff]
        %v1005 = vld [vmem:[%s280 + $0x1e0] sm:$0xff]
        %v1006 = vld [vmem:[%s280 + $0x1e8] sm:$0xff]
        %v1007 = vld [vmem:[%s280 + $0x1f0] sm:$0xff]
        %v1008 = vld [vmem:[%s280 + $0x1f8] sm:$0xff]
        %v1009 = vld [vmem:[%s280 + $0x200] sm:$0xff]
        %v1010 = vld [vmem:[%s280 + $0x208] sm:$0xff]
        %v1011 = vld [vmem:[%s280 + $0x210] sm:$0xff]
        %v1012 = vld [vmem:[%s280 + $0x218] sm:$0xff]
        %v1013 = vld [vmem:[%s280 + $0x220] sm:$0xff]
        %v1014 = vld [vmem:[%s280 + $0x228] sm:$0xff]
        %v1015 = vld [vmem:[%s280 + $0x230] sm:$0xff]
        %v1016 = vld [vmem:[%s280 + $0x238] sm:$0xff]
        %v1017 = vld [vmem:[%s280 + $0x240] sm:$0xff]
        %v1018 = vld [vmem:[%s280 + $0x248] sm:$0xff]
        %v1019 = vld [vmem:[%s280 + $0x250] sm:$0xff]
        %v1020 = vld [vmem:[%s280 + $0x258] sm:$0xff]
        %v1021 = vld [vmem:[%s280 + $0x260] sm:$0xff]
        %v1022 = vld [vmem:[%s280 + $0x268] sm:$0xff]
        %v1023 = vld [vmem:[%s280 + $0x270] sm:$0xff]
        %v1024 = vld [vmem:[%s280 + $0x278] sm:$0xff]
        %v1025 = vld [vmem:[%s280 + $0x280] sm:$0xff]
        %v1026 = vld [vmem:[%s280 + $0x288] sm:$0xff]
        %v1027 = vld [vmem:[%s280 + $0x290] sm:$0xff]
        %v1028 = vld [vmem:[%s280 + $0x298] sm:$0xff]
        %v1029 = vld [vmem:[%s280 + $0x2a0] sm:$0xff]
        %v1030 = vld [vmem:[%s280 + $0x2a8] sm:$0xff]
        %v1031 = vld [vmem:[%s280 + $0x2b0] sm:$0xff]
        %v1032 = vld [vmem:[%s280 + $0x2b8] sm:$0xff]
        %v1033 = vld [vmem:[%s280 + $0x2c0] sm:$0xff]
        %v1034 = vld [vmem:[%s280 + $0x2c8] sm:$0xff]
        %v1035 = vld [vmem:[%s280 + $0x2d0] sm:$0xff]
        %v1036 = vld [vmem:[%s280 + $0x2d8] sm:$0xff]
        %v1037 = vld [vmem:[%s280 + $0x2e0] sm:$0xff]
        %v1038 = vld [vmem:[%s280 + $0x2e8] sm:$0xff]
        %v1039 = vld [vmem:[%s280 + $0x2f0] sm:$0xff]
        %v1040 = vld [vmem:[%s280 + $0x2f8] sm:$0xff]
        %v1041 = vld [vmem:[%s280 + $0x300] sm:$0xff]
        %v1042 = vld [vmem:[%s280 + $0x308] sm:$0xff]
        %v1043 = vld [vmem:[%s280 + $0x310] sm:$0xff]
        %v1044 = vld [vmem:[%s280 + $0x318] sm:$0xff]
        %v1045 = vld [vmem:[%s280 + $0x320] sm:$0xff]
        %v1046 = vld [vmem:[%s280 + $0x328] sm:$0xff]
        %v1047 = vld [vmem:[%s280 + $0x330] sm:$0xff]
        %v1048 = vld [vmem:[%s280 + $0x338] sm:$0xff]
        %v1049 = vld [vmem:[%s280 + $0x340] sm:$0xff]
        %v1050 = vld [vmem:[%s280 + $0x348] sm:$0xff]
        %v1051 = vld [vmem:[%s280 + $0x350] sm:$0xff]
        %v1052 = vld [vmem:[%s280 + $0x358] sm:$0xff]
        %v1053 = vld [vmem:[%s280 + $0x360] sm:$0xff]
        %v1054 = vld [vmem:[%s280 + $0x368] sm:$0xff]
        %v1055 = vld [vmem:[%s280 + $0x370] sm:$0xff]
        %v1056 = vld [vmem:[%s280 + $0x378] sm:$0xff]
        %v1057 = vld [vmem:[%s280 + $0x380] sm:$0xff]
        %v1058 = vld [vmem:[%s280 + $0x388] sm:$0xff]
        %v1059 = vld [vmem:[%s280 + $0x390] sm:$0xff]
        %v1060 = vld [vmem:[%s280 + $0x398] sm:$0xff]
        %v1061 = vld [vmem:[%s280 + $0x3a0] sm:$0xff]
        %v1062 = vld [vmem:[%s280 + $0x3a8] sm:$0xff]
        %v1063 = vld [vmem:[%s280 + $0x3b0] sm:$0xff]
        %v1064 = vld [vmem:[%s280 + $0x3b8] sm:$0xff]
        %v1065 = vld [vmem:[%s280 + $0x3c0] sm:$0xff]
        %v1066 = vld [vmem:[%s280 + $0x3c8] sm:$0xff]
        %v1067 = vld [vmem:[%s280 + $0x3d0] sm:$0xff]
        %v1068 = vld [vmem:[%s280 + $0x3d8] sm:$0xff]
        %v1069 = vld [vmem:[%s280 + $0x3e0] sm:$0xff]
        %v1070 = vld [vmem:[%s280 + $0x3e8] sm:$0xff]
        %v1071 = vld [vmem:[%s280 + $0x3f0] sm:$0xff]
        %v1072 = vld [vmem:[%s280 + $0x3f8] sm:$0xff]
        %v1073 = vld [vmem:[%s287] sm:$0xff]
        %v1074 = vld [vmem:[%s287 + $0x8] sm:$0xff]
        %v1075 = vld [vmem:[%s287 + $0x10] sm:$0xff]
        %v1076 = vld [vmem:[%s287 + $0x18] sm:$0xff]
        %v1077 = vld [vmem:[%s287 + $0x20] sm:$0xff]
        %v1078 = vld [vmem:[%s287 + $0x28] sm:$0xff]
        %v1079 = vld [vmem:[%s287 + $0x30] sm:$0xff]
        %v1080 = vld [vmem:[%s287 + $0x38] sm:$0xff]
        %v1081 = vld [vmem:[%s287 + $0x40] sm:$0xff]
        %v1082 = vld [vmem:[%s287 + $0x48] sm:$0xff]
        %v1083 = vld [vmem:[%s287 + $0x50] sm:$0xff]
        %v1084 = vld [vmem:[%s287 + $0x58] sm:$0xff]
        %v1085 = vld [vmem:[%s287 + $0x60] sm:$0xff]
        %v1086 = vld [vmem:[%s287 + $0x68] sm:$0xff]
        %v1087 = vld [vmem:[%s287 + $0x70] sm:$0xff]
        %v1088 = vld [vmem:[%s287 + $0x78] sm:$0xff]
        %v1089 = vld [vmem:[%s287 + $0x80] sm:$0xff]
        %v1090 = vld [vmem:[%s287 + $0x88] sm:$0xff]
        %v1091 = vld [vmem:[%s287 + $0x90] sm:$0xff]
        %v1092 = vld [vmem:[%s287 + $0x98] sm:$0xff]
        %v1093 = vld [vmem:[%s287 + $0xa0] sm:$0xff]
        %v1094 = vld [vmem:[%s287 + $0xa8] sm:$0xff]
        %v1095 = vld [vmem:[%s287 + $0xb0] sm:$0xff]
        %v1096 = vld [vmem:[%s287 + $0xb8] sm:$0xff]
        %v1097 = vld [vmem:[%s287 + $0xc0] sm:$0xff]
        %v1098 = vld [vmem:[%s287 + $0xc8] sm:$0xff]
        %v1099 = vld [vmem:[%s287 + $0xd0] sm:$0xff]
        %v1100 = vld [vmem:[%s287 + $0xd8] sm:$0xff]
        %v1101 = vld [vmem:[%s287 + $0xe0] sm:$0xff]
        %v1102 = vld [vmem:[%s287 + $0xe8] sm:$0xff]
        %v1103 = vld [vmem:[%s287 + $0xf0] sm:$0xff]
        %v1104 = vld [vmem:[%s287 + $0xf8] sm:$0xff]
        %v1105 = vld [vmem:[%s287 + $0x100] sm:$0xff]
        %v1106 = vld [vmem:[%s287 + $0x108] sm:$0xff]
        %v1107 = vld [vmem:[%s287 + $0x110] sm:$0xff]
        %v1108 = vld [vmem:[%s287 + $0x118] sm:$0xff]
        %v1109 = vld [vmem:[%s287 + $0x120] sm:$0xff]
        %v1110 = vld [vmem:[%s287 + $0x128] sm:$0xff]
        %v1111 = vld [vmem:[%s287 + $0x130] sm:$0xff]
        %v1112 = vld [vmem:[%s287 + $0x138] sm:$0xff]
        %v1113 = vld [vmem:[%s287 + $0x140] sm:$0xff]
        %v1114 = vld [vmem:[%s287 + $0x148] sm:$0xff]
        %v1115 = vld [vmem:[%s287 + $0x150] sm:$0xff]
        %v1116 = vld [vmem:[%s287 + $0x158] sm:$0xff]
        %v1117 = vld [vmem:[%s287 + $0x160] sm:$0xff]
        %v1118 = vld [vmem:[%s287 + $0x168] sm:$0xff]
        %v1119 = vld [vmem:[%s287 + $0x170] sm:$0xff]
        %v1120 = vld [vmem:[%s287 + $0x178] sm:$0xff]
        %v1121 = vld [vmem:[%s287 + $0x180] sm:$0xff]
        %v1122 = vld [vmem:[%s287 + $0x188] sm:$0xff]
        %v1123 = vld [vmem:[%s287 + $0x190] sm:$0xff]
        %v1124 = vld [vmem:[%s287 + $0x198] sm:$0xff]
        %v1125 = vld [vmem:[%s287 + $0x1a0] sm:$0xff]
        %v1126 = vld [vmem:[%s287 + $0x1a8] sm:$0xff]
        %v1127 = vld [vmem:[%s287 + $0x1b0] sm:$0xff]
        %v1128 = vld [vmem:[%s287 + $0x1b8] sm:$0xff]
        %v1129 = vld [vmem:[%s287 + $0x1c0] sm:$0xff]
        %v1130 = vld [vmem:[%s287 + $0x1c8] sm:$0xff]
        %v1131 = vld [vmem:[%s287 + $0x1d0] sm:$0xff]
        %v1132 = vld [vmem:[%s287 + $0x1d8] sm:$0xff]
        %v1133 = vld [vmem:[%s287 + $0x1e0] sm:$0xff]
        %v1134 = vld [vmem:[%s287 + $0x1e8] sm:$0xff]
        %v1135 = vld [vmem:[%s287 + $0x1f0] sm:$0xff]
        %v1136 = vld [vmem:[%s287 + $0x1f8] sm:$0xff]
        %v1137 = vld [vmem:[%s287 + $0x200] sm:$0xff]
        %v1138 = vld [vmem:[%s287 + $0x208] sm:$0xff]
        %v1139 = vld [vmem:[%s287 + $0x210] sm:$0xff]
        %v1140 = vld [vmem:[%s287 + $0x218] sm:$0xff]
        %v1141 = vld [vmem:[%s287 + $0x220] sm:$0xff]
        %v1142 = vld [vmem:[%s287 + $0x228] sm:$0xff]
        %v1143 = vld [vmem:[%s287 + $0x230] sm:$0xff]
        %v1144 = vld [vmem:[%s287 + $0x238] sm:$0xff]
        %v1145 = vld [vmem:[%s287 + $0x240] sm:$0xff]
        %v1146 = vld [vmem:[%s287 + $0x248] sm:$0xff]
        %v1147 = vld [vmem:[%s287 + $0x250] sm:$0xff]
        %v1148 = vld [vmem:[%s287 + $0x258] sm:$0xff]
        %v1149 = vld [vmem:[%s287 + $0x260] sm:$0xff]
        %v1150 = vld [vmem:[%s287 + $0x268] sm:$0xff]
        %v1151 = vld [vmem:[%s287 + $0x270] sm:$0xff]
        %v1152 = vld [vmem:[%s287 + $0x278] sm:$0xff]
        %v1153 = vld [vmem:[%s287 + $0x280] sm:$0xff]
        %v1154 = vld [vmem:[%s287 + $0x288] sm:$0xff]
        %v1155 = vld [vmem:[%s287 + $0x290] sm:$0xff]
        %v1156 = vld [vmem:[%s287 + $0x298] sm:$0xff]
        %v1157 = vld [vmem:[%s287 + $0x2a0] sm:$0xff]
        %v1158 = vld [vmem:[%s287 + $0x2a8] sm:$0xff]
        %v1159 = vld [vmem:[%s287 + $0x2b0] sm:$0xff]
        %v1160 = vld [vmem:[%s287 + $0x2b8] sm:$0xff]
        %v1161 = vld [vmem:[%s287 + $0x2c0] sm:$0xff]
        %v1162 = vld [vmem:[%s287 + $0x2c8] sm:$0xff]
        %v1163 = vld [vmem:[%s287 + $0x2d0] sm:$0xff]
        %v1164 = vld [vmem:[%s287 + $0x2d8] sm:$0xff]
        %v1165 = vld [vmem:[%s287 + $0x2e0] sm:$0xff]
        %v1166 = vld [vmem:[%s287 + $0x2e8] sm:$0xff]
        %v1167 = vld [vmem:[%s287 + $0x2f0] sm:$0xff]
        %v1168 = vld [vmem:[%s287 + $0x2f8] sm:$0xff]
        %v1169 = vld [vmem:[%s287 + $0x300] sm:$0xff]
        %v1170 = vld [vmem:[%s287 + $0x308] sm:$0xff]
        %v1171 = vld [vmem:[%s287 + $0x310] sm:$0xff]
        %v1172 = vld [vmem:[%s287 + $0x318] sm:$0xff]
        %v1173 = vld [vmem:[%s287 + $0x320] sm:$0xff]
        %v1174 = vld [vmem:[%s287 + $0x328] sm:$0xff]
        %v1175 = vld [vmem:[%s287 + $0x330] sm:$0xff]
        %v1176 = vld [vmem:[%s287 + $0x338] sm:$0xff]
        %v1177 = vld [vmem:[%s287 + $0x340] sm:$0xff]
        %v1178 = vld [vmem:[%s287 + $0x348] sm:$0xff]
        %v1179 = vld [vmem:[%s287 + $0x350] sm:$0xff]
        %v1180 = vld [vmem:[%s287 + $0x358] sm:$0xff]
        %v1181 = vld [vmem:[%s287 + $0x360] sm:$0xff]
        %v1182 = vld [vmem:[%s287 + $0x368] sm:$0xff]
        %v1183 = vld [vmem:[%s287 + $0x370] sm:$0xff]
        %v1184 = vld [vmem:[%s287 + $0x378] sm:$0xff]
        %v1185 = vld [vmem:[%s287 + $0x380] sm:$0xff]
        %v1186 = vld [vmem:[%s287 + $0x388] sm:$0xff]
        %v1187 = vld [vmem:[%s287 + $0x390] sm:$0xff]
        %v1188 = vld [vmem:[%s287 + $0x398] sm:$0xff]
        %v1189 = vld [vmem:[%s287 + $0x3a0] sm:$0xff]
        %v1190 = vld [vmem:[%s287 + $0x3a8] sm:$0xff]
        %v1191 = vld [vmem:[%s287 + $0x3b0] sm:$0xff]
        %v1192 = vld [vmem:[%s287 + $0x3b8] sm:$0xff]
        %v1193 = vld [vmem:[%s287 + $0x3c0] sm:$0xff]
        %v1194 = vld [vmem:[%s287 + $0x3c8] sm:$0xff]
        %v1195 = vld [vmem:[%s287 + $0x3d0] sm:$0xff]
        %v1196 = vld [vmem:[%s287 + $0x3d8] sm:$0xff]
        %v1197 = vld [vmem:[%s287 + $0x3e0] sm:$0xff]
        %v1198 = vld [vmem:[%s287 + $0x3e8] sm:$0xff]
        %v1199 = vld [vmem:[%s287 + $0x3f0] sm:$0xff]
        %v1200 = vld [vmem:[%s287 + $0x3f8] sm:$0xff]
        %v1201 = vmul.f32 %v945, %v1073
        %v1202 = vmul.f32 %v946, %v1074
        %v1203 = vmul.f32 %v947, %v1075
        %v1204 = vmul.f32 %v948, %v1076
        %v1205 = vmul.f32 %v949, %v1077
        %v1206 = vmul.f32 %v950, %v1078
        %v1207 = vmul.f32 %v951, %v1079
        %v1208 = vmul.f32 %v952, %v1080
        %v1209 = vmul.f32 %v953, %v1081
        %v1210 = vmul.f32 %v954, %v1082
        %v1211 = vmul.f32 %v955, %v1083
        %v1212 = vmul.f32 %v956, %v1084
        %v1213 = vmul.f32 %v957, %v1085
        %v1214 = vmul.f32 %v958, %v1086
        %v1215 = vmul.f32 %v959, %v1087
        %v1216 = vmul.f32 %v960, %v1088
        %v1217 = vmul.f32 %v961, %v1089
        %v1218 = vmul.f32 %v962, %v1090
        %v1219 = vmul.f32 %v963, %v1091
        %v1220 = vmul.f32 %v964, %v1092
        %v1221 = vmul.f32 %v965, %v1093
        %v1222 = vmul.f32 %v966, %v1094
        %v1223 = vmul.f32 %v967, %v1095
        %v1224 = vmul.f32 %v968, %v1096
        %v1225 = vmul.f32 %v969, %v1097
        %v1226 = vmul.f32 %v970, %v1098
        %v1227 = vmul.f32 %v971, %v1099
        %v1228 = vmul.f32 %v972, %v1100
        %v1229 = vmul.f32 %v973, %v1101
        %v1230 = vmul.f32 %v974, %v1102
        %v1231 = vmul.f32 %v975, %v1103
        %v1232 = vmul.f32 %v976, %v1104
        %v1233 = vmul.f32 %v977, %v1105
        %v1234 = vmul.f32 %v978, %v1106
        %v1235 = vmul.f32 %v979, %v1107
        %v1236 = vmul.f32 %v980, %v1108
        %v1237 = vmul.f32 %v981, %v1109
        %v1238 = vmul.f32 %v982, %v1110
        %v1239 = vmul.f32 %v983, %v1111
        %v1240 = vmul.f32 %v984, %v1112
        %v1241 = vmul.f32 %v985, %v1113
        %v1242 = vmul.f32 %v986, %v1114
        %v1243 = vmul.f32 %v987, %v1115
        %v1244 = vmul.f32 %v988, %v1116
        %v1245 = vmul.f32 %v989, %v1117
        %v1246 = vmul.f32 %v990, %v1118
        %v1247 = vmul.f32 %v991, %v1119
        %v1248 = vmul.f32 %v992, %v1120
        %v1249 = vmul.f32 %v993, %v1121
        %v1250 = vmul.f32 %v994, %v1122
        %v1251 = vmul.f32 %v995, %v1123
        %v1252 = vmul.f32 %v996, %v1124
        %v1253 = vmul.f32 %v997, %v1125
        %v1254 = vmul.f32 %v998, %v1126
        %v1255 = vmul.f32 %v999, %v1127
        %v1256 = vmul.f32 %v1000, %v1128
        %v1257 = vmul.f32 %v1001, %v1129
        %v1258 = vmul.f32 %v1002, %v1130
        %v1259 = vmul.f32 %v1003, %v1131
        %v1260 = vmul.f32 %v1004, %v1132
        %v1261 = vmul.f32 %v1005, %v1133
        %v1262 = vmul.f32 %v1006, %v1134
        %v1263 = vmul.f32 %v1007, %v1135
        %v1264 = vmul.f32 %v1008, %v1136
        %v1265 = vmul.f32 %v1009, %v1137
        %v1266 = vmul.f32 %v1010, %v1138
        %v1267 = vmul.f32 %v1011, %v1139
        %v1268 = vmul.f32 %v1012, %v1140
        %v1269 = vmul.f32 %v1013, %v1141
        %v1270 = vmul.f32 %v1014, %v1142
        %v1271 = vmul.f32 %v1015, %v1143
        %v1272 = vmul.f32 %v1016, %v1144
        %v1273 = vmul.f32 %v1017, %v1145
        %v1274 = vmul.f32 %v1018, %v1146
        %v1275 = vmul.f32 %v1019, %v1147
        %v1276 = vmul.f32 %v1020, %v1148
        %v1277 = vmul.f32 %v1021, %v1149
        %v1278 = vmul.f32 %v1022, %v1150
        %v1279 = vmul.f32 %v1023, %v1151
        %v1280 = vmul.f32 %v1024, %v1152
        %v1281 = vmul.f32 %v1025, %v1153
        %v1282 = vmul.f32 %v1026, %v1154
        %v1283 = vmul.f32 %v1027, %v1155
        %v1284 = vmul.f32 %v1028, %v1156
        %v1285 = vmul.f32 %v1029, %v1157
        %v1286 = vmul.f32 %v1030, %v1158
        %v1287 = vmul.f32 %v1031, %v1159
        %v1288 = vmul.f32 %v1032, %v1160
        %v1289 = vmul.f32 %v1033, %v1161
        %v1290 = vmul.f32 %v1034, %v1162
        %v1291 = vmul.f32 %v1035, %v1163
        %v1292 = vmul.f32 %v1036, %v1164
        %v1293 = vmul.f32 %v1037, %v1165
        %v1294 = vmul.f32 %v1038, %v1166
        %v1295 = vmul.f32 %v1039, %v1167
        %v1296 = vmul.f32 %v1040, %v1168
        %v1297 = vmul.f32 %v1041, %v1169
        %v1298 = vmul.f32 %v1042, %v1170
        %v1299 = vmul.f32 %v1043, %v1171
        %v1300 = vmul.f32 %v1044, %v1172
        %v1301 = vmul.f32 %v1045, %v1173
        %v1302 = vmul.f32 %v1046, %v1174
        %v1303 = vmul.f32 %v1047, %v1175
        %v1304 = vmul.f32 %v1048, %v1176
        %v1305 = vmul.f32 %v1049, %v1177
        %v1306 = vmul.f32 %v1050, %v1178
        %v1307 = vmul.f32 %v1051, %v1179
        %v1308 = vmul.f32 %v1052, %v1180
        %v1309 = vmul.f32 %v1053, %v1181
        %v1310 = vmul.f32 %v1054, %v1182
        %v1311 = vmul.f32 %v1055, %v1183
        %v1312 = vmul.f32 %v1056, %v1184
        %v1313 = vmul.f32 %v1057, %v1185
        %v1314 = vmul.f32 %v1058, %v1186
        %v1315 = vmul.f32 %v1059, %v1187
        %v1316 = vmul.f32 %v1060, %v1188
        %v1317 = vmul.f32 %v1061, %v1189
        %v1318 = vmul.f32 %v1062, %v1190
        %v1319 = vmul.f32 %v1063, %v1191
        %v1320 = vmul.f32 %v1064, %v1192
        %v1321 = vmul.f32 %v1065, %v1193
        %v1322 = vmul.f32 %v1066, %v1194
        %v1323 = vmul.f32 %v1067, %v1195
        %v1324 = vmul.f32 %v1068, %v1196
        %v1325 = vmul.f32 %v1069, %v1197
        %v1326 = vmul.f32 %v1070, %v1198
        %v1327 = vmul.f32 %v1071, %v1199
        %v1328 = vmul.f32 %v1072, %v1200
        %v1329 = vld [vmem:[%s294] sm:$0xff]
        %v1330 = vld [vmem:[%s294 + $0x8] sm:$0xff]
        %v1331 = vld [vmem:[%s294 + $0x10] sm:$0xff]
        %v1332 = vld [vmem:[%s294 + $0x18] sm:$0xff]
        %v1333 = vld [vmem:[%s294 + $0x20] sm:$0xff]
        %v1334 = vld [vmem:[%s294 + $0x28] sm:$0xff]
        %v1335 = vld [vmem:[%s294 + $0x30] sm:$0xff]
        %v1336 = vld [vmem:[%s294 + $0x38] sm:$0xff]
        %v1337 = vld [vmem:[%s294 + $0x40] sm:$0xff]
        %v1338 = vld [vmem:[%s294 + $0x48] sm:$0xff]
        %v1339 = vld [vmem:[%s294 + $0x50] sm:$0xff]
        %v1340 = vld [vmem:[%s294 + $0x58] sm:$0xff]
        %v1341 = vld [vmem:[%s294 + $0x60] sm:$0xff]
        %v1342 = vld [vmem:[%s294 + $0x68] sm:$0xff]
        %v1343 = vld [vmem:[%s294 + $0x70] sm:$0xff]
        %v1344 = vld [vmem:[%s294 + $0x78] sm:$0xff]
        %v1345 = vld [vmem:[%s294 + $0x80] sm:$0xff]
        %v1346 = vld [vmem:[%s294 + $0x88] sm:$0xff]
        %v1347 = vld [vmem:[%s294 + $0x90] sm:$0xff]
        %v1348 = vld [vmem:[%s294 + $0x98] sm:$0xff]
        %v1349 = vld [vmem:[%s294 + $0xa0] sm:$0xff]
        %v1350 = vld [vmem:[%s294 + $0xa8] sm:$0xff]
        %v1351 = vld [vmem:[%s294 + $0xb0] sm:$0xff]
        %v1352 = vld [vmem:[%s294 + $0xb8] sm:$0xff]
        %v1353 = vld [vmem:[%s294 + $0xc0] sm:$0xff]
        %v1354 = vld [vmem:[%s294 + $0xc8] sm:$0xff]
        %v1355 = vld [vmem:[%s294 + $0xd0] sm:$0xff]
        %v1356 = vld [vmem:[%s294 + $0xd8] sm:$0xff]
        %v1357 = vld [vmem:[%s294 + $0xe0] sm:$0xff]
        %v1358 = vld [vmem:[%s294 + $0xe8] sm:$0xff]
        %v1359 = vld [vmem:[%s294 + $0xf0] sm:$0xff]
        %v1360 = vld [vmem:[%s294 + $0xf8] sm:$0xff]
        %v1361 = vld [vmem:[%s294 + $0x100] sm:$0xff]
        %v1362 = vld [vmem:[%s294 + $0x108] sm:$0xff]
        %v1363 = vld [vmem:[%s294 + $0x110] sm:$0xff]
        %v1364 = vld [vmem:[%s294 + $0x118] sm:$0xff]
        %v1365 = vld [vmem:[%s294 + $0x120] sm:$0xff]
        %v1366 = vld [vmem:[%s294 + $0x128] sm:$0xff]
        %v1367 = vld [vmem:[%s294 + $0x130] sm:$0xff]
        %v1368 = vld [vmem:[%s294 + $0x138] sm:$0xff]
        %v1369 = vld [vmem:[%s294 + $0x140] sm:$0xff]
        %v1370 = vld [vmem:[%s294 + $0x148] sm:$0xff]
        %v1371 = vld [vmem:[%s294 + $0x150] sm:$0xff]
        %v1372 = vld [vmem:[%s294 + $0x158] sm:$0xff]
        %v1373 = vld [vmem:[%s294 + $0x160] sm:$0xff]
        %v1374 = vld [vmem:[%s294 + $0x168] sm:$0xff]
        %v1375 = vld [vmem:[%s294 + $0x170] sm:$0xff]
        %v1376 = vld [vmem:[%s294 + $0x178] sm:$0xff]
        %v1377 = vld [vmem:[%s294 + $0x180] sm:$0xff]
        %v1378 = vld [vmem:[%s294 + $0x188] sm:$0xff]
        %v1379 = vld [vmem:[%s294 + $0x190] sm:$0xff]
        %v1380 = vld [vmem:[%s294 + $0x198] sm:$0xff]
        %v1381 = vld [vmem:[%s294 + $0x1a0] sm:$0xff]
        %v1382 = vld [vmem:[%s294 + $0x1a8] sm:$0xff]
        %v1383 = vld [vmem:[%s294 + $0x1b0] sm:$0xff]
        %v1384 = vld [vmem:[%s294 + $0x1b8] sm:$0xff]
        %v1385 = vld [vmem:[%s294 + $0x1c0] sm:$0xff]
        %v1386 = vld [vmem:[%s294 + $0x1c8] sm:$0xff]
        %v1387 = vld [vmem:[%s294 + $0x1d0] sm:$0xff]
        %v1388 = vld [vmem:[%s294 + $0x1d8] sm:$0xff]
        %v1389 = vld [vmem:[%s294 + $0x1e0] sm:$0xff]
        %v1390 = vld [vmem:[%s294 + $0x1e8] sm:$0xff]
        %v1391 = vld [vmem:[%s294 + $0x1f0] sm:$0xff]
        %v1392 = vld [vmem:[%s294 + $0x1f8] sm:$0xff]
        %v1393 = vld [vmem:[%s294 + $0x200] sm:$0xff]
        %v1394 = vld [vmem:[%s294 + $0x208] sm:$0xff]
        %v1395 = vld [vmem:[%s294 + $0x210] sm:$0xff]
        %v1396 = vld [vmem:[%s294 + $0x218] sm:$0xff]
        %v1397 = vld [vmem:[%s294 + $0x220] sm:$0xff]
        %v1398 = vld [vmem:[%s294 + $0x228] sm:$0xff]
        %v1399 = vld [vmem:[%s294 + $0x230] sm:$0xff]
        %v1400 = vld [vmem:[%s294 + $0x238] sm:$0xff]
        %v1401 = vld [vmem:[%s294 + $0x240] sm:$0xff]
        %v1402 = vld [vmem:[%s294 + $0x248] sm:$0xff]
        %v1403 = vld [vmem:[%s294 + $0x250] sm:$0xff]
        %v1404 = vld [vmem:[%s294 + $0x258] sm:$0xff]
        %v1405 = vld [vmem:[%s294 + $0x260] sm:$0xff]
        %v1406 = vld [vmem:[%s294 + $0x268] sm:$0xff]
        %v1407 = vld [vmem:[%s294 + $0x270] sm:$0xff]
        %v1408 = vld [vmem:[%s294 + $0x278] sm:$0xff]
        %v1409 = vld [vmem:[%s294 + $0x280] sm:$0xff]
        %v1410 = vld [vmem:[%s294 + $0x288] sm:$0xff]
        %v1411 = vld [vmem:[%s294 + $0x290] sm:$0xff]
        %v1412 = vld [vmem:[%s294 + $0x298] sm:$0xff]
        %v1413 = vld [vmem:[%s294 + $0x2a0] sm:$0xff]
        %v1414 = vld [vmem:[%s294 + $0x2a8] sm:$0xff]
        %v1415 = vld [vmem:[%s294 + $0x2b0] sm:$0xff]
        %v1416 = vld [vmem:[%s294 + $0x2b8] sm:$0xff]
        %v1417 = vld [vmem:[%s294 + $0x2c0] sm:$0xff]
        %v1418 = vld [vmem:[%s294 + $0x2c8] sm:$0xff]
        %v1419 = vld [vmem:[%s294 + $0x2d0] sm:$0xff]
        %v1420 = vld [vmem:[%s294 + $0x2d8] sm:$0xff]
        %v1421 = vld [vmem:[%s294 + $0x2e0] sm:$0xff]
        %v1422 = vld [vmem:[%s294 + $0x2e8] sm:$0xff]
        %v1423 = vld [vmem:[%s294 + $0x2f0] sm:$0xff]
        %v1424 = vld [vmem:[%s294 + $0x2f8] sm:$0xff]
        %v1425 = vld [vmem:[%s294 + $0x300] sm:$0xff]
        %v1426 = vld [vmem:[%s294 + $0x308] sm:$0xff]
        %v1427 = vld [vmem:[%s294 + $0x310] sm:$0xff]
        %v1428 = vld [vmem:[%s294 + $0x318] sm:$0xff]
        %v1429 = vld [vmem:[%s294 + $0x320] sm:$0xff]
        %v1430 = vld [vmem:[%s294 + $0x328] sm:$0xff]
        %v1431 = vld [vmem:[%s294 + $0x330] sm:$0xff]
        %v1432 = vld [vmem:[%s294 + $0x338] sm:$0xff]
        %v1433 = vld [vmem:[%s294 + $0x340] sm:$0xff]
        %v1434 = vld [vmem:[%s294 + $0x348] sm:$0xff]
        %v1435 = vld [vmem:[%s294 + $0x350] sm:$0xff]
        %v1436 = vld [vmem:[%s294 + $0x358] sm:$0xff]
        %v1437 = vld [vmem:[%s294 + $0x360] sm:$0xff]
        %v1438 = vld [vmem:[%s294 + $0x368] sm:$0xff]
        %v1439 = vld [vmem:[%s294 + $0x370] sm:$0xff]
        %v1440 = vld [vmem:[%s294 + $0x378] sm:$0xff]
        %v1441 = vld [vmem:[%s294 + $0x380] sm:$0xff]
        %v1442 = vld [vmem:[%s294 + $0x388] sm:$0xff]
        %v1443 = vld [vmem:[%s294 + $0x390] sm:$0xff]
        %v1444 = vld [vmem:[%s294 + $0x398] sm:$0xff]
        %v1445 = vld [vmem:[%s294 + $0x3a0] sm:$0xff]
        %v1446 = vld [vmem:[%s294 + $0x3a8] sm:$0xff]
        %v1447 = vld [vmem:[%s294 + $0x3b0] sm:$0xff]
        %v1448 = vld [vmem:[%s294 + $0x3b8] sm:$0xff]
        %v1449 = vld [vmem:[%s294 + $0x3c0] sm:$0xff]
        %v1450 = vld [vmem:[%s294 + $0x3c8] sm:$0xff]
        %v1451 = vld [vmem:[%s294 + $0x3d0] sm:$0xff]
        %v1452 = vld [vmem:[%s294 + $0x3d8] sm:$0xff]
        %v1453 = vld [vmem:[%s294 + $0x3e0] sm:$0xff]
        %v1454 = vld [vmem:[%s294 + $0x3e8] sm:$0xff]
        %v1455 = vld [vmem:[%s294 + $0x3f0] sm:$0xff]
        %v1456 = vld [vmem:[%s294 + $0x3f8] sm:$0xff]
        %v1457 = vmul.f32 %v817, %v1329
        %v1458 = vmul.f32 %v818, %v1330
        %v1459 = vmul.f32 %v819, %v1331
        %v1460 = vmul.f32 %v820, %v1332
        %v1461 = vmul.f32 %v821, %v1333
        %v1462 = vmul.f32 %v822, %v1334
        %v1463 = vmul.f32 %v823, %v1335
        %v1464 = vmul.f32 %v824, %v1336
        %v1465 = vmul.f32 %v825, %v1337
        %v1466 = vmul.f32 %v826, %v1338
        %v1467 = vmul.f32 %v827, %v1339
        %v1468 = vmul.f32 %v828, %v1340
        %v1469 = vmul.f32 %v829, %v1341
        %v1470 = vmul.f32 %v830, %v1342
        %v1471 = vmul.f32 %v831, %v1343
        %v1472 = vmul.f32 %v832, %v1344
        %v1473 = vmul.f32 %v833, %v1345
        %v1474 = vmul.f32 %v834, %v1346
        %v1475 = vmul.f32 %v835, %v1347
        %v1476 = vmul.f32 %v836, %v1348
        %v1477 = vmul.f32 %v837, %v1349
        %v1478 = vmul.f32 %v838, %v1350
        %v1479 = vmul.f32 %v839, %v1351
        %v1480 = vmul.f32 %v840, %v1352
        %v1481 = vmul.f32 %v841, %v1353
        %v1482 = vmul.f32 %v842, %v1354
        %v1483 = vmul.f32 %v843, %v1355
        %v1484 = vmul.f32 %v844, %v1356
        %v1485 = vmul.f32 %v845, %v1357
        %v1486 = vmul.f32 %v846, %v1358
        %v1487 = vmul.f32 %v847, %v1359
        %v1488 = vmul.f32 %v848, %v1360
        %v1489 = vmul.f32 %v849, %v1361
        %v1490 = vmul.f32 %v850, %v1362
        %v1491 = vmul.f32 %v851, %v1363
        %v1492 = vmul.f32 %v852, %v1364
        %v1493 = vmul.f32 %v853, %v1365
        %v1494 = vmul.f32 %v854, %v1366
        %v1495 = vmul.f32 %v855, %v1367
        %v1496 = vmul.f32 %v856, %v1368
        %v1497 = vmul.f32 %v857, %v1369
        %v1498 = vmul.f32 %v858, %v1370
        %v1499 = vmul.f32 %v859, %v1371
        %v1500 = vmul.f32 %v860, %v1372
        %v1501 = vmul.f32 %v861, %v1373
        %v1502 = vmul.f32 %v862, %v1374
        %v1503 = vmul.f32 %v863, %v1375
        %v1504 = vmul.f32 %v864, %v1376
        %v1505 = vmul.f32 %v865, %v1377
        %v1506 = vmul.f32 %v866, %v1378
        %v1507 = vmul.f32 %v867, %v1379
        %v1508 = vmul.f32 %v868, %v1380
        %v1509 = vmul.f32 %v869, %v1381
        %v1510 = vmul.f32 %v870, %v1382
        %v1511 = vmul.f32 %v871, %v1383
        %v1512 = vmul.f32 %v872, %v1384
        %v1513 = vmul.f32 %v873, %v1385
        %v1514 = vmul.f32 %v874, %v1386
        %v1515 = vmul.f32 %v875, %v1387
        %v1516 = vmul.f32 %v876, %v1388
        %v1517 = vmul.f32 %v877, %v1389
        %v1518 = vmul.f32 %v878, %v1390
        %v1519 = vmul.f32 %v879, %v1391
        %v1520 = vmul.f32 %v880, %v1392
        %v1521 = vmul.f32 %v881, %v1393
        %v1522 = vmul.f32 %v882, %v1394
        %v1523 = vmul.f32 %v883, %v1395
        %v1524 = vmul.f32 %v884, %v1396
        %v1525 = vmul.f32 %v885, %v1397
        %v1526 = vmul.f32 %v886, %v1398
        %v1527 = vmul.f32 %v887, %v1399
        %v1528 = vmul.f32 %v888, %v1400
        %v1529 = vmul.f32 %v889, %v1401
        %v1530 = vmul.f32 %v890, %v1402
        %v1531 = vmul.f32 %v891, %v1403
        %v1532 = vmul.f32 %v892, %v1404
        %v1533 = vmul.f32 %v893, %v1405
        %v1534 = vmul.f32 %v894, %v1406
        %v1535 = vmul.f32 %v895, %v1407
        %v1536 = vmul.f32 %v896, %v1408
        %v1537 = vmul.f32 %v897, %v1409
        %v1538 = vmul.f32 %v898, %v1410
        %v1539 = vmul.f32 %v899, %v1411
        %v1540 = vmul.f32 %v900, %v1412
        %v1541 = vmul.f32 %v901, %v1413
        %v1542 = vmul.f32 %v902, %v1414
        %v1543 = vmul.f32 %v903, %v1415
        %v1544 = vmul.f32 %v904, %v1416
        %v1545 = vmul.f32 %v905, %v1417
        %v1546 = vmul.f32 %v906, %v1418
        %v1547 = vmul.f32 %v907, %v1419
        %v1548 = vmul.f32 %v908, %v1420
        %v1549 = vmul.f32 %v909, %v1421
        %v1550 = vmul.f32 %v910, %v1422
        %v1551 = vmul.f32 %v911, %v1423
        %v1552 = vmul.f32 %v912, %v1424
        %v1553 = vmul.f32 %v913, %v1425
        %v1554 = vmul.f32 %v914, %v1426
        %v1555 = vmul.f32 %v915, %v1427
        %v1556 = vmul.f32 %v916, %v1428
        %v1557 = vmul.f32 %v917, %v1429
        %v1558 = vmul.f32 %v918, %v1430
        %v1559 = vmul.f32 %v919, %v1431
        %v1560 = vmul.f32 %v920, %v1432
        %v1561 = vmul.f32 %v921, %v1433
        %v1562 = vmul.f32 %v922, %v1434
        %v1563 = vmul.f32 %v923, %v1435
        %v1564 = vmul.f32 %v924, %v1436
        %v1565 = vmul.f32 %v925, %v1437
        %v1566 = vmul.f32 %v926, %v1438
        %v1567 = vmul.f32 %v927, %v1439
        %v1568 = vmul.f32 %v928, %v1440
        %v1569 = vmul.f32 %v929, %v1441
        %v1570 = vmul.f32 %v930, %v1442
        %v1571 = vmul.f32 %v931, %v1443
        %v1572 = vmul.f32 %v932, %v1444
        %v1573 = vmul.f32 %v933, %v1445
        %v1574 = vmul.f32 %v934, %v1446
        %v1575 = vmul.f32 %v935, %v1447
        %v1576 = vmul.f32 %v936, %v1448
        %v1577 = vmul.f32 %v937, %v1449
        %v1578 = vmul.f32 %v938, %v1450
        %v1579 = vmul.f32 %v939, %v1451
        %v1580 = vmul.f32 %v940, %v1452
        %v1581 = vmul.f32 %v941, %v1453
        %v1582 = vmul.f32 %v942, %v1454
        %v1583 = vmul.f32 %v943, %v1455
        %v1584 = vmul.f32 %v944, %v1456
        %v1586 = vsel %vm432, %v1201, 0
        %v1589 = vsel %vm432, %v1202, 0
        %1591 = vmatprep.subr.mxu0 0.0
        %1592 = vmatpush1.msra.mxu0 0.0
        %1593 = vmatprep.subr.mxu0 0.0
        %1594 = vmatpush1.msra.mxu0 0.0
        %1595 = vmatprep.subr.mxu0 0.0
        %1596 = vmatpush1.msra.mxu0 0.0
        %1597 = vmatprep.subr.mxu0 0.0
        %1598 = vmatpush1.msra.mxu0 0.0
        %1599 = vmatprep.subr.mxu0 0.0
        %1600 = vmatpush1.msra.mxu0 0.0
        %1601 = vmatprep.subr.mxu0 0.0
        %1602 = vmatpush1.msra.mxu0 0.0
        %1603 = vmatprep.subr.mxu0 0.0
        %1604 = vmatpush1.msra.mxu0 0.0
        %1605 = vmatprep.subr.mxu0 0.0
        %1606 = vmatpush1.msra.mxu0 0.0
        %1607 = vmatprep.subr.mxu0 0.0
        %1608 = vmatpush1.msra.mxu0 0.0
        %1609 = vmatprep.subr.mxu0 0.0
        %1610 = vmatpush1.msra.mxu0 0.0
        %1611 = vmatprep.subr.mxu0 0.0
        %1612 = vmatpush1.msra.mxu0 0.0
        %1613 = vmatprep.subr.mxu0 0.0
        %1614 = vmatpush1.msra.mxu0 0.0
        %1615 = vmatprep.subr.mxu0 0.0
        %1616 = vmatpush1.msra.mxu0 0.0
        %1617 = vmatprep.subr.mxu0 0.0
        %1618 = vmatpush1.msra.mxu0 0.0
        %1619 = vmatprep.subr.mxu0 0.0
        %1620 = vmatpush1.msra.mxu0 %v1458
        %1621 = vmatprep.subr.mxu0 0.0
        %1622 = vmatpush1.msra.mxu0 %v1457
        %1623 = vmatprep.subr.mxu0 0.0
        %1624 = vmatpush2.msra.mxu0 0.0
        %1625 = vmatprep.subr.mxu0 0.0
        %1626 = vmatpush2.msra.mxu0 0.0
        %1627 = vmatprep.subr.mxu0 0.0
        %1628 = vmatpush2.msra.mxu0 0.0
        %1629 = vmatprep.subr.mxu0 0.0
        %1630 = vmatpush2.msra.mxu0 0.0
        %1631 = vmatprep.subr.mxu0 0.0
        %1632 = vmatpush2.msra.mxu0 0.0
        %1633 = vmatprep.subr.mxu0 0.0
        %1634 = vmatpush2.msra.mxu0 0.0
        %1635 = vmatprep.subr.mxu0 0.0
        %1636 = vmatpush2.msra.mxu0 0.0
        %1637 = vmatprep.subr.mxu0 0.0
        %1638 = vmatpush2.msra.mxu0 0.0
        %1639 = vmatprep.subr.mxu0 0.0
        %1640 = vmatpush2.msra.mxu0 0.0
        %1641 = vmatprep.subr.mxu0 0.0
        %1642 = vmatpush2.msra.mxu0 0.0
        %1643 = vmatprep.subr.mxu0 0.0
        %1644 = vmatpush2.msra.mxu0 0.0
        %1645 = vmatprep.subr.mxu0 0.0
        %1646 = vmatpush2.msra.mxu0 0.0
        %1647 = vmatprep.subr.mxu0 0.0
        %1648 = vmatpush2.msra.mxu0 0.0
        %1649 = vmatprep.subr.mxu0 0.0
        %1650 = vmatpush2.msra.mxu0 0.0
        %1651 = vmatprep.subr.mxu0 0.0
        %1652 = vmatpush2.msra.mxu0 0.0
        %1653 = vmatprep.subr.mxu0 0.0
        %1654 = vmatpush2.msra.mxu0 0.0
        %1655 = vmatprep.mubr.f32.mxu0 0.0
        %1656 = vmatmul.mubr.f32.gmra.mxu0 %v1586
        %v1657 = vpop.f32.mrf.mxu0
        %v1658 = vadd.f32 0.0, %v1657
        %v1659 = vpop.f32.mrf.mxu0
        %1660 = vmatprep.mubr.f32.mxu0 0.0
        %1661 = vmatmul.mubr.f32.gmra.mxu0 %v1589
        %v1662 = vpop.f32.mrf.mxu0
        %v1663 = vadd.f32 0.0, %v1662
        %v1664 = vpop.f32.mrf.mxu0
        %1665 = vdwg.mxu0
        %v1667 = vsel %vm432, %v1203, 0
        %v1670 = vsel %vm432, %v1204, 0
        %1672 = vmatprep.subr.mxu0 0.0
        %1673 = vmatpush1.msra.mxu0 0.0
        %1674 = vmatprep.subr.mxu0 0.0
        %1675 = vmatpush1.msra.mxu0 0.0
        %1676 = vmatprep.subr.mxu0 0.0
        %1677 = vmatpush1.msra.mxu0 0.0
        %1678 = vmatprep.subr.mxu0 0.0
        %1679 = vmatpush1.msra.mxu0 0.0
        %1680 = vmatprep.subr.mxu0 0.0
        %1681 = vmatpush1.msra.mxu0 0.0
        %1682 = vmatprep.subr.mxu0 0.0
        %1683 = vmatpush1.msra.mxu0 0.0
        %1684 = vmatprep.subr.mxu0 0.0
        %1685 = vmatpush1.msra.mxu0 0.0
        %1686 = vmatprep.subr.mxu0 0.0
        %1687 = vmatpush1.msra.mxu0 0.0
        %1688 = vmatprep.subr.mxu0 0.0
        %1689 = vmatpush1.msra.mxu0 0.0
        %1690 = vmatprep.subr.mxu0 0.0
        %1691 = vmatpush1.msra.mxu0 0.0
        %1692 = vmatprep.subr.mxu0 0.0
        %1693 = vmatpush1.msra.mxu0 0.0
        %1694 = vmatprep.subr.mxu0 0.0
        %1695 = vmatpush1.msra.mxu0 0.0
        %1696 = vmatprep.subr.mxu0 0.0
        %1697 = vmatpush1.msra.mxu0 0.0
        %1698 = vmatprep.subr.mxu0 0.0
        %1699 = vmatpush1.msra.mxu0 0.0
        %1700 = vmatprep.subr.mxu0 0.0
        %1701 = vmatpush1.msra.mxu0 %v1460
        %1702 = vmatprep.subr.mxu0 0.0
        %1703 = vmatpush1.msra.mxu0 %v1459
        %1704 = vmatprep.subr.mxu0 0.0
        %1705 = vmatpush2.msra.mxu0 0.0
        %1706 = vmatprep.subr.mxu0 0.0
        %1707 = vmatpush2.msra.mxu0 0.0
        %1708 = vmatprep.subr.mxu0 0.0
        %1709 = vmatpush2.msra.mxu0 0.0
        %1710 = vmatprep.subr.mxu0 0.0
        %1711 = vmatpush2.msra.mxu0 0.0
        %1712 = vmatprep.subr.mxu0 0.0
        %1713 = vmatpush2.msra.mxu0 0.0
        %1714 = vmatprep.subr.mxu0 0.0
        %1715 = vmatpush2.msra.mxu0 0.0
        %1716 = vmatprep.subr.mxu0 0.0
        %1717 = vmatpush2.msra.mxu0 0.0
        %1718 = vmatprep.subr.mxu0 0.0
        %1719 = vmatpush2.msra.mxu0 0.0
        %1720 = vmatprep.subr.mxu0 0.0
        %1721 = vmatpush2.msra.mxu0 0.0
        %1722 = vmatprep.subr.mxu0 0.0
        %1723 = vmatpush2.msra.mxu0 0.0
        %1724 = vmatprep.subr.mxu0 0.0
        %1725 = vmatpush2.msra.mxu0 0.0
        %1726 = vmatprep.subr.mxu0 0.0
        %1727 = vmatpush2.msra.mxu0 0.0
        %1728 = vmatprep.subr.mxu0 0.0
        %1729 = vmatpush2.msra.mxu0 0.0
        %1730 = vmatprep.subr.mxu0 0.0
        %1731 = vmatpush2.msra.mxu0 0.0
        %1732 = vmatprep.subr.mxu0 0.0
        %1733 = vmatpush2.msra.mxu0 0.0
        %1734 = vmatprep.subr.mxu0 0.0
        %1735 = vmatpush2.msra.mxu0 0.0
        %1736 = vmatprep.mubr.f32.mxu0 0.0
        %1737 = vmatmul.mubr.f32.gmra.mxu0 %v1667
        %v1738 = vpop.f32.mrf.mxu0
        %v1739 = vadd.f32 0.0, %v1738
        %v1740 = vpop.f32.mrf.mxu0
        %1741 = vmatprep.mubr.f32.mxu0 0.0
        %1742 = vmatmul.mubr.f32.gmra.mxu0 %v1670
        %v1743 = vpop.f32.mrf.mxu0
        %v1744 = vadd.f32 0.0, %v1743
        %v1745 = vpop.f32.mrf.mxu0
        %1746 = vdwg.mxu0
        %v1748 = vsel %vm432, %v1205, 0
        %v1751 = vsel %vm432, %v1206, 0
        %1753 = vmatprep.subr.mxu0 0.0
        %1754 = vmatpush1.msra.mxu0 0.0
        %1755 = vmatprep.subr.mxu0 0.0
        %1756 = vmatpush1.msra.mxu0 0.0
        %1757 = vmatprep.subr.mxu0 0.0
        %1758 = vmatpush1.msra.mxu0 0.0
        %1759 = vmatprep.subr.mxu0 0.0
        %1760 = vmatpush1.msra.mxu0 0.0
        %1761 = vmatprep.subr.mxu0 0.0
        %1762 = vmatpush1.msra.mxu0 0.0
        %1763 = vmatprep.subr.mxu0 0.0
        %1764 = vmatpush1.msra.mxu0 0.0
        %1765 = vmatprep.subr.mxu0 0.0
        %1766 = vmatpush1.msra.mxu0 0.0
        %1767 = vmatprep.subr.mxu0 0.0
        %1768 = vmatpush1.msra.mxu0 0.0
        %1769 = vmatprep.subr.mxu0 0.0
        %1770 = vmatpush1.msra.mxu0 0.0
        %1771 = vmatprep.subr.mxu0 0.0
        %1772 = vmatpush1.msra.mxu0 0.0
        %1773 = vmatprep.subr.mxu0 0.0
        %1774 = vmatpush1.msra.mxu0 0.0
        %1775 = vmatprep.subr.mxu0 0.0
        %1776 = vmatpush1.msra.mxu0 0.0
        %1777 = vmatprep.subr.mxu0 0.0
        %1778 = vmatpush1.msra.mxu0 0.0
        %1779 = vmatprep.subr.mxu0 0.0
        %1780 = vmatpush1.msra.mxu0 0.0
        %1781 = vmatprep.subr.mxu0 0.0
        %1782 = vmatpush1.msra.mxu0 %v1462
        %1783 = vmatprep.subr.mxu0 0.0
        %1784 = vmatpush1.msra.mxu0 %v1461
        %1785 = vmatprep.subr.mxu0 0.0
        %1786 = vmatpush2.msra.mxu0 0.0
        %1787 = vmatprep.subr.mxu0 0.0
        %1788 = vmatpush2.msra.mxu0 0.0
        %1789 = vmatprep.subr.mxu0 0.0
        %1790 = vmatpush2.msra.mxu0 0.0
        %1791 = vmatprep.subr.mxu0 0.0
        %1792 = vmatpush2.msra.mxu0 0.0
        %1793 = vmatprep.subr.mxu0 0.0
        %1794 = vmatpush2.msra.mxu0 0.0
        %1795 = vmatprep.subr.mxu0 0.0
        %1796 = vmatpush2.msra.mxu0 0.0
        %1797 = vmatprep.subr.mxu0 0.0
        %1798 = vmatpush2.msra.mxu0 0.0
        %1799 = vmatprep.subr.mxu0 0.0
        %1800 = vmatpush2.msra.mxu0 0.0
        %1801 = vmatprep.subr.mxu0 0.0
        %1802 = vmatpush2.msra.mxu0 0.0
        %1803 = vmatprep.subr.mxu0 0.0
        %1804 = vmatpush2.msra.mxu0 0.0
        %1805 = vmatprep.subr.mxu0 0.0
        %1806 = vmatpush2.msra.mxu0 0.0
        %1807 = vmatprep.subr.mxu0 0.0
        %1808 = vmatpush2.msra.mxu0 0.0
        %1809 = vmatprep.subr.mxu0 0.0
        %1810 = vmatpush2.msra.mxu0 0.0
        %1811 = vmatprep.subr.mxu0 0.0
        %1812 = vmatpush2.msra.mxu0 0.0
        %1813 = vmatprep.subr.mxu0 0.0
        %1814 = vmatpush2.msra.mxu0 0.0
        %1815 = vmatprep.subr.mxu0 0.0
        %1816 = vmatpush2.msra.mxu0 0.0
        %1817 = vmatprep.mubr.f32.mxu0 0.0
        %1818 = vmatmul.mubr.f32.gmra.mxu0 %v1748
        %v1819 = vpop.f32.mrf.mxu0
        %v1820 = vadd.f32 0.0, %v1819
        %v1821 = vpop.f32.mrf.mxu0
        %1822 = vmatprep.mubr.f32.mxu0 0.0
        %1823 = vmatmul.mubr.f32.gmra.mxu0 %v1751
        %v1824 = vpop.f32.mrf.mxu0
        %v1825 = vadd.f32 0.0, %v1824
        %v1826 = vpop.f32.mrf.mxu0
        %1827 = vdwg.mxu0
        %v1829 = vsel %vm432, %v1207, 0
        %v1832 = vsel %vm432, %v1208, 0
        %1834 = vmatprep.subr.mxu0 0.0
        %1835 = vmatpush1.msra.mxu0 0.0
        %1836 = vmatprep.subr.mxu0 0.0
        %1837 = vmatpush1.msra.mxu0 0.0
        %1838 = vmatprep.subr.mxu0 0.0
        %1839 = vmatpush1.msra.mxu0 0.0
        %1840 = vmatprep.subr.mxu0 0.0
        %1841 = vmatpush1.msra.mxu0 0.0
        %1842 = vmatprep.subr.mxu0 0.0
        %1843 = vmatpush1.msra.mxu0 0.0
        %1844 = vmatprep.subr.mxu0 0.0
        %1845 = vmatpush1.msra.mxu0 0.0
        %1846 = vmatprep.subr.mxu0 0.0
        %1847 = vmatpush1.msra.mxu0 0.0
        %1848 = vmatprep.subr.mxu0 0.0
        %1849 = vmatpush1.msra.mxu0 0.0
        %1850 = vmatprep.subr.mxu0 0.0
        %1851 = vmatpush1.msra.mxu0 0.0
        %1852 = vmatprep.subr.mxu0 0.0
        %1853 = vmatpush1.msra.mxu0 0.0
        %1854 = vmatprep.subr.mxu0 0.0
        %1855 = vmatpush1.msra.mxu0 0.0
        %1856 = vmatprep.subr.mxu0 0.0
        %1857 = vmatpush1.msra.mxu0 0.0
        %1858 = vmatprep.subr.mxu0 0.0
        %1859 = vmatpush1.msra.mxu0 0.0
        %1860 = vmatprep.subr.mxu0 0.0
        %1861 = vmatpush1.msra.mxu0 0.0
        %1862 = vmatprep.subr.mxu0 0.0
        %1863 = vmatpush1.msra.mxu0 %v1464
        %1864 = vmatprep.subr.mxu0 0.0
        %1865 = vmatpush1.msra.mxu0 %v1463
        %1866 = vmatprep.subr.mxu0 0.0
        %1867 = vmatpush2.msra.mxu0 0.0
        %1868 = vmatprep.subr.mxu0 0.0
        %1869 = vmatpush2.msra.mxu0 0.0
        %1870 = vmatprep.subr.mxu0 0.0
        %1871 = vmatpush2.msra.mxu0 0.0
        %1872 = vmatprep.subr.mxu0 0.0
        %1873 = vmatpush2.msra.mxu0 0.0
        %1874 = vmatprep.subr.mxu0 0.0
        %1875 = vmatpush2.msra.mxu0 0.0
        %1876 = vmatprep.subr.mxu0 0.0
        %1877 = vmatpush2.msra.mxu0 0.0
        %1878 = vmatprep.subr.mxu0 0.0
        %1879 = vmatpush2.msra.mxu0 0.0
        %1880 = vmatprep.subr.mxu0 0.0
        %1881 = vmatpush2.msra.mxu0 0.0
        %1882 = vmatprep.subr.mxu0 0.0
        %1883 = vmatpush2.msra.mxu0 0.0
        %1884 = vmatprep.subr.mxu0 0.0
        %1885 = vmatpush2.msra.mxu0 0.0
        %1886 = vmatprep.subr.mxu0 0.0
        %1887 = vmatpush2.msra.mxu0 0.0
        %1888 = vmatprep.subr.mxu0 0.0
        %1889 = vmatpush2.msra.mxu0 0.0
        %1890 = vmatprep.subr.mxu0 0.0
        %1891 = vmatpush2.msra.mxu0 0.0
        %1892 = vmatprep.subr.mxu0 0.0
        %1893 = vmatpush2.msra.mxu0 0.0
        %1894 = vmatprep.subr.mxu0 0.0
        %1895 = vmatpush2.msra.mxu0 0.0
        %1896 = vmatprep.subr.mxu0 0.0
        %1897 = vmatpush2.msra.mxu0 0.0
        %1898 = vmatprep.mubr.f32.mxu0 0.0
        %1899 = vmatmul.mubr.f32.gmra.mxu0 %v1829
        %v1900 = vpop.f32.mrf.mxu0
        %v1901 = vadd.f32 0.0, %v1900
        %v1902 = vpop.f32.mrf.mxu0
        %1903 = vmatprep.mubr.f32.mxu0 0.0
        %1904 = vmatmul.mubr.f32.gmra.mxu0 %v1832
        %v1905 = vpop.f32.mrf.mxu0
        %v1906 = vadd.f32 0.0, %v1905
        %v1907 = vpop.f32.mrf.mxu0
        %1908 = vdwg.mxu0
        %v1910 = vsel %vm432, %v1209, 0
        %v1913 = vsel %vm432, %v1210, 0
        %1915 = vmatprep.subr.mxu0 0.0
        %1916 = vmatpush1.msra.mxu0 0.0
        %1917 = vmatprep.subr.mxu0 0.0
        %1918 = vmatpush1.msra.mxu0 0.0
        %1919 = vmatprep.subr.mxu0 0.0
        %1920 = vmatpush1.msra.mxu0 0.0
        %1921 = vmatprep.subr.mxu0 0.0
        %1922 = vmatpush1.msra.mxu0 0.0
        %1923 = vmatprep.subr.mxu0 0.0
        %1924 = vmatpush1.msra.mxu0 0.0
        %1925 = vmatprep.subr.mxu0 0.0
        %1926 = vmatpush1.msra.mxu0 0.0
        %1927 = vmatprep.subr.mxu0 0.0
        %1928 = vmatpush1.msra.mxu0 0.0
        %1929 = vmatprep.subr.mxu0 0.0
        %1930 = vmatpush1.msra.mxu0 0.0
        %1931 = vmatprep.subr.mxu0 0.0
        %1932 = vmatpush1.msra.mxu0 0.0
        %1933 = vmatprep.subr.mxu0 0.0
        %1934 = vmatpush1.msra.mxu0 0.0
        %1935 = vmatprep.subr.mxu0 0.0
        %1936 = vmatpush1.msra.mxu0 0.0
        %1937 = vmatprep.subr.mxu0 0.0
        %1938 = vmatpush1.msra.mxu0 0.0
        %1939 = vmatprep.subr.mxu0 0.0
        %1940 = vmatpush1.msra.mxu0 0.0
        %1941 = vmatprep.subr.mxu0 0.0
        %1942 = vmatpush1.msra.mxu0 0.0
        %1943 = vmatprep.subr.mxu0 0.0
        %1944 = vmatpush1.msra.mxu0 %v1466
        %1945 = vmatprep.subr.mxu0 0.0
        %1946 = vmatpush1.msra.mxu0 %v1465
        %1947 = vmatprep.subr.mxu0 0.0
        %1948 = vmatpush2.msra.mxu0 0.0
        %1949 = vmatprep.subr.mxu0 0.0
        %1950 = vmatpush2.msra.mxu0 0.0
        %1951 = vmatprep.subr.mxu0 0.0
        %1952 = vmatpush2.msra.mxu0 0.0
        %1953 = vmatprep.subr.mxu0 0.0
        %1954 = vmatpush2.msra.mxu0 0.0
        %1955 = vmatprep.subr.mxu0 0.0
        %1956 = vmatpush2.msra.mxu0 0.0
        %1957 = vmatprep.subr.mxu0 0.0
        %1958 = vmatpush2.msra.mxu0 0.0
        %1959 = vmatprep.subr.mxu0 0.0
        %1960 = vmatpush2.msra.mxu0 0.0
        %1961 = vmatprep.subr.mxu0 0.0
        %1962 = vmatpush2.msra.mxu0 0.0
        %1963 = vmatprep.subr.mxu0 0.0
        %1964 = vmatpush2.msra.mxu0 0.0
        %1965 = vmatprep.subr.mxu0 0.0
        %1966 = vmatpush2.msra.mxu0 0.0
        %1967 = vmatprep.subr.mxu0 0.0
        %1968 = vmatpush2.msra.mxu0 0.0
        %1969 = vmatprep.subr.mxu0 0.0
        %1970 = vmatpush2.msra.mxu0 0.0
        %1971 = vmatprep.subr.mxu0 0.0
        %1972 = vmatpush2.msra.mxu0 0.0
        %1973 = vmatprep.subr.mxu0 0.0
        %1974 = vmatpush2.msra.mxu0 0.0
        %1975 = vmatprep.subr.mxu0 0.0
        %1976 = vmatpush2.msra.mxu0 0.0
        %1977 = vmatprep.subr.mxu0 0.0
        %1978 = vmatpush2.msra.mxu0 0.0
        %1979 = vmatprep.mubr.f32.mxu0 0.0
        %1980 = vmatmul.mubr.f32.gmra.mxu0 %v1910
        %v1981 = vpop.f32.mrf.mxu0
        %v1982 = vadd.f32 0.0, %v1981
        %v1983 = vpop.f32.mrf.mxu0
        %1984 = vmatprep.mubr.f32.mxu0 0.0
        %1985 = vmatmul.mubr.f32.gmra.mxu0 %v1913
        %v1986 = vpop.f32.mrf.mxu0
        %v1987 = vadd.f32 0.0, %v1986
        %v1988 = vpop.f32.mrf.mxu0
        %1989 = vdwg.mxu0
        %v1991 = vsel %vm432, %v1211, 0
        %v1994 = vsel %vm432, %v1212, 0
        %1996 = vmatprep.subr.mxu0 0.0
        %1997 = vmatpush1.msra.mxu0 0.0
        %1998 = vmatprep.subr.mxu0 0.0
        %1999 = vmatpush1.msra.mxu0 0.0
        %2000 = vmatprep.subr.mxu0 0.0
        %2001 = vmatpush1.msra.mxu0 0.0
        %2002 = vmatprep.subr.mxu0 0.0
        %2003 = vmatpush1.msra.mxu0 0.0
        %2004 = vmatprep.subr.mxu0 0.0
        %2005 = vmatpush1.msra.mxu0 0.0
        %2006 = vmatprep.subr.mxu0 0.0
        %2007 = vmatpush1.msra.mxu0 0.0
        %2008 = vmatprep.subr.mxu0 0.0
        %2009 = vmatpush1.msra.mxu0 0.0
        %2010 = vmatprep.subr.mxu0 0.0
        %2011 = vmatpush1.msra.mxu0 0.0
        %2012 = vmatprep.subr.mxu0 0.0
        %2013 = vmatpush1.msra.mxu0 0.0
        %2014 = vmatprep.subr.mxu0 0.0
        %2015 = vmatpush1.msra.mxu0 0.0
        %2016 = vmatprep.subr.mxu0 0.0
        %2017 = vmatpush1.msra.mxu0 0.0
        %2018 = vmatprep.subr.mxu0 0.0
        %2019 = vmatpush1.msra.mxu0 0.0
        %2020 = vmatprep.subr.mxu0 0.0
        %2021 = vmatpush1.msra.mxu0 0.0
        %2022 = vmatprep.subr.mxu0 0.0
        %2023 = vmatpush1.msra.mxu0 0.0
        %2024 = vmatprep.subr.mxu0 0.0
        %2025 = vmatpush1.msra.mxu0 %v1468
        %2026 = vmatprep.subr.mxu0 0.0
        %2027 = vmatpush1.msra.mxu0 %v1467
        %2028 = vmatprep.subr.mxu0 0.0
        %2029 = vmatpush2.msra.mxu0 0.0
        %2030 = vmatprep.subr.mxu0 0.0
        %2031 = vmatpush2.msra.mxu0 0.0
        %2032 = vmatprep.subr.mxu0 0.0
        %2033 = vmatpush2.msra.mxu0 0.0
        %2034 = vmatprep.subr.mxu0 0.0
        %2035 = vmatpush2.msra.mxu0 0.0
        %2036 = vmatprep.subr.mxu0 0.0
        %2037 = vmatpush2.msra.mxu0 0.0
        %2038 = vmatprep.subr.mxu0 0.0
        %2039 = vmatpush2.msra.mxu0 0.0
        %2040 = vmatprep.subr.mxu0 0.0
        %2041 = vmatpush2.msra.mxu0 0.0
        %2042 = vmatprep.subr.mxu0 0.0
        %2043 = vmatpush2.msra.mxu0 0.0
        %2044 = vmatprep.subr.mxu0 0.0
        %2045 = vmatpush2.msra.mxu0 0.0
        %2046 = vmatprep.subr.mxu0 0.0
        %2047 = vmatpush2.msra.mxu0 0.0
        %2048 = vmatprep.subr.mxu0 0.0
        %2049 = vmatpush2.msra.mxu0 0.0
        %2050 = vmatprep.subr.mxu0 0.0
        %2051 = vmatpush2.msra.mxu0 0.0
        %2052 = vmatprep.subr.mxu0 0.0
        %2053 = vmatpush2.msra.mxu0 0.0
        %2054 = vmatprep.subr.mxu0 0.0
        %2055 = vmatpush2.msra.mxu0 0.0
        %2056 = vmatprep.subr.mxu0 0.0
        %2057 = vmatpush2.msra.mxu0 0.0
        %2058 = vmatprep.subr.mxu0 0.0
        %2059 = vmatpush2.msra.mxu0 0.0
        %2060 = vmatprep.mubr.f32.mxu0 0.0
        %2061 = vmatmul.mubr.f32.gmra.mxu0 %v1991
        %v2062 = vpop.f32.mrf.mxu0
        %v2063 = vadd.f32 0.0, %v2062
        %v2064 = vpop.f32.mrf.mxu0
        %2065 = vmatprep.mubr.f32.mxu0 0.0
        %2066 = vmatmul.mubr.f32.gmra.mxu0 %v1994
        %v2067 = vpop.f32.mrf.mxu0
        %v2068 = vadd.f32 0.0, %v2067
        %v2069 = vpop.f32.mrf.mxu0
        %2070 = vdwg.mxu0
        %v2072 = vsel %vm432, %v1213, 0
        %v2075 = vsel %vm432, %v1214, 0
        %2077 = vmatprep.subr.mxu0 0.0
        %2078 = vmatpush1.msra.mxu0 0.0
        %2079 = vmatprep.subr.mxu0 0.0
        %2080 = vmatpush1.msra.mxu0 0.0
        %2081 = vmatprep.subr.mxu0 0.0
        %2082 = vmatpush1.msra.mxu0 0.0
        %2083 = vmatprep.subr.mxu0 0.0
        %2084 = vmatpush1.msra.mxu0 0.0
        %2085 = vmatprep.subr.mxu0 0.0
        %2086 = vmatpush1.msra.mxu0 0.0
        %2087 = vmatprep.subr.mxu0 0.0
        %2088 = vmatpush1.msra.mxu0 0.0
        %2089 = vmatprep.subr.mxu0 0.0
        %2090 = vmatpush1.msra.mxu0 0.0
        %2091 = vmatprep.subr.mxu0 0.0
        %2092 = vmatpush1.msra.mxu0 0.0
        %2093 = vmatprep.subr.mxu0 0.0
        %2094 = vmatpush1.msra.mxu0 0.0
        %2095 = vmatprep.subr.mxu0 0.0
        %2096 = vmatpush1.msra.mxu0 0.0
        %2097 = vmatprep.subr.mxu0 0.0
        %2098 = vmatpush1.msra.mxu0 0.0
        %2099 = vmatprep.subr.mxu0 0.0
        %2100 = vmatpush1.msra.mxu0 0.0
        %2101 = vmatprep.subr.mxu0 0.0
        %2102 = vmatpush1.msra.mxu0 0.0
        %2103 = vmatprep.subr.mxu0 0.0
        %2104 = vmatpush1.msra.mxu0 0.0
        %2105 = vmatprep.subr.mxu0 0.0
        %2106 = vmatpush1.msra.mxu0 %v1470
        %2107 = vmatprep.subr.mxu0 0.0
        %2108 = vmatpush1.msra.mxu0 %v1469
        %2109 = vmatprep.subr.mxu0 0.0
        %2110 = vmatpush2.msra.mxu0 0.0
        %2111 = vmatprep.subr.mxu0 0.0
        %2112 = vmatpush2.msra.mxu0 0.0
        %2113 = vmatprep.subr.mxu0 0.0
        %2114 = vmatpush2.msra.mxu0 0.0
        %2115 = vmatprep.subr.mxu0 0.0
        %2116 = vmatpush2.msra.mxu0 0.0
        %2117 = vmatprep.subr.mxu0 0.0
        %2118 = vmatpush2.msra.mxu0 0.0
        %2119 = vmatprep.subr.mxu0 0.0
        %2120 = vmatpush2.msra.mxu0 0.0
        %2121 = vmatprep.subr.mxu0 0.0
        %2122 = vmatpush2.msra.mxu0 0.0
        %2123 = vmatprep.subr.mxu0 0.0
        %2124 = vmatpush2.msra.mxu0 0.0
        %2125 = vmatprep.subr.mxu0 0.0
        %2126 = vmatpush2.msra.mxu0 0.0
        %2127 = vmatprep.subr.mxu0 0.0
        %2128 = vmatpush2.msra.mxu0 0.0
        %2129 = vmatprep.subr.mxu0 0.0
        %2130 = vmatpush2.msra.mxu0 0.0
        %2131 = vmatprep.subr.mxu0 0.0
        %2132 = vmatpush2.msra.mxu0 0.0
        %2133 = vmatprep.subr.mxu0 0.0
        %2134 = vmatpush2.msra.mxu0 0.0
        %2135 = vmatprep.subr.mxu0 0.0
        %2136 = vmatpush2.msra.mxu0 0.0
        %2137 = vmatprep.subr.mxu0 0.0
        %2138 = vmatpush2.msra.mxu0 0.0
        %2139 = vmatprep.subr.mxu0 0.0
        %2140 = vmatpush2.msra.mxu0 0.0
        %2141 = vmatprep.mubr.f32.mxu0 0.0
        %2142 = vmatmul.mubr.f32.gmra.mxu0 %v2072
        %v2143 = vpop.f32.mrf.mxu0
        %v2144 = vadd.f32 0.0, %v2143
        %v2145 = vpop.f32.mrf.mxu0
        %2146 = vmatprep.mubr.f32.mxu0 0.0
        %2147 = vmatmul.mubr.f32.gmra.mxu0 %v2075
        %v2148 = vpop.f32.mrf.mxu0
        %v2149 = vadd.f32 0.0, %v2148
        %v2150 = vpop.f32.mrf.mxu0
        %2151 = vdwg.mxu0
        %v2153 = vsel %vm432, %v1215, 0
        %v2156 = vsel %vm432, %v1216, 0
        %2158 = vmatprep.subr.mxu0 0.0
        %2159 = vmatpush1.msra.mxu0 0.0
        %2160 = vmatprep.subr.mxu0 0.0
        %2161 = vmatpush1.msra.mxu0 0.0
        %2162 = vmatprep.subr.mxu0 0.0
        %2163 = vmatpush1.msra.mxu0 0.0
        %2164 = vmatprep.subr.mxu0 0.0
        %2165 = vmatpush1.msra.mxu0 0.0
        %2166 = vmatprep.subr.mxu0 0.0
        %2167 = vmatpush1.msra.mxu0 0.0
        %2168 = vmatprep.subr.mxu0 0.0
        %2169 = vmatpush1.msra.mxu0 0.0
        %2170 = vmatprep.subr.mxu0 0.0
        %2171 = vmatpush1.msra.mxu0 0.0
        %2172 = vmatprep.subr.mxu0 0.0
        %2173 = vmatpush1.msra.mxu0 0.0
        %2174 = vmatprep.subr.mxu0 0.0
        %2175 = vmatpush1.msra.mxu0 0.0
        %2176 = vmatprep.subr.mxu0 0.0
        %2177 = vmatpush1.msra.mxu0 0.0
        %2178 = vmatprep.subr.mxu0 0.0
        %2179 = vmatpush1.msra.mxu0 0.0
        %2180 = vmatprep.subr.mxu0 0.0
        %2181 = vmatpush1.msra.mxu0 0.0
        %2182 = vmatprep.subr.mxu0 0.0
        %2183 = vmatpush1.msra.mxu0 0.0
        %2184 = vmatprep.subr.mxu0 0.0
        %2185 = vmatpush1.msra.mxu0 0.0
        %2186 = vmatprep.subr.mxu0 0.0
        %2187 = vmatpush1.msra.mxu0 %v1472
        %2188 = vmatprep.subr.mxu0 0.0
        %2189 = vmatpush1.msra.mxu0 %v1471
        %2190 = vmatprep.subr.mxu0 0.0
        %2191 = vmatpush2.msra.mxu0 0.0
        %2192 = vmatprep.subr.mxu0 0.0
        %2193 = vmatpush2.msra.mxu0 0.0
        %2194 = vmatprep.subr.mxu0 0.0
        %2195 = vmatpush2.msra.mxu0 0.0
        %2196 = vmatprep.subr.mxu0 0.0
        %2197 = vmatpush2.msra.mxu0 0.0
        %2198 = vmatprep.subr.mxu0 0.0
        %2199 = vmatpush2.msra.mxu0 0.0
        %2200 = vmatprep.subr.mxu0 0.0
        %2201 = vmatpush2.msra.mxu0 0.0
        %2202 = vmatprep.subr.mxu0 0.0
        %2203 = vmatpush2.msra.mxu0 0.0
        %2204 = vmatprep.subr.mxu0 0.0
        %2205 = vmatpush2.msra.mxu0 0.0
        %2206 = vmatprep.subr.mxu0 0.0
        %2207 = vmatpush2.msra.mxu0 0.0
        %2208 = vmatprep.subr.mxu0 0.0
        %2209 = vmatpush2.msra.mxu0 0.0
        %2210 = vmatprep.subr.mxu0 0.0
        %2211 = vmatpush2.msra.mxu0 0.0
        %2212 = vmatprep.subr.mxu0 0.0
        %2213 = vmatpush2.msra.mxu0 0.0
        %2214 = vmatprep.subr.mxu0 0.0
        %2215 = vmatpush2.msra.mxu0 0.0
        %2216 = vmatprep.subr.mxu0 0.0
        %2217 = vmatpush2.msra.mxu0 0.0
        %2218 = vmatprep.subr.mxu0 0.0
        %2219 = vmatpush2.msra.mxu0 0.0
        %2220 = vmatprep.subr.mxu0 0.0
        %2221 = vmatpush2.msra.mxu0 0.0
        %2222 = vmatprep.mubr.f32.mxu0 0.0
        %2223 = vmatmul.mubr.f32.gmra.mxu0 %v2153
        %v2224 = vpop.f32.mrf.mxu0
        %v2225 = vadd.f32 0.0, %v2224
        %v2226 = vpop.f32.mrf.mxu0
        %2227 = vmatprep.mubr.f32.mxu0 0.0
        %2228 = vmatmul.mubr.f32.gmra.mxu0 %v2156
        %v2229 = vpop.f32.mrf.mxu0
        %v2230 = vadd.f32 0.0, %v2229
        %v2231 = vpop.f32.mrf.mxu0
        %2232 = vdwg.mxu0
        %v2234 = vsel %vm432, %v1217, 0
        %v2237 = vsel %vm432, %v1218, 0
        %2239 = vmatprep.subr.mxu0 0.0
        %2240 = vmatpush1.msra.mxu0 0.0
        %2241 = vmatprep.subr.mxu0 0.0
        %2242 = vmatpush1.msra.mxu0 0.0
        %2243 = vmatprep.subr.mxu0 0.0
        %2244 = vmatpush1.msra.mxu0 0.0
        %2245 = vmatprep.subr.mxu0 0.0
        %2246 = vmatpush1.msra.mxu0 0.0
        %2247 = vmatprep.subr.mxu0 0.0
        %2248 = vmatpush1.msra.mxu0 0.0
        %2249 = vmatprep.subr.mxu0 0.0
        %2250 = vmatpush1.msra.mxu0 0.0
        %2251 = vmatprep.subr.mxu0 0.0
        %2252 = vmatpush1.msra.mxu0 0.0
        %2253 = vmatprep.subr.mxu0 0.0
        %2254 = vmatpush1.msra.mxu0 0.0
        %2255 = vmatprep.subr.mxu0 0.0
        %2256 = vmatpush1.msra.mxu0 0.0
        %2257 = vmatprep.subr.mxu0 0.0
        %2258 = vmatpush1.msra.mxu0 0.0
        %2259 = vmatprep.subr.mxu0 0.0
        %2260 = vmatpush1.msra.mxu0 0.0
        %2261 = vmatprep.subr.mxu0 0.0
        %2262 = vmatpush1.msra.mxu0 0.0
        %2263 = vmatprep.subr.mxu0 0.0
        %2264 = vmatpush1.msra.mxu0 0.0
        %2265 = vmatprep.subr.mxu0 0.0
        %2266 = vmatpush1.msra.mxu0 0.0
        %2267 = vmatprep.subr.mxu0 0.0
        %2268 = vmatpush1.msra.mxu0 %v1474
        %2269 = vmatprep.subr.mxu0 0.0
        %2270 = vmatpush1.msra.mxu0 %v1473
        %2271 = vmatprep.subr.mxu0 0.0
        %2272 = vmatpush2.msra.mxu0 0.0
        %2273 = vmatprep.subr.mxu0 0.0
        %2274 = vmatpush2.msra.mxu0 0.0
        %2275 = vmatprep.subr.mxu0 0.0
        %2276 = vmatpush2.msra.mxu0 0.0
        %2277 = vmatprep.subr.mxu0 0.0
        %2278 = vmatpush2.msra.mxu0 0.0
        %2279 = vmatprep.subr.mxu0 0.0
        %2280 = vmatpush2.msra.mxu0 0.0
        %2281 = vmatprep.subr.mxu0 0.0
        %2282 = vmatpush2.msra.mxu0 0.0
        %2283 = vmatprep.subr.mxu0 0.0
        %2284 = vmatpush2.msra.mxu0 0.0
        %2285 = vmatprep.subr.mxu0 0.0
        %2286 = vmatpush2.msra.mxu0 0.0
        %2287 = vmatprep.subr.mxu0 0.0
        %2288 = vmatpush2.msra.mxu0 0.0
        %2289 = vmatprep.subr.mxu0 0.0
        %2290 = vmatpush2.msra.mxu0 0.0
        %2291 = vmatprep.subr.mxu0 0.0
        %2292 = vmatpush2.msra.mxu0 0.0
        %2293 = vmatprep.subr.mxu0 0.0
        %2294 = vmatpush2.msra.mxu0 0.0
        %2295 = vmatprep.subr.mxu0 0.0
        %2296 = vmatpush2.msra.mxu0 0.0
        %2297 = vmatprep.subr.mxu0 0.0
        %2298 = vmatpush2.msra.mxu0 0.0
        %2299 = vmatprep.subr.mxu0 0.0
        %2300 = vmatpush2.msra.mxu0 0.0
        %2301 = vmatprep.subr.mxu0 0.0
        %2302 = vmatpush2.msra.mxu0 0.0
        %2303 = vmatprep.mubr.f32.mxu0 0.0
        %2304 = vmatmul.mubr.f32.gmra.mxu0 %v2234
        %v2305 = vpop.f32.mrf.mxu0
        %v2306 = vadd.f32 0.0, %v2305
        %v2307 = vpop.f32.mrf.mxu0
        %2308 = vmatprep.mubr.f32.mxu0 0.0
        %2309 = vmatmul.mubr.f32.gmra.mxu0 %v2237
        %v2310 = vpop.f32.mrf.mxu0
        %v2311 = vadd.f32 0.0, %v2310
        %v2312 = vpop.f32.mrf.mxu0
        %2313 = vdwg.mxu0
        %v2315 = vsel %vm432, %v1219, 0
        %v2318 = vsel %vm432, %v1220, 0
        %2320 = vmatprep.subr.mxu0 0.0
        %2321 = vmatpush1.msra.mxu0 0.0
        %2322 = vmatprep.subr.mxu0 0.0
        %2323 = vmatpush1.msra.mxu0 0.0
        %2324 = vmatprep.subr.mxu0 0.0
        %2325 = vmatpush1.msra.mxu0 0.0
        %2326 = vmatprep.subr.mxu0 0.0
        %2327 = vmatpush1.msra.mxu0 0.0
        %2328 = vmatprep.subr.mxu0 0.0
        %2329 = vmatpush1.msra.mxu0 0.0
        %2330 = vmatprep.subr.mxu0 0.0
        %2331 = vmatpush1.msra.mxu0 0.0
        %2332 = vmatprep.subr.mxu0 0.0
        %2333 = vmatpush1.msra.mxu0 0.0
        %2334 = vmatprep.subr.mxu0 0.0
        %2335 = vmatpush1.msra.mxu0 0.0
        %2336 = vmatprep.subr.mxu0 0.0
        %2337 = vmatpush1.msra.mxu0 0.0
        %2338 = vmatprep.subr.mxu0 0.0
        %2339 = vmatpush1.msra.mxu0 0.0
        %2340 = vmatprep.subr.mxu0 0.0
        %2341 = vmatpush1.msra.mxu0 0.0
        %2342 = vmatprep.subr.mxu0 0.0
        %2343 = vmatpush1.msra.mxu0 0.0
        %2344 = vmatprep.subr.mxu0 0.0
        %2345 = vmatpush1.msra.mxu0 0.0
        %2346 = vmatprep.subr.mxu0 0.0
        %2347 = vmatpush1.msra.mxu0 0.0
        %2348 = vmatprep.subr.mxu0 0.0
        %2349 = vmatpush1.msra.mxu0 %v1476
        %2350 = vmatprep.subr.mxu0 0.0
        %2351 = vmatpush1.msra.mxu0 %v1475
        %2352 = vmatprep.subr.mxu0 0.0
        %2353 = vmatpush2.msra.mxu0 0.0
        %2354 = vmatprep.subr.mxu0 0.0
        %2355 = vmatpush2.msra.mxu0 0.0
        %2356 = vmatprep.subr.mxu0 0.0
        %2357 = vmatpush2.msra.mxu0 0.0
        %2358 = vmatprep.subr.mxu0 0.0
        %2359 = vmatpush2.msra.mxu0 0.0
        %2360 = vmatprep.subr.mxu0 0.0
        %2361 = vmatpush2.msra.mxu0 0.0
        %2362 = vmatprep.subr.mxu0 0.0
        %2363 = vmatpush2.msra.mxu0 0.0
        %2364 = vmatprep.subr.mxu0 0.0
        %2365 = vmatpush2.msra.mxu0 0.0
        %2366 = vmatprep.subr.mxu0 0.0
        %2367 = vmatpush2.msra.mxu0 0.0
        %2368 = vmatprep.subr.mxu0 0.0
        %2369 = vmatpush2.msra.mxu0 0.0
        %2370 = vmatprep.subr.mxu0 0.0
        %2371 = vmatpush2.msra.mxu0 0.0
        %2372 = vmatprep.subr.mxu0 0.0
        %2373 = vmatpush2.msra.mxu0 0.0
        %2374 = vmatprep.subr.mxu0 0.0
        %2375 = vmatpush2.msra.mxu0 0.0
        %2376 = vmatprep.subr.mxu0 0.0
        %2377 = vmatpush2.msra.mxu0 0.0
        %2378 = vmatprep.subr.mxu0 0.0
        %2379 = vmatpush2.msra.mxu0 0.0
        %2380 = vmatprep.subr.mxu0 0.0
        %2381 = vmatpush2.msra.mxu0 0.0
        %2382 = vmatprep.subr.mxu0 0.0
        %2383 = vmatpush2.msra.mxu0 0.0
        %2384 = vmatprep.mubr.f32.mxu0 0.0
        %2385 = vmatmul.mubr.f32.gmra.mxu0 %v2315
        %v2386 = vpop.f32.mrf.mxu0
        %v2387 = vadd.f32 0.0, %v2386
        %v2388 = vpop.f32.mrf.mxu0
        %2389 = vmatprep.mubr.f32.mxu0 0.0
        %2390 = vmatmul.mubr.f32.gmra.mxu0 %v2318
        %v2391 = vpop.f32.mrf.mxu0
        %v2392 = vadd.f32 0.0, %v2391
        %v2393 = vpop.f32.mrf.mxu0
        %2394 = vdwg.mxu0
        %v2396 = vsel %vm432, %v1221, 0
        %v2399 = vsel %vm432, %v1222, 0
        %2401 = vmatprep.subr.mxu0 0.0
        %2402 = vmatpush1.msra.mxu0 0.0
        %2403 = vmatprep.subr.mxu0 0.0
        %2404 = vmatpush1.msra.mxu0 0.0
        %2405 = vmatprep.subr.mxu0 0.0
        %2406 = vmatpush1.msra.mxu0 0.0
        %2407 = vmatprep.subr.mxu0 0.0
        %2408 = vmatpush1.msra.mxu0 0.0
        %2409 = vmatprep.subr.mxu0 0.0
        %2410 = vmatpush1.msra.mxu0 0.0
        %2411 = vmatprep.subr.mxu0 0.0
        %2412 = vmatpush1.msra.mxu0 0.0
        %2413 = vmatprep.subr.mxu0 0.0
        %2414 = vmatpush1.msra.mxu0 0.0
        %2415 = vmatprep.subr.mxu0 0.0
        %2416 = vmatpush1.msra.mxu0 0.0
        %2417 = vmatprep.subr.mxu0 0.0
        %2418 = vmatpush1.msra.mxu0 0.0
        %2419 = vmatprep.subr.mxu0 0.0
        %2420 = vmatpush1.msra.mxu0 0.0
        %2421 = vmatprep.subr.mxu0 0.0
        %2422 = vmatpush1.msra.mxu0 0.0
        %2423 = vmatprep.subr.mxu0 0.0
        %2424 = vmatpush1.msra.mxu0 0.0
        %2425 = vmatprep.subr.mxu0 0.0
        %2426 = vmatpush1.msra.mxu0 0.0
        %2427 = vmatprep.subr.mxu0 0.0
        %2428 = vmatpush1.msra.mxu0 0.0
        %2429 = vmatprep.subr.mxu0 0.0
        %2430 = vmatpush1.msra.mxu0 %v1478
        %2431 = vmatprep.subr.mxu0 0.0
        %2432 = vmatpush1.msra.mxu0 %v1477
        %2433 = vmatprep.subr.mxu0 0.0
        %2434 = vmatpush2.msra.mxu0 0.0
        %2435 = vmatprep.subr.mxu0 0.0
        %2436 = vmatpush2.msra.mxu0 0.0
        %2437 = vmatprep.subr.mxu0 0.0
        %2438 = vmatpush2.msra.mxu0 0.0
        %2439 = vmatprep.subr.mxu0 0.0
        %2440 = vmatpush2.msra.mxu0 0.0
        %2441 = vmatprep.subr.mxu0 0.0
        %2442 = vmatpush2.msra.mxu0 0.0
        %2443 = vmatprep.subr.mxu0 0.0
        %2444 = vmatpush2.msra.mxu0 0.0
        %2445 = vmatprep.subr.mxu0 0.0
        %2446 = vmatpush2.msra.mxu0 0.0
        %2447 = vmatprep.subr.mxu0 0.0
        %2448 = vmatpush2.msra.mxu0 0.0
        %2449 = vmatprep.subr.mxu0 0.0
        %2450 = vmatpush2.msra.mxu0 0.0
        %2451 = vmatprep.subr.mxu0 0.0
        %2452 = vmatpush2.msra.mxu0 0.0
        %2453 = vmatprep.subr.mxu0 0.0
        %2454 = vmatpush2.msra.mxu0 0.0
        %2455 = vmatprep.subr.mxu0 0.0
        %2456 = vmatpush2.msra.mxu0 0.0
        %2457 = vmatprep.subr.mxu0 0.0
        %2458 = vmatpush2.msra.mxu0 0.0
        %2459 = vmatprep.subr.mxu0 0.0
        %2460 = vmatpush2.msra.mxu0 0.0
        %2461 = vmatprep.subr.mxu0 0.0
        %2462 = vmatpush2.msra.mxu0 0.0
        %2463 = vmatprep.subr.mxu0 0.0
        %2464 = vmatpush2.msra.mxu0 0.0
        %2465 = vmatprep.mubr.f32.mxu0 0.0
        %2466 = vmatmul.mubr.f32.gmra.mxu0 %v2396
        %v2467 = vpop.f32.mrf.mxu0
        %v2468 = vadd.f32 0.0, %v2467
        %v2469 = vpop.f32.mrf.mxu0
        %2470 = vmatprep.mubr.f32.mxu0 0.0
        %2471 = vmatmul.mubr.f32.gmra.mxu0 %v2399
        %v2472 = vpop.f32.mrf.mxu0
        %v2473 = vadd.f32 0.0, %v2472
        %v2474 = vpop.f32.mrf.mxu0
        %2475 = vdwg.mxu0
        %v2477 = vsel %vm432, %v1223, 0
        %v2480 = vsel %vm432, %v1224, 0
        %2482 = vmatprep.subr.mxu0 0.0
        %2483 = vmatpush1.msra.mxu0 0.0
        %2484 = vmatprep.subr.mxu0 0.0
        %2485 = vmatpush1.msra.mxu0 0.0
        %2486 = vmatprep.subr.mxu0 0.0
        %2487 = vmatpush1.msra.mxu0 0.0
        %2488 = vmatprep.subr.mxu0 0.0
        %2489 = vmatpush1.msra.mxu0 0.0
        %2490 = vmatprep.subr.mxu0 0.0
        %2491 = vmatpush1.msra.mxu0 0.0
        %2492 = vmatprep.subr.mxu0 0.0
        %2493 = vmatpush1.msra.mxu0 0.0
        %2494 = vmatprep.subr.mxu0 0.0
        %2495 = vmatpush1.msra.mxu0 0.0
        %2496 = vmatprep.subr.mxu0 0.0
        %2497 = vmatpush1.msra.mxu0 0.0
        %2498 = vmatprep.subr.mxu0 0.0
        %2499 = vmatpush1.msra.mxu0 0.0
        %2500 = vmatprep.subr.mxu0 0.0
        %2501 = vmatpush1.msra.mxu0 0.0
        %2502 = vmatprep.subr.mxu0 0.0
        %2503 = vmatpush1.msra.mxu0 0.0
        %2504 = vmatprep.subr.mxu0 0.0
        %2505 = vmatpush1.msra.mxu0 0.0
        %2506 = vmatprep.subr.mxu0 0.0
        %2507 = vmatpush1.msra.mxu0 0.0
        %2508 = vmatprep.subr.mxu0 0.0
        %2509 = vmatpush1.msra.mxu0 0.0
        %2510 = vmatprep.subr.mxu0 0.0
        %2511 = vmatpush1.msra.mxu0 %v1480
        %2512 = vmatprep.subr.mxu0 0.0
        %2513 = vmatpush1.msra.mxu0 %v1479
        %2514 = vmatprep.subr.mxu0 0.0
        %2515 = vmatpush2.msra.mxu0 0.0
        %2516 = vmatprep.subr.mxu0 0.0
        %2517 = vmatpush2.msra.mxu0 0.0
        %2518 = vmatprep.subr.mxu0 0.0
        %2519 = vmatpush2.msra.mxu0 0.0
        %2520 = vmatprep.subr.mxu0 0.0
        %2521 = vmatpush2.msra.mxu0 0.0
        %2522 = vmatprep.subr.mxu0 0.0
        %2523 = vmatpush2.msra.mxu0 0.0
        %2524 = vmatprep.subr.mxu0 0.0
        %2525 = vmatpush2.msra.mxu0 0.0
        %2526 = vmatprep.subr.mxu0 0.0
        %2527 = vmatpush2.msra.mxu0 0.0
        %2528 = vmatprep.subr.mxu0 0.0
        %2529 = vmatpush2.msra.mxu0 0.0
        %2530 = vmatprep.subr.mxu0 0.0
        %2531 = vmatpush2.msra.mxu0 0.0
        %2532 = vmatprep.subr.mxu0 0.0
        %2533 = vmatpush2.msra.mxu0 0.0
        %2534 = vmatprep.subr.mxu0 0.0
        %2535 = vmatpush2.msra.mxu0 0.0
        %2536 = vmatprep.subr.mxu0 0.0
        %2537 = vmatpush2.msra.mxu0 0.0
        %2538 = vmatprep.subr.mxu0 0.0
        %2539 = vmatpush2.msra.mxu0 0.0
        %2540 = vmatprep.subr.mxu0 0.0
        %2541 = vmatpush2.msra.mxu0 0.0
        %2542 = vmatprep.subr.mxu0 0.0
        %2543 = vmatpush2.msra.mxu0 0.0
        %2544 = vmatprep.subr.mxu0 0.0
        %2545 = vmatpush2.msra.mxu0 0.0
        %2546 = vmatprep.mubr.f32.mxu0 0.0
        %2547 = vmatmul.mubr.f32.gmra.mxu0 %v2477
        %v2548 = vpop.f32.mrf.mxu0
        %v2549 = vadd.f32 0.0, %v2548
        %v2550 = vpop.f32.mrf.mxu0
        %2551 = vmatprep.mubr.f32.mxu0 0.0
        %2552 = vmatmul.mubr.f32.gmra.mxu0 %v2480
        %v2553 = vpop.f32.mrf.mxu0
        %v2554 = vadd.f32 0.0, %v2553
        %v2555 = vpop.f32.mrf.mxu0
        %2556 = vdwg.mxu0
        %v2558 = vsel %vm432, %v1225, 0
        %v2561 = vsel %vm432, %v1226, 0
        %2563 = vmatprep.subr.mxu0 0.0
        %2564 = vmatpush1.msra.mxu0 0.0
        %2565 = vmatprep.subr.mxu0 0.0
        %2566 = vmatpush1.msra.mxu0 0.0
        %2567 = vmatprep.subr.mxu0 0.0
        %2568 = vmatpush1.msra.mxu0 0.0
        %2569 = vmatprep.subr.mxu0 0.0
        %2570 = vmatpush1.msra.mxu0 0.0
        %2571 = vmatprep.subr.mxu0 0.0
        %2572 = vmatpush1.msra.mxu0 0.0
        %2573 = vmatprep.subr.mxu0 0.0
        %2574 = vmatpush1.msra.mxu0 0.0
        %2575 = vmatprep.subr.mxu0 0.0
        %2576 = vmatpush1.msra.mxu0 0.0
        %2577 = vmatprep.subr.mxu0 0.0
        %2578 = vmatpush1.msra.mxu0 0.0
        %2579 = vmatprep.subr.mxu0 0.0
        %2580 = vmatpush1.msra.mxu0 0.0
        %2581 = vmatprep.subr.mxu0 0.0
        %2582 = vmatpush1.msra.mxu0 0.0
        %2583 = vmatprep.subr.mxu0 0.0
        %2584 = vmatpush1.msra.mxu0 0.0
        %2585 = vmatprep.subr.mxu0 0.0
        %2586 = vmatpush1.msra.mxu0 0.0
        %2587 = vmatprep.subr.mxu0 0.0
        %2588 = vmatpush1.msra.mxu0 0.0
        %2589 = vmatprep.subr.mxu0 0.0
        %2590 = vmatpush1.msra.mxu0 0.0
        %2591 = vmatprep.subr.mxu0 0.0
        %2592 = vmatpush1.msra.mxu0 %v1482
        %2593 = vmatprep.subr.mxu0 0.0
        %2594 = vmatpush1.msra.mxu0 %v1481
        %2595 = vmatprep.subr.mxu0 0.0
        %2596 = vmatpush2.msra.mxu0 0.0
        %2597 = vmatprep.subr.mxu0 0.0
        %2598 = vmatpush2.msra.mxu0 0.0
        %2599 = vmatprep.subr.mxu0 0.0
        %2600 = vmatpush2.msra.mxu0 0.0
        %2601 = vmatprep.subr.mxu0 0.0
        %2602 = vmatpush2.msra.mxu0 0.0
        %2603 = vmatprep.subr.mxu0 0.0
        %2604 = vmatpush2.msra.mxu0 0.0
        %2605 = vmatprep.subr.mxu0 0.0
        %2606 = vmatpush2.msra.mxu0 0.0
        %2607 = vmatprep.subr.mxu0 0.0
        %2608 = vmatpush2.msra.mxu0 0.0
        %2609 = vmatprep.subr.mxu0 0.0
        %2610 = vmatpush2.msra.mxu0 0.0
        %2611 = vmatprep.subr.mxu0 0.0
        %2612 = vmatpush2.msra.mxu0 0.0
        %2613 = vmatprep.subr.mxu0 0.0
        %2614 = vmatpush2.msra.mxu0 0.0
        %2615 = vmatprep.subr.mxu0 0.0
        %2616 = vmatpush2.msra.mxu0 0.0
        %2617 = vmatprep.subr.mxu0 0.0
        %2618 = vmatpush2.msra.mxu0 0.0
        %2619 = vmatprep.subr.mxu0 0.0
        %2620 = vmatpush2.msra.mxu0 0.0
        %2621 = vmatprep.subr.mxu0 0.0
        %2622 = vmatpush2.msra.mxu0 0.0
        %2623 = vmatprep.subr.mxu0 0.0
        %2624 = vmatpush2.msra.mxu0 0.0
        %2625 = vmatprep.subr.mxu0 0.0
        %2626 = vmatpush2.msra.mxu0 0.0
        %2627 = vmatprep.mubr.f32.mxu0 0.0
        %2628 = vmatmul.mubr.f32.gmra.mxu0 %v2558
        %v2629 = vpop.f32.mrf.mxu0
        %v2630 = vadd.f32 0.0, %v2629
        %v2631 = vpop.f32.mrf.mxu0
        %2632 = vmatprep.mubr.f32.mxu0 0.0
        %2633 = vmatmul.mubr.f32.gmra.mxu0 %v2561
        %v2634 = vpop.f32.mrf.mxu0
        %v2635 = vadd.f32 0.0, %v2634
        %v2636 = vpop.f32.mrf.mxu0
        %2637 = vdwg.mxu0
        %v2639 = vsel %vm432, %v1227, 0
        %v2642 = vsel %vm432, %v1228, 0
        %2644 = vmatprep.subr.mxu0 0.0
        %2645 = vmatpush1.msra.mxu0 0.0
        %2646 = vmatprep.subr.mxu0 0.0
        %2647 = vmatpush1.msra.mxu0 0.0
        %2648 = vmatprep.subr.mxu0 0.0
        %2649 = vmatpush1.msra.mxu0 0.0
        %2650 = vmatprep.subr.mxu0 0.0
        %2651 = vmatpush1.msra.mxu0 0.0
        %2652 = vmatprep.subr.mxu0 0.0
        %2653 = vmatpush1.msra.mxu0 0.0
        %2654 = vmatprep.subr.mxu0 0.0
        %2655 = vmatpush1.msra.mxu0 0.0
        %2656 = vmatprep.subr.mxu0 0.0
        %2657 = vmatpush1.msra.mxu0 0.0
        %2658 = vmatprep.subr.mxu0 0.0
        %2659 = vmatpush1.msra.mxu0 0.0
        %2660 = vmatprep.subr.mxu0 0.0
        %2661 = vmatpush1.msra.mxu0 0.0
        %2662 = vmatprep.subr.mxu0 0.0
        %2663 = vmatpush1.msra.mxu0 0.0
        %2664 = vmatprep.subr.mxu0 0.0
        %2665 = vmatpush1.msra.mxu0 0.0
        %2666 = vmatprep.subr.mxu0 0.0
        %2667 = vmatpush1.msra.mxu0 0.0
        %2668 = vmatprep.subr.mxu0 0.0
        %2669 = vmatpush1.msra.mxu0 0.0
        %2670 = vmatprep.subr.mxu0 0.0
        %2671 = vmatpush1.msra.mxu0 0.0
        %2672 = vmatprep.subr.mxu0 0.0
        %2673 = vmatpush1.msra.mxu0 %v1484
        %2674 = vmatprep.subr.mxu0 0.0
        %2675 = vmatpush1.msra.mxu0 %v1483
        %2676 = vmatprep.subr.mxu0 0.0
        %2677 = vmatpush2.msra.mxu0 0.0
        %2678 = vmatprep.subr.mxu0 0.0
        %2679 = vmatpush2.msra.mxu0 0.0
        %2680 = vmatprep.subr.mxu0 0.0
        %2681 = vmatpush2.msra.mxu0 0.0
        %2682 = vmatprep.subr.mxu0 0.0
        %2683 = vmatpush2.msra.mxu0 0.0
        %2684 = vmatprep.subr.mxu0 0.0
        %2685 = vmatpush2.msra.mxu0 0.0
        %2686 = vmatprep.subr.mxu0 0.0
        %2687 = vmatpush2.msra.mxu0 0.0
        %2688 = vmatprep.subr.mxu0 0.0
        %2689 = vmatpush2.msra.mxu0 0.0
        %2690 = vmatprep.subr.mxu0 0.0
        %2691 = vmatpush2.msra.mxu0 0.0
        %2692 = vmatprep.subr.mxu0 0.0
        %2693 = vmatpush2.msra.mxu0 0.0
        %2694 = vmatprep.subr.mxu0 0.0
        %2695 = vmatpush2.msra.mxu0 0.0
        %2696 = vmatprep.subr.mxu0 0.0
        %2697 = vmatpush2.msra.mxu0 0.0
        %2698 = vmatprep.subr.mxu0 0.0
        %2699 = vmatpush2.msra.mxu0 0.0
        %2700 = vmatprep.subr.mxu0 0.0
        %2701 = vmatpush2.msra.mxu0 0.0
        %2702 = vmatprep.subr.mxu0 0.0
        %2703 = vmatpush2.msra.mxu0 0.0
        %2704 = vmatprep.subr.mxu0 0.0
        %2705 = vmatpush2.msra.mxu0 0.0
        %2706 = vmatprep.subr.mxu0 0.0
        %2707 = vmatpush2.msra.mxu0 0.0
        %2708 = vmatprep.mubr.f32.mxu0 0.0
        %2709 = vmatmul.mubr.f32.gmra.mxu0 %v2639
        %v2710 = vpop.f32.mrf.mxu0
        %v2711 = vadd.f32 0.0, %v2710
        %v2712 = vpop.f32.mrf.mxu0
        %2713 = vmatprep.mubr.f32.mxu0 0.0
        %2714 = vmatmul.mubr.f32.gmra.mxu0 %v2642
        %v2715 = vpop.f32.mrf.mxu0
        %v2716 = vadd.f32 0.0, %v2715
        %v2717 = vpop.f32.mrf.mxu0
        %2718 = vdwg.mxu0
        %v2720 = vsel %vm432, %v1229, 0
        %v2723 = vsel %vm432, %v1230, 0
        %2725 = vmatprep.subr.mxu0 0.0
        %2726 = vmatpush1.msra.mxu0 0.0
        %2727 = vmatprep.subr.mxu0 0.0
        %2728 = vmatpush1.msra.mxu0 0.0
        %2729 = vmatprep.subr.mxu0 0.0
        %2730 = vmatpush1.msra.mxu0 0.0
        %2731 = vmatprep.subr.mxu0 0.0
        %2732 = vmatpush1.msra.mxu0 0.0
        %2733 = vmatprep.subr.mxu0 0.0
        %2734 = vmatpush1.msra.mxu0 0.0
        %2735 = vmatprep.subr.mxu0 0.0
        %2736 = vmatpush1.msra.mxu0 0.0
        %2737 = vmatprep.subr.mxu0 0.0
        %2738 = vmatpush1.msra.mxu0 0.0
        %2739 = vmatprep.subr.mxu0 0.0
        %2740 = vmatpush1.msra.mxu0 0.0
        %2741 = vmatprep.subr.mxu0 0.0
        %2742 = vmatpush1.msra.mxu0 0.0
        %2743 = vmatprep.subr.mxu0 0.0
        %2744 = vmatpush1.msra.mxu0 0.0
        %2745 = vmatprep.subr.mxu0 0.0
        %2746 = vmatpush1.msra.mxu0 0.0
        %2747 = vmatprep.subr.mxu0 0.0
        %2748 = vmatpush1.msra.mxu0 0.0
        %2749 = vmatprep.subr.mxu0 0.0
        %2750 = vmatpush1.msra.mxu0 0.0
        %2751 = vmatprep.subr.mxu0 0.0
        %2752 = vmatpush1.msra.mxu0 0.0
        %2753 = vmatprep.subr.mxu0 0.0
        %2754 = vmatpush1.msra.mxu0 %v1486
        %2755 = vmatprep.subr.mxu0 0.0
        %2756 = vmatpush1.msra.mxu0 %v1485
        %2757 = vmatprep.subr.mxu0 0.0
        %2758 = vmatpush2.msra.mxu0 0.0
        %2759 = vmatprep.subr.mxu0 0.0
        %2760 = vmatpush2.msra.mxu0 0.0
        %2761 = vmatprep.subr.mxu0 0.0
        %2762 = vmatpush2.msra.mxu0 0.0
        %2763 = vmatprep.subr.mxu0 0.0
        %2764 = vmatpush2.msra.mxu0 0.0
        %2765 = vmatprep.subr.mxu0 0.0
        %2766 = vmatpush2.msra.mxu0 0.0
        %2767 = vmatprep.subr.mxu0 0.0
        %2768 = vmatpush2.msra.mxu0 0.0
        %2769 = vmatprep.subr.mxu0 0.0
        %2770 = vmatpush2.msra.mxu0 0.0
        %2771 = vmatprep.subr.mxu0 0.0
        %2772 = vmatpush2.msra.mxu0 0.0
        %2773 = vmatprep.subr.mxu0 0.0
        %2774 = vmatpush2.msra.mxu0 0.0
        %2775 = vmatprep.subr.mxu0 0.0
        %2776 = vmatpush2.msra.mxu0 0.0
        %2777 = vmatprep.subr.mxu0 0.0
        %2778 = vmatpush2.msra.mxu0 0.0
        %2779 = vmatprep.subr.mxu0 0.0
        %2780 = vmatpush2.msra.mxu0 0.0
        %2781 = vmatprep.subr.mxu0 0.0
        %2782 = vmatpush2.msra.mxu0 0.0
        %2783 = vmatprep.subr.mxu0 0.0
        %2784 = vmatpush2.msra.mxu0 0.0
        %2785 = vmatprep.subr.mxu0 0.0
        %2786 = vmatpush2.msra.mxu0 0.0
        %2787 = vmatprep.subr.mxu0 0.0
        %2788 = vmatpush2.msra.mxu0 0.0
        %2789 = vmatprep.mubr.f32.mxu0 0.0
        %2790 = vmatmul.mubr.f32.gmra.mxu0 %v2720
        %v2791 = vpop.f32.mrf.mxu0
        %v2792 = vadd.f32 0.0, %v2791
        %v2793 = vpop.f32.mrf.mxu0
        %2794 = vmatprep.mubr.f32.mxu0 0.0
        %2795 = vmatmul.mubr.f32.gmra.mxu0 %v2723
        %v2796 = vpop.f32.mrf.mxu0
        %v2797 = vadd.f32 0.0, %v2796
        %v2798 = vpop.f32.mrf.mxu0
        %2799 = vdwg.mxu0
        %v2801 = vsel %vm432, %v1231, 0
        %v2804 = vsel %vm432, %v1232, 0
        %2806 = vmatprep.subr.mxu0 0.0
        %2807 = vmatpush1.msra.mxu0 0.0
        %2808 = vmatprep.subr.mxu0 0.0
        %2809 = vmatpush1.msra.mxu0 0.0
        %2810 = vmatprep.subr.mxu0 0.0
        %2811 = vmatpush1.msra.mxu0 0.0
        %2812 = vmatprep.subr.mxu0 0.0
        %2813 = vmatpush1.msra.mxu0 0.0
        %2814 = vmatprep.subr.mxu0 0.0
        %2815 = vmatpush1.msra.mxu0 0.0
        %2816 = vmatprep.subr.mxu0 0.0
        %2817 = vmatpush1.msra.mxu0 0.0
        %2818 = vmatprep.subr.mxu0 0.0
        %2819 = vmatpush1.msra.mxu0 0.0
        %2820 = vmatprep.subr.mxu0 0.0
        %2821 = vmatpush1.msra.mxu0 0.0
        %2822 = vmatprep.subr.mxu0 0.0
        %2823 = vmatpush1.msra.mxu0 0.0
        %2824 = vmatprep.subr.mxu0 0.0
        %2825 = vmatpush1.msra.mxu0 0.0
        %2826 = vmatprep.subr.mxu0 0.0
        %2827 = vmatpush1.msra.mxu0 0.0
        %2828 = vmatprep.subr.mxu0 0.0
        %2829 = vmatpush1.msra.mxu0 0.0
        %2830 = vmatprep.subr.mxu0 0.0
        %2831 = vmatpush1.msra.mxu0 0.0
        %2832 = vmatprep.subr.mxu0 0.0
        %2833 = vmatpush1.msra.mxu0 0.0
        %2834 = vmatprep.subr.mxu0 0.0
        %2835 = vmatpush1.msra.mxu0 %v1488
        %2836 = vmatprep.subr.mxu0 0.0
        %2837 = vmatpush1.msra.mxu0 %v1487
        %2838 = vmatprep.subr.mxu0 0.0
        %2839 = vmatpush2.msra.mxu0 0.0
        %2840 = vmatprep.subr.mxu0 0.0
        %2841 = vmatpush2.msra.mxu0 0.0
        %2842 = vmatprep.subr.mxu0 0.0
        %2843 = vmatpush2.msra.mxu0 0.0
        %2844 = vmatprep.subr.mxu0 0.0
        %2845 = vmatpush2.msra.mxu0 0.0
        %2846 = vmatprep.subr.mxu0 0.0
        %2847 = vmatpush2.msra.mxu0 0.0
        %2848 = vmatprep.subr.mxu0 0.0
        %2849 = vmatpush2.msra.mxu0 0.0
        %2850 = vmatprep.subr.mxu0 0.0
        %2851 = vmatpush2.msra.mxu0 0.0
        %2852 = vmatprep.subr.mxu0 0.0
        %2853 = vmatpush2.msra.mxu0 0.0
        %2854 = vmatprep.subr.mxu0 0.0
        %2855 = vmatpush2.msra.mxu0 0.0
        %2856 = vmatprep.subr.mxu0 0.0
        %2857 = vmatpush2.msra.mxu0 0.0
        %2858 = vmatprep.subr.mxu0 0.0
        %2859 = vmatpush2.msra.mxu0 0.0
        %2860 = vmatprep.subr.mxu0 0.0
        %2861 = vmatpush2.msra.mxu0 0.0
        %2862 = vmatprep.subr.mxu0 0.0
        %2863 = vmatpush2.msra.mxu0 0.0
        %2864 = vmatprep.subr.mxu0 0.0
        %2865 = vmatpush2.msra.mxu0 0.0
        %2866 = vmatprep.subr.mxu0 0.0
        %2867 = vmatpush2.msra.mxu0 0.0
        %2868 = vmatprep.subr.mxu0 0.0
        %2869 = vmatpush2.msra.mxu0 0.0
        %2870 = vmatprep.mubr.f32.mxu0 0.0
        %2871 = vmatmul.mubr.f32.gmra.mxu0 %v2801
        %v2872 = vpop.f32.mrf.mxu0
        %v2873 = vadd.f32 0.0, %v2872
        %v2874 = vpop.f32.mrf.mxu0
        %2875 = vmatprep.mubr.f32.mxu0 0.0
        %2876 = vmatmul.mubr.f32.gmra.mxu0 %v2804
        %v2877 = vpop.f32.mrf.mxu0
        %v2878 = vadd.f32 0.0, %v2877
        %v2879 = vpop.f32.mrf.mxu0
        %2880 = vdwg.mxu0
        %v2882 = vsel %vm432, %v1233, 0
        %v2885 = vsel %vm432, %v1234, 0
        %2887 = vmatprep.subr.mxu0 0.0
        %2888 = vmatpush1.msra.mxu0 0.0
        %2889 = vmatprep.subr.mxu0 0.0
        %2890 = vmatpush1.msra.mxu0 0.0
        %2891 = vmatprep.subr.mxu0 0.0
        %2892 = vmatpush1.msra.mxu0 0.0
        %2893 = vmatprep.subr.mxu0 0.0
        %2894 = vmatpush1.msra.mxu0 0.0
        %2895 = vmatprep.subr.mxu0 0.0
        %2896 = vmatpush1.msra.mxu0 0.0
        %2897 = vmatprep.subr.mxu0 0.0
        %2898 = vmatpush1.msra.mxu0 0.0
        %2899 = vmatprep.subr.mxu0 0.0
        %2900 = vmatpush1.msra.mxu0 0.0
        %2901 = vmatprep.subr.mxu0 0.0
        %2902 = vmatpush1.msra.mxu0 0.0
        %2903 = vmatprep.subr.mxu0 0.0
        %2904 = vmatpush1.msra.mxu0 0.0
        %2905 = vmatprep.subr.mxu0 0.0
        %2906 = vmatpush1.msra.mxu0 0.0
        %2907 = vmatprep.subr.mxu0 0.0
        %2908 = vmatpush1.msra.mxu0 0.0
        %2909 = vmatprep.subr.mxu0 0.0
        %2910 = vmatpush1.msra.mxu0 0.0
        %2911 = vmatprep.subr.mxu0 0.0
        %2912 = vmatpush1.msra.mxu0 0.0
        %2913 = vmatprep.subr.mxu0 0.0
        %2914 = vmatpush1.msra.mxu0 0.0
        %2915 = vmatprep.subr.mxu0 0.0
        %2916 = vmatpush1.msra.mxu0 %v1490
        %2917 = vmatprep.subr.mxu0 0.0
        %2918 = vmatpush1.msra.mxu0 %v1489
        %2919 = vmatprep.subr.mxu0 0.0
        %2920 = vmatpush2.msra.mxu0 0.0
        %2921 = vmatprep.subr.mxu0 0.0
        %2922 = vmatpush2.msra.mxu0 0.0
        %2923 = vmatprep.subr.mxu0 0.0
        %2924 = vmatpush2.msra.mxu0 0.0
        %2925 = vmatprep.subr.mxu0 0.0
        %2926 = vmatpush2.msra.mxu0 0.0
        %2927 = vmatprep.subr.mxu0 0.0
        %2928 = vmatpush2.msra.mxu0 0.0
        %2929 = vmatprep.subr.mxu0 0.0
        %2930 = vmatpush2.msra.mxu0 0.0
        %2931 = vmatprep.subr.mxu0 0.0
        %2932 = vmatpush2.msra.mxu0 0.0
        %2933 = vmatprep.subr.mxu0 0.0
        %2934 = vmatpush2.msra.mxu0 0.0
        %2935 = vmatprep.subr.mxu0 0.0
        %2936 = vmatpush2.msra.mxu0 0.0
        %2937 = vmatprep.subr.mxu0 0.0
        %2938 = vmatpush2.msra.mxu0 0.0
        %2939 = vmatprep.subr.mxu0 0.0
        %2940 = vmatpush2.msra.mxu0 0.0
        %2941 = vmatprep.subr.mxu0 0.0
        %2942 = vmatpush2.msra.mxu0 0.0
        %2943 = vmatprep.subr.mxu0 0.0
        %2944 = vmatpush2.msra.mxu0 0.0
        %2945 = vmatprep.subr.mxu0 0.0
        %2946 = vmatpush2.msra.mxu0 0.0
        %2947 = vmatprep.subr.mxu0 0.0
        %2948 = vmatpush2.msra.mxu0 0.0
        %2949 = vmatprep.subr.mxu0 0.0
        %2950 = vmatpush2.msra.mxu0 0.0
        %2951 = vmatprep.mubr.f32.mxu0 0.0
        %2952 = vmatmul.mubr.f32.gmra.mxu0 %v2882
        %v2953 = vpop.f32.mrf.mxu0
        %v2954 = vadd.f32 0.0, %v2953
        %v2955 = vpop.f32.mrf.mxu0
        %2956 = vmatprep.mubr.f32.mxu0 0.0
        %2957 = vmatmul.mubr.f32.gmra.mxu0 %v2885
        %v2958 = vpop.f32.mrf.mxu0
        %v2959 = vadd.f32 0.0, %v2958
        %v2960 = vpop.f32.mrf.mxu0
        %2961 = vdwg.mxu0
        %v2963 = vsel %vm432, %v1235, 0
        %v2966 = vsel %vm432, %v1236, 0
        %2968 = vmatprep.subr.mxu0 0.0
        %2969 = vmatpush1.msra.mxu0 0.0
        %2970 = vmatprep.subr.mxu0 0.0
        %2971 = vmatpush1.msra.mxu0 0.0
        %2972 = vmatprep.subr.mxu0 0.0
        %2973 = vmatpush1.msra.mxu0 0.0
        %2974 = vmatprep.subr.mxu0 0.0
        %2975 = vmatpush1.msra.mxu0 0.0
        %2976 = vmatprep.subr.mxu0 0.0
        %2977 = vmatpush1.msra.mxu0 0.0
        %2978 = vmatprep.subr.mxu0 0.0
        %2979 = vmatpush1.msra.mxu0 0.0
        %2980 = vmatprep.subr.mxu0 0.0
        %2981 = vmatpush1.msra.mxu0 0.0
        %2982 = vmatprep.subr.mxu0 0.0
        %2983 = vmatpush1.msra.mxu0 0.0
        %2984 = vmatprep.subr.mxu0 0.0
        %2985 = vmatpush1.msra.mxu0 0.0
        %2986 = vmatprep.subr.mxu0 0.0
        %2987 = vmatpush1.msra.mxu0 0.0
        %2988 = vmatprep.subr.mxu0 0.0
        %2989 = vmatpush1.msra.mxu0 0.0
        %2990 = vmatprep.subr.mxu0 0.0
        %2991 = vmatpush1.msra.mxu0 0.0
        %2992 = vmatprep.subr.mxu0 0.0
        %2993 = vmatpush1.msra.mxu0 0.0
        %2994 = vmatprep.subr.mxu0 0.0
        %2995 = vmatpush1.msra.mxu0 0.0
        %2996 = vmatprep.subr.mxu0 0.0
        %2997 = vmatpush1.msra.mxu0 %v1492
        %2998 = vmatprep.subr.mxu0 0.0
        %2999 = vmatpush1.msra.mxu0 %v1491
        %3000 = vmatprep.subr.mxu0 0.0
        %3001 = vmatpush2.msra.mxu0 0.0
        %3002 = vmatprep.subr.mxu0 0.0
        %3003 = vmatpush2.msra.mxu0 0.0
        %3004 = vmatprep.subr.mxu0 0.0
        %3005 = vmatpush2.msra.mxu0 0.0
        %3006 = vmatprep.subr.mxu0 0.0
        %3007 = vmatpush2.msra.mxu0 0.0
        %3008 = vmatprep.subr.mxu0 0.0
        %3009 = vmatpush2.msra.mxu0 0.0
        %3010 = vmatprep.subr.mxu0 0.0
        %3011 = vmatpush2.msra.mxu0 0.0
        %3012 = vmatprep.subr.mxu0 0.0
        %3013 = vmatpush2.msra.mxu0 0.0
        %3014 = vmatprep.subr.mxu0 0.0
        %3015 = vmatpush2.msra.mxu0 0.0
        %3016 = vmatprep.subr.mxu0 0.0
        %3017 = vmatpush2.msra.mxu0 0.0
        %3018 = vmatprep.subr.mxu0 0.0
        %3019 = vmatpush2.msra.mxu0 0.0
        %3020 = vmatprep.subr.mxu0 0.0
        %3021 = vmatpush2.msra.mxu0 0.0
        %3022 = vmatprep.subr.mxu0 0.0
        %3023 = vmatpush2.msra.mxu0 0.0
        %3024 = vmatprep.subr.mxu0 0.0
        %3025 = vmatpush2.msra.mxu0 0.0
        %3026 = vmatprep.subr.mxu0 0.0
        %3027 = vmatpush2.msra.mxu0 0.0
        %3028 = vmatprep.subr.mxu0 0.0
        %3029 = vmatpush2.msra.mxu0 0.0
        %3030 = vmatprep.subr.mxu0 0.0
        %3031 = vmatpush2.msra.mxu0 0.0
        %3032 = vmatprep.mubr.f32.mxu0 0.0
        %3033 = vmatmul.mubr.f32.gmra.mxu0 %v2963
        %v3034 = vpop.f32.mrf.mxu0
        %v3035 = vadd.f32 0.0, %v3034
        %v3036 = vpop.f32.mrf.mxu0
        %3037 = vmatprep.mubr.f32.mxu0 0.0
        %3038 = vmatmul.mubr.f32.gmra.mxu0 %v2966
        %v3039 = vpop.f32.mrf.mxu0
        %v3040 = vadd.f32 0.0, %v3039
        %v3041 = vpop.f32.mrf.mxu0
        %3042 = vdwg.mxu0
        %v3044 = vsel %vm432, %v1237, 0
        %v3047 = vsel %vm432, %v1238, 0
        %3049 = vmatprep.subr.mxu0 0.0
        %3050 = vmatpush1.msra.mxu0 0.0
        %3051 = vmatprep.subr.mxu0 0.0
        %3052 = vmatpush1.msra.mxu0 0.0
        %3053 = vmatprep.subr.mxu0 0.0
        %3054 = vmatpush1.msra.mxu0 0.0
        %3055 = vmatprep.subr.mxu0 0.0
        %3056 = vmatpush1.msra.mxu0 0.0
        %3057 = vmatprep.subr.mxu0 0.0
        %3058 = vmatpush1.msra.mxu0 0.0
        %3059 = vmatprep.subr.mxu0 0.0
        %3060 = vmatpush1.msra.mxu0 0.0
        %3061 = vmatprep.subr.mxu0 0.0
        %3062 = vmatpush1.msra.mxu0 0.0
        %3063 = vmatprep.subr.mxu0 0.0
        %3064 = vmatpush1.msra.mxu0 0.0
        %3065 = vmatprep.subr.mxu0 0.0
        %3066 = vmatpush1.msra.mxu0 0.0
        %3067 = vmatprep.subr.mxu0 0.0
        %3068 = vmatpush1.msra.mxu0 0.0
        %3069 = vmatprep.subr.mxu0 0.0
        %3070 = vmatpush1.msra.mxu0 0.0
        %3071 = vmatprep.subr.mxu0 0.0
        %3072 = vmatpush1.msra.mxu0 0.0
        %3073 = vmatprep.subr.mxu0 0.0
        %3074 = vmatpush1.msra.mxu0 0.0
        %3075 = vmatprep.subr.mxu0 0.0
        %3076 = vmatpush1.msra.mxu0 0.0
        %3077 = vmatprep.subr.mxu0 0.0
        %3078 = vmatpush1.msra.mxu0 %v1494
        %3079 = vmatprep.subr.mxu0 0.0
        %3080 = vmatpush1.msra.mxu0 %v1493
        %3081 = vmatprep.subr.mxu0 0.0
        %3082 = vmatpush2.msra.mxu0 0.0
        %3083 = vmatprep.subr.mxu0 0.0
        %3084 = vmatpush2.msra.mxu0 0.0
        %3085 = vmatprep.subr.mxu0 0.0
        %3086 = vmatpush2.msra.mxu0 0.0
        %3087 = vmatprep.subr.mxu0 0.0
        %3088 = vmatpush2.msra.mxu0 0.0
        %3089 = vmatprep.subr.mxu0 0.0
        %3090 = vmatpush2.msra.mxu0 0.0
        %3091 = vmatprep.subr.mxu0 0.0
        %3092 = vmatpush2.msra.mxu0 0.0
        %3093 = vmatprep.subr.mxu0 0.0
        %3094 = vmatpush2.msra.mxu0 0.0
        %3095 = vmatprep.subr.mxu0 0.0
        %3096 = vmatpush2.msra.mxu0 0.0
        %3097 = vmatprep.subr.mxu0 0.0
        %3098 = vmatpush2.msra.mxu0 0.0
        %3099 = vmatprep.subr.mxu0 0.0
        %3100 = vmatpush2.msra.mxu0 0.0
        %3101 = vmatprep.subr.mxu0 0.0
        %3102 = vmatpush2.msra.mxu0 0.0
        %3103 = vmatprep.subr.mxu0 0.0
        %3104 = vmatpush2.msra.mxu0 0.0
        %3105 = vmatprep.subr.mxu0 0.0
        %3106 = vmatpush2.msra.mxu0 0.0
        %3107 = vmatprep.subr.mxu0 0.0
        %3108 = vmatpush2.msra.mxu0 0.0
        %3109 = vmatprep.subr.mxu0 0.0
        %3110 = vmatpush2.msra.mxu0 0.0
        %3111 = vmatprep.subr.mxu0 0.0
        %3112 = vmatpush2.msra.mxu0 0.0
        %3113 = vmatprep.mubr.f32.mxu0 0.0
        %3114 = vmatmul.mubr.f32.gmra.mxu0 %v3044
        %v3115 = vpop.f32.mrf.mxu0
        %v3116 = vadd.f32 0.0, %v3115
        %v3117 = vpop.f32.mrf.mxu0
        %3118 = vmatprep.mubr.f32.mxu0 0.0
        %3119 = vmatmul.mubr.f32.gmra.mxu0 %v3047
        %v3120 = vpop.f32.mrf.mxu0
        %v3121 = vadd.f32 0.0, %v3120
        %v3122 = vpop.f32.mrf.mxu0
        %3123 = vdwg.mxu0
        %v3125 = vsel %vm432, %v1239, 0
        %v3128 = vsel %vm432, %v1240, 0
        %3130 = vmatprep.subr.mxu0 0.0
        %3131 = vmatpush1.msra.mxu0 0.0
        %3132 = vmatprep.subr.mxu0 0.0
        %3133 = vmatpush1.msra.mxu0 0.0
        %3134 = vmatprep.subr.mxu0 0.0
        %3135 = vmatpush1.msra.mxu0 0.0
        %3136 = vmatprep.subr.mxu0 0.0
        %3137 = vmatpush1.msra.mxu0 0.0
        %3138 = vmatprep.subr.mxu0 0.0
        %3139 = vmatpush1.msra.mxu0 0.0
        %3140 = vmatprep.subr.mxu0 0.0
        %3141 = vmatpush1.msra.mxu0 0.0
        %3142 = vmatprep.subr.mxu0 0.0
        %3143 = vmatpush1.msra.mxu0 0.0
        %3144 = vmatprep.subr.mxu0 0.0
        %3145 = vmatpush1.msra.mxu0 0.0
        %3146 = vmatprep.subr.mxu0 0.0
        %3147 = vmatpush1.msra.mxu0 0.0
        %3148 = vmatprep.subr.mxu0 0.0
        %3149 = vmatpush1.msra.mxu0 0.0
        %3150 = vmatprep.subr.mxu0 0.0
        %3151 = vmatpush1.msra.mxu0 0.0
        %3152 = vmatprep.subr.mxu0 0.0
        %3153 = vmatpush1.msra.mxu0 0.0
        %3154 = vmatprep.subr.mxu0 0.0
        %3155 = vmatpush1.msra.mxu0 0.0
        %3156 = vmatprep.subr.mxu0 0.0
        %3157 = vmatpush1.msra.mxu0 0.0
        %3158 = vmatprep.subr.mxu0 0.0
        %3159 = vmatpush1.msra.mxu0 %v1496
        %3160 = vmatprep.subr.mxu0 0.0
        %3161 = vmatpush1.msra.mxu0 %v1495
        %3162 = vmatprep.subr.mxu0 0.0
        %3163 = vmatpush2.msra.mxu0 0.0
        %3164 = vmatprep.subr.mxu0 0.0
        %3165 = vmatpush2.msra.mxu0 0.0
        %3166 = vmatprep.subr.mxu0 0.0
        %3167 = vmatpush2.msra.mxu0 0.0
        %3168 = vmatprep.subr.mxu0 0.0
        %3169 = vmatpush2.msra.mxu0 0.0
        %3170 = vmatprep.subr.mxu0 0.0
        %3171 = vmatpush2.msra.mxu0 0.0
        %3172 = vmatprep.subr.mxu0 0.0
        %3173 = vmatpush2.msra.mxu0 0.0
        %3174 = vmatprep.subr.mxu0 0.0
        %3175 = vmatpush2.msra.mxu0 0.0
        %3176 = vmatprep.subr.mxu0 0.0
        %3177 = vmatpush2.msra.mxu0 0.0
        %3178 = vmatprep.subr.mxu0 0.0
        %3179 = vmatpush2.msra.mxu0 0.0
        %3180 = vmatprep.subr.mxu0 0.0
        %3181 = vmatpush2.msra.mxu0 0.0
        %3182 = vmatprep.subr.mxu0 0.0
        %3183 = vmatpush2.msra.mxu0 0.0
        %3184 = vmatprep.subr.mxu0 0.0
        %3185 = vmatpush2.msra.mxu0 0.0
        %3186 = vmatprep.subr.mxu0 0.0
        %3187 = vmatpush2.msra.mxu0 0.0
        %3188 = vmatprep.subr.mxu0 0.0
        %3189 = vmatpush2.msra.mxu0 0.0
        %3190 = vmatprep.subr.mxu0 0.0
        %3191 = vmatpush2.msra.mxu0 0.0
        %3192 = vmatprep.subr.mxu0 0.0
        %3193 = vmatpush2.msra.mxu0 0.0
        %3194 = vmatprep.mubr.f32.mxu0 0.0
        %3195 = vmatmul.mubr.f32.gmra.mxu0 %v3125
        %v3196 = vpop.f32.mrf.mxu0
        %v3197 = vadd.f32 0.0, %v3196
        %v3198 = vpop.f32.mrf.mxu0
        %3199 = vmatprep.mubr.f32.mxu0 0.0
        %3200 = vmatmul.mubr.f32.gmra.mxu0 %v3128
        %v3201 = vpop.f32.mrf.mxu0
        %v3202 = vadd.f32 0.0, %v3201
        %v3203 = vpop.f32.mrf.mxu0
        %3204 = vdwg.mxu0
        %v3206 = vsel %vm432, %v1241, 0
        %v3209 = vsel %vm432, %v1242, 0
        %3211 = vmatprep.subr.mxu0 0.0
        %3212 = vmatpush1.msra.mxu0 0.0
        %3213 = vmatprep.subr.mxu0 0.0
        %3214 = vmatpush1.msra.mxu0 0.0
        %3215 = vmatprep.subr.mxu0 0.0
        %3216 = vmatpush1.msra.mxu0 0.0
        %3217 = vmatprep.subr.mxu0 0.0
        %3218 = vmatpush1.msra.mxu0 0.0
        %3219 = vmatprep.subr.mxu0 0.0
        %3220 = vmatpush1.msra.mxu0 0.0
        %3221 = vmatprep.subr.mxu0 0.0
        %3222 = vmatpush1.msra.mxu0 0.0
        %3223 = vmatprep.subr.mxu0 0.0
        %3224 = vmatpush1.msra.mxu0 0.0
        %3225 = vmatprep.subr.mxu0 0.0
        %3226 = vmatpush1.msra.mxu0 0.0
        %3227 = vmatprep.subr.mxu0 0.0
        %3228 = vmatpush1.msra.mxu0 0.0
        %3229 = vmatprep.subr.mxu0 0.0
        %3230 = vmatpush1.msra.mxu0 0.0
        %3231 = vmatprep.subr.mxu0 0.0
        %3232 = vmatpush1.msra.mxu0 0.0
        %3233 = vmatprep.subr.mxu0 0.0
        %3234 = vmatpush1.msra.mxu0 0.0
        %3235 = vmatprep.subr.mxu0 0.0
        %3236 = vmatpush1.msra.mxu0 0.0
        %3237 = vmatprep.subr.mxu0 0.0
        %3238 = vmatpush1.msra.mxu0 0.0
        %3239 = vmatprep.subr.mxu0 0.0
        %3240 = vmatpush1.msra.mxu0 %v1498
        %3241 = vmatprep.subr.mxu0 0.0
        %3242 = vmatpush1.msra.mxu0 %v1497
        %3243 = vmatprep.subr.mxu0 0.0
        %3244 = vmatpush2.msra.mxu0 0.0
        %3245 = vmatprep.subr.mxu0 0.0
        %3246 = vmatpush2.msra.mxu0 0.0
        %3247 = vmatprep.subr.mxu0 0.0
        %3248 = vmatpush2.msra.mxu0 0.0
        %3249 = vmatprep.subr.mxu0 0.0
        %3250 = vmatpush2.msra.mxu0 0.0
        %3251 = vmatprep.subr.mxu0 0.0
        %3252 = vmatpush2.msra.mxu0 0.0
        %3253 = vmatprep.subr.mxu0 0.0
        %3254 = vmatpush2.msra.mxu0 0.0
        %3255 = vmatprep.subr.mxu0 0.0
        %3256 = vmatpush2.msra.mxu0 0.0
        %3257 = vmatprep.subr.mxu0 0.0
        %3258 = vmatpush2.msra.mxu0 0.0
        %3259 = vmatprep.subr.mxu0 0.0
        %3260 = vmatpush2.msra.mxu0 0.0
        %3261 = vmatprep.subr.mxu0 0.0
        %3262 = vmatpush2.msra.mxu0 0.0
        %3263 = vmatprep.subr.mxu0 0.0
        %3264 = vmatpush2.msra.mxu0 0.0
        %3265 = vmatprep.subr.mxu0 0.0
        %3266 = vmatpush2.msra.mxu0 0.0
        %3267 = vmatprep.subr.mxu0 0.0
        %3268 = vmatpush2.msra.mxu0 0.0
        %3269 = vmatprep.subr.mxu0 0.0
        %3270 = vmatpush2.msra.mxu0 0.0
        %3271 = vmatprep.subr.mxu0 0.0
        %3272 = vmatpush2.msra.mxu0 0.0
        %3273 = vmatprep.subr.mxu0 0.0
        %3274 = vmatpush2.msra.mxu0 0.0
        %3275 = vmatprep.mubr.f32.mxu0 0.0
        %3276 = vmatmul.mubr.f32.gmra.mxu0 %v3206
        %v3277 = vpop.f32.mrf.mxu0
        %v3278 = vadd.f32 0.0, %v3277
        %v3279 = vpop.f32.mrf.mxu0
        %3280 = vmatprep.mubr.f32.mxu0 0.0
        %3281 = vmatmul.mubr.f32.gmra.mxu0 %v3209
        %v3282 = vpop.f32.mrf.mxu0
        %v3283 = vadd.f32 0.0, %v3282
        %v3284 = vpop.f32.mrf.mxu0
        %3285 = vdwg.mxu0
        %v3287 = vsel %vm432, %v1243, 0
        %v3290 = vsel %vm432, %v1244, 0
        %3292 = vmatprep.subr.mxu0 0.0
        %3293 = vmatpush1.msra.mxu0 0.0
        %3294 = vmatprep.subr.mxu0 0.0
        %3295 = vmatpush1.msra.mxu0 0.0
        %3296 = vmatprep.subr.mxu0 0.0
        %3297 = vmatpush1.msra.mxu0 0.0
        %3298 = vmatprep.subr.mxu0 0.0
        %3299 = vmatpush1.msra.mxu0 0.0
        %3300 = vmatprep.subr.mxu0 0.0
        %3301 = vmatpush1.msra.mxu0 0.0
        %3302 = vmatprep.subr.mxu0 0.0
        %3303 = vmatpush1.msra.mxu0 0.0
        %3304 = vmatprep.subr.mxu0 0.0
        %3305 = vmatpush1.msra.mxu0 0.0
        %3306 = vmatprep.subr.mxu0 0.0
        %3307 = vmatpush1.msra.mxu0 0.0
        %3308 = vmatprep.subr.mxu0 0.0
        %3309 = vmatpush1.msra.mxu0 0.0
        %3310 = vmatprep.subr.mxu0 0.0
        %3311 = vmatpush1.msra.mxu0 0.0
        %3312 = vmatprep.subr.mxu0 0.0
        %3313 = vmatpush1.msra.mxu0 0.0
        %3314 = vmatprep.subr.mxu0 0.0
        %3315 = vmatpush1.msra.mxu0 0.0
        %3316 = vmatprep.subr.mxu0 0.0
        %3317 = vmatpush1.msra.mxu0 0.0
        %3318 = vmatprep.subr.mxu0 0.0
        %3319 = vmatpush1.msra.mxu0 0.0
        %3320 = vmatprep.subr.mxu0 0.0
        %3321 = vmatpush1.msra.mxu0 %v1500
        %3322 = vmatprep.subr.mxu0 0.0
        %3323 = vmatpush1.msra.mxu0 %v1499
        %3324 = vmatprep.subr.mxu0 0.0
        %3325 = vmatpush2.msra.mxu0 0.0
        %3326 = vmatprep.subr.mxu0 0.0
        %3327 = vmatpush2.msra.mxu0 0.0
        %3328 = vmatprep.subr.mxu0 0.0
        %3329 = vmatpush2.msra.mxu0 0.0
        %3330 = vmatprep.subr.mxu0 0.0
        %3331 = vmatpush2.msra.mxu0 0.0
        %3332 = vmatprep.subr.mxu0 0.0
        %3333 = vmatpush2.msra.mxu0 0.0
        %3334 = vmatprep.subr.mxu0 0.0
        %3335 = vmatpush2.msra.mxu0 0.0
        %3336 = vmatprep.subr.mxu0 0.0
        %3337 = vmatpush2.msra.mxu0 0.0
        %3338 = vmatprep.subr.mxu0 0.0
        %3339 = vmatpush2.msra.mxu0 0.0
        %3340 = vmatprep.subr.mxu0 0.0
        %3341 = vmatpush2.msra.mxu0 0.0
        %3342 = vmatprep.subr.mxu0 0.0
        %3343 = vmatpush2.msra.mxu0 0.0
        %3344 = vmatprep.subr.mxu0 0.0
        %3345 = vmatpush2.msra.mxu0 0.0
        %3346 = vmatprep.subr.mxu0 0.0
        %3347 = vmatpush2.msra.mxu0 0.0
        %3348 = vmatprep.subr.mxu0 0.0
        %3349 = vmatpush2.msra.mxu0 0.0
        %3350 = vmatprep.subr.mxu0 0.0
        %3351 = vmatpush2.msra.mxu0 0.0
        %3352 = vmatprep.subr.mxu0 0.0
        %3353 = vmatpush2.msra.mxu0 0.0
        %3354 = vmatprep.subr.mxu0 0.0
        %3355 = vmatpush2.msra.mxu0 0.0
        %3356 = vmatprep.mubr.f32.mxu0 0.0
        %3357 = vmatmul.mubr.f32.gmra.mxu0 %v3287
        %v3358 = vpop.f32.mrf.mxu0
        %v3359 = vadd.f32 0.0, %v3358
        %v3360 = vpop.f32.mrf.mxu0
        %3361 = vmatprep.mubr.f32.mxu0 0.0
        %3362 = vmatmul.mubr.f32.gmra.mxu0 %v3290
        %v3363 = vpop.f32.mrf.mxu0
        %v3364 = vadd.f32 0.0, %v3363
        %v3365 = vpop.f32.mrf.mxu0
        %3366 = vdwg.mxu0
        %v3368 = vsel %vm432, %v1245, 0
        %v3371 = vsel %vm432, %v1246, 0
        %3373 = vmatprep.subr.mxu0 0.0
        %3374 = vmatpush1.msra.mxu0 0.0
        %3375 = vmatprep.subr.mxu0 0.0
        %3376 = vmatpush1.msra.mxu0 0.0
        %3377 = vmatprep.subr.mxu0 0.0
        %3378 = vmatpush1.msra.mxu0 0.0
        %3379 = vmatprep.subr.mxu0 0.0
        %3380 = vmatpush1.msra.mxu0 0.0
        %3381 = vmatprep.subr.mxu0 0.0
        %3382 = vmatpush1.msra.mxu0 0.0
        %3383 = vmatprep.subr.mxu0 0.0
        %3384 = vmatpush1.msra.mxu0 0.0
        %3385 = vmatprep.subr.mxu0 0.0
        %3386 = vmatpush1.msra.mxu0 0.0
        %3387 = vmatprep.subr.mxu0 0.0
        %3388 = vmatpush1.msra.mxu0 0.0
        %3389 = vmatprep.subr.mxu0 0.0
        %3390 = vmatpush1.msra.mxu0 0.0
        %3391 = vmatprep.subr.mxu0 0.0
        %3392 = vmatpush1.msra.mxu0 0.0
        %3393 = vmatprep.subr.mxu0 0.0
        %3394 = vmatpush1.msra.mxu0 0.0
        %3395 = vmatprep.subr.mxu0 0.0
        %3396 = vmatpush1.msra.mxu0 0.0
        %3397 = vmatprep.subr.mxu0 0.0
        %3398 = vmatpush1.msra.mxu0 0.0
        %3399 = vmatprep.subr.mxu0 0.0
        %3400 = vmatpush1.msra.mxu0 0.0
        %3401 = vmatprep.subr.mxu0 0.0
        %3402 = vmatpush1.msra.mxu0 %v1502
        %3403 = vmatprep.subr.mxu0 0.0
        %3404 = vmatpush1.msra.mxu0 %v1501
        %3405 = vmatprep.subr.mxu0 0.0
        %3406 = vmatpush2.msra.mxu0 0.0
        %3407 = vmatprep.subr.mxu0 0.0
        %3408 = vmatpush2.msra.mxu0 0.0
        %3409 = vmatprep.subr.mxu0 0.0
        %3410 = vmatpush2.msra.mxu0 0.0
        %3411 = vmatprep.subr.mxu0 0.0
        %3412 = vmatpush2.msra.mxu0 0.0
        %3413 = vmatprep.subr.mxu0 0.0
        %3414 = vmatpush2.msra.mxu0 0.0
        %3415 = vmatprep.subr.mxu0 0.0
        %3416 = vmatpush2.msra.mxu0 0.0
        %3417 = vmatprep.subr.mxu0 0.0
        %3418 = vmatpush2.msra.mxu0 0.0
        %3419 = vmatprep.subr.mxu0 0.0
        %3420 = vmatpush2.msra.mxu0 0.0
        %3421 = vmatprep.subr.mxu0 0.0
        %3422 = vmatpush2.msra.mxu0 0.0
        %3423 = vmatprep.subr.mxu0 0.0
        %3424 = vmatpush2.msra.mxu0 0.0
        %3425 = vmatprep.subr.mxu0 0.0
        %3426 = vmatpush2.msra.mxu0 0.0
        %3427 = vmatprep.subr.mxu0 0.0
        %3428 = vmatpush2.msra.mxu0 0.0
        %3429 = vmatprep.subr.mxu0 0.0
        %3430 = vmatpush2.msra.mxu0 0.0
        %3431 = vmatprep.subr.mxu0 0.0
        %3432 = vmatpush2.msra.mxu0 0.0
        %3433 = vmatprep.subr.mxu0 0.0
        %3434 = vmatpush2.msra.mxu0 0.0
        %3435 = vmatprep.subr.mxu0 0.0
        %3436 = vmatpush2.msra.mxu0 0.0
        %3437 = vmatprep.mubr.f32.mxu0 0.0
        %3438 = vmatmul.mubr.f32.gmra.mxu0 %v3368
        %v3439 = vpop.f32.mrf.mxu0
        %v3440 = vadd.f32 0.0, %v3439
        %v3441 = vpop.f32.mrf.mxu0
        %3442 = vmatprep.mubr.f32.mxu0 0.0
        %3443 = vmatmul.mubr.f32.gmra.mxu0 %v3371
        %v3444 = vpop.f32.mrf.mxu0
        %v3445 = vadd.f32 0.0, %v3444
        %v3446 = vpop.f32.mrf.mxu0
        %3447 = vdwg.mxu0
        %v3449 = vsel %vm432, %v1247, 0
        %v3452 = vsel %vm432, %v1248, 0
        %3454 = vmatprep.subr.mxu0 0.0
        %3455 = vmatpush1.msra.mxu0 0.0
        %3456 = vmatprep.subr.mxu0 0.0
        %3457 = vmatpush1.msra.mxu0 0.0
        %3458 = vmatprep.subr.mxu0 0.0
        %3459 = vmatpush1.msra.mxu0 0.0
        %3460 = vmatprep.subr.mxu0 0.0
        %3461 = vmatpush1.msra.mxu0 0.0
        %3462 = vmatprep.subr.mxu0 0.0
        %3463 = vmatpush1.msra.mxu0 0.0
        %3464 = vmatprep.subr.mxu0 0.0
        %3465 = vmatpush1.msra.mxu0 0.0
        %3466 = vmatprep.subr.mxu0 0.0
        %3467 = vmatpush1.msra.mxu0 0.0
        %3468 = vmatprep.subr.mxu0 0.0
        %3469 = vmatpush1.msra.mxu0 0.0
        %3470 = vmatprep.subr.mxu0 0.0
        %3471 = vmatpush1.msra.mxu0 0.0
        %3472 = vmatprep.subr.mxu0 0.0
        %3473 = vmatpush1.msra.mxu0 0.0
        %3474 = vmatprep.subr.mxu0 0.0
        %3475 = vmatpush1.msra.mxu0 0.0
        %3476 = vmatprep.subr.mxu0 0.0
        %3477 = vmatpush1.msra.mxu0 0.0
        %3478 = vmatprep.subr.mxu0 0.0
        %3479 = vmatpush1.msra.mxu0 0.0
        %3480 = vmatprep.subr.mxu0 0.0
        %3481 = vmatpush1.msra.mxu0 0.0
        %3482 = vmatprep.subr.mxu0 0.0
        %3483 = vmatpush1.msra.mxu0 %v1504
        %3484 = vmatprep.subr.mxu0 0.0
        %3485 = vmatpush1.msra.mxu0 %v1503
        %3486 = vmatprep.subr.mxu0 0.0
        %3487 = vmatpush2.msra.mxu0 0.0
        %3488 = vmatprep.subr.mxu0 0.0
        %3489 = vmatpush2.msra.mxu0 0.0
        %3490 = vmatprep.subr.mxu0 0.0
        %3491 = vmatpush2.msra.mxu0 0.0
        %3492 = vmatprep.subr.mxu0 0.0
        %3493 = vmatpush2.msra.mxu0 0.0
        %3494 = vmatprep.subr.mxu0 0.0
        %3495 = vmatpush2.msra.mxu0 0.0
        %3496 = vmatprep.subr.mxu0 0.0
        %3497 = vmatpush2.msra.mxu0 0.0
        %3498 = vmatprep.subr.mxu0 0.0
        %3499 = vmatpush2.msra.mxu0 0.0
        %3500 = vmatprep.subr.mxu0 0.0
        %3501 = vmatpush2.msra.mxu0 0.0
        %3502 = vmatprep.subr.mxu0 0.0
        %3503 = vmatpush2.msra.mxu0 0.0
        %3504 = vmatprep.subr.mxu0 0.0
        %3505 = vmatpush2.msra.mxu0 0.0
        %3506 = vmatprep.subr.mxu0 0.0
        %3507 = vmatpush2.msra.mxu0 0.0
        %3508 = vmatprep.subr.mxu0 0.0
        %3509 = vmatpush2.msra.mxu0 0.0
        %3510 = vmatprep.subr.mxu0 0.0
        %3511 = vmatpush2.msra.mxu0 0.0
        %3512 = vmatprep.subr.mxu0 0.0
        %3513 = vmatpush2.msra.mxu0 0.0
        %3514 = vmatprep.subr.mxu0 0.0
        %3515 = vmatpush2.msra.mxu0 0.0
        %3516 = vmatprep.subr.mxu0 0.0
        %3517 = vmatpush2.msra.mxu0 0.0
        %3518 = vmatprep.mubr.f32.mxu0 0.0
        %3519 = vmatmul.mubr.f32.gmra.mxu0 %v3449
        %v3520 = vpop.f32.mrf.mxu0
        %v3521 = vadd.f32 0.0, %v3520
        %v3522 = vpop.f32.mrf.mxu0
        %3523 = vmatprep.mubr.f32.mxu0 0.0
        %3524 = vmatmul.mubr.f32.gmra.mxu0 %v3452
        %v3525 = vpop.f32.mrf.mxu0
        %v3526 = vadd.f32 0.0, %v3525
        %v3527 = vpop.f32.mrf.mxu0
        %3528 = vdwg.mxu0
        %v3530 = vsel %vm432, %v1249, 0
        %v3533 = vsel %vm432, %v1250, 0
        %3535 = vmatprep.subr.mxu0 0.0
        %3536 = vmatpush1.msra.mxu0 0.0
        %3537 = vmatprep.subr.mxu0 0.0
        %3538 = vmatpush1.msra.mxu0 0.0
        %3539 = vmatprep.subr.mxu0 0.0
        %3540 = vmatpush1.msra.mxu0 0.0
        %3541 = vmatprep.subr.mxu0 0.0
        %3542 = vmatpush1.msra.mxu0 0.0
        %3543 = vmatprep.subr.mxu0 0.0
        %3544 = vmatpush1.msra.mxu0 0.0
        %3545 = vmatprep.subr.mxu0 0.0
        %3546 = vmatpush1.msra.mxu0 0.0
        %3547 = vmatprep.subr.mxu0 0.0
        %3548 = vmatpush1.msra.mxu0 0.0
        %3549 = vmatprep.subr.mxu0 0.0
        %3550 = vmatpush1.msra.mxu0 0.0
        %3551 = vmatprep.subr.mxu0 0.0
        %3552 = vmatpush1.msra.mxu0 0.0
        %3553 = vmatprep.subr.mxu0 0.0
        %3554 = vmatpush1.msra.mxu0 0.0
        %3555 = vmatprep.subr.mxu0 0.0
        %3556 = vmatpush1.msra.mxu0 0.0
        %3557 = vmatprep.subr.mxu0 0.0
        %3558 = vmatpush1.msra.mxu0 0.0
        %3559 = vmatprep.subr.mxu0 0.0
        %3560 = vmatpush1.msra.mxu0 0.0
        %3561 = vmatprep.subr.mxu0 0.0
        %3562 = vmatpush1.msra.mxu0 0.0
        %3563 = vmatprep.subr.mxu0 0.0
        %3564 = vmatpush1.msra.mxu0 %v1506
        %3565 = vmatprep.subr.mxu0 0.0
        %3566 = vmatpush1.msra.mxu0 %v1505
        %3567 = vmatprep.subr.mxu0 0.0
        %3568 = vmatpush2.msra.mxu0 0.0
        %3569 = vmatprep.subr.mxu0 0.0
        %3570 = vmatpush2.msra.mxu0 0.0
        %3571 = vmatprep.subr.mxu0 0.0
        %3572 = vmatpush2.msra.mxu0 0.0
        %3573 = vmatprep.subr.mxu0 0.0
        %3574 = vmatpush2.msra.mxu0 0.0
        %3575 = vmatprep.subr.mxu0 0.0
        %3576 = vmatpush2.msra.mxu0 0.0
        %3577 = vmatprep.subr.mxu0 0.0
        %3578 = vmatpush2.msra.mxu0 0.0
        %3579 = vmatprep.subr.mxu0 0.0
        %3580 = vmatpush2.msra.mxu0 0.0
        %3581 = vmatprep.subr.mxu0 0.0
        %3582 = vmatpush2.msra.mxu0 0.0
        %3583 = vmatprep.subr.mxu0 0.0
        %3584 = vmatpush2.msra.mxu0 0.0
        %3585 = vmatprep.subr.mxu0 0.0
        %3586 = vmatpush2.msra.mxu0 0.0
        %3587 = vmatprep.subr.mxu0 0.0
        %3588 = vmatpush2.msra.mxu0 0.0
        %3589 = vmatprep.subr.mxu0 0.0
        %3590 = vmatpush2.msra.mxu0 0.0
        %3591 = vmatprep.subr.mxu0 0.0
        %3592 = vmatpush2.msra.mxu0 0.0
        %3593 = vmatprep.subr.mxu0 0.0
        %3594 = vmatpush2.msra.mxu0 0.0
        %3595 = vmatprep.subr.mxu0 0.0
        %3596 = vmatpush2.msra.mxu0 0.0
        %3597 = vmatprep.subr.mxu0 0.0
        %3598 = vmatpush2.msra.mxu0 0.0
        %3599 = vmatprep.mubr.f32.mxu0 0.0
        %3600 = vmatmul.mubr.f32.gmra.mxu0 %v3530
        %v3601 = vpop.f32.mrf.mxu0
        %v3602 = vadd.f32 0.0, %v3601
        %v3603 = vpop.f32.mrf.mxu0
        %3604 = vmatprep.mubr.f32.mxu0 0.0
        %3605 = vmatmul.mubr.f32.gmra.mxu0 %v3533
        %v3606 = vpop.f32.mrf.mxu0
        %v3607 = vadd.f32 0.0, %v3606
        %v3608 = vpop.f32.mrf.mxu0
        %3609 = vdwg.mxu0
        %v3611 = vsel %vm432, %v1251, 0
        %v3614 = vsel %vm432, %v1252, 0
        %3616 = vmatprep.subr.mxu0 0.0
        %3617 = vmatpush1.msra.mxu0 0.0
        %3618 = vmatprep.subr.mxu0 0.0
        %3619 = vmatpush1.msra.mxu0 0.0
        %3620 = vmatprep.subr.mxu0 0.0
        %3621 = vmatpush1.msra.mxu0 0.0
        %3622 = vmatprep.subr.mxu0 0.0
        %3623 = vmatpush1.msra.mxu0 0.0
        %3624 = vmatprep.subr.mxu0 0.0
        %3625 = vmatpush1.msra.mxu0 0.0
        %3626 = vmatprep.subr.mxu0 0.0
        %3627 = vmatpush1.msra.mxu0 0.0
        %3628 = vmatprep.subr.mxu0 0.0
        %3629 = vmatpush1.msra.mxu0 0.0
        %3630 = vmatprep.subr.mxu0 0.0
        %3631 = vmatpush1.msra.mxu0 0.0
        %3632 = vmatprep.subr.mxu0 0.0
        %3633 = vmatpush1.msra.mxu0 0.0
        %3634 = vmatprep.subr.mxu0 0.0
        %3635 = vmatpush1.msra.mxu0 0.0
        %3636 = vmatprep.subr.mxu0 0.0
        %3637 = vmatpush1.msra.mxu0 0.0
        %3638 = vmatprep.subr.mxu0 0.0
        %3639 = vmatpush1.msra.mxu0 0.0
        %3640 = vmatprep.subr.mxu0 0.0
        %3641 = vmatpush1.msra.mxu0 0.0
        %3642 = vmatprep.subr.mxu0 0.0
        %3643 = vmatpush1.msra.mxu0 0.0
        %3644 = vmatprep.subr.mxu0 0.0
        %3645 = vmatpush1.msra.mxu0 %v1508
        %3646 = vmatprep.subr.mxu0 0.0
        %3647 = vmatpush1.msra.mxu0 %v1507
        %3648 = vmatprep.subr.mxu0 0.0
        %3649 = vmatpush2.msra.mxu0 0.0
        %3650 = vmatprep.subr.mxu0 0.0
        %3651 = vmatpush2.msra.mxu0 0.0
        %3652 = vmatprep.subr.mxu0 0.0
        %3653 = vmatpush2.msra.mxu0 0.0
        %3654 = vmatprep.subr.mxu0 0.0
        %3655 = vmatpush2.msra.mxu0 0.0
        %3656 = vmatprep.subr.mxu0 0.0
        %3657 = vmatpush2.msra.mxu0 0.0
        %3658 = vmatprep.subr.mxu0 0.0
        %3659 = vmatpush2.msra.mxu0 0.0
        %3660 = vmatprep.subr.mxu0 0.0
        %3661 = vmatpush2.msra.mxu0 0.0
        %3662 = vmatprep.subr.mxu0 0.0
        %3663 = vmatpush2.msra.mxu0 0.0
        %3664 = vmatprep.subr.mxu0 0.0
        %3665 = vmatpush2.msra.mxu0 0.0
        %3666 = vmatprep.subr.mxu0 0.0
        %3667 = vmatpush2.msra.mxu0 0.0
        %3668 = vmatprep.subr.mxu0 0.0
        %3669 = vmatpush2.msra.mxu0 0.0
        %3670 = vmatprep.subr.mxu0 0.0
        %3671 = vmatpush2.msra.mxu0 0.0
        %3672 = vmatprep.subr.mxu0 0.0
        %3673 = vmatpush2.msra.mxu0 0.0
        %3674 = vmatprep.subr.mxu0 0.0
        %3675 = vmatpush2.msra.mxu0 0.0
        %3676 = vmatprep.subr.mxu0 0.0
        %3677 = vmatpush2.msra.mxu0 0.0
        %3678 = vmatprep.subr.mxu0 0.0
        %3679 = vmatpush2.msra.mxu0 0.0
        %3680 = vmatprep.mubr.f32.mxu0 0.0
        %3681 = vmatmul.mubr.f32.gmra.mxu0 %v3611
        %v3682 = vpop.f32.mrf.mxu0
        %v3683 = vadd.f32 0.0, %v3682
        %v3684 = vpop.f32.mrf.mxu0
        %3685 = vmatprep.mubr.f32.mxu0 0.0
        %3686 = vmatmul.mubr.f32.gmra.mxu0 %v3614
        %v3687 = vpop.f32.mrf.mxu0
        %v3688 = vadd.f32 0.0, %v3687
        %v3689 = vpop.f32.mrf.mxu0
        %3690 = vdwg.mxu0
        %v3692 = vsel %vm432, %v1253, 0
        %v3695 = vsel %vm432, %v1254, 0
        %3697 = vmatprep.subr.mxu0 0.0
        %3698 = vmatpush1.msra.mxu0 0.0
        %3699 = vmatprep.subr.mxu0 0.0
        %3700 = vmatpush1.msra.mxu0 0.0
        %3701 = vmatprep.subr.mxu0 0.0
        %3702 = vmatpush1.msra.mxu0 0.0
        %3703 = vmatprep.subr.mxu0 0.0
        %3704 = vmatpush1.msra.mxu0 0.0
        %3705 = vmatprep.subr.mxu0 0.0
        %3706 = vmatpush1.msra.mxu0 0.0
        %3707 = vmatprep.subr.mxu0 0.0
        %3708 = vmatpush1.msra.mxu0 0.0
        %3709 = vmatprep.subr.mxu0 0.0
        %3710 = vmatpush1.msra.mxu0 0.0
        %3711 = vmatprep.subr.mxu0 0.0
        %3712 = vmatpush1.msra.mxu0 0.0
        %3713 = vmatprep.subr.mxu0 0.0
        %3714 = vmatpush1.msra.mxu0 0.0
        %3715 = vmatprep.subr.mxu0 0.0
        %3716 = vmatpush1.msra.mxu0 0.0
        %3717 = vmatprep.subr.mxu0 0.0
        %3718 = vmatpush1.msra.mxu0 0.0
        %3719 = vmatprep.subr.mxu0 0.0
        %3720 = vmatpush1.msra.mxu0 0.0
        %3721 = vmatprep.subr.mxu0 0.0
        %3722 = vmatpush1.msra.mxu0 0.0
        %3723 = vmatprep.subr.mxu0 0.0
        %3724 = vmatpush1.msra.mxu0 0.0
        %3725 = vmatprep.subr.mxu0 0.0
        %3726 = vmatpush1.msra.mxu0 %v1510
        %3727 = vmatprep.subr.mxu0 0.0
        %3728 = vmatpush1.msra.mxu0 %v1509
        %3729 = vmatprep.subr.mxu0 0.0
        %3730 = vmatpush2.msra.mxu0 0.0
        %3731 = vmatprep.subr.mxu0 0.0
        %3732 = vmatpush2.msra.mxu0 0.0
        %3733 = vmatprep.subr.mxu0 0.0
        %3734 = vmatpush2.msra.mxu0 0.0
        %3735 = vmatprep.subr.mxu0 0.0
        %3736 = vmatpush2.msra.mxu0 0.0
        %3737 = vmatprep.subr.mxu0 0.0
        %3738 = vmatpush2.msra.mxu0 0.0
        %3739 = vmatprep.subr.mxu0 0.0
        %3740 = vmatpush2.msra.mxu0 0.0
        %3741 = vmatprep.subr.mxu0 0.0
        %3742 = vmatpush2.msra.mxu0 0.0
        %3743 = vmatprep.subr.mxu0 0.0
        %3744 = vmatpush2.msra.mxu0 0.0
        %3745 = vmatprep.subr.mxu0 0.0
        %3746 = vmatpush2.msra.mxu0 0.0
        %3747 = vmatprep.subr.mxu0 0.0
        %3748 = vmatpush2.msra.mxu0 0.0
        %3749 = vmatprep.subr.mxu0 0.0
        %3750 = vmatpush2.msra.mxu0 0.0
        %3751 = vmatprep.subr.mxu0 0.0
        %3752 = vmatpush2.msra.mxu0 0.0
        %3753 = vmatprep.subr.mxu0 0.0
        %3754 = vmatpush2.msra.mxu0 0.0
        %3755 = vmatprep.subr.mxu0 0.0
        %3756 = vmatpush2.msra.mxu0 0.0
        %3757 = vmatprep.subr.mxu0 0.0
        %3758 = vmatpush2.msra.mxu0 0.0
        %3759 = vmatprep.subr.mxu0 0.0
        %3760 = vmatpush2.msra.mxu0 0.0
        %3761 = vmatprep.mubr.f32.mxu0 0.0
        %3762 = vmatmul.mubr.f32.gmra.mxu0 %v3692
        %v3763 = vpop.f32.mrf.mxu0
        %v3764 = vadd.f32 0.0, %v3763
        %v3765 = vpop.f32.mrf.mxu0
        %3766 = vmatprep.mubr.f32.mxu0 0.0
        %3767 = vmatmul.mubr.f32.gmra.mxu0 %v3695
        %v3768 = vpop.f32.mrf.mxu0
        %v3769 = vadd.f32 0.0, %v3768
        %v3770 = vpop.f32.mrf.mxu0
        %3771 = vdwg.mxu0
        %v3773 = vsel %vm432, %v1255, 0
        %v3776 = vsel %vm432, %v1256, 0
        %3778 = vmatprep.subr.mxu0 0.0
        %3779 = vmatpush1.msra.mxu0 0.0
        %3780 = vmatprep.subr.mxu0 0.0
        %3781 = vmatpush1.msra.mxu0 0.0
        %3782 = vmatprep.subr.mxu0 0.0
        %3783 = vmatpush1.msra.mxu0 0.0
        %3784 = vmatprep.subr.mxu0 0.0
        %3785 = vmatpush1.msra.mxu0 0.0
        %3786 = vmatprep.subr.mxu0 0.0
        %3787 = vmatpush1.msra.mxu0 0.0
        %3788 = vmatprep.subr.mxu0 0.0
        %3789 = vmatpush1.msra.mxu0 0.0
        %3790 = vmatprep.subr.mxu0 0.0
        %3791 = vmatpush1.msra.mxu0 0.0
        %3792 = vmatprep.subr.mxu0 0.0
        %3793 = vmatpush1.msra.mxu0 0.0
        %3794 = vmatprep.subr.mxu0 0.0
        %3795 = vmatpush1.msra.mxu0 0.0
        %3796 = vmatprep.subr.mxu0 0.0
        %3797 = vmatpush1.msra.mxu0 0.0
        %3798 = vmatprep.subr.mxu0 0.0
        %3799 = vmatpush1.msra.mxu0 0.0
        %3800 = vmatprep.subr.mxu0 0.0
        %3801 = vmatpush1.msra.mxu0 0.0
        %3802 = vmatprep.subr.mxu0 0.0
        %3803 = vmatpush1.msra.mxu0 0.0
        %3804 = vmatprep.subr.mxu0 0.0
        %3805 = vmatpush1.msra.mxu0 0.0
        %3806 = vmatprep.subr.mxu0 0.0
        %3807 = vmatpush1.msra.mxu0 %v1512
        %3808 = vmatprep.subr.mxu0 0.0
        %3809 = vmatpush1.msra.mxu0 %v1511
        %3810 = vmatprep.subr.mxu0 0.0
        %3811 = vmatpush2.msra.mxu0 0.0
        %3812 = vmatprep.subr.mxu0 0.0
        %3813 = vmatpush2.msra.mxu0 0.0
        %3814 = vmatprep.subr.mxu0 0.0
        %3815 = vmatpush2.msra.mxu0 0.0
        %3816 = vmatprep.subr.mxu0 0.0
        %3817 = vmatpush2.msra.mxu0 0.0
        %3818 = vmatprep.subr.mxu0 0.0
        %3819 = vmatpush2.msra.mxu0 0.0
        %3820 = vmatprep.subr.mxu0 0.0
        %3821 = vmatpush2.msra.mxu0 0.0
        %3822 = vmatprep.subr.mxu0 0.0
        %3823 = vmatpush2.msra.mxu0 0.0
        %3824 = vmatprep.subr.mxu0 0.0
        %3825 = vmatpush2.msra.mxu0 0.0
        %3826 = vmatprep.subr.mxu0 0.0
        %3827 = vmatpush2.msra.mxu0 0.0
        %3828 = vmatprep.subr.mxu0 0.0
        %3829 = vmatpush2.msra.mxu0 0.0
        %3830 = vmatprep.subr.mxu0 0.0
        %3831 = vmatpush2.msra.mxu0 0.0
        %3832 = vmatprep.subr.mxu0 0.0
        %3833 = vmatpush2.msra.mxu0 0.0
        %3834 = vmatprep.subr.mxu0 0.0
        %3835 = vmatpush2.msra.mxu0 0.0
        %3836 = vmatprep.subr.mxu0 0.0
        %3837 = vmatpush2.msra.mxu0 0.0
        %3838 = vmatprep.subr.mxu0 0.0
        %3839 = vmatpush2.msra.mxu0 0.0
        %3840 = vmatprep.subr.mxu0 0.0
        %3841 = vmatpush2.msra.mxu0 0.0
        %3842 = vmatprep.mubr.f32.mxu0 0.0
        %3843 = vmatmul.mubr.f32.gmra.mxu0 %v3773
        %v3844 = vpop.f32.mrf.mxu0
        %v3845 = vadd.f32 0.0, %v3844
        %v3846 = vpop.f32.mrf.mxu0
        %3847 = vmatprep.mubr.f32.mxu0 0.0
        %3848 = vmatmul.mubr.f32.gmra.mxu0 %v3776
        %v3849 = vpop.f32.mrf.mxu0
        %v3850 = vadd.f32 0.0, %v3849
        %v3851 = vpop.f32.mrf.mxu0
        %3852 = vdwg.mxu0
        %v3854 = vsel %vm432, %v1257, 0
        %v3857 = vsel %vm432, %v1258, 0
        %3859 = vmatprep.subr.mxu0 0.0
        %3860 = vmatpush1.msra.mxu0 0.0
        %3861 = vmatprep.subr.mxu0 0.0
        %3862 = vmatpush1.msra.mxu0 0.0
        %3863 = vmatprep.subr.mxu0 0.0
        %3864 = vmatpush1.msra.mxu0 0.0
        %3865 = vmatprep.subr.mxu0 0.0
        %3866 = vmatpush1.msra.mxu0 0.0
        %3867 = vmatprep.subr.mxu0 0.0
        %3868 = vmatpush1.msra.mxu0 0.0
        %3869 = vmatprep.subr.mxu0 0.0
        %3870 = vmatpush1.msra.mxu0 0.0
        %3871 = vmatprep.subr.mxu0 0.0
        %3872 = vmatpush1.msra.mxu0 0.0
        %3873 = vmatprep.subr.mxu0 0.0
        %3874 = vmatpush1.msra.mxu0 0.0
        %3875 = vmatprep.subr.mxu0 0.0
        %3876 = vmatpush1.msra.mxu0 0.0
        %3877 = vmatprep.subr.mxu0 0.0
        %3878 = vmatpush1.msra.mxu0 0.0
        %3879 = vmatprep.subr.mxu0 0.0
        %3880 = vmatpush1.msra.mxu0 0.0
        %3881 = vmatprep.subr.mxu0 0.0
        %3882 = vmatpush1.msra.mxu0 0.0
        %3883 = vmatprep.subr.mxu0 0.0
        %3884 = vmatpush1.msra.mxu0 0.0
        %3885 = vmatprep.subr.mxu0 0.0
        %3886 = vmatpush1.msra.mxu0 0.0
        %3887 = vmatprep.subr.mxu0 0.0
        %3888 = vmatpush1.msra.mxu0 %v1514
        %3889 = vmatprep.subr.mxu0 0.0
        %3890 = vmatpush1.msra.mxu0 %v1513
        %3891 = vmatprep.subr.mxu0 0.0
        %3892 = vmatpush2.msra.mxu0 0.0
        %3893 = vmatprep.subr.mxu0 0.0
        %3894 = vmatpush2.msra.mxu0 0.0
        %3895 = vmatprep.subr.mxu0 0.0
        %3896 = vmatpush2.msra.mxu0 0.0
        %3897 = vmatprep.subr.mxu0 0.0
        %3898 = vmatpush2.msra.mxu0 0.0
        %3899 = vmatprep.subr.mxu0 0.0
        %3900 = vmatpush2.msra.mxu0 0.0
        %3901 = vmatprep.subr.mxu0 0.0
        %3902 = vmatpush2.msra.mxu0 0.0
        %3903 = vmatprep.subr.mxu0 0.0
        %3904 = vmatpush2.msra.mxu0 0.0
        %3905 = vmatprep.subr.mxu0 0.0
        %3906 = vmatpush2.msra.mxu0 0.0
        %3907 = vmatprep.subr.mxu0 0.0
        %3908 = vmatpush2.msra.mxu0 0.0
        %3909 = vmatprep.subr.mxu0 0.0
        %3910 = vmatpush2.msra.mxu0 0.0
        %3911 = vmatprep.subr.mxu0 0.0
        %3912 = vmatpush2.msra.mxu0 0.0
        %3913 = vmatprep.subr.mxu0 0.0
        %3914 = vmatpush2.msra.mxu0 0.0
        %3915 = vmatprep.subr.mxu0 0.0
        %3916 = vmatpush2.msra.mxu0 0.0
        %3917 = vmatprep.subr.mxu0 0.0
        %3918 = vmatpush2.msra.mxu0 0.0
        %3919 = vmatprep.subr.mxu0 0.0
        %3920 = vmatpush2.msra.mxu0 0.0
        %3921 = vmatprep.subr.mxu0 0.0
        %3922 = vmatpush2.msra.mxu0 0.0
        %3923 = vmatprep.mubr.f32.mxu0 0.0
        %3924 = vmatmul.mubr.f32.gmra.mxu0 %v3854
        %v3925 = vpop.f32.mrf.mxu0
        %v3926 = vadd.f32 0.0, %v3925
        %v3927 = vpop.f32.mrf.mxu0
        %3928 = vmatprep.mubr.f32.mxu0 0.0
        %3929 = vmatmul.mubr.f32.gmra.mxu0 %v3857
        %v3930 = vpop.f32.mrf.mxu0
        %v3931 = vadd.f32 0.0, %v3930
        %v3932 = vpop.f32.mrf.mxu0
        %3933 = vdwg.mxu0
        %v3935 = vsel %vm432, %v1259, 0
        %v3938 = vsel %vm432, %v1260, 0
        %3940 = vmatprep.subr.mxu0 0.0
        %3941 = vmatpush1.msra.mxu0 0.0
        %3942 = vmatprep.subr.mxu0 0.0
        %3943 = vmatpush1.msra.mxu0 0.0
        %3944 = vmatprep.subr.mxu0 0.0
        %3945 = vmatpush1.msra.mxu0 0.0
        %3946 = vmatprep.subr.mxu0 0.0
        %3947 = vmatpush1.msra.mxu0 0.0
        %3948 = vmatprep.subr.mxu0 0.0
        %3949 = vmatpush1.msra.mxu0 0.0
        %3950 = vmatprep.subr.mxu0 0.0
        %3951 = vmatpush1.msra.mxu0 0.0
        %3952 = vmatprep.subr.mxu0 0.0
        %3953 = vmatpush1.msra.mxu0 0.0
        %3954 = vmatprep.subr.mxu0 0.0
        %3955 = vmatpush1.msra.mxu0 0.0
        %3956 = vmatprep.subr.mxu0 0.0
        %3957 = vmatpush1.msra.mxu0 0.0
        %3958 = vmatprep.subr.mxu0 0.0
        %3959 = vmatpush1.msra.mxu0 0.0
        %3960 = vmatprep.subr.mxu0 0.0
        %3961 = vmatpush1.msra.mxu0 0.0
        %3962 = vmatprep.subr.mxu0 0.0
        %3963 = vmatpush1.msra.mxu0 0.0
        %3964 = vmatprep.subr.mxu0 0.0
        %3965 = vmatpush1.msra.mxu0 0.0
        %3966 = vmatprep.subr.mxu0 0.0
        %3967 = vmatpush1.msra.mxu0 0.0
        %3968 = vmatprep.subr.mxu0 0.0
        %3969 = vmatpush1.msra.mxu0 %v1516
        %3970 = vmatprep.subr.mxu0 0.0
        %3971 = vmatpush1.msra.mxu0 %v1515
        %3972 = vmatprep.subr.mxu0 0.0
        %3973 = vmatpush2.msra.mxu0 0.0
        %3974 = vmatprep.subr.mxu0 0.0
        %3975 = vmatpush2.msra.mxu0 0.0
        %3976 = vmatprep.subr.mxu0 0.0
        %3977 = vmatpush2.msra.mxu0 0.0
        %3978 = vmatprep.subr.mxu0 0.0
        %3979 = vmatpush2.msra.mxu0 0.0
        %3980 = vmatprep.subr.mxu0 0.0
        %3981 = vmatpush2.msra.mxu0 0.0
        %3982 = vmatprep.subr.mxu0 0.0
        %3983 = vmatpush2.msra.mxu0 0.0
        %3984 = vmatprep.subr.mxu0 0.0
        %3985 = vmatpush2.msra.mxu0 0.0
        %3986 = vmatprep.subr.mxu0 0.0
        %3987 = vmatpush2.msra.mxu0 0.0
        %3988 = vmatprep.subr.mxu0 0.0
        %3989 = vmatpush2.msra.mxu0 0.0
        %3990 = vmatprep.subr.mxu0 0.0
        %3991 = vmatpush2.msra.mxu0 0.0
        %3992 = vmatprep.subr.mxu0 0.0
        %3993 = vmatpush2.msra.mxu0 0.0
        %3994 = vmatprep.subr.mxu0 0.0
        %3995 = vmatpush2.msra.mxu0 0.0
        %3996 = vmatprep.subr.mxu0 0.0
        %3997 = vmatpush2.msra.mxu0 0.0
        %3998 = vmatprep.subr.mxu0 0.0
        %3999 = vmatpush2.msra.mxu0 0.0
        %4000 = vmatprep.subr.mxu0 0.0
        %4001 = vmatpush2.msra.mxu0 0.0
        %4002 = vmatprep.subr.mxu0 0.0
        %4003 = vmatpush2.msra.mxu0 0.0
        %4004 = vmatprep.mubr.f32.mxu0 0.0
        %4005 = vmatmul.mubr.f32.gmra.mxu0 %v3935
        %v4006 = vpop.f32.mrf.mxu0
        %v4007 = vadd.f32 0.0, %v4006
        %v4008 = vpop.f32.mrf.mxu0
        %4009 = vmatprep.mubr.f32.mxu0 0.0
        %4010 = vmatmul.mubr.f32.gmra.mxu0 %v3938
        %v4011 = vpop.f32.mrf.mxu0
        %v4012 = vadd.f32 0.0, %v4011
        %v4013 = vpop.f32.mrf.mxu0
        %4014 = vdwg.mxu0
        %v4016 = vsel %vm432, %v1261, 0
        %v4019 = vsel %vm432, %v1262, 0
        %4021 = vmatprep.subr.mxu0 0.0
        %4022 = vmatpush1.msra.mxu0 0.0
        %4023 = vmatprep.subr.mxu0 0.0
        %4024 = vmatpush1.msra.mxu0 0.0
        %4025 = vmatprep.subr.mxu0 0.0
        %4026 = vmatpush1.msra.mxu0 0.0
        %4027 = vmatprep.subr.mxu0 0.0
        %4028 = vmatpush1.msra.mxu0 0.0
        %4029 = vmatprep.subr.mxu0 0.0
        %4030 = vmatpush1.msra.mxu0 0.0
        %4031 = vmatprep.subr.mxu0 0.0
        %4032 = vmatpush1.msra.mxu0 0.0
        %4033 = vmatprep.subr.mxu0 0.0
        %4034 = vmatpush1.msra.mxu0 0.0
        %4035 = vmatprep.subr.mxu0 0.0
        %4036 = vmatpush1.msra.mxu0 0.0
        %4037 = vmatprep.subr.mxu0 0.0
        %4038 = vmatpush1.msra.mxu0 0.0
        %4039 = vmatprep.subr.mxu0 0.0
        %4040 = vmatpush1.msra.mxu0 0.0
        %4041 = vmatprep.subr.mxu0 0.0
        %4042 = vmatpush1.msra.mxu0 0.0
        %4043 = vmatprep.subr.mxu0 0.0
        %4044 = vmatpush1.msra.mxu0 0.0
        %4045 = vmatprep.subr.mxu0 0.0
        %4046 = vmatpush1.msra.mxu0 0.0
        %4047 = vmatprep.subr.mxu0 0.0
        %4048 = vmatpush1.msra.mxu0 0.0
        %4049 = vmatprep.subr.mxu0 0.0
        %4050 = vmatpush1.msra.mxu0 %v1518
        %4051 = vmatprep.subr.mxu0 0.0
        %4052 = vmatpush1.msra.mxu0 %v1517
        %4053 = vmatprep.subr.mxu0 0.0
        %4054 = vmatpush2.msra.mxu0 0.0
        %4055 = vmatprep.subr.mxu0 0.0
        %4056 = vmatpush2.msra.mxu0 0.0
        %4057 = vmatprep.subr.mxu0 0.0
        %4058 = vmatpush2.msra.mxu0 0.0
        %4059 = vmatprep.subr.mxu0 0.0
        %4060 = vmatpush2.msra.mxu0 0.0
        %4061 = vmatprep.subr.mxu0 0.0
        %4062 = vmatpush2.msra.mxu0 0.0
        %4063 = vmatprep.subr.mxu0 0.0
        %4064 = vmatpush2.msra.mxu0 0.0
        %4065 = vmatprep.subr.mxu0 0.0
        %4066 = vmatpush2.msra.mxu0 0.0
        %4067 = vmatprep.subr.mxu0 0.0
        %4068 = vmatpush2.msra.mxu0 0.0
        %4069 = vmatprep.subr.mxu0 0.0
        %4070 = vmatpush2.msra.mxu0 0.0
        %4071 = vmatprep.subr.mxu0 0.0
        %4072 = vmatpush2.msra.mxu0 0.0
        %4073 = vmatprep.subr.mxu0 0.0
        %4074 = vmatpush2.msra.mxu0 0.0
        %4075 = vmatprep.subr.mxu0 0.0
        %4076 = vmatpush2.msra.mxu0 0.0
        %4077 = vmatprep.subr.mxu0 0.0
        %4078 = vmatpush2.msra.mxu0 0.0
        %4079 = vmatprep.subr.mxu0 0.0
        %4080 = vmatpush2.msra.mxu0 0.0
        %4081 = vmatprep.subr.mxu0 0.0
        %4082 = vmatpush2.msra.mxu0 0.0
        %4083 = vmatprep.subr.mxu0 0.0
        %4084 = vmatpush2.msra.mxu0 0.0
        %4085 = vmatprep.mubr.f32.mxu0 0.0
        %4086 = vmatmul.mubr.f32.gmra.mxu0 %v4016
        %v4087 = vpop.f32.mrf.mxu0
        %v4088 = vadd.f32 0.0, %v4087
        %v4089 = vpop.f32.mrf.mxu0
        %4090 = vmatprep.mubr.f32.mxu0 0.0
        %4091 = vmatmul.mubr.f32.gmra.mxu0 %v4019
        %v4092 = vpop.f32.mrf.mxu0
        %v4093 = vadd.f32 0.0, %v4092
        %v4094 = vpop.f32.mrf.mxu0
        %4095 = vdwg.mxu0
        %v4097 = vsel %vm432, %v1263, 0
        %v4100 = vsel %vm432, %v1264, 0
        %4102 = vmatprep.subr.mxu0 0.0
        %4103 = vmatpush1.msra.mxu0 0.0
        %4104 = vmatprep.subr.mxu0 0.0
        %4105 = vmatpush1.msra.mxu0 0.0
        %4106 = vmatprep.subr.mxu0 0.0
        %4107 = vmatpush1.msra.mxu0 0.0
        %4108 = vmatprep.subr.mxu0 0.0
        %4109 = vmatpush1.msra.mxu0 0.0
        %4110 = vmatprep.subr.mxu0 0.0
        %4111 = vmatpush1.msra.mxu0 0.0
        %4112 = vmatprep.subr.mxu0 0.0
        %4113 = vmatpush1.msra.mxu0 0.0
        %4114 = vmatprep.subr.mxu0 0.0
        %4115 = vmatpush1.msra.mxu0 0.0
        %4116 = vmatprep.subr.mxu0 0.0
        %4117 = vmatpush1.msra.mxu0 0.0
        %4118 = vmatprep.subr.mxu0 0.0
        %4119 = vmatpush1.msra.mxu0 0.0
        %4120 = vmatprep.subr.mxu0 0.0
        %4121 = vmatpush1.msra.mxu0 0.0
        %4122 = vmatprep.subr.mxu0 0.0
        %4123 = vmatpush1.msra.mxu0 0.0
        %4124 = vmatprep.subr.mxu0 0.0
        %4125 = vmatpush1.msra.mxu0 0.0
        %4126 = vmatprep.subr.mxu0 0.0
        %4127 = vmatpush1.msra.mxu0 0.0
        %4128 = vmatprep.subr.mxu0 0.0
        %4129 = vmatpush1.msra.mxu0 0.0
        %4130 = vmatprep.subr.mxu0 0.0
        %4131 = vmatpush1.msra.mxu0 %v1520
        %4132 = vmatprep.subr.mxu0 0.0
        %4133 = vmatpush1.msra.mxu0 %v1519
        %4134 = vmatprep.subr.mxu0 0.0
        %4135 = vmatpush2.msra.mxu0 0.0
        %4136 = vmatprep.subr.mxu0 0.0
        %4137 = vmatpush2.msra.mxu0 0.0
        %4138 = vmatprep.subr.mxu0 0.0
        %4139 = vmatpush2.msra.mxu0 0.0
        %4140 = vmatprep.subr.mxu0 0.0
        %4141 = vmatpush2.msra.mxu0 0.0
        %4142 = vmatprep.subr.mxu0 0.0
        %4143 = vmatpush2.msra.mxu0 0.0
        %4144 = vmatprep.subr.mxu0 0.0
        %4145 = vmatpush2.msra.mxu0 0.0
        %4146 = vmatprep.subr.mxu0 0.0
        %4147 = vmatpush2.msra.mxu0 0.0
        %4148 = vmatprep.subr.mxu0 0.0
        %4149 = vmatpush2.msra.mxu0 0.0
        %4150 = vmatprep.subr.mxu0 0.0
        %4151 = vmatpush2.msra.mxu0 0.0
        %4152 = vmatprep.subr.mxu0 0.0
        %4153 = vmatpush2.msra.mxu0 0.0
        %4154 = vmatprep.subr.mxu0 0.0
        %4155 = vmatpush2.msra.mxu0 0.0
        %4156 = vmatprep.subr.mxu0 0.0
        %4157 = vmatpush2.msra.mxu0 0.0
        %4158 = vmatprep.subr.mxu0 0.0
        %4159 = vmatpush2.msra.mxu0 0.0
        %4160 = vmatprep.subr.mxu0 0.0
        %4161 = vmatpush2.msra.mxu0 0.0
        %4162 = vmatprep.subr.mxu0 0.0
        %4163 = vmatpush2.msra.mxu0 0.0
        %4164 = vmatprep.subr.mxu0 0.0
        %4165 = vmatpush2.msra.mxu0 0.0
        %4166 = vmatprep.mubr.f32.mxu0 0.0
        %4167 = vmatmul.mubr.f32.gmra.mxu0 %v4097
        %v4168 = vpop.f32.mrf.mxu0
        %v4169 = vadd.f32 0.0, %v4168
        %v4170 = vpop.f32.mrf.mxu0
        %4171 = vmatprep.mubr.f32.mxu0 0.0
        %4172 = vmatmul.mubr.f32.gmra.mxu0 %v4100
        %v4173 = vpop.f32.mrf.mxu0
        %v4174 = vadd.f32 0.0, %v4173
        %v4175 = vpop.f32.mrf.mxu0
        %4176 = vdwg.mxu0
        %v4178 = vsel %vm432, %v1265, 0
        %v4181 = vsel %vm432, %v1266, 0
        %4183 = vmatprep.subr.mxu0 0.0
        %4184 = vmatpush1.msra.mxu0 0.0
        %4185 = vmatprep.subr.mxu0 0.0
        %4186 = vmatpush1.msra.mxu0 0.0
        %4187 = vmatprep.subr.mxu0 0.0
        %4188 = vmatpush1.msra.mxu0 0.0
        %4189 = vmatprep.subr.mxu0 0.0
        %4190 = vmatpush1.msra.mxu0 0.0
        %4191 = vmatprep.subr.mxu0 0.0
        %4192 = vmatpush1.msra.mxu0 0.0
        %4193 = vmatprep.subr.mxu0 0.0
        %4194 = vmatpush1.msra.mxu0 0.0
        %4195 = vmatprep.subr.mxu0 0.0
        %4196 = vmatpush1.msra.mxu0 0.0
        %4197 = vmatprep.subr.mxu0 0.0
        %4198 = vmatpush1.msra.mxu0 0.0
        %4199 = vmatprep.subr.mxu0 0.0
        %4200 = vmatpush1.msra.mxu0 0.0
        %4201 = vmatprep.subr.mxu0 0.0
        %4202 = vmatpush1.msra.mxu0 0.0
        %4203 = vmatprep.subr.mxu0 0.0
        %4204 = vmatpush1.msra.mxu0 0.0
        %4205 = vmatprep.subr.mxu0 0.0
        %4206 = vmatpush1.msra.mxu0 0.0
        %4207 = vmatprep.subr.mxu0 0.0
        %4208 = vmatpush1.msra.mxu0 0.0
        %4209 = vmatprep.subr.mxu0 0.0
        %4210 = vmatpush1.msra.mxu0 0.0
        %4211 = vmatprep.subr.mxu0 0.0
        %4212 = vmatpush1.msra.mxu0 %v1522
        %4213 = vmatprep.subr.mxu0 0.0
        %4214 = vmatpush1.msra.mxu0 %v1521
        %4215 = vmatprep.subr.mxu0 0.0
        %4216 = vmatpush2.msra.mxu0 0.0
        %4217 = vmatprep.subr.mxu0 0.0
        %4218 = vmatpush2.msra.mxu0 0.0
        %4219 = vmatprep.subr.mxu0 0.0
        %4220 = vmatpush2.msra.mxu0 0.0
        %4221 = vmatprep.subr.mxu0 0.0
        %4222 = vmatpush2.msra.mxu0 0.0
        %4223 = vmatprep.subr.mxu0 0.0
        %4224 = vmatpush2.msra.mxu0 0.0
        %4225 = vmatprep.subr.mxu0 0.0
        %4226 = vmatpush2.msra.mxu0 0.0
        %4227 = vmatprep.subr.mxu0 0.0
        %4228 = vmatpush2.msra.mxu0 0.0
        %4229 = vmatprep.subr.mxu0 0.0
        %4230 = vmatpush2.msra.mxu0 0.0
        %4231 = vmatprep.subr.mxu0 0.0
        %4232 = vmatpush2.msra.mxu0 0.0
        %4233 = vmatprep.subr.mxu0 0.0
        %4234 = vmatpush2.msra.mxu0 0.0
        %4235 = vmatprep.subr.mxu0 0.0
        %4236 = vmatpush2.msra.mxu0 0.0
        %4237 = vmatprep.subr.mxu0 0.0
        %4238 = vmatpush2.msra.mxu0 0.0
        %4239 = vmatprep.subr.mxu0 0.0
        %4240 = vmatpush2.msra.mxu0 0.0
        %4241 = vmatprep.subr.mxu0 0.0
        %4242 = vmatpush2.msra.mxu0 0.0
        %4243 = vmatprep.subr.mxu0 0.0
        %4244 = vmatpush2.msra.mxu0 0.0
        %4245 = vmatprep.subr.mxu0 0.0
        %4246 = vmatpush2.msra.mxu0 0.0
        %4247 = vmatprep.mubr.f32.mxu0 0.0
        %4248 = vmatmul.mubr.f32.gmra.mxu0 %v4178
        %v4249 = vpop.f32.mrf.mxu0
        %v4250 = vadd.f32 0.0, %v4249
        %v4251 = vpop.f32.mrf.mxu0
        %4252 = vmatprep.mubr.f32.mxu0 0.0
        %4253 = vmatmul.mubr.f32.gmra.mxu0 %v4181
        %v4254 = vpop.f32.mrf.mxu0
        %v4255 = vadd.f32 0.0, %v4254
        %v4256 = vpop.f32.mrf.mxu0
        %4257 = vdwg.mxu0
        %v4259 = vsel %vm432, %v1267, 0
        %v4262 = vsel %vm432, %v1268, 0
        %4264 = vmatprep.subr.mxu0 0.0
        %4265 = vmatpush1.msra.mxu0 0.0
        %4266 = vmatprep.subr.mxu0 0.0
        %4267 = vmatpush1.msra.mxu0 0.0
        %4268 = vmatprep.subr.mxu0 0.0
        %4269 = vmatpush1.msra.mxu0 0.0
        %4270 = vmatprep.subr.mxu0 0.0
        %4271 = vmatpush1.msra.mxu0 0.0
        %4272 = vmatprep.subr.mxu0 0.0
        %4273 = vmatpush1.msra.mxu0 0.0
        %4274 = vmatprep.subr.mxu0 0.0
        %4275 = vmatpush1.msra.mxu0 0.0
        %4276 = vmatprep.subr.mxu0 0.0
        %4277 = vmatpush1.msra.mxu0 0.0
        %4278 = vmatprep.subr.mxu0 0.0
        %4279 = vmatpush1.msra.mxu0 0.0
        %4280 = vmatprep.subr.mxu0 0.0
        %4281 = vmatpush1.msra.mxu0 0.0
        %4282 = vmatprep.subr.mxu0 0.0
        %4283 = vmatpush1.msra.mxu0 0.0
        %4284 = vmatprep.subr.mxu0 0.0
        %4285 = vmatpush1.msra.mxu0 0.0
        %4286 = vmatprep.subr.mxu0 0.0
        %4287 = vmatpush1.msra.mxu0 0.0
        %4288 = vmatprep.subr.mxu0 0.0
        %4289 = vmatpush1.msra.mxu0 0.0
        %4290 = vmatprep.subr.mxu0 0.0
        %4291 = vmatpush1.msra.mxu0 0.0
        %4292 = vmatprep.subr.mxu0 0.0
        %4293 = vmatpush1.msra.mxu0 %v1524
        %4294 = vmatprep.subr.mxu0 0.0
        %4295 = vmatpush1.msra.mxu0 %v1523
        %4296 = vmatprep.subr.mxu0 0.0
        %4297 = vmatpush2.msra.mxu0 0.0
        %4298 = vmatprep.subr.mxu0 0.0
        %4299 = vmatpush2.msra.mxu0 0.0
        %4300 = vmatprep.subr.mxu0 0.0
        %4301 = vmatpush2.msra.mxu0 0.0
        %4302 = vmatprep.subr.mxu0 0.0
        %4303 = vmatpush2.msra.mxu0 0.0
        %4304 = vmatprep.subr.mxu0 0.0
        %4305 = vmatpush2.msra.mxu0 0.0
        %4306 = vmatprep.subr.mxu0 0.0
        %4307 = vmatpush2.msra.mxu0 0.0
        %4308 = vmatprep.subr.mxu0 0.0
        %4309 = vmatpush2.msra.mxu0 0.0
        %4310 = vmatprep.subr.mxu0 0.0
        %4311 = vmatpush2.msra.mxu0 0.0
        %4312 = vmatprep.subr.mxu0 0.0
        %4313 = vmatpush2.msra.mxu0 0.0
        %4314 = vmatprep.subr.mxu0 0.0
        %4315 = vmatpush2.msra.mxu0 0.0
        %4316 = vmatprep.subr.mxu0 0.0
        %4317 = vmatpush2.msra.mxu0 0.0
        %4318 = vmatprep.subr.mxu0 0.0
        %4319 = vmatpush2.msra.mxu0 0.0
        %4320 = vmatprep.subr.mxu0 0.0
        %4321 = vmatpush2.msra.mxu0 0.0
        %4322 = vmatprep.subr.mxu0 0.0
        %4323 = vmatpush2.msra.mxu0 0.0
        %4324 = vmatprep.subr.mxu0 0.0
        %4325 = vmatpush2.msra.mxu0 0.0
        %4326 = vmatprep.subr.mxu0 0.0
        %4327 = vmatpush2.msra.mxu0 0.0
        %4328 = vmatprep.mubr.f32.mxu0 0.0
        %4329 = vmatmul.mubr.f32.gmra.mxu0 %v4259
        %v4330 = vpop.f32.mrf.mxu0
        %v4331 = vadd.f32 0.0, %v4330
        %v4332 = vpop.f32.mrf.mxu0
        %4333 = vmatprep.mubr.f32.mxu0 0.0
        %4334 = vmatmul.mubr.f32.gmra.mxu0 %v4262
        %v4335 = vpop.f32.mrf.mxu0
        %v4336 = vadd.f32 0.0, %v4335
        %v4337 = vpop.f32.mrf.mxu0
        %4338 = vdwg.mxu0
        %v4340 = vsel %vm432, %v1269, 0
        %v4343 = vsel %vm432, %v1270, 0
        %4345 = vmatprep.subr.mxu0 0.0
        %4346 = vmatpush1.msra.mxu0 0.0
        %4347 = vmatprep.subr.mxu0 0.0
        %4348 = vmatpush1.msra.mxu0 0.0
        %4349 = vmatprep.subr.mxu0 0.0
        %4350 = vmatpush1.msra.mxu0 0.0
        %4351 = vmatprep.subr.mxu0 0.0
        %4352 = vmatpush1.msra.mxu0 0.0
        %4353 = vmatprep.subr.mxu0 0.0
        %4354 = vmatpush1.msra.mxu0 0.0
        %4355 = vmatprep.subr.mxu0 0.0
        %4356 = vmatpush1.msra.mxu0 0.0
        %4357 = vmatprep.subr.mxu0 0.0
        %4358 = vmatpush1.msra.mxu0 0.0
        %4359 = vmatprep.subr.mxu0 0.0
        %4360 = vmatpush1.msra.mxu0 0.0
        %4361 = vmatprep.subr.mxu0 0.0
        %4362 = vmatpush1.msra.mxu0 0.0
        %4363 = vmatprep.subr.mxu0 0.0
        %4364 = vmatpush1.msra.mxu0 0.0
        %4365 = vmatprep.subr.mxu0 0.0
        %4366 = vmatpush1.msra.mxu0 0.0
        %4367 = vmatprep.subr.mxu0 0.0
        %4368 = vmatpush1.msra.mxu0 0.0
        %4369 = vmatprep.subr.mxu0 0.0
        %4370 = vmatpush1.msra.mxu0 0.0
        %4371 = vmatprep.subr.mxu0 0.0
        %4372 = vmatpush1.msra.mxu0 0.0
        %4373 = vmatprep.subr.mxu0 0.0
        %4374 = vmatpush1.msra.mxu0 %v1526
        %4375 = vmatprep.subr.mxu0 0.0
        %4376 = vmatpush1.msra.mxu0 %v1525
        %4377 = vmatprep.subr.mxu0 0.0
        %4378 = vmatpush2.msra.mxu0 0.0
        %4379 = vmatprep.subr.mxu0 0.0
        %4380 = vmatpush2.msra.mxu0 0.0
        %4381 = vmatprep.subr.mxu0 0.0
        %4382 = vmatpush2.msra.mxu0 0.0
        %4383 = vmatprep.subr.mxu0 0.0
        %4384 = vmatpush2.msra.mxu0 0.0
        %4385 = vmatprep.subr.mxu0 0.0
        %4386 = vmatpush2.msra.mxu0 0.0
        %4387 = vmatprep.subr.mxu0 0.0
        %4388 = vmatpush2.msra.mxu0 0.0
        %4389 = vmatprep.subr.mxu0 0.0
        %4390 = vmatpush2.msra.mxu0 0.0
        %4391 = vmatprep.subr.mxu0 0.0
        %4392 = vmatpush2.msra.mxu0 0.0
        %4393 = vmatprep.subr.mxu0 0.0
        %4394 = vmatpush2.msra.mxu0 0.0
        %4395 = vmatprep.subr.mxu0 0.0
        %4396 = vmatpush2.msra.mxu0 0.0
        %4397 = vmatprep.subr.mxu0 0.0
        %4398 = vmatpush2.msra.mxu0 0.0
        %4399 = vmatprep.subr.mxu0 0.0
        %4400 = vmatpush2.msra.mxu0 0.0
        %4401 = vmatprep.subr.mxu0 0.0
        %4402 = vmatpush2.msra.mxu0 0.0
        %4403 = vmatprep.subr.mxu0 0.0
        %4404 = vmatpush2.msra.mxu0 0.0
        %4405 = vmatprep.subr.mxu0 0.0
        %4406 = vmatpush2.msra.mxu0 0.0
        %4407 = vmatprep.subr.mxu0 0.0
        %4408 = vmatpush2.msra.mxu0 0.0
        %4409 = vmatprep.mubr.f32.mxu0 0.0
        %4410 = vmatmul.mubr.f32.gmra.mxu0 %v4340
        %v4411 = vpop.f32.mrf.mxu0
        %v4412 = vadd.f32 0.0, %v4411
        %v4413 = vpop.f32.mrf.mxu0
        %4414 = vmatprep.mubr.f32.mxu0 0.0
        %4415 = vmatmul.mubr.f32.gmra.mxu0 %v4343
        %v4416 = vpop.f32.mrf.mxu0
        %v4417 = vadd.f32 0.0, %v4416
        %v4418 = vpop.f32.mrf.mxu0
        %4419 = vdwg.mxu0
        %v4421 = vsel %vm432, %v1271, 0
        %v4424 = vsel %vm432, %v1272, 0
        %4426 = vmatprep.subr.mxu0 0.0
        %4427 = vmatpush1.msra.mxu0 0.0
        %4428 = vmatprep.subr.mxu0 0.0
        %4429 = vmatpush1.msra.mxu0 0.0
        %4430 = vmatprep.subr.mxu0 0.0
        %4431 = vmatpush1.msra.mxu0 0.0
        %4432 = vmatprep.subr.mxu0 0.0
        %4433 = vmatpush1.msra.mxu0 0.0
        %4434 = vmatprep.subr.mxu0 0.0
        %4435 = vmatpush1.msra.mxu0 0.0
        %4436 = vmatprep.subr.mxu0 0.0
        %4437 = vmatpush1.msra.mxu0 0.0
        %4438 = vmatprep.subr.mxu0 0.0
        %4439 = vmatpush1.msra.mxu0 0.0
        %4440 = vmatprep.subr.mxu0 0.0
        %4441 = vmatpush1.msra.mxu0 0.0
        %4442 = vmatprep.subr.mxu0 0.0
        %4443 = vmatpush1.msra.mxu0 0.0
        %4444 = vmatprep.subr.mxu0 0.0
        %4445 = vmatpush1.msra.mxu0 0.0
        %4446 = vmatprep.subr.mxu0 0.0
        %4447 = vmatpush1.msra.mxu0 0.0
        %4448 = vmatprep.subr.mxu0 0.0
        %4449 = vmatpush1.msra.mxu0 0.0
        %4450 = vmatprep.subr.mxu0 0.0
        %4451 = vmatpush1.msra.mxu0 0.0
        %4452 = vmatprep.subr.mxu0 0.0
        %4453 = vmatpush1.msra.mxu0 0.0
        %4454 = vmatprep.subr.mxu0 0.0
        %4455 = vmatpush1.msra.mxu0 %v1528
        %4456 = vmatprep.subr.mxu0 0.0
        %4457 = vmatpush1.msra.mxu0 %v1527
        %4458 = vmatprep.subr.mxu0 0.0
        %4459 = vmatpush2.msra.mxu0 0.0
        %4460 = vmatprep.subr.mxu0 0.0
        %4461 = vmatpush2.msra.mxu0 0.0
        %4462 = vmatprep.subr.mxu0 0.0
        %4463 = vmatpush2.msra.mxu0 0.0
        %4464 = vmatprep.subr.mxu0 0.0
        %4465 = vmatpush2.msra.mxu0 0.0
        %4466 = vmatprep.subr.mxu0 0.0
        %4467 = vmatpush2.msra.mxu0 0.0
        %4468 = vmatprep.subr.mxu0 0.0
        %4469 = vmatpush2.msra.mxu0 0.0
        %4470 = vmatprep.subr.mxu0 0.0
        %4471 = vmatpush2.msra.mxu0 0.0
        %4472 = vmatprep.subr.mxu0 0.0
        %4473 = vmatpush2.msra.mxu0 0.0
        %4474 = vmatprep.subr.mxu0 0.0
        %4475 = vmatpush2.msra.mxu0 0.0
        %4476 = vmatprep.subr.mxu0 0.0
        %4477 = vmatpush2.msra.mxu0 0.0
        %4478 = vmatprep.subr.mxu0 0.0
        %4479 = vmatpush2.msra.mxu0 0.0
        %4480 = vmatprep.subr.mxu0 0.0
        %4481 = vmatpush2.msra.mxu0 0.0
        %4482 = vmatprep.subr.mxu0 0.0
        %4483 = vmatpush2.msra.mxu0 0.0
        %4484 = vmatprep.subr.mxu0 0.0
        %4485 = vmatpush2.msra.mxu0 0.0
        %4486 = vmatprep.subr.mxu0 0.0
        %4487 = vmatpush2.msra.mxu0 0.0
        %4488 = vmatprep.subr.mxu0 0.0
        %4489 = vmatpush2.msra.mxu0 0.0
        %4490 = vmatprep.mubr.f32.mxu0 0.0
        %4491 = vmatmul.mubr.f32.gmra.mxu0 %v4421
        %v4492 = vpop.f32.mrf.mxu0
        %v4493 = vadd.f32 0.0, %v4492
        %v4494 = vpop.f32.mrf.mxu0
        %4495 = vmatprep.mubr.f32.mxu0 0.0
        %4496 = vmatmul.mubr.f32.gmra.mxu0 %v4424
        %v4497 = vpop.f32.mrf.mxu0
        %v4498 = vadd.f32 0.0, %v4497
        %v4499 = vpop.f32.mrf.mxu0
        %4500 = vdwg.mxu0
        %v4502 = vsel %vm432, %v1273, 0
        %v4505 = vsel %vm432, %v1274, 0
        %4507 = vmatprep.subr.mxu0 0.0
        %4508 = vmatpush1.msra.mxu0 0.0
        %4509 = vmatprep.subr.mxu0 0.0
        %4510 = vmatpush1.msra.mxu0 0.0
        %4511 = vmatprep.subr.mxu0 0.0
        %4512 = vmatpush1.msra.mxu0 0.0
        %4513 = vmatprep.subr.mxu0 0.0
        %4514 = vmatpush1.msra.mxu0 0.0
        %4515 = vmatprep.subr.mxu0 0.0
        %4516 = vmatpush1.msra.mxu0 0.0
        %4517 = vmatprep.subr.mxu0 0.0
        %4518 = vmatpush1.msra.mxu0 0.0
        %4519 = vmatprep.subr.mxu0 0.0
        %4520 = vmatpush1.msra.mxu0 0.0
        %4521 = vmatprep.subr.mxu0 0.0
        %4522 = vmatpush1.msra.mxu0 0.0
        %4523 = vmatprep.subr.mxu0 0.0
        %4524 = vmatpush1.msra.mxu0 0.0
        %4525 = vmatprep.subr.mxu0 0.0
        %4526 = vmatpush1.msra.mxu0 0.0
        %4527 = vmatprep.subr.mxu0 0.0
        %4528 = vmatpush1.msra.mxu0 0.0
        %4529 = vmatprep.subr.mxu0 0.0
        %4530 = vmatpush1.msra.mxu0 0.0
        %4531 = vmatprep.subr.mxu0 0.0
        %4532 = vmatpush1.msra.mxu0 0.0
        %4533 = vmatprep.subr.mxu0 0.0
        %4534 = vmatpush1.msra.mxu0 0.0
        %4535 = vmatprep.subr.mxu0 0.0
        %4536 = vmatpush1.msra.mxu0 %v1530
        %4537 = vmatprep.subr.mxu0 0.0
        %4538 = vmatpush1.msra.mxu0 %v1529
        %4539 = vmatprep.subr.mxu0 0.0
        %4540 = vmatpush2.msra.mxu0 0.0
        %4541 = vmatprep.subr.mxu0 0.0
        %4542 = vmatpush2.msra.mxu0 0.0
        %4543 = vmatprep.subr.mxu0 0.0
        %4544 = vmatpush2.msra.mxu0 0.0
        %4545 = vmatprep.subr.mxu0 0.0
        %4546 = vmatpush2.msra.mxu0 0.0
        %4547 = vmatprep.subr.mxu0 0.0
        %4548 = vmatpush2.msra.mxu0 0.0
        %4549 = vmatprep.subr.mxu0 0.0
        %4550 = vmatpush2.msra.mxu0 0.0
        %4551 = vmatprep.subr.mxu0 0.0
        %4552 = vmatpush2.msra.mxu0 0.0
        %4553 = vmatprep.subr.mxu0 0.0
        %4554 = vmatpush2.msra.mxu0 0.0
        %4555 = vmatprep.subr.mxu0 0.0
        %4556 = vmatpush2.msra.mxu0 0.0
        %4557 = vmatprep.subr.mxu0 0.0
        %4558 = vmatpush2.msra.mxu0 0.0
        %4559 = vmatprep.subr.mxu0 0.0
        %4560 = vmatpush2.msra.mxu0 0.0
        %4561 = vmatprep.subr.mxu0 0.0
        %4562 = vmatpush2.msra.mxu0 0.0
        %4563 = vmatprep.subr.mxu0 0.0
        %4564 = vmatpush2.msra.mxu0 0.0
        %4565 = vmatprep.subr.mxu0 0.0
        %4566 = vmatpush2.msra.mxu0 0.0
        %4567 = vmatprep.subr.mxu0 0.0
        %4568 = vmatpush2.msra.mxu0 0.0
        %4569 = vmatprep.subr.mxu0 0.0
        %4570 = vmatpush2.msra.mxu0 0.0
        %4571 = vmatprep.mubr.f32.mxu0 0.0
        %4572 = vmatmul.mubr.f32.gmra.mxu0 %v4502
        %v4573 = vpop.f32.mrf.mxu0
        %v4574 = vadd.f32 0.0, %v4573
        %v4575 = vpop.f32.mrf.mxu0
        %4576 = vmatprep.mubr.f32.mxu0 0.0
        %4577 = vmatmul.mubr.f32.gmra.mxu0 %v4505
        %v4578 = vpop.f32.mrf.mxu0
        %v4579 = vadd.f32 0.0, %v4578
        %v4580 = vpop.f32.mrf.mxu0
        %4581 = vdwg.mxu0
        %v4583 = vsel %vm432, %v1275, 0
        %v4586 = vsel %vm432, %v1276, 0
        %4588 = vmatprep.subr.mxu0 0.0
        %4589 = vmatpush1.msra.mxu0 0.0
        %4590 = vmatprep.subr.mxu0 0.0
        %4591 = vmatpush1.msra.mxu0 0.0
        %4592 = vmatprep.subr.mxu0 0.0
        %4593 = vmatpush1.msra.mxu0 0.0
        %4594 = vmatprep.subr.mxu0 0.0
        %4595 = vmatpush1.msra.mxu0 0.0
        %4596 = vmatprep.subr.mxu0 0.0
        %4597 = vmatpush1.msra.mxu0 0.0
        %4598 = vmatprep.subr.mxu0 0.0
        %4599 = vmatpush1.msra.mxu0 0.0
        %4600 = vmatprep.subr.mxu0 0.0
        %4601 = vmatpush1.msra.mxu0 0.0
        %4602 = vmatprep.subr.mxu0 0.0
        %4603 = vmatpush1.msra.mxu0 0.0
        %4604 = vmatprep.subr.mxu0 0.0
        %4605 = vmatpush1.msra.mxu0 0.0
        %4606 = vmatprep.subr.mxu0 0.0
        %4607 = vmatpush1.msra.mxu0 0.0
        %4608 = vmatprep.subr.mxu0 0.0
        %4609 = vmatpush1.msra.mxu0 0.0
        %4610 = vmatprep.subr.mxu0 0.0
        %4611 = vmatpush1.msra.mxu0 0.0
        %4612 = vmatprep.subr.mxu0 0.0
        %4613 = vmatpush1.msra.mxu0 0.0
        %4614 = vmatprep.subr.mxu0 0.0
        %4615 = vmatpush1.msra.mxu0 0.0
        %4616 = vmatprep.subr.mxu0 0.0
        %4617 = vmatpush1.msra.mxu0 %v1532
        %4618 = vmatprep.subr.mxu0 0.0
        %4619 = vmatpush1.msra.mxu0 %v1531
        %4620 = vmatprep.subr.mxu0 0.0
        %4621 = vmatpush2.msra.mxu0 0.0
        %4622 = vmatprep.subr.mxu0 0.0
        %4623 = vmatpush2.msra.mxu0 0.0
        %4624 = vmatprep.subr.mxu0 0.0
        %4625 = vmatpush2.msra.mxu0 0.0
        %4626 = vmatprep.subr.mxu0 0.0
        %4627 = vmatpush2.msra.mxu0 0.0
        %4628 = vmatprep.subr.mxu0 0.0
        %4629 = vmatpush2.msra.mxu0 0.0
        %4630 = vmatprep.subr.mxu0 0.0
        %4631 = vmatpush2.msra.mxu0 0.0
        %4632 = vmatprep.subr.mxu0 0.0
        %4633 = vmatpush2.msra.mxu0 0.0
        %4634 = vmatprep.subr.mxu0 0.0
        %4635 = vmatpush2.msra.mxu0 0.0
        %4636 = vmatprep.subr.mxu0 0.0
        %4637 = vmatpush2.msra.mxu0 0.0
        %4638 = vmatprep.subr.mxu0 0.0
        %4639 = vmatpush2.msra.mxu0 0.0
        %4640 = vmatprep.subr.mxu0 0.0
        %4641 = vmatpush2.msra.mxu0 0.0
        %4642 = vmatprep.subr.mxu0 0.0
        %4643 = vmatpush2.msra.mxu0 0.0
        %4644 = vmatprep.subr.mxu0 0.0
        %4645 = vmatpush2.msra.mxu0 0.0
        %4646 = vmatprep.subr.mxu0 0.0
        %4647 = vmatpush2.msra.mxu0 0.0
        %4648 = vmatprep.subr.mxu0 0.0
        %4649 = vmatpush2.msra.mxu0 0.0
        %4650 = vmatprep.subr.mxu0 0.0
        %4651 = vmatpush2.msra.mxu0 0.0
        %4652 = vmatprep.mubr.f32.mxu0 0.0
        %4653 = vmatmul.mubr.f32.gmra.mxu0 %v4583
        %v4654 = vpop.f32.mrf.mxu0
        %v4655 = vadd.f32 0.0, %v4654
        %v4656 = vpop.f32.mrf.mxu0
        %4657 = vmatprep.mubr.f32.mxu0 0.0
        %4658 = vmatmul.mubr.f32.gmra.mxu0 %v4586
        %v4659 = vpop.f32.mrf.mxu0
        %v4660 = vadd.f32 0.0, %v4659
        %v4661 = vpop.f32.mrf.mxu0
        %4662 = vdwg.mxu0
        %v4664 = vsel %vm432, %v1277, 0
        %v4667 = vsel %vm432, %v1278, 0
        %4669 = vmatprep.subr.mxu0 0.0
        %4670 = vmatpush1.msra.mxu0 0.0
        %4671 = vmatprep.subr.mxu0 0.0
        %4672 = vmatpush1.msra.mxu0 0.0
        %4673 = vmatprep.subr.mxu0 0.0
        %4674 = vmatpush1.msra.mxu0 0.0
        %4675 = vmatprep.subr.mxu0 0.0
        %4676 = vmatpush1.msra.mxu0 0.0
        %4677 = vmatprep.subr.mxu0 0.0
        %4678 = vmatpush1.msra.mxu0 0.0
        %4679 = vmatprep.subr.mxu0 0.0
        %4680 = vmatpush1.msra.mxu0 0.0
        %4681 = vmatprep.subr.mxu0 0.0
        %4682 = vmatpush1.msra.mxu0 0.0
        %4683 = vmatprep.subr.mxu0 0.0
        %4684 = vmatpush1.msra.mxu0 0.0
        %4685 = vmatprep.subr.mxu0 0.0
        %4686 = vmatpush1.msra.mxu0 0.0
        %4687 = vmatprep.subr.mxu0 0.0
        %4688 = vmatpush1.msra.mxu0 0.0
        %4689 = vmatprep.subr.mxu0 0.0
        %4690 = vmatpush1.msra.mxu0 0.0
        %4691 = vmatprep.subr.mxu0 0.0
        %4692 = vmatpush1.msra.mxu0 0.0
        %4693 = vmatprep.subr.mxu0 0.0
        %4694 = vmatpush1.msra.mxu0 0.0
        %4695 = vmatprep.subr.mxu0 0.0
        %4696 = vmatpush1.msra.mxu0 0.0
        %4697 = vmatprep.subr.mxu0 0.0
        %4698 = vmatpush1.msra.mxu0 %v1534
        %4699 = vmatprep.subr.mxu0 0.0
        %4700 = vmatpush1.msra.mxu0 %v1533
        %4701 = vmatprep.subr.mxu0 0.0
        %4702 = vmatpush2.msra.mxu0 0.0
        %4703 = vmatprep.subr.mxu0 0.0
        %4704 = vmatpush2.msra.mxu0 0.0
        %4705 = vmatprep.subr.mxu0 0.0
        %4706 = vmatpush2.msra.mxu0 0.0
        %4707 = vmatprep.subr.mxu0 0.0
        %4708 = vmatpush2.msra.mxu0 0.0
        %4709 = vmatprep.subr.mxu0 0.0
        %4710 = vmatpush2.msra.mxu0 0.0
        %4711 = vmatprep.subr.mxu0 0.0
        %4712 = vmatpush2.msra.mxu0 0.0
        %4713 = vmatprep.subr.mxu0 0.0
        %4714 = vmatpush2.msra.mxu0 0.0
        %4715 = vmatprep.subr.mxu0 0.0
        %4716 = vmatpush2.msra.mxu0 0.0
        %4717 = vmatprep.subr.mxu0 0.0
        %4718 = vmatpush2.msra.mxu0 0.0
        %4719 = vmatprep.subr.mxu0 0.0
        %4720 = vmatpush2.msra.mxu0 0.0
        %4721 = vmatprep.subr.mxu0 0.0
        %4722 = vmatpush2.msra.mxu0 0.0
        %4723 = vmatprep.subr.mxu0 0.0
        %4724 = vmatpush2.msra.mxu0 0.0
        %4725 = vmatprep.subr.mxu0 0.0
        %4726 = vmatpush2.msra.mxu0 0.0
        %4727 = vmatprep.subr.mxu0 0.0
        %4728 = vmatpush2.msra.mxu0 0.0
        %4729 = vmatprep.subr.mxu0 0.0
        %4730 = vmatpush2.msra.mxu0 0.0
        %4731 = vmatprep.subr.mxu0 0.0
        %4732 = vmatpush2.msra.mxu0 0.0
        %4733 = vmatprep.mubr.f32.mxu0 0.0
        %4734 = vmatmul.mubr.f32.gmra.mxu0 %v4664
        %v4735 = vpop.f32.mrf.mxu0
        %v4736 = vadd.f32 0.0, %v4735
        %v4737 = vpop.f32.mrf.mxu0
        %4738 = vmatprep.mubr.f32.mxu0 0.0
        %4739 = vmatmul.mubr.f32.gmra.mxu0 %v4667
        %v4740 = vpop.f32.mrf.mxu0
        %v4741 = vadd.f32 0.0, %v4740
        %v4742 = vpop.f32.mrf.mxu0
        %4743 = vdwg.mxu0
        %v4745 = vsel %vm432, %v1279, 0
        %v4748 = vsel %vm432, %v1280, 0
        %4750 = vmatprep.subr.mxu0 0.0
        %4751 = vmatpush1.msra.mxu0 0.0
        %4752 = vmatprep.subr.mxu0 0.0
        %4753 = vmatpush1.msra.mxu0 0.0
        %4754 = vmatprep.subr.mxu0 0.0
        %4755 = vmatpush1.msra.mxu0 0.0
        %4756 = vmatprep.subr.mxu0 0.0
        %4757 = vmatpush1.msra.mxu0 0.0
        %4758 = vmatprep.subr.mxu0 0.0
        %4759 = vmatpush1.msra.mxu0 0.0
        %4760 = vmatprep.subr.mxu0 0.0
        %4761 = vmatpush1.msra.mxu0 0.0
        %4762 = vmatprep.subr.mxu0 0.0
        %4763 = vmatpush1.msra.mxu0 0.0
        %4764 = vmatprep.subr.mxu0 0.0
        %4765 = vmatpush1.msra.mxu0 0.0
        %4766 = vmatprep.subr.mxu0 0.0
        %4767 = vmatpush1.msra.mxu0 0.0
        %4768 = vmatprep.subr.mxu0 0.0
        %4769 = vmatpush1.msra.mxu0 0.0
        %4770 = vmatprep.subr.mxu0 0.0
        %4771 = vmatpush1.msra.mxu0 0.0
        %4772 = vmatprep.subr.mxu0 0.0
        %4773 = vmatpush1.msra.mxu0 0.0
        %4774 = vmatprep.subr.mxu0 0.0
        %4775 = vmatpush1.msra.mxu0 0.0
        %4776 = vmatprep.subr.mxu0 0.0
        %4777 = vmatpush1.msra.mxu0 0.0
        %4778 = vmatprep.subr.mxu0 0.0
        %4779 = vmatpush1.msra.mxu0 %v1536
        %4780 = vmatprep.subr.mxu0 0.0
        %4781 = vmatpush1.msra.mxu0 %v1535
        %4782 = vmatprep.subr.mxu0 0.0
        %4783 = vmatpush2.msra.mxu0 0.0
        %4784 = vmatprep.subr.mxu0 0.0
        %4785 = vmatpush2.msra.mxu0 0.0
        %4786 = vmatprep.subr.mxu0 0.0
        %4787 = vmatpush2.msra.mxu0 0.0
        %4788 = vmatprep.subr.mxu0 0.0
        %4789 = vmatpush2.msra.mxu0 0.0
        %4790 = vmatprep.subr.mxu0 0.0
        %4791 = vmatpush2.msra.mxu0 0.0
        %4792 = vmatprep.subr.mxu0 0.0
        %4793 = vmatpush2.msra.mxu0 0.0
        %4794 = vmatprep.subr.mxu0 0.0
        %4795 = vmatpush2.msra.mxu0 0.0
        %4796 = vmatprep.subr.mxu0 0.0
        %4797 = vmatpush2.msra.mxu0 0.0
        %4798 = vmatprep.subr.mxu0 0.0
        %4799 = vmatpush2.msra.mxu0 0.0
        %4800 = vmatprep.subr.mxu0 0.0
        %4801 = vmatpush2.msra.mxu0 0.0
        %4802 = vmatprep.subr.mxu0 0.0
        %4803 = vmatpush2.msra.mxu0 0.0
        %4804 = vmatprep.subr.mxu0 0.0
        %4805 = vmatpush2.msra.mxu0 0.0
        %4806 = vmatprep.subr.mxu0 0.0
        %4807 = vmatpush2.msra.mxu0 0.0
        %4808 = vmatprep.subr.mxu0 0.0
        %4809 = vmatpush2.msra.mxu0 0.0
        %4810 = vmatprep.subr.mxu0 0.0
        %4811 = vmatpush2.msra.mxu0 0.0
        %4812 = vmatprep.subr.mxu0 0.0
        %4813 = vmatpush2.msra.mxu0 0.0
        %4814 = vmatprep.mubr.f32.mxu0 0.0
        %4815 = vmatmul.mubr.f32.gmra.mxu0 %v4745
        %v4816 = vpop.f32.mrf.mxu0
        %v4817 = vadd.f32 0.0, %v4816
        %v4818 = vpop.f32.mrf.mxu0
        %4819 = vmatprep.mubr.f32.mxu0 0.0
        %4820 = vmatmul.mubr.f32.gmra.mxu0 %v4748
        %v4821 = vpop.f32.mrf.mxu0
        %v4822 = vadd.f32 0.0, %v4821
        %v4823 = vpop.f32.mrf.mxu0
        %4824 = vdwg.mxu0
        %v4826 = vsel %vm432, %v1281, 0
        %v4829 = vsel %vm432, %v1282, 0
        %4831 = vmatprep.subr.mxu0 0.0
        %4832 = vmatpush1.msra.mxu0 0.0
        %4833 = vmatprep.subr.mxu0 0.0
        %4834 = vmatpush1.msra.mxu0 0.0
        %4835 = vmatprep.subr.mxu0 0.0
        %4836 = vmatpush1.msra.mxu0 0.0
        %4837 = vmatprep.subr.mxu0 0.0
        %4838 = vmatpush1.msra.mxu0 0.0
        %4839 = vmatprep.subr.mxu0 0.0
        %4840 = vmatpush1.msra.mxu0 0.0
        %4841 = vmatprep.subr.mxu0 0.0
        %4842 = vmatpush1.msra.mxu0 0.0
        %4843 = vmatprep.subr.mxu0 0.0
        %4844 = vmatpush1.msra.mxu0 0.0
        %4845 = vmatprep.subr.mxu0 0.0
        %4846 = vmatpush1.msra.mxu0 0.0
        %4847 = vmatprep.subr.mxu0 0.0
        %4848 = vmatpush1.msra.mxu0 0.0
        %4849 = vmatprep.subr.mxu0 0.0
        %4850 = vmatpush1.msra.mxu0 0.0
        %4851 = vmatprep.subr.mxu0 0.0
        %4852 = vmatpush1.msra.mxu0 0.0
        %4853 = vmatprep.subr.mxu0 0.0
        %4854 = vmatpush1.msra.mxu0 0.0
        %4855 = vmatprep.subr.mxu0 0.0
        %4856 = vmatpush1.msra.mxu0 0.0
        %4857 = vmatprep.subr.mxu0 0.0
        %4858 = vmatpush1.msra.mxu0 0.0
        %4859 = vmatprep.subr.mxu0 0.0
        %4860 = vmatpush1.msra.mxu0 %v1538
        %4861 = vmatprep.subr.mxu0 0.0
        %4862 = vmatpush1.msra.mxu0 %v1537
        %4863 = vmatprep.subr.mxu0 0.0
        %4864 = vmatpush2.msra.mxu0 0.0
        %4865 = vmatprep.subr.mxu0 0.0
        %4866 = vmatpush2.msra.mxu0 0.0
        %4867 = vmatprep.subr.mxu0 0.0
        %4868 = vmatpush2.msra.mxu0 0.0
        %4869 = vmatprep.subr.mxu0 0.0
        %4870 = vmatpush2.msra.mxu0 0.0
        %4871 = vmatprep.subr.mxu0 0.0
        %4872 = vmatpush2.msra.mxu0 0.0
        %4873 = vmatprep.subr.mxu0 0.0
        %4874 = vmatpush2.msra.mxu0 0.0
        %4875 = vmatprep.subr.mxu0 0.0
        %4876 = vmatpush2.msra.mxu0 0.0
        %4877 = vmatprep.subr.mxu0 0.0
        %4878 = vmatpush2.msra.mxu0 0.0
        %4879 = vmatprep.subr.mxu0 0.0
        %4880 = vmatpush2.msra.mxu0 0.0
        %4881 = vmatprep.subr.mxu0 0.0
        %4882 = vmatpush2.msra.mxu0 0.0
        %4883 = vmatprep.subr.mxu0 0.0
        %4884 = vmatpush2.msra.mxu0 0.0
        %4885 = vmatprep.subr.mxu0 0.0
        %4886 = vmatpush2.msra.mxu0 0.0
        %4887 = vmatprep.subr.mxu0 0.0
        %4888 = vmatpush2.msra.mxu0 0.0
        %4889 = vmatprep.subr.mxu0 0.0
        %4890 = vmatpush2.msra.mxu0 0.0
        %4891 = vmatprep.subr.mxu0 0.0
        %4892 = vmatpush2.msra.mxu0 0.0
        %4893 = vmatprep.subr.mxu0 0.0
        %4894 = vmatpush2.msra.mxu0 0.0
        %4895 = vmatprep.mubr.f32.mxu0 0.0
        %4896 = vmatmul.mubr.f32.gmra.mxu0 %v4826
        %v4897 = vpop.f32.mrf.mxu0
        %v4898 = vadd.f32 0.0, %v4897
        %v4899 = vpop.f32.mrf.mxu0
        %4900 = vmatprep.mubr.f32.mxu0 0.0
        %4901 = vmatmul.mubr.f32.gmra.mxu0 %v4829
        %v4902 = vpop.f32.mrf.mxu0
        %v4903 = vadd.f32 0.0, %v4902
        %v4904 = vpop.f32.mrf.mxu0
        %4905 = vdwg.mxu0
        %v4907 = vsel %vm432, %v1283, 0
        %v4910 = vsel %vm432, %v1284, 0
        %4912 = vmatprep.subr.mxu0 0.0
        %4913 = vmatpush1.msra.mxu0 0.0
        %4914 = vmatprep.subr.mxu0 0.0
        %4915 = vmatpush1.msra.mxu0 0.0
        %4916 = vmatprep.subr.mxu0 0.0
        %4917 = vmatpush1.msra.mxu0 0.0
        %4918 = vmatprep.subr.mxu0 0.0
        %4919 = vmatpush1.msra.mxu0 0.0
        %4920 = vmatprep.subr.mxu0 0.0
        %4921 = vmatpush1.msra.mxu0 0.0
        %4922 = vmatprep.subr.mxu0 0.0
        %4923 = vmatpush1.msra.mxu0 0.0
        %4924 = vmatprep.subr.mxu0 0.0
        %4925 = vmatpush1.msra.mxu0 0.0
        %4926 = vmatprep.subr.mxu0 0.0
        %4927 = vmatpush1.msra.mxu0 0.0
        %4928 = vmatprep.subr.mxu0 0.0
        %4929 = vmatpush1.msra.mxu0 0.0
        %4930 = vmatprep.subr.mxu0 0.0
        %4931 = vmatpush1.msra.mxu0 0.0
        %4932 = vmatprep.subr.mxu0 0.0
        %4933 = vmatpush1.msra.mxu0 0.0
        %4934 = vmatprep.subr.mxu0 0.0
        %4935 = vmatpush1.msra.mxu0 0.0
        %4936 = vmatprep.subr.mxu0 0.0
        %4937 = vmatpush1.msra.mxu0 0.0
        %4938 = vmatprep.subr.mxu0 0.0
        %4939 = vmatpush1.msra.mxu0 0.0
        %4940 = vmatprep.subr.mxu0 0.0
        %4941 = vmatpush1.msra.mxu0 %v1540
        %4942 = vmatprep.subr.mxu0 0.0
        %4943 = vmatpush1.msra.mxu0 %v1539
        %4944 = vmatprep.subr.mxu0 0.0
        %4945 = vmatpush2.msra.mxu0 0.0
        %4946 = vmatprep.subr.mxu0 0.0
        %4947 = vmatpush2.msra.mxu0 0.0
        %4948 = vmatprep.subr.mxu0 0.0
        %4949 = vmatpush2.msra.mxu0 0.0
        %4950 = vmatprep.subr.mxu0 0.0
        %4951 = vmatpush2.msra.mxu0 0.0
        %4952 = vmatprep.subr.mxu0 0.0
        %4953 = vmatpush2.msra.mxu0 0.0
        %4954 = vmatprep.subr.mxu0 0.0
        %4955 = vmatpush2.msra.mxu0 0.0
        %4956 = vmatprep.subr.mxu0 0.0
        %4957 = vmatpush2.msra.mxu0 0.0
        %4958 = vmatprep.subr.mxu0 0.0
        %4959 = vmatpush2.msra.mxu0 0.0
        %4960 = vmatprep.subr.mxu0 0.0
        %4961 = vmatpush2.msra.mxu0 0.0
        %4962 = vmatprep.subr.mxu0 0.0
        %4963 = vmatpush2.msra.mxu0 0.0
        %4964 = vmatprep.subr.mxu0 0.0
        %4965 = vmatpush2.msra.mxu0 0.0
        %4966 = vmatprep.subr.mxu0 0.0
        %4967 = vmatpush2.msra.mxu0 0.0
        %4968 = vmatprep.subr.mxu0 0.0
        %4969 = vmatpush2.msra.mxu0 0.0
        %4970 = vmatprep.subr.mxu0 0.0
        %4971 = vmatpush2.msra.mxu0 0.0
        %4972 = vmatprep.subr.mxu0 0.0
        %4973 = vmatpush2.msra.mxu0 0.0
        %4974 = vmatprep.subr.mxu0 0.0
        %4975 = vmatpush2.msra.mxu0 0.0
        %4976 = vmatprep.mubr.f32.mxu0 0.0
        %4977 = vmatmul.mubr.f32.gmra.mxu0 %v4907
        %v4978 = vpop.f32.mrf.mxu0
        %v4979 = vadd.f32 0.0, %v4978
        %v4980 = vpop.f32.mrf.mxu0
        %4981 = vmatprep.mubr.f32.mxu0 0.0
        %4982 = vmatmul.mubr.f32.gmra.mxu0 %v4910
        %v4983 = vpop.f32.mrf.mxu0
        %v4984 = vadd.f32 0.0, %v4983
        %v4985 = vpop.f32.mrf.mxu0
        %4986 = vdwg.mxu0
        %v4988 = vsel %vm432, %v1285, 0
        %v4991 = vsel %vm432, %v1286, 0
        %4993 = vmatprep.subr.mxu0 0.0
        %4994 = vmatpush1.msra.mxu0 0.0
        %4995 = vmatprep.subr.mxu0 0.0
        %4996 = vmatpush1.msra.mxu0 0.0
        %4997 = vmatprep.subr.mxu0 0.0
        %4998 = vmatpush1.msra.mxu0 0.0
        %4999 = vmatprep.subr.mxu0 0.0
        %5000 = vmatpush1.msra.mxu0 0.0
        %5001 = vmatprep.subr.mxu0 0.0
        %5002 = vmatpush1.msra.mxu0 0.0
        %5003 = vmatprep.subr.mxu0 0.0
        %5004 = vmatpush1.msra.mxu0 0.0
        %5005 = vmatprep.subr.mxu0 0.0
        %5006 = vmatpush1.msra.mxu0 0.0
        %5007 = vmatprep.subr.mxu0 0.0
        %5008 = vmatpush1.msra.mxu0 0.0
        %5009 = vmatprep.subr.mxu0 0.0
        %5010 = vmatpush1.msra.mxu0 0.0
        %5011 = vmatprep.subr.mxu0 0.0
        %5012 = vmatpush1.msra.mxu0 0.0
        %5013 = vmatprep.subr.mxu0 0.0
        %5014 = vmatpush1.msra.mxu0 0.0
        %5015 = vmatprep.subr.mxu0 0.0
        %5016 = vmatpush1.msra.mxu0 0.0
        %5017 = vmatprep.subr.mxu0 0.0
        %5018 = vmatpush1.msra.mxu0 0.0
        %5019 = vmatprep.subr.mxu0 0.0
        %5020 = vmatpush1.msra.mxu0 0.0
        %5021 = vmatprep.subr.mxu0 0.0
        %5022 = vmatpush1.msra.mxu0 %v1542
        %5023 = vmatprep.subr.mxu0 0.0
        %5024 = vmatpush1.msra.mxu0 %v1541
        %5025 = vmatprep.subr.mxu0 0.0
        %5026 = vmatpush2.msra.mxu0 0.0
        %5027 = vmatprep.subr.mxu0 0.0
        %5028 = vmatpush2.msra.mxu0 0.0
        %5029 = vmatprep.subr.mxu0 0.0
        %5030 = vmatpush2.msra.mxu0 0.0
        %5031 = vmatprep.subr.mxu0 0.0
        %5032 = vmatpush2.msra.mxu0 0.0
        %5033 = vmatprep.subr.mxu0 0.0
        %5034 = vmatpush2.msra.mxu0 0.0
        %5035 = vmatprep.subr.mxu0 0.0
        %5036 = vmatpush2.msra.mxu0 0.0
        %5037 = vmatprep.subr.mxu0 0.0
        %5038 = vmatpush2.msra.mxu0 0.0
        %5039 = vmatprep.subr.mxu0 0.0
        %5040 = vmatpush2.msra.mxu0 0.0
        %5041 = vmatprep.subr.mxu0 0.0
        %5042 = vmatpush2.msra.mxu0 0.0
        %5043 = vmatprep.subr.mxu0 0.0
        %5044 = vmatpush2.msra.mxu0 0.0
        %5045 = vmatprep.subr.mxu0 0.0
        %5046 = vmatpush2.msra.mxu0 0.0
        %5047 = vmatprep.subr.mxu0 0.0
        %5048 = vmatpush2.msra.mxu0 0.0
        %5049 = vmatprep.subr.mxu0 0.0
        %5050 = vmatpush2.msra.mxu0 0.0
        %5051 = vmatprep.subr.mxu0 0.0
        %5052 = vmatpush2.msra.mxu0 0.0
        %5053 = vmatprep.subr.mxu0 0.0
        %5054 = vmatpush2.msra.mxu0 0.0
        %5055 = vmatprep.subr.mxu0 0.0
        %5056 = vmatpush2.msra.mxu0 0.0
        %5057 = vmatprep.mubr.f32.mxu0 0.0
        %5058 = vmatmul.mubr.f32.gmra.mxu0 %v4988
        %v5059 = vpop.f32.mrf.mxu0
        %v5060 = vadd.f32 0.0, %v5059
        %v5061 = vpop.f32.mrf.mxu0
        %5062 = vmatprep.mubr.f32.mxu0 0.0
        %5063 = vmatmul.mubr.f32.gmra.mxu0 %v4991
        %v5064 = vpop.f32.mrf.mxu0
        %v5065 = vadd.f32 0.0, %v5064
        %v5066 = vpop.f32.mrf.mxu0
        %5067 = vdwg.mxu0
        %v5069 = vsel %vm432, %v1287, 0
        %v5072 = vsel %vm432, %v1288, 0
        %5074 = vmatprep.subr.mxu0 0.0
        %5075 = vmatpush1.msra.mxu0 0.0
        %5076 = vmatprep.subr.mxu0 0.0
        %5077 = vmatpush1.msra.mxu0 0.0
        %5078 = vmatprep.subr.mxu0 0.0
        %5079 = vmatpush1.msra.mxu0 0.0
        %5080 = vmatprep.subr.mxu0 0.0
        %5081 = vmatpush1.msra.mxu0 0.0
        %5082 = vmatprep.subr.mxu0 0.0
        %5083 = vmatpush1.msra.mxu0 0.0
        %5084 = vmatprep.subr.mxu0 0.0
        %5085 = vmatpush1.msra.mxu0 0.0
        %5086 = vmatprep.subr.mxu0 0.0
        %5087 = vmatpush1.msra.mxu0 0.0
        %5088 = vmatprep.subr.mxu0 0.0
        %5089 = vmatpush1.msra.mxu0 0.0
        %5090 = vmatprep.subr.mxu0 0.0
        %5091 = vmatpush1.msra.mxu0 0.0
        %5092 = vmatprep.subr.mxu0 0.0
        %5093 = vmatpush1.msra.mxu0 0.0
        %5094 = vmatprep.subr.mxu0 0.0
        %5095 = vmatpush1.msra.mxu0 0.0
        %5096 = vmatprep.subr.mxu0 0.0
        %5097 = vmatpush1.msra.mxu0 0.0
        %5098 = vmatprep.subr.mxu0 0.0
        %5099 = vmatpush1.msra.mxu0 0.0
        %5100 = vmatprep.subr.mxu0 0.0
        %5101 = vmatpush1.msra.mxu0 0.0
        %5102 = vmatprep.subr.mxu0 0.0
        %5103 = vmatpush1.msra.mxu0 %v1544
        %5104 = vmatprep.subr.mxu0 0.0
        %5105 = vmatpush1.msra.mxu0 %v1543
        %5106 = vmatprep.subr.mxu0 0.0
        %5107 = vmatpush2.msra.mxu0 0.0
        %5108 = vmatprep.subr.mxu0 0.0
        %5109 = vmatpush2.msra.mxu0 0.0
        %5110 = vmatprep.subr.mxu0 0.0
        %5111 = vmatpush2.msra.mxu0 0.0
        %5112 = vmatprep.subr.mxu0 0.0
        %5113 = vmatpush2.msra.mxu0 0.0
        %5114 = vmatprep.subr.mxu0 0.0
        %5115 = vmatpush2.msra.mxu0 0.0
        %5116 = vmatprep.subr.mxu0 0.0
        %5117 = vmatpush2.msra.mxu0 0.0
        %5118 = vmatprep.subr.mxu0 0.0
        %5119 = vmatpush2.msra.mxu0 0.0
        %5120 = vmatprep.subr.mxu0 0.0
        %5121 = vmatpush2.msra.mxu0 0.0
        %5122 = vmatprep.subr.mxu0 0.0
        %5123 = vmatpush2.msra.mxu0 0.0
        %5124 = vmatprep.subr.mxu0 0.0
        %5125 = vmatpush2.msra.mxu0 0.0
        %5126 = vmatprep.subr.mxu0 0.0
        %5127 = vmatpush2.msra.mxu0 0.0
        %5128 = vmatprep.subr.mxu0 0.0
        %5129 = vmatpush2.msra.mxu0 0.0
        %5130 = vmatprep.subr.mxu0 0.0
        %5131 = vmatpush2.msra.mxu0 0.0
        %5132 = vmatprep.subr.mxu0 0.0
        %5133 = vmatpush2.msra.mxu0 0.0
        %5134 = vmatprep.subr.mxu0 0.0
        %5135 = vmatpush2.msra.mxu0 0.0
        %5136 = vmatprep.subr.mxu0 0.0
        %5137 = vmatpush2.msra.mxu0 0.0
        %5138 = vmatprep.mubr.f32.mxu0 0.0
        %5139 = vmatmul.mubr.f32.gmra.mxu0 %v5069
        %v5140 = vpop.f32.mrf.mxu0
        %v5141 = vadd.f32 0.0, %v5140
        %v5142 = vpop.f32.mrf.mxu0
        %5143 = vmatprep.mubr.f32.mxu0 0.0
        %5144 = vmatmul.mubr.f32.gmra.mxu0 %v5072
        %v5145 = vpop.f32.mrf.mxu0
        %v5146 = vadd.f32 0.0, %v5145
        %v5147 = vpop.f32.mrf.mxu0
        %5148 = vdwg.mxu0
        %v5150 = vsel %vm432, %v1289, 0
        %v5153 = vsel %vm432, %v1290, 0
        %5155 = vmatprep.subr.mxu0 0.0
        %5156 = vmatpush1.msra.mxu0 0.0
        %5157 = vmatprep.subr.mxu0 0.0
        %5158 = vmatpush1.msra.mxu0 0.0
        %5159 = vmatprep.subr.mxu0 0.0
        %5160 = vmatpush1.msra.mxu0 0.0
        %5161 = vmatprep.subr.mxu0 0.0
        %5162 = vmatpush1.msra.mxu0 0.0
        %5163 = vmatprep.subr.mxu0 0.0
        %5164 = vmatpush1.msra.mxu0 0.0
        %5165 = vmatprep.subr.mxu0 0.0
        %5166 = vmatpush1.msra.mxu0 0.0
        %5167 = vmatprep.subr.mxu0 0.0
        %5168 = vmatpush1.msra.mxu0 0.0
        %5169 = vmatprep.subr.mxu0 0.0
        %5170 = vmatpush1.msra.mxu0 0.0
        %5171 = vmatprep.subr.mxu0 0.0
        %5172 = vmatpush1.msra.mxu0 0.0
        %5173 = vmatprep.subr.mxu0 0.0
        %5174 = vmatpush1.msra.mxu0 0.0
        %5175 = vmatprep.subr.mxu0 0.0
        %5176 = vmatpush1.msra.mxu0 0.0
        %5177 = vmatprep.subr.mxu0 0.0
        %5178 = vmatpush1.msra.mxu0 0.0
        %5179 = vmatprep.subr.mxu0 0.0
        %5180 = vmatpush1.msra.mxu0 0.0
        %5181 = vmatprep.subr.mxu0 0.0
        %5182 = vmatpush1.msra.mxu0 0.0
        %5183 = vmatprep.subr.mxu0 0.0
        %5184 = vmatpush1.msra.mxu0 %v1546
        %5185 = vmatprep.subr.mxu0 0.0
        %5186 = vmatpush1.msra.mxu0 %v1545
        %5187 = vmatprep.subr.mxu0 0.0
        %5188 = vmatpush2.msra.mxu0 0.0
        %5189 = vmatprep.subr.mxu0 0.0
        %5190 = vmatpush2.msra.mxu0 0.0
        %5191 = vmatprep.subr.mxu0 0.0
        %5192 = vmatpush2.msra.mxu0 0.0
        %5193 = vmatprep.subr.mxu0 0.0
        %5194 = vmatpush2.msra.mxu0 0.0
        %5195 = vmatprep.subr.mxu0 0.0
        %5196 = vmatpush2.msra.mxu0 0.0
        %5197 = vmatprep.subr.mxu0 0.0
        %5198 = vmatpush2.msra.mxu0 0.0
        %5199 = vmatprep.subr.mxu0 0.0
        %5200 = vmatpush2.msra.mxu0 0.0
        %5201 = vmatprep.subr.mxu0 0.0
        %5202 = vmatpush2.msra.mxu0 0.0
        %5203 = vmatprep.subr.mxu0 0.0
        %5204 = vmatpush2.msra.mxu0 0.0
        %5205 = vmatprep.subr.mxu0 0.0
        %5206 = vmatpush2.msra.mxu0 0.0
        %5207 = vmatprep.subr.mxu0 0.0
        %5208 = vmatpush2.msra.mxu0 0.0
        %5209 = vmatprep.subr.mxu0 0.0
        %5210 = vmatpush2.msra.mxu0 0.0
        %5211 = vmatprep.subr.mxu0 0.0
        %5212 = vmatpush2.msra.mxu0 0.0
        %5213 = vmatprep.subr.mxu0 0.0
        %5214 = vmatpush2.msra.mxu0 0.0
        %5215 = vmatprep.subr.mxu0 0.0
        %5216 = vmatpush2.msra.mxu0 0.0
        %5217 = vmatprep.subr.mxu0 0.0
        %5218 = vmatpush2.msra.mxu0 0.0
        %5219 = vmatprep.mubr.f32.mxu0 0.0
        %5220 = vmatmul.mubr.f32.gmra.mxu0 %v5150
        %v5221 = vpop.f32.mrf.mxu0
        %v5222 = vadd.f32 0.0, %v5221
        %v5223 = vpop.f32.mrf.mxu0
        %5224 = vmatprep.mubr.f32.mxu0 0.0
        %5225 = vmatmul.mubr.f32.gmra.mxu0 %v5153
        %v5226 = vpop.f32.mrf.mxu0
        %v5227 = vadd.f32 0.0, %v5226
        %v5228 = vpop.f32.mrf.mxu0
        %5229 = vdwg.mxu0
        %v5231 = vsel %vm432, %v1291, 0
        %v5234 = vsel %vm432, %v1292, 0
        %5236 = vmatprep.subr.mxu0 0.0
        %5237 = vmatpush1.msra.mxu0 0.0
        %5238 = vmatprep.subr.mxu0 0.0
        %5239 = vmatpush1.msra.mxu0 0.0
        %5240 = vmatprep.subr.mxu0 0.0
        %5241 = vmatpush1.msra.mxu0 0.0
        %5242 = vmatprep.subr.mxu0 0.0
        %5243 = vmatpush1.msra.mxu0 0.0
        %5244 = vmatprep.subr.mxu0 0.0
        %5245 = vmatpush1.msra.mxu0 0.0
        %5246 = vmatprep.subr.mxu0 0.0
        %5247 = vmatpush1.msra.mxu0 0.0
        %5248 = vmatprep.subr.mxu0 0.0
        %5249 = vmatpush1.msra.mxu0 0.0
        %5250 = vmatprep.subr.mxu0 0.0
        %5251 = vmatpush1.msra.mxu0 0.0
        %5252 = vmatprep.subr.mxu0 0.0
        %5253 = vmatpush1.msra.mxu0 0.0
        %5254 = vmatprep.subr.mxu0 0.0
        %5255 = vmatpush1.msra.mxu0 0.0
        %5256 = vmatprep.subr.mxu0 0.0
        %5257 = vmatpush1.msra.mxu0 0.0
        %5258 = vmatprep.subr.mxu0 0.0
        %5259 = vmatpush1.msra.mxu0 0.0
        %5260 = vmatprep.subr.mxu0 0.0
        %5261 = vmatpush1.msra.mxu0 0.0
        %5262 = vmatprep.subr.mxu0 0.0
        %5263 = vmatpush1.msra.mxu0 0.0
        %5264 = vmatprep.subr.mxu0 0.0
        %5265 = vmatpush1.msra.mxu0 %v1548
        %5266 = vmatprep.subr.mxu0 0.0
        %5267 = vmatpush1.msra.mxu0 %v1547
        %5268 = vmatprep.subr.mxu0 0.0
        %5269 = vmatpush2.msra.mxu0 0.0
        %5270 = vmatprep.subr.mxu0 0.0
        %5271 = vmatpush2.msra.mxu0 0.0
        %5272 = vmatprep.subr.mxu0 0.0
        %5273 = vmatpush2.msra.mxu0 0.0
        %5274 = vmatprep.subr.mxu0 0.0
        %5275 = vmatpush2.msra.mxu0 0.0
        %5276 = vmatprep.subr.mxu0 0.0
        %5277 = vmatpush2.msra.mxu0 0.0
        %5278 = vmatprep.subr.mxu0 0.0
        %5279 = vmatpush2.msra.mxu0 0.0
        %5280 = vmatprep.subr.mxu0 0.0
        %5281 = vmatpush2.msra.mxu0 0.0
        %5282 = vmatprep.subr.mxu0 0.0
        %5283 = vmatpush2.msra.mxu0 0.0
        %5284 = vmatprep.subr.mxu0 0.0
        %5285 = vmatpush2.msra.mxu0 0.0
        %5286 = vmatprep.subr.mxu0 0.0
        %5287 = vmatpush2.msra.mxu0 0.0
        %5288 = vmatprep.subr.mxu0 0.0
        %5289 = vmatpush2.msra.mxu0 0.0
        %5290 = vmatprep.subr.mxu0 0.0
        %5291 = vmatpush2.msra.mxu0 0.0
        %5292 = vmatprep.subr.mxu0 0.0
        %5293 = vmatpush2.msra.mxu0 0.0
        %5294 = vmatprep.subr.mxu0 0.0
        %5295 = vmatpush2.msra.mxu0 0.0
        %5296 = vmatprep.subr.mxu0 0.0
        %5297 = vmatpush2.msra.mxu0 0.0
        %5298 = vmatprep.subr.mxu0 0.0
        %5299 = vmatpush2.msra.mxu0 0.0
        %5300 = vmatprep.mubr.f32.mxu0 0.0
        %5301 = vmatmul.mubr.f32.gmra.mxu0 %v5231
        %v5302 = vpop.f32.mrf.mxu0
        %v5303 = vadd.f32 0.0, %v5302
        %v5304 = vpop.f32.mrf.mxu0
        %5305 = vmatprep.mubr.f32.mxu0 0.0
        %5306 = vmatmul.mubr.f32.gmra.mxu0 %v5234
        %v5307 = vpop.f32.mrf.mxu0
        %v5308 = vadd.f32 0.0, %v5307
        %v5309 = vpop.f32.mrf.mxu0
        %5310 = vdwg.mxu0
        %v5312 = vsel %vm432, %v1293, 0
        %v5315 = vsel %vm432, %v1294, 0
        %5317 = vmatprep.subr.mxu0 0.0
        %5318 = vmatpush1.msra.mxu0 0.0
        %5319 = vmatprep.subr.mxu0 0.0
        %5320 = vmatpush1.msra.mxu0 0.0
        %5321 = vmatprep.subr.mxu0 0.0
        %5322 = vmatpush1.msra.mxu0 0.0
        %5323 = vmatprep.subr.mxu0 0.0
        %5324 = vmatpush1.msra.mxu0 0.0
        %5325 = vmatprep.subr.mxu0 0.0
        %5326 = vmatpush1.msra.mxu0 0.0
        %5327 = vmatprep.subr.mxu0 0.0
        %5328 = vmatpush1.msra.mxu0 0.0
        %5329 = vmatprep.subr.mxu0 0.0
        %5330 = vmatpush1.msra.mxu0 0.0
        %5331 = vmatprep.subr.mxu0 0.0
        %5332 = vmatpush1.msra.mxu0 0.0
        %5333 = vmatprep.subr.mxu0 0.0
        %5334 = vmatpush1.msra.mxu0 0.0
        %5335 = vmatprep.subr.mxu0 0.0
        %5336 = vmatpush1.msra.mxu0 0.0
        %5337 = vmatprep.subr.mxu0 0.0
        %5338 = vmatpush1.msra.mxu0 0.0
        %5339 = vmatprep.subr.mxu0 0.0
        %5340 = vmatpush1.msra.mxu0 0.0
        %5341 = vmatprep.subr.mxu0 0.0
        %5342 = vmatpush1.msra.mxu0 0.0
        %5343 = vmatprep.subr.mxu0 0.0
        %5344 = vmatpush1.msra.mxu0 0.0
        %5345 = vmatprep.subr.mxu0 0.0
        %5346 = vmatpush1.msra.mxu0 %v1550
        %5347 = vmatprep.subr.mxu0 0.0
        %5348 = vmatpush1.msra.mxu0 %v1549
        %5349 = vmatprep.subr.mxu0 0.0
        %5350 = vmatpush2.msra.mxu0 0.0
        %5351 = vmatprep.subr.mxu0 0.0
        %5352 = vmatpush2.msra.mxu0 0.0
        %5353 = vmatprep.subr.mxu0 0.0
        %5354 = vmatpush2.msra.mxu0 0.0
        %5355 = vmatprep.subr.mxu0 0.0
        %5356 = vmatpush2.msra.mxu0 0.0
        %5357 = vmatprep.subr.mxu0 0.0
        %5358 = vmatpush2.msra.mxu0 0.0
        %5359 = vmatprep.subr.mxu0 0.0
        %5360 = vmatpush2.msra.mxu0 0.0
        %5361 = vmatprep.subr.mxu0 0.0
        %5362 = vmatpush2.msra.mxu0 0.0
        %5363 = vmatprep.subr.mxu0 0.0
        %5364 = vmatpush2.msra.mxu0 0.0
        %5365 = vmatprep.subr.mxu0 0.0
        %5366 = vmatpush2.msra.mxu0 0.0
        %5367 = vmatprep.subr.mxu0 0.0
        %5368 = vmatpush2.msra.mxu0 0.0
        %5369 = vmatprep.subr.mxu0 0.0
        %5370 = vmatpush2.msra.mxu0 0.0
        %5371 = vmatprep.subr.mxu0 0.0
        %5372 = vmatpush2.msra.mxu0 0.0
        %5373 = vmatprep.subr.mxu0 0.0
        %5374 = vmatpush2.msra.mxu0 0.0
        %5375 = vmatprep.subr.mxu0 0.0
        %5376 = vmatpush2.msra.mxu0 0.0
        %5377 = vmatprep.subr.mxu0 0.0
        %5378 = vmatpush2.msra.mxu0 0.0
        %5379 = vmatprep.subr.mxu0 0.0
        %5380 = vmatpush2.msra.mxu0 0.0
        %5381 = vmatprep.mubr.f32.mxu0 0.0
        %5382 = vmatmul.mubr.f32.gmra.mxu0 %v5312
        %v5383 = vpop.f32.mrf.mxu0
        %v5384 = vadd.f32 0.0, %v5383
        %v5385 = vpop.f32.mrf.mxu0
        %5386 = vmatprep.mubr.f32.mxu0 0.0
        %5387 = vmatmul.mubr.f32.gmra.mxu0 %v5315
        %v5388 = vpop.f32.mrf.mxu0
        %v5389 = vadd.f32 0.0, %v5388
        %v5390 = vpop.f32.mrf.mxu0
        %5391 = vdwg.mxu0
        %v5393 = vsel %vm432, %v1295, 0
        %v5396 = vsel %vm432, %v1296, 0
        %5398 = vmatprep.subr.mxu0 0.0
        %5399 = vmatpush1.msra.mxu0 0.0
        %5400 = vmatprep.subr.mxu0 0.0
        %5401 = vmatpush1.msra.mxu0 0.0
        %5402 = vmatprep.subr.mxu0 0.0
        %5403 = vmatpush1.msra.mxu0 0.0
        %5404 = vmatprep.subr.mxu0 0.0
        %5405 = vmatpush1.msra.mxu0 0.0
        %5406 = vmatprep.subr.mxu0 0.0
        %5407 = vmatpush1.msra.mxu0 0.0
        %5408 = vmatprep.subr.mxu0 0.0
        %5409 = vmatpush1.msra.mxu0 0.0
        %5410 = vmatprep.subr.mxu0 0.0
        %5411 = vmatpush1.msra.mxu0 0.0
        %5412 = vmatprep.subr.mxu0 0.0
        %5413 = vmatpush1.msra.mxu0 0.0
        %5414 = vmatprep.subr.mxu0 0.0
        %5415 = vmatpush1.msra.mxu0 0.0
        %5416 = vmatprep.subr.mxu0 0.0
        %5417 = vmatpush1.msra.mxu0 0.0
        %5418 = vmatprep.subr.mxu0 0.0
        %5419 = vmatpush1.msra.mxu0 0.0
        %5420 = vmatprep.subr.mxu0 0.0
        %5421 = vmatpush1.msra.mxu0 0.0
        %5422 = vmatprep.subr.mxu0 0.0
        %5423 = vmatpush1.msra.mxu0 0.0
        %5424 = vmatprep.subr.mxu0 0.0
        %5425 = vmatpush1.msra.mxu0 0.0
        %5426 = vmatprep.subr.mxu0 0.0
        %5427 = vmatpush1.msra.mxu0 %v1552
        %5428 = vmatprep.subr.mxu0 0.0
        %5429 = vmatpush1.msra.mxu0 %v1551
        %5430 = vmatprep.subr.mxu0 0.0
        %5431 = vmatpush2.msra.mxu0 0.0
        %5432 = vmatprep.subr.mxu0 0.0
        %5433 = vmatpush2.msra.mxu0 0.0
        %5434 = vmatprep.subr.mxu0 0.0
        %5435 = vmatpush2.msra.mxu0 0.0
        %5436 = vmatprep.subr.mxu0 0.0
        %5437 = vmatpush2.msra.mxu0 0.0
        %5438 = vmatprep.subr.mxu0 0.0
        %5439 = vmatpush2.msra.mxu0 0.0
        %5440 = vmatprep.subr.mxu0 0.0
        %5441 = vmatpush2.msra.mxu0 0.0
        %5442 = vmatprep.subr.mxu0 0.0
        %5443 = vmatpush2.msra.mxu0 0.0
        %5444 = vmatprep.subr.mxu0 0.0
        %5445 = vmatpush2.msra.mxu0 0.0
        %5446 = vmatprep.subr.mxu0 0.0
        %5447 = vmatpush2.msra.mxu0 0.0
        %5448 = vmatprep.subr.mxu0 0.0
        %5449 = vmatpush2.msra.mxu0 0.0
        %5450 = vmatprep.subr.mxu0 0.0
        %5451 = vmatpush2.msra.mxu0 0.0
        %5452 = vmatprep.subr.mxu0 0.0
        %5453 = vmatpush2.msra.mxu0 0.0
        %5454 = vmatprep.subr.mxu0 0.0
        %5455 = vmatpush2.msra.mxu0 0.0
        %5456 = vmatprep.subr.mxu0 0.0
        %5457 = vmatpush2.msra.mxu0 0.0
        %5458 = vmatprep.subr.mxu0 0.0
        %5459 = vmatpush2.msra.mxu0 0.0
        %5460 = vmatprep.subr.mxu0 0.0
        %5461 = vmatpush2.msra.mxu0 0.0
        %5462 = vmatprep.mubr.f32.mxu0 0.0
        %5463 = vmatmul.mubr.f32.gmra.mxu0 %v5393
        %v5464 = vpop.f32.mrf.mxu0
        %v5465 = vadd.f32 0.0, %v5464
        %v5466 = vpop.f32.mrf.mxu0
        %5467 = vmatprep.mubr.f32.mxu0 0.0
        %5468 = vmatmul.mubr.f32.gmra.mxu0 %v5396
        %v5469 = vpop.f32.mrf.mxu0
        %v5470 = vadd.f32 0.0, %v5469
        %v5471 = vpop.f32.mrf.mxu0
        %5472 = vdwg.mxu0
        %v5474 = vsel %vm432, %v1297, 0
        %v5477 = vsel %vm432, %v1298, 0
        %5479 = vmatprep.subr.mxu0 0.0
        %5480 = vmatpush1.msra.mxu0 0.0
        %5481 = vmatprep.subr.mxu0 0.0
        %5482 = vmatpush1.msra.mxu0 0.0
        %5483 = vmatprep.subr.mxu0 0.0
        %5484 = vmatpush1.msra.mxu0 0.0
        %5485 = vmatprep.subr.mxu0 0.0
        %5486 = vmatpush1.msra.mxu0 0.0
        %5487 = vmatprep.subr.mxu0 0.0
        %5488 = vmatpush1.msra.mxu0 0.0
        %5489 = vmatprep.subr.mxu0 0.0
        %5490 = vmatpush1.msra.mxu0 0.0
        %5491 = vmatprep.subr.mxu0 0.0
        %5492 = vmatpush1.msra.mxu0 0.0
        %5493 = vmatprep.subr.mxu0 0.0
        %5494 = vmatpush1.msra.mxu0 0.0
        %5495 = vmatprep.subr.mxu0 0.0
        %5496 = vmatpush1.msra.mxu0 0.0
        %5497 = vmatprep.subr.mxu0 0.0
        %5498 = vmatpush1.msra.mxu0 0.0
        %5499 = vmatprep.subr.mxu0 0.0
        %5500 = vmatpush1.msra.mxu0 0.0
        %5501 = vmatprep.subr.mxu0 0.0
        %5502 = vmatpush1.msra.mxu0 0.0
        %5503 = vmatprep.subr.mxu0 0.0
        %5504 = vmatpush1.msra.mxu0 0.0
        %5505 = vmatprep.subr.mxu0 0.0
        %5506 = vmatpush1.msra.mxu0 0.0
        %5507 = vmatprep.subr.mxu0 0.0
        %5508 = vmatpush1.msra.mxu0 %v1554
        %5509 = vmatprep.subr.mxu0 0.0
        %5510 = vmatpush1.msra.mxu0 %v1553
        %5511 = vmatprep.subr.mxu0 0.0
        %5512 = vmatpush2.msra.mxu0 0.0
        %5513 = vmatprep.subr.mxu0 0.0
        %5514 = vmatpush2.msra.mxu0 0.0
        %5515 = vmatprep.subr.mxu0 0.0
        %5516 = vmatpush2.msra.mxu0 0.0
        %5517 = vmatprep.subr.mxu0 0.0
        %5518 = vmatpush2.msra.mxu0 0.0
        %5519 = vmatprep.subr.mxu0 0.0
        %5520 = vmatpush2.msra.mxu0 0.0
        %5521 = vmatprep.subr.mxu0 0.0
        %5522 = vmatpush2.msra.mxu0 0.0
        %5523 = vmatprep.subr.mxu0 0.0
        %5524 = vmatpush2.msra.mxu0 0.0
        %5525 = vmatprep.subr.mxu0 0.0
        %5526 = vmatpush2.msra.mxu0 0.0
        %5527 = vmatprep.subr.mxu0 0.0
        %5528 = vmatpush2.msra.mxu0 0.0
        %5529 = vmatprep.subr.mxu0 0.0
        %5530 = vmatpush2.msra.mxu0 0.0
        %5531 = vmatprep.subr.mxu0 0.0
        %5532 = vmatpush2.msra.mxu0 0.0
        %5533 = vmatprep.subr.mxu0 0.0
        %5534 = vmatpush2.msra.mxu0 0.0
        %5535 = vmatprep.subr.mxu0 0.0
        %5536 = vmatpush2.msra.mxu0 0.0
        %5537 = vmatprep.subr.mxu0 0.0
        %5538 = vmatpush2.msra.mxu0 0.0
        %5539 = vmatprep.subr.mxu0 0.0
        %5540 = vmatpush2.msra.mxu0 0.0
        %5541 = vmatprep.subr.mxu0 0.0
        %5542 = vmatpush2.msra.mxu0 0.0
        %5543 = vmatprep.mubr.f32.mxu0 0.0
        %5544 = vmatmul.mubr.f32.gmra.mxu0 %v5474
        %v5545 = vpop.f32.mrf.mxu0
        %v5546 = vadd.f32 0.0, %v5545
        %v5547 = vpop.f32.mrf.mxu0
        %5548 = vmatprep.mubr.f32.mxu0 0.0
        %5549 = vmatmul.mubr.f32.gmra.mxu0 %v5477
        %v5550 = vpop.f32.mrf.mxu0
        %v5551 = vadd.f32 0.0, %v5550
        %v5552 = vpop.f32.mrf.mxu0
        %5553 = vdwg.mxu0
        %v5555 = vsel %vm432, %v1299, 0
        %v5558 = vsel %vm432, %v1300, 0
        %5560 = vmatprep.subr.mxu0 0.0
        %5561 = vmatpush1.msra.mxu0 0.0
        %5562 = vmatprep.subr.mxu0 0.0
        %5563 = vmatpush1.msra.mxu0 0.0
        %5564 = vmatprep.subr.mxu0 0.0
        %5565 = vmatpush1.msra.mxu0 0.0
        %5566 = vmatprep.subr.mxu0 0.0
        %5567 = vmatpush1.msra.mxu0 0.0
        %5568 = vmatprep.subr.mxu0 0.0
        %5569 = vmatpush1.msra.mxu0 0.0
        %5570 = vmatprep.subr.mxu0 0.0
        %5571 = vmatpush1.msra.mxu0 0.0
        %5572 = vmatprep.subr.mxu0 0.0
        %5573 = vmatpush1.msra.mxu0 0.0
        %5574 = vmatprep.subr.mxu0 0.0
        %5575 = vmatpush1.msra.mxu0 0.0
        %5576 = vmatprep.subr.mxu0 0.0
        %5577 = vmatpush1.msra.mxu0 0.0
        %5578 = vmatprep.subr.mxu0 0.0
        %5579 = vmatpush1.msra.mxu0 0.0
        %5580 = vmatprep.subr.mxu0 0.0
        %5581 = vmatpush1.msra.mxu0 0.0
        %5582 = vmatprep.subr.mxu0 0.0
        %5583 = vmatpush1.msra.mxu0 0.0
        %5584 = vmatprep.subr.mxu0 0.0
        %5585 = vmatpush1.msra.mxu0 0.0
        %5586 = vmatprep.subr.mxu0 0.0
        %5587 = vmatpush1.msra.mxu0 0.0
        %5588 = vmatprep.subr.mxu0 0.0
        %5589 = vmatpush1.msra.mxu0 %v1556
        %5590 = vmatprep.subr.mxu0 0.0
        %5591 = vmatpush1.msra.mxu0 %v1555
        %5592 = vmatprep.subr.mxu0 0.0
        %5593 = vmatpush2.msra.mxu0 0.0
        %5594 = vmatprep.subr.mxu0 0.0
        %5595 = vmatpush2.msra.mxu0 0.0
        %5596 = vmatprep.subr.mxu0 0.0
        %5597 = vmatpush2.msra.mxu0 0.0
        %5598 = vmatprep.subr.mxu0 0.0
        %5599 = vmatpush2.msra.mxu0 0.0
        %5600 = vmatprep.subr.mxu0 0.0
        %5601 = vmatpush2.msra.mxu0 0.0
        %5602 = vmatprep.subr.mxu0 0.0
        %5603 = vmatpush2.msra.mxu0 0.0
        %5604 = vmatprep.subr.mxu0 0.0
        %5605 = vmatpush2.msra.mxu0 0.0
        %5606 = vmatprep.subr.mxu0 0.0
        %5607 = vmatpush2.msra.mxu0 0.0
        %5608 = vmatprep.subr.mxu0 0.0
        %5609 = vmatpush2.msra.mxu0 0.0
        %5610 = vmatprep.subr.mxu0 0.0
        %5611 = vmatpush2.msra.mxu0 0.0
        %5612 = vmatprep.subr.mxu0 0.0
        %5613 = vmatpush2.msra.mxu0 0.0
        %5614 = vmatprep.subr.mxu0 0.0
        %5615 = vmatpush2.msra.mxu0 0.0
        %5616 = vmatprep.subr.mxu0 0.0
        %5617 = vmatpush2.msra.mxu0 0.0
        %5618 = vmatprep.subr.mxu0 0.0
        %5619 = vmatpush2.msra.mxu0 0.0
        %5620 = vmatprep.subr.mxu0 0.0
        %5621 = vmatpush2.msra.mxu0 0.0
        %5622 = vmatprep.subr.mxu0 0.0
        %5623 = vmatpush2.msra.mxu0 0.0
        %5624 = vmatprep.mubr.f32.mxu0 0.0
        %5625 = vmatmul.mubr.f32.gmra.mxu0 %v5555
        %v5626 = vpop.f32.mrf.mxu0
        %v5627 = vadd.f32 0.0, %v5626
        %v5628 = vpop.f32.mrf.mxu0
        %5629 = vmatprep.mubr.f32.mxu0 0.0
        %5630 = vmatmul.mubr.f32.gmra.mxu0 %v5558
        %v5631 = vpop.f32.mrf.mxu0
        %v5632 = vadd.f32 0.0, %v5631
        %v5633 = vpop.f32.mrf.mxu0
        %5634 = vdwg.mxu0
        %v5636 = vsel %vm432, %v1301, 0
        %v5639 = vsel %vm432, %v1302, 0
        %5641 = vmatprep.subr.mxu0 0.0
        %5642 = vmatpush1.msra.mxu0 0.0
        %5643 = vmatprep.subr.mxu0 0.0
        %5644 = vmatpush1.msra.mxu0 0.0
        %5645 = vmatprep.subr.mxu0 0.0
        %5646 = vmatpush1.msra.mxu0 0.0
        %5647 = vmatprep.subr.mxu0 0.0
        %5648 = vmatpush1.msra.mxu0 0.0
        %5649 = vmatprep.subr.mxu0 0.0
        %5650 = vmatpush1.msra.mxu0 0.0
        %5651 = vmatprep.subr.mxu0 0.0
        %5652 = vmatpush1.msra.mxu0 0.0
        %5653 = vmatprep.subr.mxu0 0.0
        %5654 = vmatpush1.msra.mxu0 0.0
        %5655 = vmatprep.subr.mxu0 0.0
        %5656 = vmatpush1.msra.mxu0 0.0
        %5657 = vmatprep.subr.mxu0 0.0
        %5658 = vmatpush1.msra.mxu0 0.0
        %5659 = vmatprep.subr.mxu0 0.0
        %5660 = vmatpush1.msra.mxu0 0.0
        %5661 = vmatprep.subr.mxu0 0.0
        %5662 = vmatpush1.msra.mxu0 0.0
        %5663 = vmatprep.subr.mxu0 0.0
        %5664 = vmatpush1.msra.mxu0 0.0
        %5665 = vmatprep.subr.mxu0 0.0
        %5666 = vmatpush1.msra.mxu0 0.0
        %5667 = vmatprep.subr.mxu0 0.0
        %5668 = vmatpush1.msra.mxu0 0.0
        %5669 = vmatprep.subr.mxu0 0.0
        %5670 = vmatpush1.msra.mxu0 %v1558
        %5671 = vmatprep.subr.mxu0 0.0
        %5672 = vmatpush1.msra.mxu0 %v1557
        %5673 = vmatprep.subr.mxu0 0.0
        %5674 = vmatpush2.msra.mxu0 0.0
        %5675 = vmatprep.subr.mxu0 0.0
        %5676 = vmatpush2.msra.mxu0 0.0
        %5677 = vmatprep.subr.mxu0 0.0
        %5678 = vmatpush2.msra.mxu0 0.0
        %5679 = vmatprep.subr.mxu0 0.0
        %5680 = vmatpush2.msra.mxu0 0.0
        %5681 = vmatprep.subr.mxu0 0.0
        %5682 = vmatpush2.msra.mxu0 0.0
        %5683 = vmatprep.subr.mxu0 0.0
        %5684 = vmatpush2.msra.mxu0 0.0
        %5685 = vmatprep.subr.mxu0 0.0
        %5686 = vmatpush2.msra.mxu0 0.0
        %5687 = vmatprep.subr.mxu0 0.0
        %5688 = vmatpush2.msra.mxu0 0.0
        %5689 = vmatprep.subr.mxu0 0.0
        %5690 = vmatpush2.msra.mxu0 0.0
        %5691 = vmatprep.subr.mxu0 0.0
        %5692 = vmatpush2.msra.mxu0 0.0
        %5693 = vmatprep.subr.mxu0 0.0
        %5694 = vmatpush2.msra.mxu0 0.0
        %5695 = vmatprep.subr.mxu0 0.0
        %5696 = vmatpush2.msra.mxu0 0.0
        %5697 = vmatprep.subr.mxu0 0.0
        %5698 = vmatpush2.msra.mxu0 0.0
        %5699 = vmatprep.subr.mxu0 0.0
        %5700 = vmatpush2.msra.mxu0 0.0
        %5701 = vmatprep.subr.mxu0 0.0
        %5702 = vmatpush2.msra.mxu0 0.0
        %5703 = vmatprep.subr.mxu0 0.0
        %5704 = vmatpush2.msra.mxu0 0.0
        %5705 = vmatprep.mubr.f32.mxu0 0.0
        %5706 = vmatmul.mubr.f32.gmra.mxu0 %v5636
        %v5707 = vpop.f32.mrf.mxu0
        %v5708 = vadd.f32 0.0, %v5707
        %v5709 = vpop.f32.mrf.mxu0
        %5710 = vmatprep.mubr.f32.mxu0 0.0
        %5711 = vmatmul.mubr.f32.gmra.mxu0 %v5639
        %v5712 = vpop.f32.mrf.mxu0
        %v5713 = vadd.f32 0.0, %v5712
        %v5714 = vpop.f32.mrf.mxu0
        %5715 = vdwg.mxu0
        %v5717 = vsel %vm432, %v1303, 0
        %v5720 = vsel %vm432, %v1304, 0
        %5722 = vmatprep.subr.mxu0 0.0
        %5723 = vmatpush1.msra.mxu0 0.0
        %5724 = vmatprep.subr.mxu0 0.0
        %5725 = vmatpush1.msra.mxu0 0.0
        %5726 = vmatprep.subr.mxu0 0.0
        %5727 = vmatpush1.msra.mxu0 0.0
        %5728 = vmatprep.subr.mxu0 0.0
        %5729 = vmatpush1.msra.mxu0 0.0
        %5730 = vmatprep.subr.mxu0 0.0
        %5731 = vmatpush1.msra.mxu0 0.0
        %5732 = vmatprep.subr.mxu0 0.0
        %5733 = vmatpush1.msra.mxu0 0.0
        %5734 = vmatprep.subr.mxu0 0.0
        %5735 = vmatpush1.msra.mxu0 0.0
        %5736 = vmatprep.subr.mxu0 0.0
        %5737 = vmatpush1.msra.mxu0 0.0
        %5738 = vmatprep.subr.mxu0 0.0
        %5739 = vmatpush1.msra.mxu0 0.0
        %5740 = vmatprep.subr.mxu0 0.0
        %5741 = vmatpush1.msra.mxu0 0.0
        %5742 = vmatprep.subr.mxu0 0.0
        %5743 = vmatpush1.msra.mxu0 0.0
        %5744 = vmatprep.subr.mxu0 0.0
        %5745 = vmatpush1.msra.mxu0 0.0
        %5746 = vmatprep.subr.mxu0 0.0
        %5747 = vmatpush1.msra.mxu0 0.0
        %5748 = vmatprep.subr.mxu0 0.0
        %5749 = vmatpush1.msra.mxu0 0.0
        %5750 = vmatprep.subr.mxu0 0.0
        %5751 = vmatpush1.msra.mxu0 %v1560
        %5752 = vmatprep.subr.mxu0 0.0
        %5753 = vmatpush1.msra.mxu0 %v1559
        %5754 = vmatprep.subr.mxu0 0.0
        %5755 = vmatpush2.msra.mxu0 0.0
        %5756 = vmatprep.subr.mxu0 0.0
        %5757 = vmatpush2.msra.mxu0 0.0
        %5758 = vmatprep.subr.mxu0 0.0
        %5759 = vmatpush2.msra.mxu0 0.0
        %5760 = vmatprep.subr.mxu0 0.0
        %5761 = vmatpush2.msra.mxu0 0.0
        %5762 = vmatprep.subr.mxu0 0.0
        %5763 = vmatpush2.msra.mxu0 0.0
        %5764 = vmatprep.subr.mxu0 0.0
        %5765 = vmatpush2.msra.mxu0 0.0
        %5766 = vmatprep.subr.mxu0 0.0
        %5767 = vmatpush2.msra.mxu0 0.0
        %5768 = vmatprep.subr.mxu0 0.0
        %5769 = vmatpush2.msra.mxu0 0.0
        %5770 = vmatprep.subr.mxu0 0.0
        %5771 = vmatpush2.msra.mxu0 0.0
        %5772 = vmatprep.subr.mxu0 0.0
        %5773 = vmatpush2.msra.mxu0 0.0
        %5774 = vmatprep.subr.mxu0 0.0
        %5775 = vmatpush2.msra.mxu0 0.0
        %5776 = vmatprep.subr.mxu0 0.0
        %5777 = vmatpush2.msra.mxu0 0.0
        %5778 = vmatprep.subr.mxu0 0.0
        %5779 = vmatpush2.msra.mxu0 0.0
        %5780 = vmatprep.subr.mxu0 0.0
        %5781 = vmatpush2.msra.mxu0 0.0
        %5782 = vmatprep.subr.mxu0 0.0
        %5783 = vmatpush2.msra.mxu0 0.0
        %5784 = vmatprep.subr.mxu0 0.0
        %5785 = vmatpush2.msra.mxu0 0.0
        %5786 = vmatprep.mubr.f32.mxu0 0.0
        %5787 = vmatmul.mubr.f32.gmra.mxu0 %v5717
        %v5788 = vpop.f32.mrf.mxu0
        %v5789 = vadd.f32 0.0, %v5788
        %v5790 = vpop.f32.mrf.mxu0
        %5791 = vmatprep.mubr.f32.mxu0 0.0
        %5792 = vmatmul.mubr.f32.gmra.mxu0 %v5720
        %v5793 = vpop.f32.mrf.mxu0
        %v5794 = vadd.f32 0.0, %v5793
        %v5795 = vpop.f32.mrf.mxu0
        %5796 = vdwg.mxu0
        %v5798 = vsel %vm432, %v1305, 0
        %v5801 = vsel %vm432, %v1306, 0
        %5803 = vmatprep.subr.mxu0 0.0
        %5804 = vmatpush1.msra.mxu0 0.0
        %5805 = vmatprep.subr.mxu0 0.0
        %5806 = vmatpush1.msra.mxu0 0.0
        %5807 = vmatprep.subr.mxu0 0.0
        %5808 = vmatpush1.msra.mxu0 0.0
        %5809 = vmatprep.subr.mxu0 0.0
        %5810 = vmatpush1.msra.mxu0 0.0
        %5811 = vmatprep.subr.mxu0 0.0
        %5812 = vmatpush1.msra.mxu0 0.0
        %5813 = vmatprep.subr.mxu0 0.0
        %5814 = vmatpush1.msra.mxu0 0.0
        %5815 = vmatprep.subr.mxu0 0.0
        %5816 = vmatpush1.msra.mxu0 0.0
        %5817 = vmatprep.subr.mxu0 0.0
        %5818 = vmatpush1.msra.mxu0 0.0
        %5819 = vmatprep.subr.mxu0 0.0
        %5820 = vmatpush1.msra.mxu0 0.0
        %5821 = vmatprep.subr.mxu0 0.0
        %5822 = vmatpush1.msra.mxu0 0.0
        %5823 = vmatprep.subr.mxu0 0.0
        %5824 = vmatpush1.msra.mxu0 0.0
        %5825 = vmatprep.subr.mxu0 0.0
        %5826 = vmatpush1.msra.mxu0 0.0
        %5827 = vmatprep.subr.mxu0 0.0
        %5828 = vmatpush1.msra.mxu0 0.0
        %5829 = vmatprep.subr.mxu0 0.0
        %5830 = vmatpush1.msra.mxu0 0.0
        %5831 = vmatprep.subr.mxu0 0.0
        %5832 = vmatpush1.msra.mxu0 %v1562
        %5833 = vmatprep.subr.mxu0 0.0
        %5834 = vmatpush1.msra.mxu0 %v1561
        %5835 = vmatprep.subr.mxu0 0.0
        %5836 = vmatpush2.msra.mxu0 0.0
        %5837 = vmatprep.subr.mxu0 0.0
        %5838 = vmatpush2.msra.mxu0 0.0
        %5839 = vmatprep.subr.mxu0 0.0
        %5840 = vmatpush2.msra.mxu0 0.0
        %5841 = vmatprep.subr.mxu0 0.0
        %5842 = vmatpush2.msra.mxu0 0.0
        %5843 = vmatprep.subr.mxu0 0.0
        %5844 = vmatpush2.msra.mxu0 0.0
        %5845 = vmatprep.subr.mxu0 0.0
        %5846 = vmatpush2.msra.mxu0 0.0
        %5847 = vmatprep.subr.mxu0 0.0
        %5848 = vmatpush2.msra.mxu0 0.0
        %5849 = vmatprep.subr.mxu0 0.0
        %5850 = vmatpush2.msra.mxu0 0.0
        %5851 = vmatprep.subr.mxu0 0.0
        %5852 = vmatpush2.msra.mxu0 0.0
        %5853 = vmatprep.subr.mxu0 0.0
        %5854 = vmatpush2.msra.mxu0 0.0
        %5855 = vmatprep.subr.mxu0 0.0
        %5856 = vmatpush2.msra.mxu0 0.0
        %5857 = vmatprep.subr.mxu0 0.0
        %5858 = vmatpush2.msra.mxu0 0.0
        %5859 = vmatprep.subr.mxu0 0.0
        %5860 = vmatpush2.msra.mxu0 0.0
        %5861 = vmatprep.subr.mxu0 0.0
        %5862 = vmatpush2.msra.mxu0 0.0
        %5863 = vmatprep.subr.mxu0 0.0
        %5864 = vmatpush2.msra.mxu0 0.0
        %5865 = vmatprep.subr.mxu0 0.0
        %5866 = vmatpush2.msra.mxu0 0.0
        %5867 = vmatprep.mubr.f32.mxu0 0.0
        %5868 = vmatmul.mubr.f32.gmra.mxu0 %v5798
        %v5869 = vpop.f32.mrf.mxu0
        %v5870 = vadd.f32 0.0, %v5869
        %v5871 = vpop.f32.mrf.mxu0
        %5872 = vmatprep.mubr.f32.mxu0 0.0
        %5873 = vmatmul.mubr.f32.gmra.mxu0 %v5801
        %v5874 = vpop.f32.mrf.mxu0
        %v5875 = vadd.f32 0.0, %v5874
        %v5876 = vpop.f32.mrf.mxu0
        %5877 = vdwg.mxu0
        %v5879 = vsel %vm432, %v1307, 0
        %v5882 = vsel %vm432, %v1308, 0
        %5884 = vmatprep.subr.mxu0 0.0
        %5885 = vmatpush1.msra.mxu0 0.0
        %5886 = vmatprep.subr.mxu0 0.0
        %5887 = vmatpush1.msra.mxu0 0.0
        %5888 = vmatprep.subr.mxu0 0.0
        %5889 = vmatpush1.msra.mxu0 0.0
        %5890 = vmatprep.subr.mxu0 0.0
        %5891 = vmatpush1.msra.mxu0 0.0
        %5892 = vmatprep.subr.mxu0 0.0
        %5893 = vmatpush1.msra.mxu0 0.0
        %5894 = vmatprep.subr.mxu0 0.0
        %5895 = vmatpush1.msra.mxu0 0.0
        %5896 = vmatprep.subr.mxu0 0.0
        %5897 = vmatpush1.msra.mxu0 0.0
        %5898 = vmatprep.subr.mxu0 0.0
        %5899 = vmatpush1.msra.mxu0 0.0
        %5900 = vmatprep.subr.mxu0 0.0
        %5901 = vmatpush1.msra.mxu0 0.0
        %5902 = vmatprep.subr.mxu0 0.0
        %5903 = vmatpush1.msra.mxu0 0.0
        %5904 = vmatprep.subr.mxu0 0.0
        %5905 = vmatpush1.msra.mxu0 0.0
        %5906 = vmatprep.subr.mxu0 0.0
        %5907 = vmatpush1.msra.mxu0 0.0
        %5908 = vmatprep.subr.mxu0 0.0
        %5909 = vmatpush1.msra.mxu0 0.0
        %5910 = vmatprep.subr.mxu0 0.0
        %5911 = vmatpush1.msra.mxu0 0.0
        %5912 = vmatprep.subr.mxu0 0.0
        %5913 = vmatpush1.msra.mxu0 %v1564
        %5914 = vmatprep.subr.mxu0 0.0
        %5915 = vmatpush1.msra.mxu0 %v1563
        %5916 = vmatprep.subr.mxu0 0.0
        %5917 = vmatpush2.msra.mxu0 0.0
        %5918 = vmatprep.subr.mxu0 0.0
        %5919 = vmatpush2.msra.mxu0 0.0
        %5920 = vmatprep.subr.mxu0 0.0
        %5921 = vmatpush2.msra.mxu0 0.0
        %5922 = vmatprep.subr.mxu0 0.0
        %5923 = vmatpush2.msra.mxu0 0.0
        %5924 = vmatprep.subr.mxu0 0.0
        %5925 = vmatpush2.msra.mxu0 0.0
        %5926 = vmatprep.subr.mxu0 0.0
        %5927 = vmatpush2.msra.mxu0 0.0
        %5928 = vmatprep.subr.mxu0 0.0
        %5929 = vmatpush2.msra.mxu0 0.0
        %5930 = vmatprep.subr.mxu0 0.0
        %5931 = vmatpush2.msra.mxu0 0.0
        %5932 = vmatprep.subr.mxu0 0.0
        %5933 = vmatpush2.msra.mxu0 0.0
        %5934 = vmatprep.subr.mxu0 0.0
        %5935 = vmatpush2.msra.mxu0 0.0
        %5936 = vmatprep.subr.mxu0 0.0
        %5937 = vmatpush2.msra.mxu0 0.0
        %5938 = vmatprep.subr.mxu0 0.0
        %5939 = vmatpush2.msra.mxu0 0.0
        %5940 = vmatprep.subr.mxu0 0.0
        %5941 = vmatpush2.msra.mxu0 0.0
        %5942 = vmatprep.subr.mxu0 0.0
        %5943 = vmatpush2.msra.mxu0 0.0
        %5944 = vmatprep.subr.mxu0 0.0
        %5945 = vmatpush2.msra.mxu0 0.0
        %5946 = vmatprep.subr.mxu0 0.0
        %5947 = vmatpush2.msra.mxu0 0.0
        %5948 = vmatprep.mubr.f32.mxu0 0.0
        %5949 = vmatmul.mubr.f32.gmra.mxu0 %v5879
        %v5950 = vpop.f32.mrf.mxu0
        %v5951 = vadd.f32 0.0, %v5950
        %v5952 = vpop.f32.mrf.mxu0
        %5953 = vmatprep.mubr.f32.mxu0 0.0
        %5954 = vmatmul.mubr.f32.gmra.mxu0 %v5882
        %v5955 = vpop.f32.mrf.mxu0
        %v5956 = vadd.f32 0.0, %v5955
        %v5957 = vpop.f32.mrf.mxu0
        %5958 = vdwg.mxu0
        %v5960 = vsel %vm432, %v1309, 0
        %v5963 = vsel %vm432, %v1310, 0
        %5965 = vmatprep.subr.mxu0 0.0
        %5966 = vmatpush1.msra.mxu0 0.0
        %5967 = vmatprep.subr.mxu0 0.0
        %5968 = vmatpush1.msra.mxu0 0.0
        %5969 = vmatprep.subr.mxu0 0.0
        %5970 = vmatpush1.msra.mxu0 0.0
        %5971 = vmatprep.subr.mxu0 0.0
        %5972 = vmatpush1.msra.mxu0 0.0
        %5973 = vmatprep.subr.mxu0 0.0
        %5974 = vmatpush1.msra.mxu0 0.0
        %5975 = vmatprep.subr.mxu0 0.0
        %5976 = vmatpush1.msra.mxu0 0.0
        %5977 = vmatprep.subr.mxu0 0.0
        %5978 = vmatpush1.msra.mxu0 0.0
        %5979 = vmatprep.subr.mxu0 0.0
        %5980 = vmatpush1.msra.mxu0 0.0
        %5981 = vmatprep.subr.mxu0 0.0
        %5982 = vmatpush1.msra.mxu0 0.0
        %5983 = vmatprep.subr.mxu0 0.0
        %5984 = vmatpush1.msra.mxu0 0.0
        %5985 = vmatprep.subr.mxu0 0.0
        %5986 = vmatpush1.msra.mxu0 0.0
        %5987 = vmatprep.subr.mxu0 0.0
        %5988 = vmatpush1.msra.mxu0 0.0
        %5989 = vmatprep.subr.mxu0 0.0
        %5990 = vmatpush1.msra.mxu0 0.0
        %5991 = vmatprep.subr.mxu0 0.0
        %5992 = vmatpush1.msra.mxu0 0.0
        %5993 = vmatprep.subr.mxu0 0.0
        %5994 = vmatpush1.msra.mxu0 %v1566
        %5995 = vmatprep.subr.mxu0 0.0
        %5996 = vmatpush1.msra.mxu0 %v1565
        %5997 = vmatprep.subr.mxu0 0.0
        %5998 = vmatpush2.msra.mxu0 0.0
        %5999 = vmatprep.subr.mxu0 0.0
        %6000 = vmatpush2.msra.mxu0 0.0
        %6001 = vmatprep.subr.mxu0 0.0
        %6002 = vmatpush2.msra.mxu0 0.0
        %6003 = vmatprep.subr.mxu0 0.0
        %6004 = vmatpush2.msra.mxu0 0.0
        %6005 = vmatprep.subr.mxu0 0.0
        %6006 = vmatpush2.msra.mxu0 0.0
        %6007 = vmatprep.subr.mxu0 0.0
        %6008 = vmatpush2.msra.mxu0 0.0
        %6009 = vmatprep.subr.mxu0 0.0
        %6010 = vmatpush2.msra.mxu0 0.0
        %6011 = vmatprep.subr.mxu0 0.0
        %6012 = vmatpush2.msra.mxu0 0.0
        %6013 = vmatprep.subr.mxu0 0.0
        %6014 = vmatpush2.msra.mxu0 0.0
        %6015 = vmatprep.subr.mxu0 0.0
        %6016 = vmatpush2.msra.mxu0 0.0
        %6017 = vmatprep.subr.mxu0 0.0
        %6018 = vmatpush2.msra.mxu0 0.0
        %6019 = vmatprep.subr.mxu0 0.0
        %6020 = vmatpush2.msra.mxu0 0.0
        %6021 = vmatprep.subr.mxu0 0.0
        %6022 = vmatpush2.msra.mxu0 0.0
        %6023 = vmatprep.subr.mxu0 0.0
        %6024 = vmatpush2.msra.mxu0 0.0
        %6025 = vmatprep.subr.mxu0 0.0
        %6026 = vmatpush2.msra.mxu0 0.0
        %6027 = vmatprep.subr.mxu0 0.0
        %6028 = vmatpush2.msra.mxu0 0.0
        %6029 = vmatprep.mubr.f32.mxu0 0.0
        %6030 = vmatmul.mubr.f32.gmra.mxu0 %v5960
        %v6031 = vpop.f32.mrf.mxu0
        %v6032 = vadd.f32 0.0, %v6031
        %v6033 = vpop.f32.mrf.mxu0
        %6034 = vmatprep.mubr.f32.mxu0 0.0
        %6035 = vmatmul.mubr.f32.gmra.mxu0 %v5963
        %v6036 = vpop.f32.mrf.mxu0
        %v6037 = vadd.f32 0.0, %v6036
        %v6038 = vpop.f32.mrf.mxu0
        %6039 = vdwg.mxu0
        %v6041 = vsel %vm432, %v1311, 0
        %v6044 = vsel %vm432, %v1312, 0
        %6046 = vmatprep.subr.mxu0 0.0
        %6047 = vmatpush1.msra.mxu0 0.0
        %6048 = vmatprep.subr.mxu0 0.0
        %6049 = vmatpush1.msra.mxu0 0.0
        %6050 = vmatprep.subr.mxu0 0.0
        %6051 = vmatpush1.msra.mxu0 0.0
        %6052 = vmatprep.subr.mxu0 0.0
        %6053 = vmatpush1.msra.mxu0 0.0
        %6054 = vmatprep.subr.mxu0 0.0
        %6055 = vmatpush1.msra.mxu0 0.0
        %6056 = vmatprep.subr.mxu0 0.0
        %6057 = vmatpush1.msra.mxu0 0.0
        %6058 = vmatprep.subr.mxu0 0.0
        %6059 = vmatpush1.msra.mxu0 0.0
        %6060 = vmatprep.subr.mxu0 0.0
        %6061 = vmatpush1.msra.mxu0 0.0
        %6062 = vmatprep.subr.mxu0 0.0
        %6063 = vmatpush1.msra.mxu0 0.0
        %6064 = vmatprep.subr.mxu0 0.0
        %6065 = vmatpush1.msra.mxu0 0.0
        %6066 = vmatprep.subr.mxu0 0.0
        %6067 = vmatpush1.msra.mxu0 0.0
        %6068 = vmatprep.subr.mxu0 0.0
        %6069 = vmatpush1.msra.mxu0 0.0
        %6070 = vmatprep.subr.mxu0 0.0
        %6071 = vmatpush1.msra.mxu0 0.0
        %6072 = vmatprep.subr.mxu0 0.0
        %6073 = vmatpush1.msra.mxu0 0.0
        %6074 = vmatprep.subr.mxu0 0.0
        %6075 = vmatpush1.msra.mxu0 %v1568
        %6076 = vmatprep.subr.mxu0 0.0
        %6077 = vmatpush1.msra.mxu0 %v1567
        %6078 = vmatprep.subr.mxu0 0.0
        %6079 = vmatpush2.msra.mxu0 0.0
        %6080 = vmatprep.subr.mxu0 0.0
        %6081 = vmatpush2.msra.mxu0 0.0
        %6082 = vmatprep.subr.mxu0 0.0
        %6083 = vmatpush2.msra.mxu0 0.0
        %6084 = vmatprep.subr.mxu0 0.0
        %6085 = vmatpush2.msra.mxu0 0.0
        %6086 = vmatprep.subr.mxu0 0.0
        %6087 = vmatpush2.msra.mxu0 0.0
        %6088 = vmatprep.subr.mxu0 0.0
        %6089 = vmatpush2.msra.mxu0 0.0
        %6090 = vmatprep.subr.mxu0 0.0
        %6091 = vmatpush2.msra.mxu0 0.0
        %6092 = vmatprep.subr.mxu0 0.0
        %6093 = vmatpush2.msra.mxu0 0.0
        %6094 = vmatprep.subr.mxu0 0.0
        %6095 = vmatpush2.msra.mxu0 0.0
        %6096 = vmatprep.subr.mxu0 0.0
        %6097 = vmatpush2.msra.mxu0 0.0
        %6098 = vmatprep.subr.mxu0 0.0
        %6099 = vmatpush2.msra.mxu0 0.0
        %6100 = vmatprep.subr.mxu0 0.0
        %6101 = vmatpush2.msra.mxu0 0.0
        %6102 = vmatprep.subr.mxu0 0.0
        %6103 = vmatpush2.msra.mxu0 0.0
        %6104 = vmatprep.subr.mxu0 0.0
        %6105 = vmatpush2.msra.mxu0 0.0
        %6106 = vmatprep.subr.mxu0 0.0
        %6107 = vmatpush2.msra.mxu0 0.0
        %6108 = vmatprep.subr.mxu0 0.0
        %6109 = vmatpush2.msra.mxu0 0.0
        %6110 = vmatprep.mubr.f32.mxu0 0.0
        %6111 = vmatmul.mubr.f32.gmra.mxu0 %v6041
        %v6112 = vpop.f32.mrf.mxu0
        %v6113 = vadd.f32 0.0, %v6112
        %v6114 = vpop.f32.mrf.mxu0
        %6115 = vmatprep.mubr.f32.mxu0 0.0
        %6116 = vmatmul.mubr.f32.gmra.mxu0 %v6044
        %v6117 = vpop.f32.mrf.mxu0
        %v6118 = vadd.f32 0.0, %v6117
        %v6119 = vpop.f32.mrf.mxu0
        %6120 = vdwg.mxu0
        %v6122 = vsel %vm432, %v1313, 0
        %v6125 = vsel %vm432, %v1314, 0
        %6127 = vmatprep.subr.mxu0 0.0
        %6128 = vmatpush1.msra.mxu0 0.0
        %6129 = vmatprep.subr.mxu0 0.0
        %6130 = vmatpush1.msra.mxu0 0.0
        %6131 = vmatprep.subr.mxu0 0.0
        %6132 = vmatpush1.msra.mxu0 0.0
        %6133 = vmatprep.subr.mxu0 0.0
        %6134 = vmatpush1.msra.mxu0 0.0
        %6135 = vmatprep.subr.mxu0 0.0
        %6136 = vmatpush1.msra.mxu0 0.0
        %6137 = vmatprep.subr.mxu0 0.0
        %6138 = vmatpush1.msra.mxu0 0.0
        %6139 = vmatprep.subr.mxu0 0.0
        %6140 = vmatpush1.msra.mxu0 0.0
        %6141 = vmatprep.subr.mxu0 0.0
        %6142 = vmatpush1.msra.mxu0 0.0
        %6143 = vmatprep.subr.mxu0 0.0
        %6144 = vmatpush1.msra.mxu0 0.0
        %6145 = vmatprep.subr.mxu0 0.0
        %6146 = vmatpush1.msra.mxu0 0.0
        %6147 = vmatprep.subr.mxu0 0.0
        %6148 = vmatpush1.msra.mxu0 0.0
        %6149 = vmatprep.subr.mxu0 0.0
        %6150 = vmatpush1.msra.mxu0 0.0
        %6151 = vmatprep.subr.mxu0 0.0
        %6152 = vmatpush1.msra.mxu0 0.0
        %6153 = vmatprep.subr.mxu0 0.0
        %6154 = vmatpush1.msra.mxu0 0.0
        %6155 = vmatprep.subr.mxu0 0.0
        %6156 = vmatpush1.msra.mxu0 %v1570
        %6157 = vmatprep.subr.mxu0 0.0
        %6158 = vmatpush1.msra.mxu0 %v1569
        %6159 = vmatprep.subr.mxu0 0.0
        %6160 = vmatpush2.msra.mxu0 0.0
        %6161 = vmatprep.subr.mxu0 0.0
        %6162 = vmatpush2.msra.mxu0 0.0
        %6163 = vmatprep.subr.mxu0 0.0
        %6164 = vmatpush2.msra.mxu0 0.0
        %6165 = vmatprep.subr.mxu0 0.0
        %6166 = vmatpush2.msra.mxu0 0.0
        %6167 = vmatprep.subr.mxu0 0.0
        %6168 = vmatpush2.msra.mxu0 0.0
        %6169 = vmatprep.subr.mxu0 0.0
        %6170 = vmatpush2.msra.mxu0 0.0
        %6171 = vmatprep.subr.mxu0 0.0
        %6172 = vmatpush2.msra.mxu0 0.0
        %6173 = vmatprep.subr.mxu0 0.0
        %6174 = vmatpush2.msra.mxu0 0.0
        %6175 = vmatprep.subr.mxu0 0.0
        %6176 = vmatpush2.msra.mxu0 0.0
        %6177 = vmatprep.subr.mxu0 0.0
        %6178 = vmatpush2.msra.mxu0 0.0
        %6179 = vmatprep.subr.mxu0 0.0
        %6180 = vmatpush2.msra.mxu0 0.0
        %6181 = vmatprep.subr.mxu0 0.0
        %6182 = vmatpush2.msra.mxu0 0.0
        %6183 = vmatprep.subr.mxu0 0.0
        %6184 = vmatpush2.msra.mxu0 0.0
        %6185 = vmatprep.subr.mxu0 0.0
        %6186 = vmatpush2.msra.mxu0 0.0
        %6187 = vmatprep.subr.mxu0 0.0
        %6188 = vmatpush2.msra.mxu0 0.0
        %6189 = vmatprep.subr.mxu0 0.0
        %6190 = vmatpush2.msra.mxu0 0.0
        %6191 = vmatprep.mubr.f32.mxu0 0.0
        %6192 = vmatmul.mubr.f32.gmra.mxu0 %v6122
        %v6193 = vpop.f32.mrf.mxu0
        %v6194 = vadd.f32 0.0, %v6193
        %v6195 = vpop.f32.mrf.mxu0
        %6196 = vmatprep.mubr.f32.mxu0 0.0
        %6197 = vmatmul.mubr.f32.gmra.mxu0 %v6125
        %v6198 = vpop.f32.mrf.mxu0
        %v6199 = vadd.f32 0.0, %v6198
        %v6200 = vpop.f32.mrf.mxu0
        %6201 = vdwg.mxu0
        %v6203 = vsel %vm432, %v1315, 0
        %v6206 = vsel %vm432, %v1316, 0
        %6208 = vmatprep.subr.mxu0 0.0
        %6209 = vmatpush1.msra.mxu0 0.0
        %6210 = vmatprep.subr.mxu0 0.0
        %6211 = vmatpush1.msra.mxu0 0.0
        %6212 = vmatprep.subr.mxu0 0.0
        %6213 = vmatpush1.msra.mxu0 0.0
        %6214 = vmatprep.subr.mxu0 0.0
        %6215 = vmatpush1.msra.mxu0 0.0
        %6216 = vmatprep.subr.mxu0 0.0
        %6217 = vmatpush1.msra.mxu0 0.0
        %6218 = vmatprep.subr.mxu0 0.0
        %6219 = vmatpush1.msra.mxu0 0.0
        %6220 = vmatprep.subr.mxu0 0.0
        %6221 = vmatpush1.msra.mxu0 0.0
        %6222 = vmatprep.subr.mxu0 0.0
        %6223 = vmatpush1.msra.mxu0 0.0
        %6224 = vmatprep.subr.mxu0 0.0
        %6225 = vmatpush1.msra.mxu0 0.0
        %6226 = vmatprep.subr.mxu0 0.0
        %6227 = vmatpush1.msra.mxu0 0.0
        %6228 = vmatprep.subr.mxu0 0.0
        %6229 = vmatpush1.msra.mxu0 0.0
        %6230 = vmatprep.subr.mxu0 0.0
        %6231 = vmatpush1.msra.mxu0 0.0
        %6232 = vmatprep.subr.mxu0 0.0
        %6233 = vmatpush1.msra.mxu0 0.0
        %6234 = vmatprep.subr.mxu0 0.0
        %6235 = vmatpush1.msra.mxu0 0.0
        %6236 = vmatprep.subr.mxu0 0.0
        %6237 = vmatpush1.msra.mxu0 %v1572
        %6238 = vmatprep.subr.mxu0 0.0
        %6239 = vmatpush1.msra.mxu0 %v1571
        %6240 = vmatprep.subr.mxu0 0.0
        %6241 = vmatpush2.msra.mxu0 0.0
        %6242 = vmatprep.subr.mxu0 0.0
        %6243 = vmatpush2.msra.mxu0 0.0
        %6244 = vmatprep.subr.mxu0 0.0
        %6245 = vmatpush2.msra.mxu0 0.0
        %6246 = vmatprep.subr.mxu0 0.0
        %6247 = vmatpush2.msra.mxu0 0.0
        %6248 = vmatprep.subr.mxu0 0.0
        %6249 = vmatpush2.msra.mxu0 0.0
        %6250 = vmatprep.subr.mxu0 0.0
        %6251 = vmatpush2.msra.mxu0 0.0
        %6252 = vmatprep.subr.mxu0 0.0
        %6253 = vmatpush2.msra.mxu0 0.0
        %6254 = vmatprep.subr.mxu0 0.0
        %6255 = vmatpush2.msra.mxu0 0.0
        %6256 = vmatprep.subr.mxu0 0.0
        %6257 = vmatpush2.msra.mxu0 0.0
        %6258 = vmatprep.subr.mxu0 0.0
        %6259 = vmatpush2.msra.mxu0 0.0
        %6260 = vmatprep.subr.mxu0 0.0
        %6261 = vmatpush2.msra.mxu0 0.0
        %6262 = vmatprep.subr.mxu0 0.0
        %6263 = vmatpush2.msra.mxu0 0.0
        %6264 = vmatprep.subr.mxu0 0.0
        %6265 = vmatpush2.msra.mxu0 0.0
        %6266 = vmatprep.subr.mxu0 0.0
        %6267 = vmatpush2.msra.mxu0 0.0
        %6268 = vmatprep.subr.mxu0 0.0
        %6269 = vmatpush2.msra.mxu0 0.0
        %6270 = vmatprep.subr.mxu0 0.0
        %6271 = vmatpush2.msra.mxu0 0.0
        %6272 = vmatprep.mubr.f32.mxu0 0.0
        %6273 = vmatmul.mubr.f32.gmra.mxu0 %v6203
        %v6274 = vpop.f32.mrf.mxu0
        %v6275 = vadd.f32 0.0, %v6274
        %v6276 = vpop.f32.mrf.mxu0
        %6277 = vmatprep.mubr.f32.mxu0 0.0
        %6278 = vmatmul.mubr.f32.gmra.mxu0 %v6206
        %v6279 = vpop.f32.mrf.mxu0
        %v6280 = vadd.f32 0.0, %v6279
        %v6281 = vpop.f32.mrf.mxu0
        %6282 = vdwg.mxu0
        %v6284 = vsel %vm432, %v1317, 0
        %v6287 = vsel %vm432, %v1318, 0
        %6289 = vmatprep.subr.mxu0 0.0
        %6290 = vmatpush1.msra.mxu0 0.0
        %6291 = vmatprep.subr.mxu0 0.0
        %6292 = vmatpush1.msra.mxu0 0.0
        %6293 = vmatprep.subr.mxu0 0.0
        %6294 = vmatpush1.msra.mxu0 0.0
        %6295 = vmatprep.subr.mxu0 0.0
        %6296 = vmatpush1.msra.mxu0 0.0
        %6297 = vmatprep.subr.mxu0 0.0
        %6298 = vmatpush1.msra.mxu0 0.0
        %6299 = vmatprep.subr.mxu0 0.0
        %6300 = vmatpush1.msra.mxu0 0.0
        %6301 = vmatprep.subr.mxu0 0.0
        %6302 = vmatpush1.msra.mxu0 0.0
        %6303 = vmatprep.subr.mxu0 0.0
        %6304 = vmatpush1.msra.mxu0 0.0
        %6305 = vmatprep.subr.mxu0 0.0
        %6306 = vmatpush1.msra.mxu0 0.0
        %6307 = vmatprep.subr.mxu0 0.0
        %6308 = vmatpush1.msra.mxu0 0.0
        %6309 = vmatprep.subr.mxu0 0.0
        %6310 = vmatpush1.msra.mxu0 0.0
        %6311 = vmatprep.subr.mxu0 0.0
        %6312 = vmatpush1.msra.mxu0 0.0
        %6313 = vmatprep.subr.mxu0 0.0
        %6314 = vmatpush1.msra.mxu0 0.0
        %6315 = vmatprep.subr.mxu0 0.0
        %6316 = vmatpush1.msra.mxu0 0.0
        %6317 = vmatprep.subr.mxu0 0.0
        %6318 = vmatpush1.msra.mxu0 %v1574
        %6319 = vmatprep.subr.mxu0 0.0
        %6320 = vmatpush1.msra.mxu0 %v1573
        %6321 = vmatprep.subr.mxu0 0.0
        %6322 = vmatpush2.msra.mxu0 0.0
        %6323 = vmatprep.subr.mxu0 0.0
        %6324 = vmatpush2.msra.mxu0 0.0
        %6325 = vmatprep.subr.mxu0 0.0
        %6326 = vmatpush2.msra.mxu0 0.0
        %6327 = vmatprep.subr.mxu0 0.0
        %6328 = vmatpush2.msra.mxu0 0.0
        %6329 = vmatprep.subr.mxu0 0.0
        %6330 = vmatpush2.msra.mxu0 0.0
        %6331 = vmatprep.subr.mxu0 0.0
        %6332 = vmatpush2.msra.mxu0 0.0
        %6333 = vmatprep.subr.mxu0 0.0
        %6334 = vmatpush2.msra.mxu0 0.0
        %6335 = vmatprep.subr.mxu0 0.0
        %6336 = vmatpush2.msra.mxu0 0.0
        %6337 = vmatprep.subr.mxu0 0.0
        %6338 = vmatpush2.msra.mxu0 0.0
        %6339 = vmatprep.subr.mxu0 0.0
        %6340 = vmatpush2.msra.mxu0 0.0
        %6341 = vmatprep.subr.mxu0 0.0
        %6342 = vmatpush2.msra.mxu0 0.0
        %6343 = vmatprep.subr.mxu0 0.0
        %6344 = vmatpush2.msra.mxu0 0.0
        %6345 = vmatprep.subr.mxu0 0.0
        %6346 = vmatpush2.msra.mxu0 0.0
        %6347 = vmatprep.subr.mxu0 0.0
        %6348 = vmatpush2.msra.mxu0 0.0
        %6349 = vmatprep.subr.mxu0 0.0
        %6350 = vmatpush2.msra.mxu0 0.0
        %6351 = vmatprep.subr.mxu0 0.0
        %6352 = vmatpush2.msra.mxu0 0.0
        %6353 = vmatprep.mubr.f32.mxu0 0.0
        %6354 = vmatmul.mubr.f32.gmra.mxu0 %v6284
        %v6355 = vpop.f32.mrf.mxu0
        %v6356 = vadd.f32 0.0, %v6355
        %v6357 = vpop.f32.mrf.mxu0
        %6358 = vmatprep.mubr.f32.mxu0 0.0
        %6359 = vmatmul.mubr.f32.gmra.mxu0 %v6287
        %v6360 = vpop.f32.mrf.mxu0
        %v6361 = vadd.f32 0.0, %v6360
        %v6362 = vpop.f32.mrf.mxu0
        %6363 = vdwg.mxu0
        %v6365 = vsel %vm432, %v1319, 0
        %v6368 = vsel %vm432, %v1320, 0
        %6370 = vmatprep.subr.mxu0 0.0
        %6371 = vmatpush1.msra.mxu0 0.0
        %6372 = vmatprep.subr.mxu0 0.0
        %6373 = vmatpush1.msra.mxu0 0.0
        %6374 = vmatprep.subr.mxu0 0.0
        %6375 = vmatpush1.msra.mxu0 0.0
        %6376 = vmatprep.subr.mxu0 0.0
        %6377 = vmatpush1.msra.mxu0 0.0
        %6378 = vmatprep.subr.mxu0 0.0
        %6379 = vmatpush1.msra.mxu0 0.0
        %6380 = vmatprep.subr.mxu0 0.0
        %6381 = vmatpush1.msra.mxu0 0.0
        %6382 = vmatprep.subr.mxu0 0.0
        %6383 = vmatpush1.msra.mxu0 0.0
        %6384 = vmatprep.subr.mxu0 0.0
        %6385 = vmatpush1.msra.mxu0 0.0
        %6386 = vmatprep.subr.mxu0 0.0
        %6387 = vmatpush1.msra.mxu0 0.0
        %6388 = vmatprep.subr.mxu0 0.0
        %6389 = vmatpush1.msra.mxu0 0.0
        %6390 = vmatprep.subr.mxu0 0.0
        %6391 = vmatpush1.msra.mxu0 0.0
        %6392 = vmatprep.subr.mxu0 0.0
        %6393 = vmatpush1.msra.mxu0 0.0
        %6394 = vmatprep.subr.mxu0 0.0
        %6395 = vmatpush1.msra.mxu0 0.0
        %6396 = vmatprep.subr.mxu0 0.0
        %6397 = vmatpush1.msra.mxu0 0.0
        %6398 = vmatprep.subr.mxu0 0.0
        %6399 = vmatpush1.msra.mxu0 %v1576
        %6400 = vmatprep.subr.mxu0 0.0
        %6401 = vmatpush1.msra.mxu0 %v1575
        %6402 = vmatprep.subr.mxu0 0.0
        %6403 = vmatpush2.msra.mxu0 0.0
        %6404 = vmatprep.subr.mxu0 0.0
        %6405 = vmatpush2.msra.mxu0 0.0
        %6406 = vmatprep.subr.mxu0 0.0
        %6407 = vmatpush2.msra.mxu0 0.0
        %6408 = vmatprep.subr.mxu0 0.0
        %6409 = vmatpush2.msra.mxu0 0.0
        %6410 = vmatprep.subr.mxu0 0.0
        %6411 = vmatpush2.msra.mxu0 0.0
        %6412 = vmatprep.subr.mxu0 0.0
        %6413 = vmatpush2.msra.mxu0 0.0
        %6414 = vmatprep.subr.mxu0 0.0
        %6415 = vmatpush2.msra.mxu0 0.0
        %6416 = vmatprep.subr.mxu0 0.0
        %6417 = vmatpush2.msra.mxu0 0.0
        %6418 = vmatprep.subr.mxu0 0.0
        %6419 = vmatpush2.msra.mxu0 0.0
        %6420 = vmatprep.subr.mxu0 0.0
        %6421 = vmatpush2.msra.mxu0 0.0
        %6422 = vmatprep.subr.mxu0 0.0
        %6423 = vmatpush2.msra.mxu0 0.0
        %6424 = vmatprep.subr.mxu0 0.0
        %6425 = vmatpush2.msra.mxu0 0.0
        %6426 = vmatprep.subr.mxu0 0.0
        %6427 = vmatpush2.msra.mxu0 0.0
        %6428 = vmatprep.subr.mxu0 0.0
        %6429 = vmatpush2.msra.mxu0 0.0
        %6430 = vmatprep.subr.mxu0 0.0
        %6431 = vmatpush2.msra.mxu0 0.0
        %6432 = vmatprep.subr.mxu0 0.0
        %6433 = vmatpush2.msra.mxu0 0.0
        %6434 = vmatprep.mubr.f32.mxu0 0.0
        %6435 = vmatmul.mubr.f32.gmra.mxu0 %v6365
        %v6436 = vpop.f32.mrf.mxu0
        %v6437 = vadd.f32 0.0, %v6436
        %v6438 = vpop.f32.mrf.mxu0
        %6439 = vmatprep.mubr.f32.mxu0 0.0
        %6440 = vmatmul.mubr.f32.gmra.mxu0 %v6368
        %v6441 = vpop.f32.mrf.mxu0
        %v6442 = vadd.f32 0.0, %v6441
        %v6443 = vpop.f32.mrf.mxu0
        %6444 = vdwg.mxu0
        %v6446 = vsel %vm432, %v1321, 0
        %v6449 = vsel %vm432, %v1322, 0
        %6451 = vmatprep.subr.mxu0 0.0
        %6452 = vmatpush1.msra.mxu0 0.0
        %6453 = vmatprep.subr.mxu0 0.0
        %6454 = vmatpush1.msra.mxu0 0.0
        %6455 = vmatprep.subr.mxu0 0.0
        %6456 = vmatpush1.msra.mxu0 0.0
        %6457 = vmatprep.subr.mxu0 0.0
        %6458 = vmatpush1.msra.mxu0 0.0
        %6459 = vmatprep.subr.mxu0 0.0
        %6460 = vmatpush1.msra.mxu0 0.0
        %6461 = vmatprep.subr.mxu0 0.0
        %6462 = vmatpush1.msra.mxu0 0.0
        %6463 = vmatprep.subr.mxu0 0.0
        %6464 = vmatpush1.msra.mxu0 0.0
        %6465 = vmatprep.subr.mxu0 0.0
        %6466 = vmatpush1.msra.mxu0 0.0
        %6467 = vmatprep.subr.mxu0 0.0
        %6468 = vmatpush1.msra.mxu0 0.0
        %6469 = vmatprep.subr.mxu0 0.0
        %6470 = vmatpush1.msra.mxu0 0.0
        %6471 = vmatprep.subr.mxu0 0.0
        %6472 = vmatpush1.msra.mxu0 0.0
        %6473 = vmatprep.subr.mxu0 0.0
        %6474 = vmatpush1.msra.mxu0 0.0
        %6475 = vmatprep.subr.mxu0 0.0
        %6476 = vmatpush1.msra.mxu0 0.0
        %6477 = vmatprep.subr.mxu0 0.0
        %6478 = vmatpush1.msra.mxu0 0.0
        %6479 = vmatprep.subr.mxu0 0.0
        %6480 = vmatpush1.msra.mxu0 %v1578
        %6481 = vmatprep.subr.mxu0 0.0
        %6482 = vmatpush1.msra.mxu0 %v1577
        %6483 = vmatprep.subr.mxu0 0.0
        %6484 = vmatpush2.msra.mxu0 0.0
        %6485 = vmatprep.subr.mxu0 0.0
        %6486 = vmatpush2.msra.mxu0 0.0
        %6487 = vmatprep.subr.mxu0 0.0
        %6488 = vmatpush2.msra.mxu0 0.0
        %6489 = vmatprep.subr.mxu0 0.0
        %6490 = vmatpush2.msra.mxu0 0.0
        %6491 = vmatprep.subr.mxu0 0.0
        %6492 = vmatpush2.msra.mxu0 0.0
        %6493 = vmatprep.subr.mxu0 0.0
        %6494 = vmatpush2.msra.mxu0 0.0
        %6495 = vmatprep.subr.mxu0 0.0
        %6496 = vmatpush2.msra.mxu0 0.0
        %6497 = vmatprep.subr.mxu0 0.0
        %6498 = vmatpush2.msra.mxu0 0.0
        %6499 = vmatprep.subr.mxu0 0.0
        %6500 = vmatpush2.msra.mxu0 0.0
        %6501 = vmatprep.subr.mxu0 0.0
        %6502 = vmatpush2.msra.mxu0 0.0
        %6503 = vmatprep.subr.mxu0 0.0
        %6504 = vmatpush2.msra.mxu0 0.0
        %6505 = vmatprep.subr.mxu0 0.0
        %6506 = vmatpush2.msra.mxu0 0.0
        %6507 = vmatprep.subr.mxu0 0.0
        %6508 = vmatpush2.msra.mxu0 0.0
        %6509 = vmatprep.subr.mxu0 0.0
        %6510 = vmatpush2.msra.mxu0 0.0
        %6511 = vmatprep.subr.mxu0 0.0
        %6512 = vmatpush2.msra.mxu0 0.0
        %6513 = vmatprep.subr.mxu0 0.0
        %6514 = vmatpush2.msra.mxu0 0.0
        %6515 = vmatprep.mubr.f32.mxu0 0.0
        %6516 = vmatmul.mubr.f32.gmra.mxu0 %v6446
        %v6517 = vpop.f32.mrf.mxu0
        %v6518 = vadd.f32 0.0, %v6517
        %v6519 = vpop.f32.mrf.mxu0
        %6520 = vmatprep.mubr.f32.mxu0 0.0
        %6521 = vmatmul.mubr.f32.gmra.mxu0 %v6449
        %v6522 = vpop.f32.mrf.mxu0
        %v6523 = vadd.f32 0.0, %v6522
        %v6524 = vpop.f32.mrf.mxu0
        %6525 = vdwg.mxu0
        %v6527 = vsel %vm432, %v1323, 0
        %v6530 = vsel %vm432, %v1324, 0
        %6532 = vmatprep.subr.mxu0 0.0
        %6533 = vmatpush1.msra.mxu0 0.0
        %6534 = vmatprep.subr.mxu0 0.0
        %6535 = vmatpush1.msra.mxu0 0.0
        %6536 = vmatprep.subr.mxu0 0.0
        %6537 = vmatpush1.msra.mxu0 0.0
        %6538 = vmatprep.subr.mxu0 0.0
        %6539 = vmatpush1.msra.mxu0 0.0
        %6540 = vmatprep.subr.mxu0 0.0
        %6541 = vmatpush1.msra.mxu0 0.0
        %6542 = vmatprep.subr.mxu0 0.0
        %6543 = vmatpush1.msra.mxu0 0.0
        %6544 = vmatprep.subr.mxu0 0.0
        %6545 = vmatpush1.msra.mxu0 0.0
        %6546 = vmatprep.subr.mxu0 0.0
        %6547 = vmatpush1.msra.mxu0 0.0
        %6548 = vmatprep.subr.mxu0 0.0
        %6549 = vmatpush1.msra.mxu0 0.0
        %6550 = vmatprep.subr.mxu0 0.0
        %6551 = vmatpush1.msra.mxu0 0.0
        %6552 = vmatprep.subr.mxu0 0.0
        %6553 = vmatpush1.msra.mxu0 0.0
        %6554 = vmatprep.subr.mxu0 0.0
        %6555 = vmatpush1.msra.mxu0 0.0
        %6556 = vmatprep.subr.mxu0 0.0
        %6557 = vmatpush1.msra.mxu0 0.0
        %6558 = vmatprep.subr.mxu0 0.0
        %6559 = vmatpush1.msra.mxu0 0.0
        %6560 = vmatprep.subr.mxu0 0.0
        %6561 = vmatpush1.msra.mxu0 %v1580
        %6562 = vmatprep.subr.mxu0 0.0
        %6563 = vmatpush1.msra.mxu0 %v1579
        %6564 = vmatprep.subr.mxu0 0.0
        %6565 = vmatpush2.msra.mxu0 0.0
        %6566 = vmatprep.subr.mxu0 0.0
        %6567 = vmatpush2.msra.mxu0 0.0
        %6568 = vmatprep.subr.mxu0 0.0
        %6569 = vmatpush2.msra.mxu0 0.0
        %6570 = vmatprep.subr.mxu0 0.0
        %6571 = vmatpush2.msra.mxu0 0.0
        %6572 = vmatprep.subr.mxu0 0.0
        %6573 = vmatpush2.msra.mxu0 0.0
        %6574 = vmatprep.subr.mxu0 0.0
        %6575 = vmatpush2.msra.mxu0 0.0
        %6576 = vmatprep.subr.mxu0 0.0
        %6577 = vmatpush2.msra.mxu0 0.0
        %6578 = vmatprep.subr.mxu0 0.0
        %6579 = vmatpush2.msra.mxu0 0.0
        %6580 = vmatprep.subr.mxu0 0.0
        %6581 = vmatpush2.msra.mxu0 0.0
        %6582 = vmatprep.subr.mxu0 0.0
        %6583 = vmatpush2.msra.mxu0 0.0
        %6584 = vmatprep.subr.mxu0 0.0
        %6585 = vmatpush2.msra.mxu0 0.0
        %6586 = vmatprep.subr.mxu0 0.0
        %6587 = vmatpush2.msra.mxu0 0.0
        %6588 = vmatprep.subr.mxu0 0.0
        %6589 = vmatpush2.msra.mxu0 0.0
        %6590 = vmatprep.subr.mxu0 0.0
        %6591 = vmatpush2.msra.mxu0 0.0
        %6592 = vmatprep.subr.mxu0 0.0
        %6593 = vmatpush2.msra.mxu0 0.0
        %6594 = vmatprep.subr.mxu0 0.0
        %6595 = vmatpush2.msra.mxu0 0.0
        %6596 = vmatprep.mubr.f32.mxu0 0.0
        %6597 = vmatmul.mubr.f32.gmra.mxu0 %v6527
        %v6598 = vpop.f32.mrf.mxu0
        %v6599 = vadd.f32 0.0, %v6598
        %v6600 = vpop.f32.mrf.mxu0
        %6601 = vmatprep.mubr.f32.mxu0 0.0
        %6602 = vmatmul.mubr.f32.gmra.mxu0 %v6530
        %v6603 = vpop.f32.mrf.mxu0
        %v6604 = vadd.f32 0.0, %v6603
        %v6605 = vpop.f32.mrf.mxu0
        %6606 = vdwg.mxu0
        %v6608 = vsel %vm432, %v1325, 0
        %v6611 = vsel %vm432, %v1326, 0
        %6613 = vmatprep.subr.mxu0 0.0
        %6614 = vmatpush1.msra.mxu0 0.0
        %6615 = vmatprep.subr.mxu0 0.0
        %6616 = vmatpush1.msra.mxu0 0.0
        %6617 = vmatprep.subr.mxu0 0.0
        %6618 = vmatpush1.msra.mxu0 0.0
        %6619 = vmatprep.subr.mxu0 0.0
        %6620 = vmatpush1.msra.mxu0 0.0
        %6621 = vmatprep.subr.mxu0 0.0
        %6622 = vmatpush1.msra.mxu0 0.0
        %6623 = vmatprep.subr.mxu0 0.0
        %6624 = vmatpush1.msra.mxu0 0.0
        %6625 = vmatprep.subr.mxu0 0.0
        %6626 = vmatpush1.msra.mxu0 0.0
        %6627 = vmatprep.subr.mxu0 0.0
        %6628 = vmatpush1.msra.mxu0 0.0
        %6629 = vmatprep.subr.mxu0 0.0
        %6630 = vmatpush1.msra.mxu0 0.0
        %6631 = vmatprep.subr.mxu0 0.0
        %6632 = vmatpush1.msra.mxu0 0.0
        %6633 = vmatprep.subr.mxu0 0.0
        %6634 = vmatpush1.msra.mxu0 0.0
        %6635 = vmatprep.subr.mxu0 0.0
        %6636 = vmatpush1.msra.mxu0 0.0
        %6637 = vmatprep.subr.mxu0 0.0
        %6638 = vmatpush1.msra.mxu0 0.0
        %6639 = vmatprep.subr.mxu0 0.0
        %6640 = vmatpush1.msra.mxu0 0.0
        %6641 = vmatprep.subr.mxu0 0.0
        %6642 = vmatpush1.msra.mxu0 %v1582
        %6643 = vmatprep.subr.mxu0 0.0
        %6644 = vmatpush1.msra.mxu0 %v1581
        %6645 = vmatprep.subr.mxu0 0.0
        %6646 = vmatpush2.msra.mxu0 0.0
        %6647 = vmatprep.subr.mxu0 0.0
        %6648 = vmatpush2.msra.mxu0 0.0
        %6649 = vmatprep.subr.mxu0 0.0
        %6650 = vmatpush2.msra.mxu0 0.0
        %6651 = vmatprep.subr.mxu0 0.0
        %6652 = vmatpush2.msra.mxu0 0.0
        %6653 = vmatprep.subr.mxu0 0.0
        %6654 = vmatpush2.msra.mxu0 0.0
        %6655 = vmatprep.subr.mxu0 0.0
        %6656 = vmatpush2.msra.mxu0 0.0
        %6657 = vmatprep.subr.mxu0 0.0
        %6658 = vmatpush2.msra.mxu0 0.0
        %6659 = vmatprep.subr.mxu0 0.0
        %6660 = vmatpush2.msra.mxu0 0.0
        %6661 = vmatprep.subr.mxu0 0.0
        %6662 = vmatpush2.msra.mxu0 0.0
        %6663 = vmatprep.subr.mxu0 0.0
        %6664 = vmatpush2.msra.mxu0 0.0
        %6665 = vmatprep.subr.mxu0 0.0
        %6666 = vmatpush2.msra.mxu0 0.0
        %6667 = vmatprep.subr.mxu0 0.0
        %6668 = vmatpush2.msra.mxu0 0.0
        %6669 = vmatprep.subr.mxu0 0.0
        %6670 = vmatpush2.msra.mxu0 0.0
        %6671 = vmatprep.subr.mxu0 0.0
        %6672 = vmatpush2.msra.mxu0 0.0
        %6673 = vmatprep.subr.mxu0 0.0
        %6674 = vmatpush2.msra.mxu0 0.0
        %6675 = vmatprep.subr.mxu0 0.0
        %6676 = vmatpush2.msra.mxu0 0.0
        %6677 = vmatprep.mubr.f32.mxu0 0.0
        %6678 = vmatmul.mubr.f32.gmra.mxu0 %v6608
        %v6679 = vpop.f32.mrf.mxu0
        %v6680 = vadd.f32 0.0, %v6679
        %v6681 = vpop.f32.mrf.mxu0
        %6682 = vmatprep.mubr.f32.mxu0 0.0
        %6683 = vmatmul.mubr.f32.gmra.mxu0 %v6611
        %v6684 = vpop.f32.mrf.mxu0
        %v6685 = vadd.f32 0.0, %v6684
        %v6686 = vpop.f32.mrf.mxu0
        %6687 = vdwg.mxu0
        %v6689 = vsel %vm432, %v1327, 0
        %v6692 = vsel %vm432, %v1328, 0
        %6694 = vmatprep.subr.mxu0 0.0
        %6695 = vmatpush1.msra.mxu0 0.0
        %6696 = vmatprep.subr.mxu0 0.0
        %6697 = vmatpush1.msra.mxu0 0.0
        %6698 = vmatprep.subr.mxu0 0.0
        %6699 = vmatpush1.msra.mxu0 0.0
        %6700 = vmatprep.subr.mxu0 0.0
        %6701 = vmatpush1.msra.mxu0 0.0
        %6702 = vmatprep.subr.mxu0 0.0
        %6703 = vmatpush1.msra.mxu0 0.0
        %6704 = vmatprep.subr.mxu0 0.0
        %6705 = vmatpush1.msra.mxu0 0.0
        %6706 = vmatprep.subr.mxu0 0.0
        %6707 = vmatpush1.msra.mxu0 0.0
        %6708 = vmatprep.subr.mxu0 0.0
        %6709 = vmatpush1.msra.mxu0 0.0
        %6710 = vmatprep.subr.mxu0 0.0
        %6711 = vmatpush1.msra.mxu0 0.0
        %6712 = vmatprep.subr.mxu0 0.0
        %6713 = vmatpush1.msra.mxu0 0.0
        %6714 = vmatprep.subr.mxu0 0.0
        %6715 = vmatpush1.msra.mxu0 0.0
        %6716 = vmatprep.subr.mxu0 0.0
        %6717 = vmatpush1.msra.mxu0 0.0
        %6718 = vmatprep.subr.mxu0 0.0
        %6719 = vmatpush1.msra.mxu0 0.0
        %6720 = vmatprep.subr.mxu0 0.0
        %6721 = vmatpush1.msra.mxu0 0.0
        %6722 = vmatprep.subr.mxu0 0.0
        %6723 = vmatpush1.msra.mxu0 %v1584
        %6724 = vmatprep.subr.mxu0 0.0
        %6725 = vmatpush1.msra.mxu0 %v1583
        %6726 = vmatprep.subr.mxu0 0.0
        %6727 = vmatpush2.msra.mxu0 0.0
        %6728 = vmatprep.subr.mxu0 0.0
        %6729 = vmatpush2.msra.mxu0 0.0
        %6730 = vmatprep.subr.mxu0 0.0
        %6731 = vmatpush2.msra.mxu0 0.0
        %6732 = vmatprep.subr.mxu0 0.0
        %6733 = vmatpush2.msra.mxu0 0.0
        %6734 = vmatprep.subr.mxu0 0.0
        %6735 = vmatpush2.msra.mxu0 0.0
        %6736 = vmatprep.subr.mxu0 0.0
        %6737 = vmatpush2.msra.mxu0 0.0
        %6738 = vmatprep.subr.mxu0 0.0
        %6739 = vmatpush2.msra.mxu0 0.0
        %6740 = vmatprep.subr.mxu0 0.0
        %6741 = vmatpush2.msra.mxu0 0.0
        %6742 = vmatprep.subr.mxu0 0.0
        %6743 = vmatpush2.msra.mxu0 0.0
        %6744 = vmatprep.subr.mxu0 0.0
        %6745 = vmatpush2.msra.mxu0 0.0
        %6746 = vmatprep.subr.mxu0 0.0
        %6747 = vmatpush2.msra.mxu0 0.0
        %6748 = vmatprep.subr.mxu0 0.0
        %6749 = vmatpush2.msra.mxu0 0.0
        %6750 = vmatprep.subr.mxu0 0.0
        %6751 = vmatpush2.msra.mxu0 0.0
        %6752 = vmatprep.subr.mxu0 0.0
        %6753 = vmatpush2.msra.mxu0 0.0
        %6754 = vmatprep.subr.mxu0 0.0
        %6755 = vmatpush2.msra.mxu0 0.0
        %6756 = vmatprep.subr.mxu0 0.0
        %6757 = vmatpush2.msra.mxu0 0.0
        %6758 = vmatprep.mubr.f32.mxu0 0.0
        %6759 = vmatmul.mubr.f32.gmra.mxu0 %v6689
        %v6760 = vpop.f32.mrf.mxu0
        %v6761 = vadd.f32 0.0, %v6760
        %v6762 = vpop.f32.mrf.mxu0
        %6763 = vmatprep.mubr.f32.mxu0 0.0
        %6764 = vmatmul.mubr.f32.gmra.mxu0 %v6692
        %v6765 = vpop.f32.mrf.mxu0
        %v6766 = vadd.f32 0.0, %v6765
        %v6767 = vpop.f32.mrf.mxu0
        %6768 = vdwg.mxu0
        %v6769 = vmul.f32 %v817, %v1658
        %v6770 = vmul.f32 %v818, %v1663
        %v6771 = vmul.f32 %v819, %v1739
        %v6772 = vmul.f32 %v820, %v1744
        %v6773 = vmul.f32 %v821, %v1820
        %v6774 = vmul.f32 %v822, %v1825
        %v6775 = vmul.f32 %v823, %v1901
        %v6776 = vmul.f32 %v824, %v1906
        %v6777 = vmul.f32 %v825, %v1982
        %v6778 = vmul.f32 %v826, %v1987
        %v6779 = vmul.f32 %v827, %v2063
        %v6780 = vmul.f32 %v828, %v2068
        %v6781 = vmul.f32 %v829, %v2144
        %v6782 = vmul.f32 %v830, %v2149
        %v6783 = vmul.f32 %v831, %v2225
        %v6784 = vmul.f32 %v832, %v2230
        %v6785 = vmul.f32 %v833, %v2306
        %v6786 = vmul.f32 %v834, %v2311
        %v6787 = vmul.f32 %v835, %v2387
        %v6788 = vmul.f32 %v836, %v2392
        %v6789 = vmul.f32 %v837, %v2468
        %v6790 = vmul.f32 %v838, %v2473
        %v6791 = vmul.f32 %v839, %v2549
        %v6792 = vmul.f32 %v840, %v2554
        %v6793 = vmul.f32 %v841, %v2630
        %v6794 = vmul.f32 %v842, %v2635
        %v6795 = vmul.f32 %v843, %v2711
        %v6796 = vmul.f32 %v844, %v2716
        %v6797 = vmul.f32 %v845, %v2792
        %v6798 = vmul.f32 %v846, %v2797
        %v6799 = vmul.f32 %v847, %v2873
        %v6800 = vmul.f32 %v848, %v2878
        %v6801 = vmul.f32 %v849, %v2954
        %v6802 = vmul.f32 %v850, %v2959
        %v6803 = vmul.f32 %v851, %v3035
        %v6804 = vmul.f32 %v852, %v3040
        %v6805 = vmul.f32 %v853, %v3116
        %v6806 = vmul.f32 %v854, %v3121
        %v6807 = vmul.f32 %v855, %v3197
        %v6808 = vmul.f32 %v856, %v3202
        %v6809 = vmul.f32 %v857, %v3278
        %v6810 = vmul.f32 %v858, %v3283
        %v6811 = vmul.f32 %v859, %v3359
        %v6812 = vmul.f32 %v860, %v3364
        %v6813 = vmul.f32 %v861, %v3440
        %v6814 = vmul.f32 %v862, %v3445
        %v6815 = vmul.f32 %v863, %v3521
        %v6816 = vmul.f32 %v864, %v3526
        %v6817 = vmul.f32 %v865, %v3602
        %v6818 = vmul.f32 %v866, %v3607
        %v6819 = vmul.f32 %v867, %v3683
        %v6820 = vmul.f32 %v868, %v3688
        %v6821 = vmul.f32 %v869, %v3764
        %v6822 = vmul.f32 %v870, %v3769
        %v6823 = vmul.f32 %v871, %v3845
        %v6824 = vmul.f32 %v872, %v3850
        %v6825 = vmul.f32 %v873, %v3926
        %v6826 = vmul.f32 %v874, %v3931
        %v6827 = vmul.f32 %v875, %v4007
        %v6828 = vmul.f32 %v876, %v4012
        %v6829 = vmul.f32 %v877, %v4088
        %v6830 = vmul.f32 %v878, %v4093
        %v6831 = vmul.f32 %v879, %v4169
        %v6832 = vmul.f32 %v880, %v4174
        %v6833 = vmul.f32 %v881, %v4250
        %v6834 = vmul.f32 %v882, %v4255
        %v6835 = vmul.f32 %v883, %v4331
        %v6836 = vmul.f32 %v884, %v4336
        %v6837 = vmul.f32 %v885, %v4412
        %v6838 = vmul.f32 %v886, %v4417
        %v6839 = vmul.f32 %v887, %v4493
        %v6840 = vmul.f32 %v888, %v4498
        %v6841 = vmul.f32 %v889, %v4574
        %v6842 = vmul.f32 %v890, %v4579
        %v6843 = vmul.f32 %v891, %v4655
        %v6844 = vmul.f32 %v892, %v4660
        %v6845 = vmul.f32 %v893, %v4736
        %v6846 = vmul.f32 %v894, %v4741
        %v6847 = vmul.f32 %v895, %v4817
        %v6848 = vmul.f32 %v896, %v4822
        %v6849 = vmul.f32 %v897, %v4898
        %v6850 = vmul.f32 %v898, %v4903
        %v6851 = vmul.f32 %v899, %v4979
        %v6852 = vmul.f32 %v900, %v4984
        %v6853 = vmul.f32 %v901, %v5060
        %v6854 = vmul.f32 %v902, %v5065
        %v6855 = vmul.f32 %v903, %v5141
        %v6856 = vmul.f32 %v904, %v5146
        %v6857 = vmul.f32 %v905, %v5222
        %v6858 = vmul.f32 %v906, %v5227
        %v6859 = vmul.f32 %v907, %v5303
        %v6860 = vmul.f32 %v908, %v5308
        %v6861 = vmul.f32 %v909, %v5384
        %v6862 = vmul.f32 %v910, %v5389
        %v6863 = vmul.f32 %v911, %v5465
        %v6864 = vmul.f32 %v912, %v5470
        %v6865 = vmul.f32 %v913, %v5546
        %v6866 = vmul.f32 %v914, %v5551
        %v6867 = vmul.f32 %v915, %v5627
        %v6868 = vmul.f32 %v916, %v5632
        %v6869 = vmul.f32 %v917, %v5708
        %v6870 = vmul.f32 %v918, %v5713
        %v6871 = vmul.f32 %v919, %v5789
        %v6872 = vmul.f32 %v920, %v5794
        %v6873 = vmul.f32 %v921, %v5870
        %v6874 = vmul.f32 %v922, %v5875
        %v6875 = vmul.f32 %v923, %v5951
        %v6876 = vmul.f32 %v924, %v5956
        %v6877 = vmul.f32 %v925, %v6032
        %v6878 = vmul.f32 %v926, %v6037
        %v6879 = vmul.f32 %v927, %v6113
        %v6880 = vmul.f32 %v928, %v6118
        %v6881 = vmul.f32 %v929, %v6194
        %v6882 = vmul.f32 %v930, %v6199
        %v6883 = vmul.f32 %v931, %v6275
        %v6884 = vmul.f32 %v932, %v6280
        %v6885 = vmul.f32 %v933, %v6356
        %v6886 = vmul.f32 %v934, %v6361
        %v6887 = vmul.f32 %v935, %v6437
        %v6888 = vmul.f32 %v936, %v6442
        %v6889 = vmul.f32 %v937, %v6518
        %v6890 = vmul.f32 %v938, %v6523
        %v6891 = vmul.f32 %v939, %v6599
        %v6892 = vmul.f32 %v940, %v6604
        %v6893 = vmul.f32 %v941, %v6680
        %v6894 = vmul.f32 %v942, %v6685
        %v6895 = vmul.f32 %v943, %v6761
        %v6896 = vmul.f32 %v944, %v6766
        %v6897 = vld [vmem:[%s4] sm:$0xff]
        %v6898 = vld [vmem:[%s4 + $0x8] sm:$0xff]
        %v6899 = vld [vmem:[%s4 + $0x10] sm:$0xff]
        %v6900 = vld [vmem:[%s4 + $0x18] sm:$0xff]
        %v6901 = vld [vmem:[%s4 + $0x20] sm:$0xff]
        %v6902 = vld [vmem:[%s4 + $0x28] sm:$0xff]
        %v6903 = vld [vmem:[%s4 + $0x30] sm:$0xff]
        %v6904 = vld [vmem:[%s4 + $0x38] sm:$0xff]
        %v6905 = vld [vmem:[%s4 + $0x40] sm:$0x3f]
        %vm6906 = vcmask 572416
        %v6908 = vsel %vm6906, %v6769, 0
        %v6911 = vsel %vm6906, %v6770, 0
        %v6914 = vsel %vm6906, %v6771, 0
        %v6917 = vsel %vm6906, %v6772, 0
        %v6920 = vsel %vm6906, %v6773, 0
        %v6923 = vsel %vm6906, %v6774, 0
        %v6926 = vsel %vm6906, %v6775, 0
        %v6929 = vsel %vm6906, %v6776, 0
        %v6932 = vsel %vm6906, %v6777, 0
        %v6935 = vsel %vm6906, %v6778, 0
        %v6938 = vsel %vm6906, %v6779, 0
        %v6941 = vsel %vm6906, %v6780, 0
        %v6944 = vsel %vm6906, %v6781, 0
        %v6947 = vsel %vm6906, %v6782, 0
        %v6950 = vsel %vm6906, %v6783, 0
        %v6953 = vsel %vm6906, %v6784, 0
        %v6956 = vsel %vm6906, %v6785, 0
        %v6959 = vsel %vm6906, %v6786, 0
        %v6962 = vsel %vm6906, %v6787, 0
        %v6965 = vsel %vm6906, %v6788, 0
        %v6968 = vsel %vm6906, %v6789, 0
        %v6971 = vsel %vm6906, %v6790, 0
        %v6974 = vsel %vm6906, %v6791, 0
        %v6977 = vsel %vm6906, %v6792, 0
        %v6980 = vsel %vm6906, %v6793, 0
        %v6983 = vsel %vm6906, %v6794, 0
        %v6986 = vsel %vm6906, %v6795, 0
        %v6989 = vsel %vm6906, %v6796, 0
        %v6992 = vsel %vm6906, %v6797, 0
        %v6995 = vsel %vm6906, %v6798, 0
        %v6998 = vsel %vm6906, %v6799, 0
        %v7001 = vsel %vm6906, %v6800, 0
        %v7004 = vsel %vm6906, %v6801, 0
        %v7007 = vsel %vm6906, %v6802, 0
        %v7010 = vsel %vm6906, %v6803, 0
        %v7013 = vsel %vm6906, %v6804, 0
        %v7016 = vsel %vm6906, %v6805, 0
        %v7019 = vsel %vm6906, %v6806, 0
        %v7022 = vsel %vm6906, %v6807, 0
        %v7025 = vsel %vm6906, %v6808, 0
        %v7028 = vsel %vm6906, %v6809, 0
        %v7031 = vsel %vm6906, %v6810, 0
        %v7034 = vsel %vm6906, %v6811, 0
        %v7037 = vsel %vm6906, %v6812, 0
        %v7040 = vsel %vm6906, %v6813, 0
        %v7043 = vsel %vm6906, %v6814, 0
        %v7046 = vsel %vm6906, %v6815, 0
        %v7049 = vsel %vm6906, %v6816, 0
        %v7052 = vsel %vm6906, %v6817, 0
        %v7055 = vsel %vm6906, %v6818, 0
        %v7058 = vsel %vm6906, %v6819, 0
        %v7061 = vsel %vm6906, %v6820, 0
        %v7064 = vsel %vm6906, %v6821, 0
        %v7067 = vsel %vm6906, %v6822, 0
        %v7070 = vsel %vm6906, %v6823, 0
        %v7073 = vsel %vm6906, %v6824, 0
        %v7076 = vsel %vm6906, %v6825, 0
        %v7079 = vsel %vm6906, %v6826, 0
        %v7082 = vsel %vm6906, %v6827, 0
        %v7085 = vsel %vm6906, %v6828, 0
        %v7088 = vsel %vm6906, %v6829, 0
        %v7091 = vsel %vm6906, %v6830, 0
        %v7094 = vsel %vm6906, %v6831, 0
        %v7097 = vsel %vm6906, %v6832, 0
        %v7100 = vsel %vm6906, %v6833, 0
        %v7103 = vsel %vm6906, %v6834, 0
        %v7106 = vsel %vm6906, %v6835, 0
        %v7109 = vsel %vm6906, %v6836, 0
        %v7112 = vsel %vm6906, %v6837, 0
        %v7115 = vsel %vm6906, %v6838, 0
        %v7118 = vsel %vm6906, %v6839, 0
        %v7121 = vsel %vm6906, %v6840, 0
        %v7124 = vsel %vm6906, %v6841, 0
        %v7127 = vsel %vm6906, %v6842, 0
        %v7130 = vsel %vm6906, %v6843, 0
        %v7133 = vsel %vm6906, %v6844, 0
        %v7136 = vsel %vm6906, %v6845, 0
        %v7139 = vsel %vm6906, %v6846, 0
        %v7142 = vsel %vm6906, %v6847, 0
        %v7145 = vsel %vm6906, %v6848, 0
        %v7148 = vsel %vm6906, %v6849, 0
        %v7151 = vsel %vm6906, %v6850, 0
        %v7154 = vsel %vm6906, %v6851, 0
        %v7157 = vsel %vm6906, %v6852, 0
        %v7160 = vsel %vm6906, %v6853, 0
        %v7163 = vsel %vm6906, %v6854, 0
        %v7166 = vsel %vm6906, %v6855, 0
        %v7169 = vsel %vm6906, %v6856, 0
        %v7172 = vsel %vm6906, %v6857, 0
        %v7175 = vsel %vm6906, %v6858, 0
        %v7178 = vsel %vm6906, %v6859, 0
        %v7181 = vsel %vm6906, %v6860, 0
        %v7184 = vsel %vm6906, %v6861, 0
        %v7187 = vsel %vm6906, %v6862, 0
        %v7190 = vsel %vm6906, %v6863, 0
        %v7193 = vsel %vm6906, %v6864, 0
        %v7196 = vsel %vm6906, %v6865, 0
        %v7199 = vsel %vm6906, %v6866, 0
        %v7202 = vsel %vm6906, %v6867, 0
        %v7205 = vsel %vm6906, %v6868, 0
        %v7208 = vsel %vm6906, %v6869, 0
        %v7211 = vsel %vm6906, %v6870, 0
        %v7214 = vsel %vm6906, %v6871, 0
        %v7217 = vsel %vm6906, %v6872, 0
        %v7220 = vsel %vm6906, %v6873, 0
        %v7223 = vsel %vm6906, %v6874, 0
        %v7226 = vsel %vm6906, %v6875, 0
        %v7229 = vsel %vm6906, %v6876, 0
        %v7232 = vsel %vm6906, %v6877, 0
        %v7235 = vsel %vm6906, %v6878, 0
        %v7238 = vsel %vm6906, %v6879, 0
        %v7241 = vsel %vm6906, %v6880, 0
        %v7244 = vsel %vm6906, %v6881, 0
        %v7247 = vsel %vm6906, %v6882, 0
        %v7250 = vsel %vm6906, %v6883, 0
        %v7253 = vsel %vm6906, %v6884, 0
        %v7256 = vsel %vm6906, %v6885, 0
        %v7259 = vsel %vm6906, %v6886, 0
        %v7262 = vsel %vm6906, %v6887, 0
        %v7265 = vsel %vm6906, %v6888, 0
        %v7268 = vsel %vm6906, %v6889, 0
        %v7271 = vsel %vm6906, %v6890, 0
        %v7274 = vsel %vm6906, %v6891, 0
        %v7277 = vsel %vm6906, %v6892, 0
        %v7280 = vsel %vm6906, %v6893, 0
        %v7283 = vsel %vm6906, %v6894, 0
        %v7286 = vsel %vm6906, %v6895, 0
        %v7289 = vsel %vm6906, %v6896, 0
        %vm7291 = vcmask 1045504
        %v7293 = vsel %vm7291, %v6905, 0
        %7295 = vmatprep.subr.mxu0 0.0
        %7296 = vmatpush1.msra.mxu0 0.0
        %7297 = vmatprep.subr.mxu0 0.0
        %7298 = vmatpush1.msra.mxu0 0.0
        %7299 = vmatprep.subr.mxu0 0.0
        %7300 = vmatpush1.msra.mxu0 0.0
        %7301 = vmatprep.subr.mxu0 0.0
        %7302 = vmatpush1.msra.mxu0 0.0
        %7303 = vmatprep.subr.mxu0 0.0
        %7304 = vmatpush1.msra.mxu0 0.0
        %7305 = vmatprep.subr.mxu0 0.0
        %7306 = vmatpush1.msra.mxu0 0.0
        %7307 = vmatprep.subr.mxu0 0.0
        %7308 = vmatpush1.msra.mxu0 0.0
        %7309 = vmatprep.subr.mxu0 0.0
        %7310 = vmatpush1.msra.mxu0 %v7293
        %7311 = vmatprep.subr.mxu0 0.0
        %7312 = vmatpush1.msra.mxu0 %v6904
        %7313 = vmatprep.subr.mxu0 0.0
        %7314 = vmatpush1.msra.mxu0 %v6903
        %7315 = vmatprep.subr.mxu0 0.0
        %7316 = vmatpush1.msra.mxu0 %v6902
        %7317 = vmatprep.subr.mxu0 0.0
        %7318 = vmatpush1.msra.mxu0 %v6901
        %7319 = vmatprep.subr.mxu0 0.0
        %7320 = vmatpush1.msra.mxu0 %v6900
        %7321 = vmatprep.subr.mxu0 0.0
        %7322 = vmatpush1.msra.mxu0 %v6899
        %7323 = vmatprep.subr.mxu0 0.0
        %7324 = vmatpush1.msra.mxu0 %v6898
        %7325 = vmatprep.subr.mxu0 0.0
        %7326 = vmatpush1.msra.mxu0 %v6897
        %7327 = vmatprep.subr.mxu0 0.0
        %7328 = vmatpush2.msra.mxu0 0.0
        %7329 = vmatprep.subr.mxu0 0.0
        %7330 = vmatpush2.msra.mxu0 0.0
        %7331 = vmatprep.subr.mxu0 0.0
        %7332 = vmatpush2.msra.mxu0 0.0
        %7333 = vmatprep.subr.mxu0 0.0
        %7334 = vmatpush2.msra.mxu0 0.0
        %7335 = vmatprep.subr.mxu0 0.0
        %7336 = vmatpush2.msra.mxu0 0.0
        %7337 = vmatprep.subr.mxu0 0.0
        %7338 = vmatpush2.msra.mxu0 0.0
        %7339 = vmatprep.subr.mxu0 0.0
        %7340 = vmatpush2.msra.mxu0 0.0
        %7341 = vmatprep.subr.mxu0 0.0
        %7342 = vmatpush2.msra.mxu0 0.0
        %7343 = vmatprep.subr.mxu0 0.0
        %7344 = vmatpush2.msra.mxu0 0.0
        %7345 = vmatprep.subr.mxu0 0.0
        %7346 = vmatpush2.msra.mxu0 0.0
        %7347 = vmatprep.subr.mxu0 0.0
        %7348 = vmatpush2.msra.mxu0 0.0
        %7349 = vmatprep.subr.mxu0 0.0
        %7350 = vmatpush2.msra.mxu0 0.0
        %7351 = vmatprep.subr.mxu0 0.0
        %7352 = vmatpush2.msra.mxu0 0.0
        %7353 = vmatprep.subr.mxu0 0.0
        %7354 = vmatpush2.msra.mxu0 0.0
        %7355 = vmatprep.subr.mxu0 0.0
        %7356 = vmatpush2.msra.mxu0 0.0
        %7357 = vmatprep.subr.mxu0 0.0
        %7358 = vmatpush2.msra.mxu0 0.0
        %7359 = vmatprep.mubr.f32.mxu0 0.0
        %7360 = vmatmul.mubr.f32.gmra.mxu0 %v6908
        %v7361 = vpop.f32.mrf.mxu0
        %v7362 = vadd.f32 0.0, %v7361
        %v7363 = vpop.f32.mrf.mxu0
        %7364 = vmatprep.mubr.f32.mxu0 0.0
        %7365 = vmatmul.mubr.f32.gmra.mxu0 %v6911
        %v7366 = vpop.f32.mrf.mxu0
        %v7367 = vadd.f32 0.0, %v7366
        %v7368 = vpop.f32.mrf.mxu0
        %7369 = vmatprep.mubr.f32.mxu0 0.0
        %7370 = vmatmul.mubr.f32.gmra.mxu0 %v6914
        %v7371 = vpop.f32.mrf.mxu0
        %v7372 = vadd.f32 0.0, %v7371
        %v7373 = vpop.f32.mrf.mxu0
        %7374 = vmatprep.mubr.f32.mxu0 0.0
        %7375 = vmatmul.mubr.f32.gmra.mxu0 %v6917
        %v7376 = vpop.f32.mrf.mxu0
        %v7377 = vadd.f32 0.0, %v7376
        %v7378 = vpop.f32.mrf.mxu0
        %7379 = vmatprep.mubr.f32.mxu0 0.0
        %7380 = vmatmul.mubr.f32.gmra.mxu0 %v6920
        %v7381 = vpop.f32.mrf.mxu0
        %v7382 = vadd.f32 0.0, %v7381
        %v7383 = vpop.f32.mrf.mxu0
        %7384 = vmatprep.mubr.f32.mxu0 0.0
        %7385 = vmatmul.mubr.f32.gmra.mxu0 %v6923
        %v7386 = vpop.f32.mrf.mxu0
        %v7387 = vadd.f32 0.0, %v7386
        %v7388 = vpop.f32.mrf.mxu0
        %7389 = vmatprep.mubr.f32.mxu0 0.0
        %7390 = vmatmul.mubr.f32.gmra.mxu0 %v6926
        %v7391 = vpop.f32.mrf.mxu0
        %v7392 = vadd.f32 0.0, %v7391
        %v7393 = vpop.f32.mrf.mxu0
        %7394 = vmatprep.mubr.f32.mxu0 0.0
        %7395 = vmatmul.mubr.f32.gmra.mxu0 %v6929
        %v7396 = vpop.f32.mrf.mxu0
        %v7397 = vadd.f32 0.0, %v7396
        %v7398 = vpop.f32.mrf.mxu0
        %7399 = vmatprep.mubr.f32.mxu0 0.0
        %7400 = vmatmul.mubr.f32.gmra.mxu0 %v6932
        %v7401 = vpop.f32.mrf.mxu0
        %v7402 = vadd.f32 0.0, %v7401
        %v7403 = vpop.f32.mrf.mxu0
        %7404 = vmatprep.mubr.f32.mxu0 0.0
        %7405 = vmatmul.mubr.f32.gmra.mxu0 %v6935
        %v7406 = vpop.f32.mrf.mxu0
        %v7407 = vadd.f32 0.0, %v7406
        %v7408 = vpop.f32.mrf.mxu0
        %7409 = vmatprep.mubr.f32.mxu0 0.0
        %7410 = vmatmul.mubr.f32.gmra.mxu0 %v6938
        %v7411 = vpop.f32.mrf.mxu0
        %v7412 = vadd.f32 0.0, %v7411
        %v7413 = vpop.f32.mrf.mxu0
        %7414 = vmatprep.mubr.f32.mxu0 0.0
        %7415 = vmatmul.mubr.f32.gmra.mxu0 %v6941
        %v7416 = vpop.f32.mrf.mxu0
        %v7417 = vadd.f32 0.0, %v7416
        %v7418 = vpop.f32.mrf.mxu0
        %7419 = vmatprep.mubr.f32.mxu0 0.0
        %7420 = vmatmul.mubr.f32.gmra.mxu0 %v6944
        %v7421 = vpop.f32.mrf.mxu0
        %v7422 = vadd.f32 0.0, %v7421
        %v7423 = vpop.f32.mrf.mxu0
        %7424 = vmatprep.mubr.f32.mxu0 0.0
        %7425 = vmatmul.mubr.f32.gmra.mxu0 %v6947
        %v7426 = vpop.f32.mrf.mxu0
        %v7427 = vadd.f32 0.0, %v7426
        %v7428 = vpop.f32.mrf.mxu0
        %7429 = vmatprep.mubr.f32.mxu0 0.0
        %7430 = vmatmul.mubr.f32.gmra.mxu0 %v6950
        %v7431 = vpop.f32.mrf.mxu0
        %v7432 = vadd.f32 0.0, %v7431
        %v7433 = vpop.f32.mrf.mxu0
        %7434 = vmatprep.mubr.f32.mxu0 0.0
        %7435 = vmatmul.mubr.f32.gmra.mxu0 %v6953
        %v7436 = vpop.f32.mrf.mxu0
        %v7437 = vadd.f32 0.0, %v7436
        %v7438 = vpop.f32.mrf.mxu0
        %7439 = vmatprep.mubr.f32.mxu0 0.0
        %7440 = vmatmul.mubr.f32.gmra.mxu0 %v6956
        %v7441 = vpop.f32.mrf.mxu0
        %v7442 = vadd.f32 0.0, %v7441
        %v7443 = vpop.f32.mrf.mxu0
        %7444 = vmatprep.mubr.f32.mxu0 0.0
        %7445 = vmatmul.mubr.f32.gmra.mxu0 %v6959
        %v7446 = vpop.f32.mrf.mxu0
        %v7447 = vadd.f32 0.0, %v7446
        %v7448 = vpop.f32.mrf.mxu0
        %7449 = vmatprep.mubr.f32.mxu0 0.0
        %7450 = vmatmul.mubr.f32.gmra.mxu0 %v6962
        %v7451 = vpop.f32.mrf.mxu0
        %v7452 = vadd.f32 0.0, %v7451
        %v7453 = vpop.f32.mrf.mxu0
        %7454 = vmatprep.mubr.f32.mxu0 0.0
        %7455 = vmatmul.mubr.f32.gmra.mxu0 %v6965
        %v7456 = vpop.f32.mrf.mxu0
        %v7457 = vadd.f32 0.0, %v7456
        %v7458 = vpop.f32.mrf.mxu0
        %7459 = vmatprep.mubr.f32.mxu0 0.0
        %7460 = vmatmul.mubr.f32.gmra.mxu0 %v6968
        %v7461 = vpop.f32.mrf.mxu0
        %v7462 = vadd.f32 0.0, %v7461
        %v7463 = vpop.f32.mrf.mxu0
        %7464 = vmatprep.mubr.f32.mxu0 0.0
        %7465 = vmatmul.mubr.f32.gmra.mxu0 %v6971
        %v7466 = vpop.f32.mrf.mxu0
        %v7467 = vadd.f32 0.0, %v7466
        %v7468 = vpop.f32.mrf.mxu0
        %7469 = vmatprep.mubr.f32.mxu0 0.0
        %7470 = vmatmul.mubr.f32.gmra.mxu0 %v6974
        %v7471 = vpop.f32.mrf.mxu0
        %v7472 = vadd.f32 0.0, %v7471
        %v7473 = vpop.f32.mrf.mxu0
        %7474 = vmatprep.mubr.f32.mxu0 0.0
        %7475 = vmatmul.mubr.f32.gmra.mxu0 %v6977
        %v7476 = vpop.f32.mrf.mxu0
        %v7477 = vadd.f32 0.0, %v7476
        %v7478 = vpop.f32.mrf.mxu0
        %7479 = vmatprep.mubr.f32.mxu0 0.0
        %7480 = vmatmul.mubr.f32.gmra.mxu0 %v6980
        %v7481 = vpop.f32.mrf.mxu0
        %v7482 = vadd.f32 0.0, %v7481
        %v7483 = vpop.f32.mrf.mxu0
        %7484 = vmatprep.mubr.f32.mxu0 0.0
        %7485 = vmatmul.mubr.f32.gmra.mxu0 %v6983
        %v7486 = vpop.f32.mrf.mxu0
        %v7487 = vadd.f32 0.0, %v7486
        %v7488 = vpop.f32.mrf.mxu0
        %7489 = vmatprep.mubr.f32.mxu0 0.0
        %7490 = vmatmul.mubr.f32.gmra.mxu0 %v6986
        %v7491 = vpop.f32.mrf.mxu0
        %v7492 = vadd.f32 0.0, %v7491
        %v7493 = vpop.f32.mrf.mxu0
        %7494 = vmatprep.mubr.f32.mxu0 0.0
        %7495 = vmatmul.mubr.f32.gmra.mxu0 %v6989
        %v7496 = vpop.f32.mrf.mxu0
        %v7497 = vadd.f32 0.0, %v7496
        %v7498 = vpop.f32.mrf.mxu0
        %7499 = vmatprep.mubr.f32.mxu0 0.0
        %7500 = vmatmul.mubr.f32.gmra.mxu0 %v6992
        %v7501 = vpop.f32.mrf.mxu0
        %v7502 = vadd.f32 0.0, %v7501
        %v7503 = vpop.f32.mrf.mxu0
        %7504 = vmatprep.mubr.f32.mxu0 0.0
        %7505 = vmatmul.mubr.f32.gmra.mxu0 %v6995
        %v7506 = vpop.f32.mrf.mxu0
        %v7507 = vadd.f32 0.0, %v7506
        %v7508 = vpop.f32.mrf.mxu0
        %7509 = vmatprep.mubr.f32.mxu0 0.0
        %7510 = vmatmul.mubr.f32.gmra.mxu0 %v6998
        %v7511 = vpop.f32.mrf.mxu0
        %v7512 = vadd.f32 0.0, %v7511
        %v7513 = vpop.f32.mrf.mxu0
        %7514 = vmatprep.mubr.f32.mxu0 0.0
        %7515 = vmatmul.mubr.f32.gmra.mxu0 %v7001
        %v7516 = vpop.f32.mrf.mxu0
        %v7517 = vadd.f32 0.0, %v7516
        %v7518 = vpop.f32.mrf.mxu0
        %7519 = vmatprep.mubr.f32.mxu0 0.0
        %7520 = vmatmul.mubr.f32.gmra.mxu0 %v7004
        %v7521 = vpop.f32.mrf.mxu0
        %v7522 = vadd.f32 0.0, %v7521
        %v7523 = vpop.f32.mrf.mxu0
        %7524 = vmatprep.mubr.f32.mxu0 0.0
        %7525 = vmatmul.mubr.f32.gmra.mxu0 %v7007
        %v7526 = vpop.f32.mrf.mxu0
        %v7527 = vadd.f32 0.0, %v7526
        %v7528 = vpop.f32.mrf.mxu0
        %7529 = vmatprep.mubr.f32.mxu0 0.0
        %7530 = vmatmul.mubr.f32.gmra.mxu0 %v7010
        %v7531 = vpop.f32.mrf.mxu0
        %v7532 = vadd.f32 0.0, %v7531
        %v7533 = vpop.f32.mrf.mxu0
        %7534 = vmatprep.mubr.f32.mxu0 0.0
        %7535 = vmatmul.mubr.f32.gmra.mxu0 %v7013
        %v7536 = vpop.f32.mrf.mxu0
        %v7537 = vadd.f32 0.0, %v7536
        %v7538 = vpop.f32.mrf.mxu0
        %7539 = vmatprep.mubr.f32.mxu0 0.0
        %7540 = vmatmul.mubr.f32.gmra.mxu0 %v7016
        %v7541 = vpop.f32.mrf.mxu0
        %v7542 = vadd.f32 0.0, %v7541
        %v7543 = vpop.f32.mrf.mxu0
        %7544 = vmatprep.mubr.f32.mxu0 0.0
        %7545 = vmatmul.mubr.f32.gmra.mxu0 %v7019
        %v7546 = vpop.f32.mrf.mxu0
        %v7547 = vadd.f32 0.0, %v7546
        %v7548 = vpop.f32.mrf.mxu0
        %7549 = vmatprep.mubr.f32.mxu0 0.0
        %7550 = vmatmul.mubr.f32.gmra.mxu0 %v7022
        %v7551 = vpop.f32.mrf.mxu0
        %v7552 = vadd.f32 0.0, %v7551
        %v7553 = vpop.f32.mrf.mxu0
        %7554 = vmatprep.mubr.f32.mxu0 0.0
        %7555 = vmatmul.mubr.f32.gmra.mxu0 %v7025
        %v7556 = vpop.f32.mrf.mxu0
        %v7557 = vadd.f32 0.0, %v7556
        %v7558 = vpop.f32.mrf.mxu0
        %7559 = vmatprep.mubr.f32.mxu0 0.0
        %7560 = vmatmul.mubr.f32.gmra.mxu0 %v7028
        %v7561 = vpop.f32.mrf.mxu0
        %v7562 = vadd.f32 0.0, %v7561
        %v7563 = vpop.f32.mrf.mxu0
        %7564 = vmatprep.mubr.f32.mxu0 0.0
        %7565 = vmatmul.mubr.f32.gmra.mxu0 %v7031
        %v7566 = vpop.f32.mrf.mxu0
        %v7567 = vadd.f32 0.0, %v7566
        %v7568 = vpop.f32.mrf.mxu0
        %7569 = vmatprep.mubr.f32.mxu0 0.0
        %7570 = vmatmul.mubr.f32.gmra.mxu0 %v7034
        %v7571 = vpop.f32.mrf.mxu0
        %v7572 = vadd.f32 0.0, %v7571
        %v7573 = vpop.f32.mrf.mxu0
        %7574 = vmatprep.mubr.f32.mxu0 0.0
        %7575 = vmatmul.mubr.f32.gmra.mxu0 %v7037
        %v7576 = vpop.f32.mrf.mxu0
        %v7577 = vadd.f32 0.0, %v7576
        %v7578 = vpop.f32.mrf.mxu0
        %7579 = vmatprep.mubr.f32.mxu0 0.0
        %7580 = vmatmul.mubr.f32.gmra.mxu0 %v7040
        %v7581 = vpop.f32.mrf.mxu0
        %v7582 = vadd.f32 0.0, %v7581
        %v7583 = vpop.f32.mrf.mxu0
        %7584 = vmatprep.mubr.f32.mxu0 0.0
        %7585 = vmatmul.mubr.f32.gmra.mxu0 %v7043
        %v7586 = vpop.f32.mrf.mxu0
        %v7587 = vadd.f32 0.0, %v7586
        %v7588 = vpop.f32.mrf.mxu0
        %7589 = vmatprep.mubr.f32.mxu0 0.0
        %7590 = vmatmul.mubr.f32.gmra.mxu0 %v7046
        %v7591 = vpop.f32.mrf.mxu0
        %v7592 = vadd.f32 0.0, %v7591
        %v7593 = vpop.f32.mrf.mxu0
        %7594 = vmatprep.mubr.f32.mxu0 0.0
        %7595 = vmatmul.mubr.f32.gmra.mxu0 %v7049
        %v7596 = vpop.f32.mrf.mxu0
        %v7597 = vadd.f32 0.0, %v7596
        %v7598 = vpop.f32.mrf.mxu0
        %7599 = vmatprep.mubr.f32.mxu0 0.0
        %7600 = vmatmul.mubr.f32.gmra.mxu0 %v7052
        %v7601 = vpop.f32.mrf.mxu0
        %v7602 = vadd.f32 0.0, %v7601
        %v7603 = vpop.f32.mrf.mxu0
        %7604 = vmatprep.mubr.f32.mxu0 0.0
        %7605 = vmatmul.mubr.f32.gmra.mxu0 %v7055
        %v7606 = vpop.f32.mrf.mxu0
        %v7607 = vadd.f32 0.0, %v7606
        %v7608 = vpop.f32.mrf.mxu0
        %7609 = vmatprep.mubr.f32.mxu0 0.0
        %7610 = vmatmul.mubr.f32.gmra.mxu0 %v7058
        %v7611 = vpop.f32.mrf.mxu0
        %v7612 = vadd.f32 0.0, %v7611
        %v7613 = vpop.f32.mrf.mxu0
        %7614 = vmatprep.mubr.f32.mxu0 0.0
        %7615 = vmatmul.mubr.f32.gmra.mxu0 %v7061
        %v7616 = vpop.f32.mrf.mxu0
        %v7617 = vadd.f32 0.0, %v7616
        %v7618 = vpop.f32.mrf.mxu0
        %7619 = vmatprep.mubr.f32.mxu0 0.0
        %7620 = vmatmul.mubr.f32.gmra.mxu0 %v7064
        %v7621 = vpop.f32.mrf.mxu0
        %v7622 = vadd.f32 0.0, %v7621
        %v7623 = vpop.f32.mrf.mxu0
        %7624 = vmatprep.mubr.f32.mxu0 0.0
        %7625 = vmatmul.mubr.f32.gmra.mxu0 %v7067
        %v7626 = vpop.f32.mrf.mxu0
        %v7627 = vadd.f32 0.0, %v7626
        %v7628 = vpop.f32.mrf.mxu0
        %7629 = vmatprep.mubr.f32.mxu0 0.0
        %7630 = vmatmul.mubr.f32.gmra.mxu0 %v7070
        %v7631 = vpop.f32.mrf.mxu0
        %v7632 = vadd.f32 0.0, %v7631
        %v7633 = vpop.f32.mrf.mxu0
        %7634 = vmatprep.mubr.f32.mxu0 0.0
        %7635 = vmatmul.mubr.f32.gmra.mxu0 %v7073
        %v7636 = vpop.f32.mrf.mxu0
        %v7637 = vadd.f32 0.0, %v7636
        %v7638 = vpop.f32.mrf.mxu0
        %7639 = vmatprep.mubr.f32.mxu0 0.0
        %7640 = vmatmul.mubr.f32.gmra.mxu0 %v7076
        %v7641 = vpop.f32.mrf.mxu0
        %v7642 = vadd.f32 0.0, %v7641
        %v7643 = vpop.f32.mrf.mxu0
        %7644 = vmatprep.mubr.f32.mxu0 0.0
        %7645 = vmatmul.mubr.f32.gmra.mxu0 %v7079
        %v7646 = vpop.f32.mrf.mxu0
        %v7647 = vadd.f32 0.0, %v7646
        %v7648 = vpop.f32.mrf.mxu0
        %7649 = vmatprep.mubr.f32.mxu0 0.0
        %7650 = vmatmul.mubr.f32.gmra.mxu0 %v7082
        %v7651 = vpop.f32.mrf.mxu0
        %v7652 = vadd.f32 0.0, %v7651
        %v7653 = vpop.f32.mrf.mxu0
        %7654 = vmatprep.mubr.f32.mxu0 0.0
        %7655 = vmatmul.mubr.f32.gmra.mxu0 %v7085
        %v7656 = vpop.f32.mrf.mxu0
        %v7657 = vadd.f32 0.0, %v7656
        %v7658 = vpop.f32.mrf.mxu0
        %7659 = vmatprep.mubr.f32.mxu0 0.0
        %7660 = vmatmul.mubr.f32.gmra.mxu0 %v7088
        %v7661 = vpop.f32.mrf.mxu0
        %v7662 = vadd.f32 0.0, %v7661
        %v7663 = vpop.f32.mrf.mxu0
        %7664 = vmatprep.mubr.f32.mxu0 0.0
        %7665 = vmatmul.mubr.f32.gmra.mxu0 %v7091
        %v7666 = vpop.f32.mrf.mxu0
        %v7667 = vadd.f32 0.0, %v7666
        %v7668 = vpop.f32.mrf.mxu0
        %7669 = vmatprep.mubr.f32.mxu0 0.0
        %7670 = vmatmul.mubr.f32.gmra.mxu0 %v7094
        %v7671 = vpop.f32.mrf.mxu0
        %v7672 = vadd.f32 0.0, %v7671
        %v7673 = vpop.f32.mrf.mxu0
        %7674 = vmatprep.mubr.f32.mxu0 0.0
        %7675 = vmatmul.mubr.f32.gmra.mxu0 %v7097
        %v7676 = vpop.f32.mrf.mxu0
        %v7677 = vadd.f32 0.0, %v7676
        %v7678 = vpop.f32.mrf.mxu0
        %7679 = vmatprep.mubr.f32.mxu0 0.0
        %7680 = vmatmul.mubr.f32.gmra.mxu0 %v7100
        %v7681 = vpop.f32.mrf.mxu0
        %v7682 = vadd.f32 0.0, %v7681
        %v7683 = vpop.f32.mrf.mxu0
        %7684 = vmatprep.mubr.f32.mxu0 0.0
        %7685 = vmatmul.mubr.f32.gmra.mxu0 %v7103
        %v7686 = vpop.f32.mrf.mxu0
        %v7687 = vadd.f32 0.0, %v7686
        %v7688 = vpop.f32.mrf.mxu0
        %7689 = vmatprep.mubr.f32.mxu0 0.0
        %7690 = vmatmul.mubr.f32.gmra.mxu0 %v7106
        %v7691 = vpop.f32.mrf.mxu0
        %v7692 = vadd.f32 0.0, %v7691
        %v7693 = vpop.f32.mrf.mxu0
        %7694 = vmatprep.mubr.f32.mxu0 0.0
        %7695 = vmatmul.mubr.f32.gmra.mxu0 %v7109
        %v7696 = vpop.f32.mrf.mxu0
        %v7697 = vadd.f32 0.0, %v7696
        %v7698 = vpop.f32.mrf.mxu0
        %7699 = vmatprep.mubr.f32.mxu0 0.0
        %7700 = vmatmul.mubr.f32.gmra.mxu0 %v7112
        %v7701 = vpop.f32.mrf.mxu0
        %v7702 = vadd.f32 0.0, %v7701
        %v7703 = vpop.f32.mrf.mxu0
        %7704 = vmatprep.mubr.f32.mxu0 0.0
        %7705 = vmatmul.mubr.f32.gmra.mxu0 %v7115
        %v7706 = vpop.f32.mrf.mxu0
        %v7707 = vadd.f32 0.0, %v7706
        %v7708 = vpop.f32.mrf.mxu0
        %7709 = vmatprep.mubr.f32.mxu0 0.0
        %7710 = vmatmul.mubr.f32.gmra.mxu0 %v7118
        %v7711 = vpop.f32.mrf.mxu0
        %v7712 = vadd.f32 0.0, %v7711
        %v7713 = vpop.f32.mrf.mxu0
        %7714 = vmatprep.mubr.f32.mxu0 0.0
        %7715 = vmatmul.mubr.f32.gmra.mxu0 %v7121
        %v7716 = vpop.f32.mrf.mxu0
        %v7717 = vadd.f32 0.0, %v7716
        %v7718 = vpop.f32.mrf.mxu0
        %7719 = vmatprep.mubr.f32.mxu0 0.0
        %7720 = vmatmul.mubr.f32.gmra.mxu0 %v7124
        %v7721 = vpop.f32.mrf.mxu0
        %v7722 = vadd.f32 0.0, %v7721
        %v7723 = vpop.f32.mrf.mxu0
        %7724 = vmatprep.mubr.f32.mxu0 0.0
        %7725 = vmatmul.mubr.f32.gmra.mxu0 %v7127
        %v7726 = vpop.f32.mrf.mxu0
        %v7727 = vadd.f32 0.0, %v7726
        %v7728 = vpop.f32.mrf.mxu0
        %7729 = vmatprep.mubr.f32.mxu0 0.0
        %7730 = vmatmul.mubr.f32.gmra.mxu0 %v7130
        %v7731 = vpop.f32.mrf.mxu0
        %v7732 = vadd.f32 0.0, %v7731
        %v7733 = vpop.f32.mrf.mxu0
        %7734 = vmatprep.mubr.f32.mxu0 0.0
        %7735 = vmatmul.mubr.f32.gmra.mxu0 %v7133
        %v7736 = vpop.f32.mrf.mxu0
        %v7737 = vadd.f32 0.0, %v7736
        %v7738 = vpop.f32.mrf.mxu0
        %7739 = vmatprep.mubr.f32.mxu0 0.0
        %7740 = vmatmul.mubr.f32.gmra.mxu0 %v7136
        %v7741 = vpop.f32.mrf.mxu0
        %v7742 = vadd.f32 0.0, %v7741
        %v7743 = vpop.f32.mrf.mxu0
        %7744 = vmatprep.mubr.f32.mxu0 0.0
        %7745 = vmatmul.mubr.f32.gmra.mxu0 %v7139
        %v7746 = vpop.f32.mrf.mxu0
        %v7747 = vadd.f32 0.0, %v7746
        %v7748 = vpop.f32.mrf.mxu0
        %7749 = vmatprep.mubr.f32.mxu0 0.0
        %7750 = vmatmul.mubr.f32.gmra.mxu0 %v7142
        %v7751 = vpop.f32.mrf.mxu0
        %v7752 = vadd.f32 0.0, %v7751
        %v7753 = vpop.f32.mrf.mxu0
        %7754 = vmatprep.mubr.f32.mxu0 0.0
        %7755 = vmatmul.mubr.f32.gmra.mxu0 %v7145
        %v7756 = vpop.f32.mrf.mxu0
        %v7757 = vadd.f32 0.0, %v7756
        %v7758 = vpop.f32.mrf.mxu0
        %7759 = vmatprep.mubr.f32.mxu0 0.0
        %7760 = vmatmul.mubr.f32.gmra.mxu0 %v7148
        %v7761 = vpop.f32.mrf.mxu0
        %v7762 = vadd.f32 0.0, %v7761
        %v7763 = vpop.f32.mrf.mxu0
        %7764 = vmatprep.mubr.f32.mxu0 0.0
        %7765 = vmatmul.mubr.f32.gmra.mxu0 %v7151
        %v7766 = vpop.f32.mrf.mxu0
        %v7767 = vadd.f32 0.0, %v7766
        %v7768 = vpop.f32.mrf.mxu0
        %7769 = vmatprep.mubr.f32.mxu0 0.0
        %7770 = vmatmul.mubr.f32.gmra.mxu0 %v7154
        %v7771 = vpop.f32.mrf.mxu0
        %v7772 = vadd.f32 0.0, %v7771
        %v7773 = vpop.f32.mrf.mxu0
        %7774 = vmatprep.mubr.f32.mxu0 0.0
        %7775 = vmatmul.mubr.f32.gmra.mxu0 %v7157
        %v7776 = vpop.f32.mrf.mxu0
        %v7777 = vadd.f32 0.0, %v7776
        %v7778 = vpop.f32.mrf.mxu0
        %7779 = vmatprep.mubr.f32.mxu0 0.0
        %7780 = vmatmul.mubr.f32.gmra.mxu0 %v7160
        %v7781 = vpop.f32.mrf.mxu0
        %v7782 = vadd.f32 0.0, %v7781
        %v7783 = vpop.f32.mrf.mxu0
        %7784 = vmatprep.mubr.f32.mxu0 0.0
        %7785 = vmatmul.mubr.f32.gmra.mxu0 %v7163
        %v7786 = vpop.f32.mrf.mxu0
        %v7787 = vadd.f32 0.0, %v7786
        %v7788 = vpop.f32.mrf.mxu0
        %7789 = vmatprep.mubr.f32.mxu0 0.0
        %7790 = vmatmul.mubr.f32.gmra.mxu0 %v7166
        %v7791 = vpop.f32.mrf.mxu0
        %v7792 = vadd.f32 0.0, %v7791
        %v7793 = vpop.f32.mrf.mxu0
        %7794 = vmatprep.mubr.f32.mxu0 0.0
        %7795 = vmatmul.mubr.f32.gmra.mxu0 %v7169
        %v7796 = vpop.f32.mrf.mxu0
        %v7797 = vadd.f32 0.0, %v7796
        %v7798 = vpop.f32.mrf.mxu0
        %7799 = vmatprep.mubr.f32.mxu0 0.0
        %7800 = vmatmul.mubr.f32.gmra.mxu0 %v7172
        %v7801 = vpop.f32.mrf.mxu0
        %v7802 = vadd.f32 0.0, %v7801
        %v7803 = vpop.f32.mrf.mxu0
        %7804 = vmatprep.mubr.f32.mxu0 0.0
        %7805 = vmatmul.mubr.f32.gmra.mxu0 %v7175
        %v7806 = vpop.f32.mrf.mxu0
        %v7807 = vadd.f32 0.0, %v7806
        %v7808 = vpop.f32.mrf.mxu0
        %7809 = vmatprep.mubr.f32.mxu0 0.0
        %7810 = vmatmul.mubr.f32.gmra.mxu0 %v7178
        %v7811 = vpop.f32.mrf.mxu0
        %v7812 = vadd.f32 0.0, %v7811
        %v7813 = vpop.f32.mrf.mxu0
        %7814 = vmatprep.mubr.f32.mxu0 0.0
        %7815 = vmatmul.mubr.f32.gmra.mxu0 %v7181
        %v7816 = vpop.f32.mrf.mxu0
        %v7817 = vadd.f32 0.0, %v7816
        %v7818 = vpop.f32.mrf.mxu0
        %7819 = vmatprep.mubr.f32.mxu0 0.0
        %7820 = vmatmul.mubr.f32.gmra.mxu0 %v7184
        %v7821 = vpop.f32.mrf.mxu0
        %v7822 = vadd.f32 0.0, %v7821
        %v7823 = vpop.f32.mrf.mxu0
        %7824 = vmatprep.mubr.f32.mxu0 0.0
        %7825 = vmatmul.mubr.f32.gmra.mxu0 %v7187
        %v7826 = vpop.f32.mrf.mxu0
        %v7827 = vadd.f32 0.0, %v7826
        %v7828 = vpop.f32.mrf.mxu0
        %7829 = vmatprep.mubr.f32.mxu0 0.0
        %7830 = vmatmul.mubr.f32.gmra.mxu0 %v7190
        %v7831 = vpop.f32.mrf.mxu0
        %v7832 = vadd.f32 0.0, %v7831
        %v7833 = vpop.f32.mrf.mxu0
        %7834 = vmatprep.mubr.f32.mxu0 0.0
        %7835 = vmatmul.mubr.f32.gmra.mxu0 %v7193
        %v7836 = vpop.f32.mrf.mxu0
        %v7837 = vadd.f32 0.0, %v7836
        %v7838 = vpop.f32.mrf.mxu0
        %7839 = vmatprep.mubr.f32.mxu0 0.0
        %7840 = vmatmul.mubr.f32.gmra.mxu0 %v7196
        %v7841 = vpop.f32.mrf.mxu0
        %v7842 = vadd.f32 0.0, %v7841
        %v7843 = vpop.f32.mrf.mxu0
        %7844 = vmatprep.mubr.f32.mxu0 0.0
        %7845 = vmatmul.mubr.f32.gmra.mxu0 %v7199
        %v7846 = vpop.f32.mrf.mxu0
        %v7847 = vadd.f32 0.0, %v7846
        %v7848 = vpop.f32.mrf.mxu0
        %7849 = vmatprep.mubr.f32.mxu0 0.0
        %7850 = vmatmul.mubr.f32.gmra.mxu0 %v7202
        %v7851 = vpop.f32.mrf.mxu0
        %v7852 = vadd.f32 0.0, %v7851
        %v7853 = vpop.f32.mrf.mxu0
        %7854 = vmatprep.mubr.f32.mxu0 0.0
        %7855 = vmatmul.mubr.f32.gmra.mxu0 %v7205
        %v7856 = vpop.f32.mrf.mxu0
        %v7857 = vadd.f32 0.0, %v7856
        %v7858 = vpop.f32.mrf.mxu0
        %7859 = vmatprep.mubr.f32.mxu0 0.0
        %7860 = vmatmul.mubr.f32.gmra.mxu0 %v7208
        %v7861 = vpop.f32.mrf.mxu0
        %v7862 = vadd.f32 0.0, %v7861
        %v7863 = vpop.f32.mrf.mxu0
        %7864 = vmatprep.mubr.f32.mxu0 0.0
        %7865 = vmatmul.mubr.f32.gmra.mxu0 %v7211
        %v7866 = vpop.f32.mrf.mxu0
        %v7867 = vadd.f32 0.0, %v7866
        %v7868 = vpop.f32.mrf.mxu0
        %7869 = vmatprep.mubr.f32.mxu0 0.0
        %7870 = vmatmul.mubr.f32.gmra.mxu0 %v7214
        %v7871 = vpop.f32.mrf.mxu0
        %v7872 = vadd.f32 0.0, %v7871
        %v7873 = vpop.f32.mrf.mxu0
        %7874 = vmatprep.mubr.f32.mxu0 0.0
        %7875 = vmatmul.mubr.f32.gmra.mxu0 %v7217
        %v7876 = vpop.f32.mrf.mxu0
        %v7877 = vadd.f32 0.0, %v7876
        %v7878 = vpop.f32.mrf.mxu0
        %7879 = vmatprep.mubr.f32.mxu0 0.0
        %7880 = vmatmul.mubr.f32.gmra.mxu0 %v7220
        %v7881 = vpop.f32.mrf.mxu0
        %v7882 = vadd.f32 0.0, %v7881
        %v7883 = vpop.f32.mrf.mxu0
        %7884 = vmatprep.mubr.f32.mxu0 0.0
        %7885 = vmatmul.mubr.f32.gmra.mxu0 %v7223
        %v7886 = vpop.f32.mrf.mxu0
        %v7887 = vadd.f32 0.0, %v7886
        %v7888 = vpop.f32.mrf.mxu0
        %7889 = vmatprep.mubr.f32.mxu0 0.0
        %7890 = vmatmul.mubr.f32.gmra.mxu0 %v7226
        %v7891 = vpop.f32.mrf.mxu0
        %v7892 = vadd.f32 0.0, %v7891
        %v7893 = vpop.f32.mrf.mxu0
        %7894 = vmatprep.mubr.f32.mxu0 0.0
        %7895 = vmatmul.mubr.f32.gmra.mxu0 %v7229
        %v7896 = vpop.f32.mrf.mxu0
        %v7897 = vadd.f32 0.0, %v7896
        %v7898 = vpop.f32.mrf.mxu0
        %7899 = vmatprep.mubr.f32.mxu0 0.0
        %7900 = vmatmul.mubr.f32.gmra.mxu0 %v7232
        %v7901 = vpop.f32.mrf.mxu0
        %v7902 = vadd.f32 0.0, %v7901
        %v7903 = vpop.f32.mrf.mxu0
        %7904 = vmatprep.mubr.f32.mxu0 0.0
        %7905 = vmatmul.mubr.f32.gmra.mxu0 %v7235
        %v7906 = vpop.f32.mrf.mxu0
        %v7907 = vadd.f32 0.0, %v7906
        %v7908 = vpop.f32.mrf.mxu0
        %7909 = vmatprep.mubr.f32.mxu0 0.0
        %7910 = vmatmul.mubr.f32.gmra.mxu0 %v7238
        %v7911 = vpop.f32.mrf.mxu0
        %v7912 = vadd.f32 0.0, %v7911
        %v7913 = vpop.f32.mrf.mxu0
        %7914 = vmatprep.mubr.f32.mxu0 0.0
        %7915 = vmatmul.mubr.f32.gmra.mxu0 %v7241
        %v7916 = vpop.f32.mrf.mxu0
        %v7917 = vadd.f32 0.0, %v7916
        %v7918 = vpop.f32.mrf.mxu0
        %7919 = vmatprep.mubr.f32.mxu0 0.0
        %7920 = vmatmul.mubr.f32.gmra.mxu0 %v7244
        %v7921 = vpop.f32.mrf.mxu0
        %v7922 = vadd.f32 0.0, %v7921
        %v7923 = vpop.f32.mrf.mxu0
        %7924 = vmatprep.mubr.f32.mxu0 0.0
        %7925 = vmatmul.mubr.f32.gmra.mxu0 %v7247
        %v7926 = vpop.f32.mrf.mxu0
        %v7927 = vadd.f32 0.0, %v7926
        %v7928 = vpop.f32.mrf.mxu0
        %7929 = vmatprep.mubr.f32.mxu0 0.0
        %7930 = vmatmul.mubr.f32.gmra.mxu0 %v7250
        %v7931 = vpop.f32.mrf.mxu0
        %v7932 = vadd.f32 0.0, %v7931
        %v7933 = vpop.f32.mrf.mxu0
        %7934 = vmatprep.mubr.f32.mxu0 0.0
        %7935 = vmatmul.mubr.f32.gmra.mxu0 %v7253
        %v7936 = vpop.f32.mrf.mxu0
        %v7937 = vadd.f32 0.0, %v7936
        %v7938 = vpop.f32.mrf.mxu0
        %7939 = vmatprep.mubr.f32.mxu0 0.0
        %7940 = vmatmul.mubr.f32.gmra.mxu0 %v7256
        %v7941 = vpop.f32.mrf.mxu0
        %v7942 = vadd.f32 0.0, %v7941
        %v7943 = vpop.f32.mrf.mxu0
        %7944 = vmatprep.mubr.f32.mxu0 0.0
        %7945 = vmatmul.mubr.f32.gmra.mxu0 %v7259
        %v7946 = vpop.f32.mrf.mxu0
        %v7947 = vadd.f32 0.0, %v7946
        %v7948 = vpop.f32.mrf.mxu0
        %7949 = vmatprep.mubr.f32.mxu0 0.0
        %7950 = vmatmul.mubr.f32.gmra.mxu0 %v7262
        %v7951 = vpop.f32.mrf.mxu0
        %v7952 = vadd.f32 0.0, %v7951
        %v7953 = vpop.f32.mrf.mxu0
        %7954 = vmatprep.mubr.f32.mxu0 0.0
        %7955 = vmatmul.mubr.f32.gmra.mxu0 %v7265
        %v7956 = vpop.f32.mrf.mxu0
        %v7957 = vadd.f32 0.0, %v7956
        %v7958 = vpop.f32.mrf.mxu0
        %7959 = vmatprep.mubr.f32.mxu0 0.0
        %7960 = vmatmul.mubr.f32.gmra.mxu0 %v7268
        %v7961 = vpop.f32.mrf.mxu0
        %v7962 = vadd.f32 0.0, %v7961
        %v7963 = vpop.f32.mrf.mxu0
        %7964 = vmatprep.mubr.f32.mxu0 0.0
        %7965 = vmatmul.mubr.f32.gmra.mxu0 %v7271
        %v7966 = vpop.f32.mrf.mxu0
        %v7967 = vadd.f32 0.0, %v7966
        %v7968 = vpop.f32.mrf.mxu0
        %7969 = vmatprep.mubr.f32.mxu0 0.0
        %7970 = vmatmul.mubr.f32.gmra.mxu0 %v7274
        %v7971 = vpop.f32.mrf.mxu0
        %v7972 = vadd.f32 0.0, %v7971
        %v7973 = vpop.f32.mrf.mxu0
        %7974 = vmatprep.mubr.f32.mxu0 0.0
        %7975 = vmatmul.mubr.f32.gmra.mxu0 %v7277
        %v7976 = vpop.f32.mrf.mxu0
        %v7977 = vadd.f32 0.0, %v7976
        %v7978 = vpop.f32.mrf.mxu0
        %7979 = vmatprep.mubr.f32.mxu0 0.0
        %7980 = vmatmul.mubr.f32.gmra.mxu0 %v7280
        %v7981 = vpop.f32.mrf.mxu0
        %v7982 = vadd.f32 0.0, %v7981
        %v7983 = vpop.f32.mrf.mxu0
        %7984 = vmatprep.mubr.f32.mxu0 0.0
        %7985 = vmatmul.mubr.f32.gmra.mxu0 %v7283
        %v7986 = vpop.f32.mrf.mxu0
        %v7987 = vadd.f32 0.0, %v7986
        %v7988 = vpop.f32.mrf.mxu0
        %7989 = vmatprep.mubr.f32.mxu0 0.0
        %7990 = vmatmul.mubr.f32.gmra.mxu0 %v7286
        %v7991 = vpop.f32.mrf.mxu0
        %v7992 = vadd.f32 0.0, %v7991
        %v7993 = vpop.f32.mrf.mxu0
        %7994 = vmatprep.mubr.f32.mxu0 0.0
        %7995 = vmatmul.mubr.f32.gmra.mxu0 %v7289
        %v7996 = vpop.f32.mrf.mxu0
        %v7997 = vadd.f32 0.0, %v7996
        %v7998 = vpop.f32.mrf.mxu0
        %7999 = vdwg.mxu0
        %v8000 = vmax.f32 %v7362, 0.0
        %v8001 = vmax.f32 %v7367, 0.0
        %v8002 = vmax.f32 %v7372, 0.0
        %v8003 = vmax.f32 %v7377, 0.0
        %v8004 = vmax.f32 %v7382, 0.0
        %v8005 = vmax.f32 %v7387, 0.0
        %v8006 = vmax.f32 %v7392, 0.0
        %v8007 = vmax.f32 %v7397, 0.0
        %v8008 = vmax.f32 %v7402, 0.0
        %v8009 = vmax.f32 %v7407, 0.0
        %v8010 = vmax.f32 %v7412, 0.0
        %v8011 = vmax.f32 %v7417, 0.0
        %v8012 = vmax.f32 %v7422, 0.0
        %v8013 = vmax.f32 %v7427, 0.0
        %v8014 = vmax.f32 %v7432, 0.0
        %v8015 = vmax.f32 %v7437, 0.0
        %v8016 = vmax.f32 %v7442, 0.0
        %v8017 = vmax.f32 %v7447, 0.0
        %v8018 = vmax.f32 %v7452, 0.0
        %v8019 = vmax.f32 %v7457, 0.0
        %v8020 = vmax.f32 %v7462, 0.0
        %v8021 = vmax.f32 %v7467, 0.0
        %v8022 = vmax.f32 %v7472, 0.0
        %v8023 = vmax.f32 %v7477, 0.0
        %v8024 = vmax.f32 %v7482, 0.0
        %v8025 = vmax.f32 %v7487, 0.0
        %v8026 = vmax.f32 %v7492, 0.0
        %v8027 = vmax.f32 %v7497, 0.0
        %v8028 = vmax.f32 %v7502, 0.0
        %v8029 = vmax.f32 %v7507, 0.0
        %v8030 = vmax.f32 %v7512, 0.0
        %v8031 = vmax.f32 %v7517, 0.0
        %v8032 = vmax.f32 %v7522, 0.0
        %v8033 = vmax.f32 %v7527, 0.0
        %v8034 = vmax.f32 %v7532, 0.0
        %v8035 = vmax.f32 %v7537, 0.0
        %v8036 = vmax.f32 %v7542, 0.0
        %v8037 = vmax.f32 %v7547, 0.0
        %v8038 = vmax.f32 %v7552, 0.0
        %v8039 = vmax.f32 %v7557, 0.0
        %v8040 = vmax.f32 %v7562, 0.0
        %v8041 = vmax.f32 %v7567, 0.0
        %v8042 = vmax.f32 %v7572, 0.0
        %v8043 = vmax.f32 %v7577, 0.0
        %v8044 = vmax.f32 %v7582, 0.0
        %v8045 = vmax.f32 %v7587, 0.0
        %v8046 = vmax.f32 %v7592, 0.0
        %v8047 = vmax.f32 %v7597, 0.0
        %v8048 = vmax.f32 %v7602, 0.0
        %v8049 = vmax.f32 %v7607, 0.0
        %v8050 = vmax.f32 %v7612, 0.0
        %v8051 = vmax.f32 %v7617, 0.0
        %v8052 = vmax.f32 %v7622, 0.0
        %v8053 = vmax.f32 %v7627, 0.0
        %v8054 = vmax.f32 %v7632, 0.0
        %v8055 = vmax.f32 %v7637, 0.0
        %v8056 = vmax.f32 %v7642, 0.0
        %v8057 = vmax.f32 %v7647, 0.0
        %v8058 = vmax.f32 %v7652, 0.0
        %v8059 = vmax.f32 %v7657, 0.0
        %v8060 = vmax.f32 %v7662, 0.0
        %v8061 = vmax.f32 %v7667, 0.0
        %v8062 = vmax.f32 %v7672, 0.0
        %v8063 = vmax.f32 %v7677, 0.0
        %v8064 = vmax.f32 %v7682, 0.0
        %v8065 = vmax.f32 %v7687, 0.0
        %v8066 = vmax.f32 %v7692, 0.0
        %v8067 = vmax.f32 %v7697, 0.0
        %v8068 = vmax.f32 %v7702, 0.0
        %v8069 = vmax.f32 %v7707, 0.0
        %v8070 = vmax.f32 %v7712, 0.0
        %v8071 = vmax.f32 %v7717, 0.0
        %v8072 = vmax.f32 %v7722, 0.0
        %v8073 = vmax.f32 %v7727, 0.0
        %v8074 = vmax.f32 %v7732, 0.0
        %v8075 = vmax.f32 %v7737, 0.0
        %v8076 = vmax.f32 %v7742, 0.0
        %v8077 = vmax.f32 %v7747, 0.0
        %v8078 = vmax.f32 %v7752, 0.0
        %v8079 = vmax.f32 %v7757, 0.0
        %v8080 = vmax.f32 %v7762, 0.0
        %v8081 = vmax.f32 %v7767, 0.0
        %v8082 = vmax.f32 %v7772, 0.0
        %v8083 = vmax.f32 %v7777, 0.0
        %v8084 = vmax.f32 %v7782, 0.0
        %v8085 = vmax.f32 %v7787, 0.0
        %v8086 = vmax.f32 %v7792, 0.0
        %v8087 = vmax.f32 %v7797, 0.0
        %v8088 = vmax.f32 %v7802, 0.0
        %v8089 = vmax.f32 %v7807, 0.0
        %v8090 = vmax.f32 %v7812, 0.0
        %v8091 = vmax.f32 %v7817, 0.0
        %v8092 = vmax.f32 %v7822, 0.0
        %v8093 = vmax.f32 %v7827, 0.0
        %v8094 = vmax.f32 %v7832, 0.0
        %v8095 = vmax.f32 %v7837, 0.0
        %v8096 = vmax.f32 %v7842, 0.0
        %v8097 = vmax.f32 %v7847, 0.0
        %v8098 = vmax.f32 %v7852, 0.0
        %v8099 = vmax.f32 %v7857, 0.0
        %v8100 = vmax.f32 %v7862, 0.0
        %v8101 = vmax.f32 %v7867, 0.0
        %v8102 = vmax.f32 %v7872, 0.0
        %v8103 = vmax.f32 %v7877, 0.0
        %v8104 = vmax.f32 %v7882, 0.0
        %v8105 = vmax.f32 %v7887, 0.0
        %v8106 = vmax.f32 %v7892, 0.0
        %v8107 = vmax.f32 %v7897, 0.0
        %v8108 = vmax.f32 %v7902, 0.0
        %v8109 = vmax.f32 %v7907, 0.0
        %v8110 = vmax.f32 %v7912, 0.0
        %v8111 = vmax.f32 %v7917, 0.0
        %v8112 = vmax.f32 %v7922, 0.0
        %v8113 = vmax.f32 %v7927, 0.0
        %v8114 = vmax.f32 %v7932, 0.0
        %v8115 = vmax.f32 %v7937, 0.0
        %v8116 = vmax.f32 %v7942, 0.0
        %v8117 = vmax.f32 %v7947, 0.0
        %v8118 = vmax.f32 %v7952, 0.0
        %v8119 = vmax.f32 %v7957, 0.0
        %v8120 = vmax.f32 %v7962, 0.0
        %v8121 = vmax.f32 %v7967, 0.0
        %v8122 = vmax.f32 %v7972, 0.0
        %v8123 = vmax.f32 %v7977, 0.0
        %v8124 = vmax.f32 %v7982, 0.0
        %v8125 = vmax.f32 %v7987, 0.0
        %v8126 = vmax.f32 %v7992, 0.0
        %v8127 = vmax.f32 %v7997, 0.0
        %8128 = vst [vmem:[%s274] sm:$0xff] %v8000
        %8129 = vst [vmem:[%s274 + $0x8] sm:$0xff] %v8001
        %8130 = vst [vmem:[%s274 + $0x10] sm:$0xff] %v8002
        %8131 = vst [vmem:[%s274 + $0x18] sm:$0xff] %v8003
        %8132 = vst [vmem:[%s274 + $0x20] sm:$0xff] %v8004
        %8133 = vst [vmem:[%s274 + $0x28] sm:$0xff] %v8005
        %8134 = vst [vmem:[%s274 + $0x30] sm:$0xff] %v8006
        %8135 = vst [vmem:[%s274 + $0x38] sm:$0xff] %v8007
        %8136 = vst [vmem:[%s274 + $0x40] sm:$0xff] %v8008
        %8137 = vst [vmem:[%s274 + $0x48] sm:$0xff] %v8009
        %8138 = vst [vmem:[%s274 + $0x50] sm:$0xff] %v8010
        %8139 = vst [vmem:[%s274 + $0x58] sm:$0xff] %v8011
        %8140 = vst [vmem:[%s274 + $0x60] sm:$0xff] %v8012
        %8141 = vst [vmem:[%s274 + $0x68] sm:$0xff] %v8013
        %8142 = vst [vmem:[%s274 + $0x70] sm:$0xff] %v8014
        %8143 = vst [vmem:[%s274 + $0x78] sm:$0xff] %v8015
        %8144 = vst [vmem:[%s274 + $0x80] sm:$0xff] %v8016
        %8145 = vst [vmem:[%s274 + $0x88] sm:$0xff] %v8017
        %8146 = vst [vmem:[%s274 + $0x90] sm:$0xff] %v8018
        %8147 = vst [vmem:[%s274 + $0x98] sm:$0xff] %v8019
        %8148 = vst [vmem:[%s274 + $0xa0] sm:$0xff] %v8020
        %8149 = vst [vmem:[%s274 + $0xa8] sm:$0xff] %v8021
        %8150 = vst [vmem:[%s274 + $0xb0] sm:$0xff] %v8022
        %8151 = vst [vmem:[%s274 + $0xb8] sm:$0xff] %v8023
        %8152 = vst [vmem:[%s274 + $0xc0] sm:$0xff] %v8024
        %8153 = vst [vmem:[%s274 + $0xc8] sm:$0xff] %v8025
        %8154 = vst [vmem:[%s274 + $0xd0] sm:$0xff] %v8026
        %8155 = vst [vmem:[%s274 + $0xd8] sm:$0xff] %v8027
        %8156 = vst [vmem:[%s274 + $0xe0] sm:$0xff] %v8028
        %8157 = vst [vmem:[%s274 + $0xe8] sm:$0xff] %v8029
        %8158 = vst [vmem:[%s274 + $0xf0] sm:$0xff] %v8030
        %8159 = vst [vmem:[%s274 + $0xf8] sm:$0xff] %v8031
        %8160 = vst [vmem:[%s274 + $0x100] sm:$0xff] %v8032
        %8161 = vst [vmem:[%s274 + $0x108] sm:$0xff] %v8033
        %8162 = vst [vmem:[%s274 + $0x110] sm:$0xff] %v8034
        %8163 = vst [vmem:[%s274 + $0x118] sm:$0xff] %v8035
        %8164 = vst [vmem:[%s274 + $0x120] sm:$0xff] %v8036
        %8165 = vst [vmem:[%s274 + $0x128] sm:$0xff] %v8037
        %8166 = vst [vmem:[%s274 + $0x130] sm:$0xff] %v8038
        %8167 = vst [vmem:[%s274 + $0x138] sm:$0xff] %v8039
        %8168 = vst [vmem:[%s274 + $0x140] sm:$0xff] %v8040
        %8169 = vst [vmem:[%s274 + $0x148] sm:$0xff] %v8041
        %8170 = vst [vmem:[%s274 + $0x150] sm:$0xff] %v8042
        %8171 = vst [vmem:[%s274 + $0x158] sm:$0xff] %v8043
        %8172 = vst [vmem:[%s274 + $0x160] sm:$0xff] %v8044
        %8173 = vst [vmem:[%s274 + $0x168] sm:$0xff] %v8045
        %8174 = vst [vmem:[%s274 + $0x170] sm:$0xff] %v8046
        %8175 = vst [vmem:[%s274 + $0x178] sm:$0xff] %v8047
        %8176 = vst [vmem:[%s274 + $0x180] sm:$0xff] %v8048
        %8177 = vst [vmem:[%s274 + $0x188] sm:$0xff] %v8049
        %8178 = vst [vmem:[%s274 + $0x190] sm:$0xff] %v8050
        %8179 = vst [vmem:[%s274 + $0x198] sm:$0xff] %v8051
        %8180 = vst [vmem:[%s274 + $0x1a0] sm:$0xff] %v8052
        %8181 = vst [vmem:[%s274 + $0x1a8] sm:$0xff] %v8053
        %8182 = vst [vmem:[%s274 + $0x1b0] sm:$0xff] %v8054
        %8183 = vst [vmem:[%s274 + $0x1b8] sm:$0xff] %v8055
        %8184 = vst [vmem:[%s274 + $0x1c0] sm:$0xff] %v8056
        %8185 = vst [vmem:[%s274 + $0x1c8] sm:$0xff] %v8057
        %8186 = vst [vmem:[%s274 + $0x1d0] sm:$0xff] %v8058
        %8187 = vst [vmem:[%s274 + $0x1d8] sm:$0xff] %v8059
        %8188 = vst [vmem:[%s274 + $0x1e0] sm:$0xff] %v8060
        %8189 = vst [vmem:[%s274 + $0x1e8] sm:$0xff] %v8061
        %8190 = vst [vmem:[%s274 + $0x1f0] sm:$0xff] %v8062
        %8191 = vst [vmem:[%s274 + $0x1f8] sm:$0xff] %v8063
        %8192 = vst [vmem:[%s274 + $0x200] sm:$0xff] %v8064
        %8193 = vst [vmem:[%s274 + $0x208] sm:$0xff] %v8065
        %8194 = vst [vmem:[%s274 + $0x210] sm:$0xff] %v8066
        %8195 = vst [vmem:[%s274 + $0x218] sm:$0xff] %v8067
        %8196 = vst [vmem:[%s274 + $0x220] sm:$0xff] %v8068
        %8197 = vst [vmem:[%s274 + $0x228] sm:$0xff] %v8069
        %8198 = vst [vmem:[%s274 + $0x230] sm:$0xff] %v8070
        %8199 = vst [vmem:[%s274 + $0x238] sm:$0xff] %v8071
        %8200 = vst [vmem:[%s274 + $0x240] sm:$0xff] %v8072
        %8201 = vst [vmem:[%s274 + $0x248] sm:$0xff] %v8073
        %8202 = vst [vmem:[%s274 + $0x250] sm:$0xff] %v8074
        %8203 = vst [vmem:[%s274 + $0x258] sm:$0xff] %v8075
        %8204 = vst [vmem:[%s274 + $0x260] sm:$0xff] %v8076
        %8205 = vst [vmem:[%s274 + $0x268] sm:$0xff] %v8077
        %8206 = vst [vmem:[%s274 + $0x270] sm:$0xff] %v8078
        %8207 = vst [vmem:[%s274 + $0x278] sm:$0xff] %v8079
        %8208 = vst [vmem:[%s274 + $0x280] sm:$0xff] %v8080
        %8209 = vst [vmem:[%s274 + $0x288] sm:$0xff] %v8081
        %8210 = vst [vmem:[%s274 + $0x290] sm:$0xff] %v8082
        %8211 = vst [vmem:[%s274 + $0x298] sm:$0xff] %v8083
        %8212 = vst [vmem:[%s274 + $0x2a0] sm:$0xff] %v8084
        %8213 = vst [vmem:[%s274 + $0x2a8] sm:$0xff] %v8085
        %8214 = vst [vmem:[%s274 + $0x2b0] sm:$0xff] %v8086
        %8215 = vst [vmem:[%s274 + $0x2b8] sm:$0xff] %v8087
        %8216 = vst [vmem:[%s274 + $0x2c0] sm:$0xff] %v8088
        %8217 = vst [vmem:[%s274 + $0x2c8] sm:$0xff] %v8089
        %8218 = vst [vmem:[%s274 + $0x2d0] sm:$0xff] %v8090
        %8219 = vst [vmem:[%s274 + $0x2d8] sm:$0xff] %v8091
        %8220 = vst [vmem:[%s274 + $0x2e0] sm:$0xff] %v8092
        %8221 = vst [vmem:[%s274 + $0x2e8] sm:$0xff] %v8093
        %8222 = vst [vmem:[%s274 + $0x2f0] sm:$0xff] %v8094
        %8223 = vst [vmem:[%s274 + $0x2f8] sm:$0xff] %v8095
        %8224 = vst [vmem:[%s274 + $0x300] sm:$0xff] %v8096
        %8225 = vst [vmem:[%s274 + $0x308] sm:$0xff] %v8097
        %8226 = vst [vmem:[%s274 + $0x310] sm:$0xff] %v8098
        %8227 = vst [vmem:[%s274 + $0x318] sm:$0xff] %v8099
        %8228 = vst [vmem:[%s274 + $0x320] sm:$0xff] %v8100
        %8229 = vst [vmem:[%s274 + $0x328] sm:$0xff] %v8101
        %8230 = vst [vmem:[%s274 + $0x330] sm:$0xff] %v8102
        %8231 = vst [vmem:[%s274 + $0x338] sm:$0xff] %v8103
        %8232 = vst [vmem:[%s274 + $0x340] sm:$0xff] %v8104
        %8233 = vst [vmem:[%s274 + $0x348] sm:$0xff] %v8105
        %8234 = vst [vmem:[%s274 + $0x350] sm:$0xff] %v8106
        %8235 = vst [vmem:[%s274 + $0x358] sm:$0xff] %v8107
        %8236 = vst [vmem:[%s274 + $0x360] sm:$0xff] %v8108
        %8237 = vst [vmem:[%s274 + $0x368] sm:$0xff] %v8109
        %8238 = vst [vmem:[%s274 + $0x370] sm:$0xff] %v8110
        %8239 = vst [vmem:[%s274 + $0x378] sm:$0xff] %v8111
        %8240 = vst [vmem:[%s274 + $0x380] sm:$0xff] %v8112
        %8241 = vst [vmem:[%s274 + $0x388] sm:$0xff] %v8113
        %8242 = vst [vmem:[%s274 + $0x390] sm:$0xff] %v8114
        %8243 = vst [vmem:[%s274 + $0x398] sm:$0xff] %v8115
        %8244 = vst [vmem:[%s274 + $0x3a0] sm:$0xff] %v8116
        %8245 = vst [vmem:[%s274 + $0x3a8] sm:$0xff] %v8117
        %8246 = vst [vmem:[%s274 + $0x3b0] sm:$0xff] %v8118
        %8247 = vst [vmem:[%s274 + $0x3b8] sm:$0xff] %v8119
        %8248 = vst [vmem:[%s274 + $0x3c0] sm:$0xff] %v8120
        %8249 = vst [vmem:[%s274 + $0x3c8] sm:$0xff] %v8121
        %8250 = vst [vmem:[%s274 + $0x3d0] sm:$0xff] %v8122
        %8251 = vst [vmem:[%s274 + $0x3d8] sm:$0xff] %v8123
        %8252 = vst [vmem:[%s274 + $0x3e0] sm:$0xff] %v8124
        %8253 = vst [vmem:[%s274 + $0x3e8] sm:$0xff] %v8125
        %8254 = vst [vmem:[%s274 + $0x3f0] sm:$0xff] %v8126
        %8255 = vst [vmem:[%s274 + $0x3f8] sm:$0xff] %v8127
        %s8256 = sand.u32 %s152, 1
        %s8257 = scalar_lea.sflag [#allocation3], %s8256
        %s8258 = sand.u32 %s152, 1
        %s8259 = smul.addr %s8258, 1024
        %s8260 = scalar_lea.vmem [#allocation2], %s8259
        // Predicated region
        $region41: #{tpu_custom_call.1} parent=39 // pred_check
          %p8261 = pneg %p162
        $region42: #{tpu_custom_call.1} parent=39 // pred_check_branch
          %8263 = sbr.rel (%p8261) target = $region44
        $region43: #{tpu_custom_call.1} parent=39 // pred_region
          %s8264 = smul.u32 64, %s19
          %s8266 = ssub.s32 16384, 16384
          %8267 = vsyncadd %s8257, %s8266
          %s8268 = smul.addr %s8264, 2
          %s8269 = smul.addr %s8268, 128
          %s8270 = scalar_lea.hbm %s5, %s8269
          %s8271 = sshll.u32 %s8260, 4
          %s8272 = int_to_ptr.vmem [resolvable:$true] %s8271
          %8277 = dma.vmem_to_hbm [thread:$0]  %s8272, 16384, %s8270, %s8257, 128, 128, 8
        $region44: #{tpu_custom_call.1} parent=39 // pred_fallthru
          _
      $region40: #{tpu_custom_call.1} parent=5 // pred_fallthru
        _
      %p8278 = scmp.le.s32.totalorder 2, %s14
      // Predicated region
      $region45: #{tpu_custom_call.1} parent=5 // pred_check
        %p8279 = pneg %p8278
      $region46: #{tpu_custom_call.1} parent=5 // pred_check_branch
        %8281 = sbr.rel (%p8279) target = $region48
      $region47: #{tpu_custom_call.1} parent=5 // pred_region
        %s8282 = ssub.s32 %s14, 2
        // Predicated region
        $region49: #{tpu_custom_call.1} parent=47 // pred_check
          %p8283 = pneg %p168
        $region50: #{tpu_custom_call.1} parent=47 // pred_check_branch
          %8285 = sbr.rel (%p8283) target = $region52
        $region51: #{tpu_custom_call.1} parent=47 // pred_region
          %s8286 = sand.u32 %s153, 1
          %s8287 = scalar_lea.sflag [#allocation3], %s8286
          %s8288 = sand.u32 %s153, 1
          %s8289 = smul.addr %s8288, 1024
          %s8290 = scalar_lea.vmem [#allocation2], %s8289
          %8291 = dma.done %s8287, 16384
        $region52: #{tpu_custom_call.1} parent=47 // pred_fallthru
          _
      $region48: #{tpu_custom_call.1} parent=5 // pred_fallthru
        _
    $region6: #{tpu_custom_call.1} parent=1 // loop_footer
      %s18 = sadd.s32 1, %s14
    $region7: #{tpu_custom_call.1} parent=1 // loop_footer_branch
      %13 = sbr.rel target = $region3
    $region8: #{tpu_custom_call.1} parent=1 // loop_exit
      _
    %8292 = vsyncpa [#allocation3], 1
    %s8293 = scalar_lea.sflag [#allocation3], 1
    %8294 = vsyncpa %s8293, 1

</llo_original>
